<compile_context>
chip_gen: v5e
topology: v5e:2x2
jax: 0.10.0
libtpu: 0.0.40
codegen_flags: <defaults>
</compile_context>

<pallas_src>
import jax
import jax.numpy as jnp
from jax.experimental import pallas as pl
from jax.experimental.pallas import tpu as pltpu


# ----------------------------- Pallas kernel ------------------------------- #

def _basic_block_kernel(x_ref, w1_ref, b1_ref, w2_ref, b2_ref, out_ref,
                        pad_ref, acc_ref):
    """Fused conv3x3+bn+relu -> conv3x3+bn -> +residual -> relu, one image/step.

    x_ref   : (1, C, H*W)   f32   NCHW input, spatial flattened (lane-dense)
    w1_ref  : (9, C, C)     bf16  conv1 weights, tap-major, BN1 scale folded
    b1_ref  : (1, C)        f32   BN1 bias
    w2_ref  : (9, C, C)     bf16  conv2 weights, BN2 scale folded
    b2_ref  : (C, 1)        f32   BN2 bias
    out_ref : (1, C, H*W)   f32   NCHW output (lane-dense)
    pad_ref : (H+2, W+2, C) f32   zero-padded activation scratch (both stages)
    acc_ref : (H*W, C)      f32   matmul accumulator
    """
    Hp2, Wp2, C = pad_ref.shape
    H, W = Hp2 - 2, Wp2 - 2
    HW = H * W

    # Zero only the one-pixel border strips; the interior is rewritten below.
    zrow = jnp.zeros((1, Wp2, C), jnp.float32)
    zcol = jnp.zeros((Hp2, 1, C), jnp.float32)
    pad_ref[0:1, :, :] = zrow
    pad_ref[H + 1:H + 2, :, :] = zrow
    pad_ref[:, 0:1, :] = zcol
    pad_ref[:, W + 1:W + 2, :] = zcol

    def conv3x3(w_ref):
        # 9 accumulated MXU matmuls from shifted slices of the padded scratch.
        # (H, W, C) -> (H*W, C) keeps C as the lane dim -> free re-labelling.
        for dh in range(3):
            for dw in range(3):
                k = dh * 3 + dw
                tap = pad_ref[dh:dh + H, dw:dw + W, :].reshape(HW, C)
                p = jnp.dot(tap.astype(jnp.bfloat16), w_ref[k],
                            preferred_element_type=jnp.float32)
                if k == 0:
                    acc_ref[...] = p
                else:
                    acc_ref[...] += p
        return acc_ref[...]

    # ---- stage 1: conv1 (BN1 scale pre-folded) + bias + ReLU ---------------
    # NCHW block -> NHWC pad interior via one 2-D transpose (XLU slot).
    pad_ref[1:H + 1, 1:W + 1, :] = jnp.transpose(x_ref[0]).reshape(H, W, C)
    y = jnp.maximum(conv3x3(w1_ref) + b1_ref[...], 0.0)          # (H*W, C) f32

    # ---- stage 2: conv2 (BN2 scale pre-folded) -----------------------------
    # The intermediate never leaves VMEM: overwrite the pad interior
    # (borders are still zero from above).
    pad_ref[1:H + 1, 1:W + 1, :] = y.reshape(H, W, C)
    y = conv3x3(w2_ref)                                          # (H*W, C) f32

    # ---- epilogue in lane-dense (C, H*W): bias + residual + ReLU -----------
    # Residual is re-read from x_ref here (f32), not held live across stages.
    y = jnp.transpose(y) + b2_ref[...] + x_ref[0]                # (C, H*W) f32
    out_ref[0] = jnp.maximum(y, 0.0).astype(out_ref.dtype)


# ------------------------------ JAX wrapper -------------------------------- #

def basic_block_forward(x_nchw, params):
    """BasicBlock.forward (stride=1, downsample=None). Input/output are NCHW."""
    N, Cin, H, W = x_nchw.shape
    w1 = params["w1"]                                  # (3, 3, Cin, C) HWIO
    C = w1.shape[-1]
    # stride=1 + downsample=None requires inplanes == planes for the residual.
    assert Cin == C, "BasicBlock without downsample requires inplanes == planes"

    # Fold BN scale into conv weights (per-output-channel); keep biases.
    # Weights go to bf16 (MXU-native); biases stay f32.
    w1f = (w1 * params["scale1"]).reshape(9, Cin, C).astype(jnp.bfloat16)
    w2f = (params["w2"] * params["scale2"]).reshape(9, C, C).astype(jnp.bfloat16)
    b1 = params["bias1"].reshape(1, C).astype(jnp.float32)
    b2 = params["bias2"].reshape(C, 1).astype(jnp.float32)

    # Free metadata reshape: stays NCHW, spatial flattened (lane-dense blocks).
    x_flat = x_nchw.reshape(N, Cin, H * W)

    out_flat = pl.pallas_call(
        _basic_block_kernel,
        out_shape=jax.ShapeDtypeStruct((N, C, H * W), x_nchw.dtype),
        grid=(N,),
        in_specs=[
            pl.BlockSpec((1, Cin, H * W), lambda n: (n, 0, 0)),   # x (NCHW, flat)
            pl.BlockSpec((9, Cin, C), lambda n: (0, 0, 0)),       # w1 (resident)
            pl.BlockSpec((1, C), lambda n: (0, 0)),               # bias1
            pl.BlockSpec((9, C, C), lambda n: (0, 0, 0)),         # w2 (resident)
            pl.BlockSpec((C, 1), lambda n: (0, 0)),               # bias2
        ],
        out_specs=pl.BlockSpec((1, C, H * W), lambda n: (n, 0, 0)),
        scratch_shapes=[
            pltpu.VMEM((H + 2, W + 2, C), jnp.float32),           # padded act
            pltpu.VMEM((H * W, C), jnp.float32),                  # f32 accumulator
        ],
        compiler_params=pltpu.CompilerParams(
            dimension_semantics=("parallel",)),
    )(x_flat, w1f, b1, w2f, b2)

    return out_flat.reshape(N, C, H, W)                # free reshape, already NCHW


# --------------------------- reference (plain JAX) -------------------------- #

def _ref_conv3x3(x_nhwc, w_hwio):
    return jax.lax.conv_general_dilated(
        x_nhwc, w_hwio, window_strides=(1, 1), padding=((1, 1), (1, 1)),
        dimension_numbers=("NHWC", "HWIO", "NHWC"))


def basic_block_reference(x_nchw, params):
    x = jnp.transpose(x_nchw, (0, 2, 3, 1))
    out = _ref_conv3x3(x, params["w1"]) * params["scale1"] + params["bias1"]
    out = jnp.maximum(out, 0.0)
    out = _ref_conv3x3(out, params["w2"]) * params["scale2"] + params["bias2"]
    out = jnp.maximum(out + x, 0.0)
    return jnp.transpose(out, (0, 3, 1, 2))


# ---------------------------------- main ------------------------------------ #

if __name__ == "__main__":
    # Small shapes consistent with BasicBlock(inplanes=4, planes=4, stride=1)
    N, C, Hs, Ws = 2, 4, 16, 16
    inplanes = planes = C
    eps = 1e-5

    key = jax.random.PRNGKey(0)
    kx, kw1, kw2, kg1, kb1, kg2, kb2, km1, kv1, km2, kv2 = jax.random.split(key, 11)

    x = jax.random.normal(kx, (N, C, Hs, Ws), dtype=jnp.float32)

    # conv weights, deterministically initialized; stored as HWIO
    w1 = 0.2 * jax.random.normal(kw1, (3, 3, inplanes, planes), dtype=jnp.float32)
    w2 = 0.2 * jax.random.normal(kw2, (3, 3, planes, planes), dtype=jnp.float32)

    # batchnorm parameters (inference-mode fold into scale/bias)
    gamma1 = 1.0 + 0.1 * jax.random.normal(kg1, (planes,), dtype=jnp.float32)
    beta1 = 0.1 * jax.random.normal(kb1, (planes,), dtype=jnp.float32)
    mean1 = 0.1 * jax.random.normal(km1, (planes,), dtype=jnp.float32)
    var1 = 1.0 + 0.1 * jax.random.uniform(kv1, (planes,), dtype=jnp.float32)
    gamma2 = 1.0 + 0.1 * jax.random.normal(kg2, (planes,), dtype=jnp.float32)
    beta2 = 0.1 * jax.random.normal(kb2, (planes,), dtype=jnp.float32)
    mean2 = 0.1 * jax.random.normal(km2, (planes,), dtype=jnp.float32)
    var2 = 1.0 + 0.1 * jax.random.uniform(kv2, (planes,), dtype=jnp.float32)

    scale1 = gamma1 / jnp.sqrt(var1 + eps)
    bias1 = beta1 - mean1 * scale1
    scale2 = gamma2 / jnp.sqrt(var2 + eps)
    bias2 = beta2 - mean2 * scale2

    params = dict(w1=w1, scale1=scale1, bias1=bias1,
                  w2=w2, scale2=scale2, bias2=bias2)

    out = jax.block_until_ready(basic_block_forward(x, params))
    ref = jax.block_until_ready(basic_block_reference(x, params))

    assert out.shape == (N, C, Hs, Ws)
    # Tolerance accounts for the intentional bf16 MXU operands (f32 accumulate).
    assert jnp.allclose(out, ref, rtol=5e-2, atol=5e-2)
    print("KERNEL_OK")
</pallas_src>

<mosaic_0001>
module attributes {stable_mosaic.version = 11 : i64} {
  func.func @_basic_block_kernel(%arg0: i32, %arg1: memref<1x4x256xf32, #tpu.memory_space<vmem>>, %arg2: memref<9x4x4xbf16, #tpu.memory_space<vmem>>, %arg3: memref<1x4xf32, #tpu.memory_space<vmem>>, %arg4: memref<9x4x4xbf16, #tpu.memory_space<vmem>>, %arg5: memref<4x1xf32, #tpu.memory_space<vmem>>, %arg6: memref<1x4x256xf32, #tpu.memory_space<vmem>>, %arg7: memref<18x18x4xf32, #tpu.memory_space<vmem>>, %arg8: memref<256x4xf32, #tpu.memory_space<vmem>>) attributes {dimension_semantics = [#tpu.dimension_semantics<parallel>], iteration_bounds = array<i64: 2>, scalar_prefetch = 0 : i64, scratch_operands = 2 : i64, tpu.core_type = #tpu.core_type<tc>, window_params = [{transform_indices = @transform_0, window_bounds = array<i64: 1, 4, 256>}, {pipeline_mode = #tpu.pipeline_mode<synchronous>, transform_indices = @transform_1, window_bounds = array<i64: 9, 4, 4>}, {pipeline_mode = #tpu.pipeline_mode<synchronous>, transform_indices = @transform_2, window_bounds = array<i64: 1, 4>}, {pipeline_mode = #tpu.pipeline_mode<synchronous>, transform_indices = @transform_3, window_bounds = array<i64: 9, 4, 4>}, {pipeline_mode = #tpu.pipeline_mode<synchronous>, transform_indices = @transform_4, window_bounds = array<i64: 4, 1>}, {transform_indices = @transform_5, window_bounds = array<i64: 1, 4, 256>}]} {
    %cst = arith.constant 0.000000e+00 : f32
    %0 = vector.broadcast %cst : f32 to vector<1x18x4xf32>
    %cst_0 = arith.constant 0.000000e+00 : f32
    %1 = vector.broadcast %cst_0 : f32 to vector<18x1x4xf32>
    %c0 = arith.constant 0 : index
    %c0_1 = arith.constant 0 : index
    %c0_2 = arith.constant 0 : index
    %2 = vector.load %arg7[%c0, %c0_1, %c0_2] : memref<18x18x4xf32, #tpu.memory_space<vmem>>, vector<1x18x4xf32>
    tpu.vector_store %arg7[%c0, %c0_1, %c0_2], %0 {strides = array<i32>} : memref<18x18x4xf32, #tpu.memory_space<vmem>>, vector<1x18x4xf32>,
    %c17 = arith.constant 17 : index
    %c0_3 = arith.constant 0 : index
    %c0_4 = arith.constant 0 : index
    %3 = vector.load %arg7[%c17, %c0_3, %c0_4] : memref<18x18x4xf32, #tpu.memory_space<vmem>>, vector<1x18x4xf32>
    tpu.vector_store %arg7[%c17, %c0_3, %c0_4], %0 {strides = array<i32>} : memref<18x18x4xf32, #tpu.memory_space<vmem>>, vector<1x18x4xf32>,
    %c0_5 = arith.constant 0 : index
    %c0_6 = arith.constant 0 : index
    %c0_7 = arith.constant 0 : index
    %4 = vector.load %arg7[%c0_5, %c0_6, %c0_7] : memref<18x18x4xf32, #tpu.memory_space<vmem>>, vector<18x1x4xf32>
    tpu.vector_store %arg7[%c0_5, %c0_6, %c0_7], %1 {strides = array<i32>} : memref<18x18x4xf32, #tpu.memory_space<vmem>>, vector<18x1x4xf32>,
    %c0_8 = arith.constant 0 : index
    %c17_9 = arith.constant 17 : index
    %c0_10 = arith.constant 0 : index
    %5 = vector.load %arg7[%c0_8, %c17_9, %c0_10] : memref<18x18x4xf32, #tpu.memory_space<vmem>>, vector<18x1x4xf32>
    tpu.vector_store %arg7[%c0_8, %c17_9, %c0_10], %1 {strides = array<i32>} : memref<18x18x4xf32, #tpu.memory_space<vmem>>, vector<18x1x4xf32>,
    %c0_11 = arith.constant 0 : index
    %c0_12 = arith.constant 0 : index
    %c0_13 = arith.constant 0 : index
    %6 = vector.load %arg1[%c0_11, %c0_12, %c0_13] : memref<1x4x256xf32, #tpu.memory_space<vmem>>, vector<1x4x256xf32>
    %7 = vector.shape_cast %6 : vector<1x4x256xf32> to vector<4x256xf32>
    %8 = tpu.transpose %7, [1, 0] : vector<4x256xf32> -> vector<256x4xf32>
    %9 = vector.shape_cast %8 : vector<256x4xf32> to vector<16x16x4xf32>
    %c1 = arith.constant 1 : index
    %c1_14 = arith.constant 1 : index
    %c0_15 = arith.constant 0 : index
    %10 = vector.load %arg7[%c1, %c1_14, %c0_15] : memref<18x18x4xf32, #tpu.memory_space<vmem>>, vector<16x16x4xf32>
    tpu.vector_store %arg7[%c1, %c1_14, %c0_15], %9 {strides = array<i32>} : memref<18x18x4xf32, #tpu.memory_space<vmem>>, vector<16x16x4xf32>,
    %c0_16 = arith.constant 0 : index
    %c0_17 = arith.constant 0 : index
    %c0_18 = arith.constant 0 : index
    %11 = vector.load %arg7[%c0_16, %c0_17, %c0_18] : memref<18x18x4xf32, #tpu.memory_space<vmem>>, vector<16x16x4xf32>
    %12 = vector.shape_cast %11 : vector<16x16x4xf32> to vector<256x4xf32>
    %13 = arith.truncf %12 : vector<256x4xf32> to vector<256x4xbf16>
    %c0_19 = arith.constant 0 : index
    %c0_20 = arith.constant 0 : index
    %c0_21 = arith.constant 0 : index
    %14 = vector.load %arg2[%c0_19, %c0_20, %c0_21] : memref<9x4x4xbf16, #tpu.memory_space<vmem>>, vector<1x4x4xbf16>
    %15 = vector.shape_cast %14 : vector<1x4x4xbf16> to vector<4x4xbf16>
    %cst_22 = arith.constant dense<0.000000e+00> : vector<256x4xf32>
    %16 = tpu.matmul %13, %15, %cst_22 {dimension_numbers = #tpu.dot_dimension_numbers<[1], [0], [0], [1], [0, 0, 1, 1], [], []>} : vector<256x4xbf16>, vector<4x4xbf16>, vector<256x4xf32> -> vector<256x4xf32>
    %c0_23 = arith.constant 0 : index
    %c0_24 = arith.constant 0 : index
    %17 = vector.load %arg8[%c0_23, %c0_24] : memref<256x4xf32, #tpu.memory_space<vmem>>, vector<256x4xf32>
    tpu.vector_store %arg8[%c0_23, %c0_24], %16 {strides = array<i32>} : memref<256x4xf32, #tpu.memory_space<vmem>>, vector<256x4xf32>,
    %c0_25 = arith.constant 0 : index
    %c1_26 = arith.constant 1 : index
    %c0_27 = arith.constant 0 : index
    %18 = vector.load %arg7[%c0_25, %c1_26, %c0_27] : memref<18x18x4xf32, #tpu.memory_space<vmem>>, vector<16x16x4xf32>
    %19 = vector.shape_cast %18 : vector<16x16x4xf32> to vector<256x4xf32>
    %20 = arith.truncf %19 : vector<256x4xf32> to vector<256x4xbf16>
    %c1_28 = arith.constant 1 : index
    %c0_29 = arith.constant 0 : index
    %c0_30 = arith.constant 0 : index
    %21 = vector.load %arg2[%c1_28, %c0_29, %c0_30] : memref<9x4x4xbf16, #tpu.memory_space<vmem>>, vector<1x4x4xbf16>
    %22 = vector.shape_cast %21 : vector<1x4x4xbf16> to vector<4x4xbf16>
    %cst_31 = arith.constant dense<0.000000e+00> : vector<256x4xf32>
    %23 = tpu.matmul %20, %22, %cst_31 {dimension_numbers = #tpu.dot_dimension_numbers<[1], [0], [0], [1], [0, 0, 1, 1], [], []>} : vector<256x4xbf16>, vector<4x4xbf16>, vector<256x4xf32> -> vector<256x4xf32>
    %c0_32 = arith.constant 0 : index
    %c0_33 = arith.constant 0 : index
    %24 = vector.load %arg8[%c0_32, %c0_33] : memref<256x4xf32, #tpu.memory_space<vmem>>, vector<256x4xf32>
    %25 = arith.addf %24, %23 : vector<256x4xf32>
    %c0_34 = arith.constant 0 : index
    %c0_35 = arith.constant 0 : index
    %26 = vector.load %arg8[%c0_34, %c0_35] : memref<256x4xf32, #tpu.memory_space<vmem>>, vector<256x4xf32>
    tpu.vector_store %arg8[%c0_34, %c0_35], %25 {strides = array<i32>} : memref<256x4xf32, #tpu.memory_space<vmem>>, vector<256x4xf32>,
    %c0_36 = arith.constant 0 : index
    %c2 = arith.constant 2 : index
    %c0_37 = arith.constant 0 : index
    %27 = vector.load %arg7[%c0_36, %c2, %c0_37] : memref<18x18x4xf32, #tpu.memory_space<vmem>>, vector<16x16x4xf32>
    %28 = vector.shape_cast %27 : vector<16x16x4xf32> to vector<256x4xf32>
    %29 = arith.truncf %28 : vector<256x4xf32> to vector<256x4xbf16>
    %c2_38 = arith.constant 2 : index
    %c0_39 = arith.constant 0 : index
    %c0_40 = arith.constant 0 : index
    %30 = vector.load %arg2[%c2_38, %c0_39, %c0_40] : memref<9x4x4xbf16, #tpu.memory_space<vmem>>, vector<1x4x4xbf16>
    %31 = vector.shape_cast %30 : vector<1x4x4xbf16> to vector<4x4xbf16>
    %cst_41 = arith.constant dense<0.000000e+00> : vector<256x4xf32>
    %32 = tpu.matmul %29, %31, %cst_41 {dimension_numbers = #tpu.dot_dimension_numbers<[1], [0], [0], [1], [0, 0, 1, 1], [], []>} : vector<256x4xbf16>, vector<4x4xbf16>, vector<256x4xf32> -> vector<256x4xf32>
    %c0_42 = arith.constant 0 : index
    %c0_43 = arith.constant 0 : index
    %33 = vector.load %arg8[%c0_42, %c0_43] : memref<256x4xf32, #tpu.memory_space<vmem>>, vector<256x4xf32>
    %34 = arith.addf %33, %32 : vector<256x4xf32>
    %c0_44 = arith.constant 0 : index
    %c0_45 = arith.constant 0 : index
    %35 = vector.load %arg8[%c0_44, %c0_45] : memref<256x4xf32, #tpu.memory_space<vmem>>, vector<256x4xf32>
    tpu.vector_store %arg8[%c0_44, %c0_45], %34 {strides = array<i32>} : memref<256x4xf32, #tpu.memory_space<vmem>>, vector<256x4xf32>,
    %c1_46 = arith.constant 1 : index
    %c0_47 = arith.constant 0 : index
    %c0_48 = arith.constant 0 : index
    %36 = vector.load %arg7[%c1_46, %c0_47, %c0_48] : memref<18x18x4xf32, #tpu.memory_space<vmem>>, vector<16x16x4xf32>
    %37 = vector.shape_cast %36 : vector<16x16x4xf32> to vector<256x4xf32>
    %38 = arith.truncf %37 : vector<256x4xf32> to vector<256x4xbf16>
    %c3 = arith.constant 3 : index
    %c0_49 = arith.constant 0 : index
    %c0_50 = arith.constant 0 : index
    %39 = vector.load %arg2[%c3, %c0_49, %c0_50] : memref<9x4x4xbf16, #tpu.memory_space<vmem>>, vector<1x4x4xbf16>
    %40 = vector.shape_cast %39 : vector<1x4x4xbf16> to vector<4x4xbf16>
    %cst_51 = arith.constant dense<0.000000e+00> : vector<256x4xf32>
    %41 = tpu.matmul %38, %40, %cst_51 {dimension_numbers = #tpu.dot_dimension_numbers<[1], [0], [0], [1], [0, 0, 1, 1], [], []>} : vector<256x4xbf16>, vector<4x4xbf16>, vector<256x4xf32> -> vector<256x4xf32>
    %c0_52 = arith.constant 0 : index
    %c0_53 = arith.constant 0 : index
    %42 = vector.load %arg8[%c0_52, %c0_53] : memref<256x4xf32, #tpu.memory_space<vmem>>, vector<256x4xf32>
    %43 = arith.addf %42, %41 : vector<256x4xf32>
    %c0_54 = arith.constant 0 : index
    %c0_55 = arith.constant 0 : index
    %44 = vector.load %arg8[%c0_54, %c0_55] : memref<256x4xf32, #tpu.memory_space<vmem>>, vector<256x4xf32>
    tpu.vector_store %arg8[%c0_54, %c0_55], %43 {strides = array<i32>} : memref<256x4xf32, #tpu.memory_space<vmem>>, vector<256x4xf32>,
    %c1_56 = arith.constant 1 : index
    %c1_57 = arith.constant 1 : index
    %c0_58 = arith.constant 0 : index
    %45 = vector.load %arg7[%c1_56, %c1_57, %c0_58] : memref<18x18x4xf32, #tpu.memory_space<vmem>>, vector<16x16x4xf32>
    %46 = vector.shape_cast %45 : vector<16x16x4xf32> to vector<256x4xf32>
    %47 = arith.truncf %46 : vector<256x4xf32> to vector<256x4xbf16>
    %c4 = arith.constant 4 : index
    %c0_59 = arith.constant 0 : index
    %c0_60 = arith.constant 0 : index
    %48 = vector.load %arg2[%c4, %c0_59, %c0_60] : memref<9x4x4xbf16, #tpu.memory_space<vmem>>, vector<1x4x4xbf16>
    %49 = vector.shape_cast %48 : vector<1x4x4xbf16> to vector<4x4xbf16>
    %cst_61 = arith.constant dense<0.000000e+00> : vector<256x4xf32>
    %50 = tpu.matmul %47, %49, %cst_61 {dimension_numbers = #tpu.dot_dimension_numbers<[1], [0], [0], [1], [0, 0, 1, 1], [], []>} : vector<256x4xbf16>, vector<4x4xbf16>, vector<256x4xf32> -> vector<256x4xf32>
    %c0_62 = arith.constant 0 : index
    %c0_63 = arith.constant 0 : index
    %51 = vector.load %arg8[%c0_62, %c0_63] : memref<256x4xf32, #tpu.memory_space<vmem>>, vector<256x4xf32>
    %52 = arith.addf %51, %50 : vector<256x4xf32>
    %c0_64 = arith.constant 0 : index
    %c0_65 = arith.constant 0 : index
    %53 = vector.load %arg8[%c0_64, %c0_65] : memref<256x4xf32, #tpu.memory_space<vmem>>, vector<256x4xf32>
    tpu.vector_store %arg8[%c0_64, %c0_65], %52 {strides = array<i32>} : memref<256x4xf32, #tpu.memory_space<vmem>>, vector<256x4xf32>,
    %c1_66 = arith.constant 1 : index
    %c2_67 = arith.constant 2 : index
    %c0_68 = arith.constant 0 : index
    %54 = vector.load %arg7[%c1_66, %c2_67, %c0_68] : memref<18x18x4xf32, #tpu.memory_space<vmem>>, vector<16x16x4xf32>
    %55 = vector.shape_cast %54 : vector<16x16x4xf32> to vector<256x4xf32>
    %56 = arith.truncf %55 : vector<256x4xf32> to vector<256x4xbf16>
    %c5 = arith.constant 5 : index
    %c0_69 = arith.constant 0 : index
    %c0_70 = arith.constant 0 : index
    %57 = vector.load %arg2[%c5, %c0_69, %c0_70] : memref<9x4x4xbf16, #tpu.memory_space<vmem>>, vector<1x4x4xbf16>
    %58 = vector.shape_cast %57 : vector<1x4x4xbf16> to vector<4x4xbf16>
    %cst_71 = arith.constant dense<0.000000e+00> : vector<256x4xf32>
    %59 = tpu.matmul %56, %58, %cst_71 {dimension_numbers = #tpu.dot_dimension_numbers<[1], [0], [0], [1], [0, 0, 1, 1], [], []>} : vector<256x4xbf16>, vector<4x4xbf16>, vector<256x4xf32> -> vector<256x4xf32>
    %c0_72 = arith.constant 0 : index
    %c0_73 = arith.constant 0 : index
    %60 = vector.load %arg8[%c0_72, %c0_73] : memref<256x4xf32, #tpu.memory_space<vmem>>, vector<256x4xf32>
    %61 = arith.addf %60, %59 : vector<256x4xf32>
    %c0_74 = arith.constant 0 : index
    %c0_75 = arith.constant 0 : index
    %62 = vector.load %arg8[%c0_74, %c0_75] : memref<256x4xf32, #tpu.memory_space<vmem>>, vector<256x4xf32>
    tpu.vector_store %arg8[%c0_74, %c0_75], %61 {strides = array<i32>} : memref<256x4xf32, #tpu.memory_space<vmem>>, vector<256x4xf32>,
    %c2_76 = arith.constant 2 : index
    %c0_77 = arith.constant 0 : index
    %c0_78 = arith.constant 0 : index
    %63 = vector.load %arg7[%c2_76, %c0_77, %c0_78] : memref<18x18x4xf32, #tpu.memory_space<vmem>>, vector<16x16x4xf32>
    %64 = vector.shape_cast %63 : vector<16x16x4xf32> to vector<256x4xf32>
    %65 = arith.truncf %64 : vector<256x4xf32> to vector<256x4xbf16>
    %c6 = arith.constant 6 : index
    %c0_79 = arith.constant 0 : index
    %c0_80 = arith.constant 0 : index
    %66 = vector.load %arg2[%c6, %c0_79, %c0_80] : memref<9x4x4xbf16, #tpu.memory_space<vmem>>, vector<1x4x4xbf16>
    %67 = vector.shape_cast %66 : vector<1x4x4xbf16> to vector<4x4xbf16>
    %cst_81 = arith.constant dense<0.000000e+00> : vector<256x4xf32>
    %68 = tpu.matmul %65, %67, %cst_81 {dimension_numbers = #tpu.dot_dimension_numbers<[1], [0], [0], [1], [0, 0, 1, 1], [], []>} : vector<256x4xbf16>, vector<4x4xbf16>, vector<256x4xf32> -> vector<256x4xf32>
    %c0_82 = arith.constant 0 : index
    %c0_83 = arith.constant 0 : index
    %69 = vector.load %arg8[%c0_82, %c0_83] : memref<256x4xf32, #tpu.memory_space<vmem>>, vector<256x4xf32>
    %70 = arith.addf %69, %68 : vector<256x4xf32>
    %c0_84 = arith.constant 0 : index
    %c0_85 = arith.constant 0 : index
    %71 = vector.load %arg8[%c0_84, %c0_85] : memref<256x4xf32, #tpu.memory_space<vmem>>, vector<256x4xf32>
    tpu.vector_store %arg8[%c0_84, %c0_85], %70 {strides = array<i32>} : memref<256x4xf32, #tpu.memory_space<vmem>>, vector<256x4xf32>,
    %c2_86 = arith.constant 2 : index
    %c1_87 = arith.constant 1 : index
    %c0_88 = arith.constant 0 : index
    %72 = vector.load %arg7[%c2_86, %c1_87, %c0_88] : memref<18x18x4xf32, #tpu.memory_space<vmem>>, vector<16x16x4xf32>
    %73 = vector.shape_cast %72 : vector<16x16x4xf32> to vector<256x4xf32>
    %74 = arith.truncf %73 : vector<256x4xf32> to vector<256x4xbf16>
    %c7 = arith.constant 7 : index
    %c0_89 = arith.constant 0 : index
    %c0_90 = arith.constant 0 : index
    %75 = vector.load %arg2[%c7, %c0_89, %c0_90] : memref<9x4x4xbf16, #tpu.memory_space<vmem>>, vector<1x4x4xbf16>
    %76 = vector.shape_cast %75 : vector<1x4x4xbf16> to vector<4x4xbf16>
    %cst_91 = arith.constant dense<0.000000e+00> : vector<256x4xf32>
    %77 = tpu.matmul %74, %76, %cst_91 {dimension_numbers = #tpu.dot_dimension_numbers<[1], [0], [0], [1], [0, 0, 1, 1], [], []>} : vector<256x4xbf16>, vector<4x4xbf16>, vector<256x4xf32> -> vector<256x4xf32>
    %c0_92 = arith.constant 0 : index
    %c0_93 = arith.constant 0 : index
    %78 = vector.load %arg8[%c0_92, %c0_93] : memref<256x4xf32, #tpu.memory_space<vmem>>, vector<256x4xf32>
    %79 = arith.addf %78, %77 : vector<256x4xf32>
    %c0_94 = arith.constant 0 : index
    %c0_95 = arith.constant 0 : index
    %80 = vector.load %arg8[%c0_94, %c0_95] : memref<256x4xf32, #tpu.memory_space<vmem>>, vector<256x4xf32>
    tpu.vector_store %arg8[%c0_94, %c0_95], %79 {strides = array<i32>} : memref<256x4xf32, #tpu.memory_space<vmem>>, vector<256x4xf32>,
    %c2_96 = arith.constant 2 : index
    %c2_97 = arith.constant 2 : index
    %c0_98 = arith.constant 0 : index
    %81 = vector.load %arg7[%c2_96, %c2_97, %c0_98] : memref<18x18x4xf32, #tpu.memory_space<vmem>>, vector<16x16x4xf32>
    %82 = vector.shape_cast %81 : vector<16x16x4xf32> to vector<256x4xf32>
    %83 = arith.truncf %82 : vector<256x4xf32> to vector<256x4xbf16>
    %c8 = arith.constant 8 : index
    %c0_99 = arith.constant 0 : index
    %c0_100 = arith.constant 0 : index
    %84 = vector.load %arg2[%c8, %c0_99, %c0_100] : memref<9x4x4xbf16, #tpu.memory_space<vmem>>, vector<1x4x4xbf16>
    %85 = vector.shape_cast %84 : vector<1x4x4xbf16> to vector<4x4xbf16>
    %cst_101 = arith.constant dense<0.000000e+00> : vector<256x4xf32>
    %86 = tpu.matmul %83, %85, %cst_101 {dimension_numbers = #tpu.dot_dimension_numbers<[1], [0], [0], [1], [0, 0, 1, 1], [], []>} : vector<256x4xbf16>, vector<4x4xbf16>, vector<256x4xf32> -> vector<256x4xf32>
    %c0_102 = arith.constant 0 : index
    %c0_103 = arith.constant 0 : index
    %87 = vector.load %arg8[%c0_102, %c0_103] : memref<256x4xf32, #tpu.memory_space<vmem>>, vector<256x4xf32>
    %88 = arith.addf %87, %86 : vector<256x4xf32>
    %c0_104 = arith.constant 0 : index
    %c0_105 = arith.constant 0 : index
    %89 = vector.load %arg8[%c0_104, %c0_105] : memref<256x4xf32, #tpu.memory_space<vmem>>, vector<256x4xf32>
    tpu.vector_store %arg8[%c0_104, %c0_105], %88 {strides = array<i32>} : memref<256x4xf32, #tpu.memory_space<vmem>>, vector<256x4xf32>,
    %c0_106 = arith.constant 0 : index
    %c0_107 = arith.constant 0 : index
    %90 = vector.load %arg8[%c0_106, %c0_107] : memref<256x4xf32, #tpu.memory_space<vmem>>, vector<256x4xf32>
    %c0_108 = arith.constant 0 : index
    %c0_109 = arith.constant 0 : index
    %91 = vector.load %arg3[%c0_108, %c0_109] : memref<1x4xf32, #tpu.memory_space<vmem>>, vector<1x4xf32>
    %92 = vector.broadcast %91 : vector<1x4xf32> to vector<256x4xf32>
    %93 = arith.addf %90, %92 : vector<256x4xf32>
    %cst_110 = arith.constant 0.000000e+00 : f32
    %94 = vector.broadcast %cst_110 : f32 to vector<256x4xf32>
    %95 = arith.maximumf %93, %94 : vector<256x4xf32>
    %96 = vector.shape_cast %95 : vector<256x4xf32> to vector<16x16x4xf32>
    %c1_111 = arith.constant 1 : index
    %c1_112 = arith.constant 1 : index
    %c0_113 = arith.constant 0 : index
    %97 = vector.load %arg7[%c1_111, %c1_112, %c0_113] : memref<18x18x4xf32, #tpu.memory_space<vmem>>, vector<16x16x4xf32>
    tpu.vector_store %arg7[%c1_111, %c1_112, %c0_113], %96 {strides = array<i32>} : memref<18x18x4xf32, #tpu.memory_space<vmem>>, vector<16x16x4xf32>,
    %c0_114 = arith.constant 0 : index
    %c0_115 = arith.constant 0 : index
    %c0_116 = arith.constant 0 : index
    %98 = vector.load %arg7[%c0_114, %c0_115, %c0_116] : memref<18x18x4xf32, #tpu.memory_space<vmem>>, vector<16x16x4xf32>
    %99 = vector.shape_cast %98 : vector<16x16x4xf32> to vector<256x4xf32>
    %100 = arith.truncf %99 : vector<256x4xf32> to vector<256x4xbf16>
    %c0_117 = arith.constant 0 : index
    %c0_118 = arith.constant 0 : index
    %c0_119 = arith.constant 0 : index
    %101 = vector.load %arg4[%c0_117, %c0_118, %c0_119] : memref<9x4x4xbf16, #tpu.memory_space<vmem>>, vector<1x4x4xbf16>
    %102 = vector.shape_cast %101 : vector<1x4x4xbf16> to vector<4x4xbf16>
    %cst_120 = arith.constant dense<0.000000e+00> : vector<256x4xf32>
    %103 = tpu.matmul %100, %102, %cst_120 {dimension_numbers = #tpu.dot_dimension_numbers<[1], [0], [0], [1], [0, 0, 1, 1], [], []>} : vector<256x4xbf16>, vector<4x4xbf16>, vector<256x4xf32> -> vector<256x4xf32>
    %c0_121 = arith.constant 0 : index
    %c0_122 = arith.constant 0 : index
    %104 = vector.load %arg8[%c0_121, %c0_122] : memref<256x4xf32, #tpu.memory_space<vmem>>, vector<256x4xf32>
    tpu.vector_store %arg8[%c0_121, %c0_122], %103 {strides = array<i32>} : memref<256x4xf32, #tpu.memory_space<vmem>>, vector<256x4xf32>,
    %c0_123 = arith.constant 0 : index
    %c1_124 = arith.constant 1 : index
    %c0_125 = arith.constant 0 : index
    %105 = vector.load %arg7[%c0_123, %c1_124, %c0_125] : memref<18x18x4xf32, #tpu.memory_space<vmem>>, vector<16x16x4xf32>
    %106 = vector.shape_cast %105 : vector<16x16x4xf32> to vector<256x4xf32>
    %107 = arith.truncf %106 : vector<256x4xf32> to vector<256x4xbf16>
    %c1_126 = arith.constant 1 : index
    %c0_127 = arith.constant 0 : index
    %c0_128 = arith.constant 0 : index
    %108 = vector.load %arg4[%c1_126, %c0_127, %c0_128] : memref<9x4x4xbf16, #tpu.memory_space<vmem>>, vector<1x4x4xbf16>
    %109 = vector.shape_cast %108 : vector<1x4x4xbf16> to vector<4x4xbf16>
    %cst_129 = arith.constant dense<0.000000e+00> : vector<256x4xf32>
    %110 = tpu.matmul %107, %109, %cst_129 {dimension_numbers = #tpu.dot_dimension_numbers<[1], [0], [0], [1], [0, 0, 1, 1], [], []>} : vector<256x4xbf16>, vector<4x4xbf16>, vector<256x4xf32> -> vector<256x4xf32>
    %c0_130 = arith.constant 0 : index
    %c0_131 = arith.constant 0 : index
    %111 = vector.load %arg8[%c0_130, %c0_131] : memref<256x4xf32, #tpu.memory_space<vmem>>, vector<256x4xf32>
    %112 = arith.addf %111, %110 : vector<256x4xf32>
    %c0_132 = arith.constant 0 : index
    %c0_133 = arith.constant 0 : index
    %113 = vector.load %arg8[%c0_132, %c0_133] : memref<256x4xf32, #tpu.memory_space<vmem>>, vector<256x4xf32>
    tpu.vector_store %arg8[%c0_132, %c0_133], %112 {strides = array<i32>} : memref<256x4xf32, #tpu.memory_space<vmem>>, vector<256x4xf32>,
    %c0_134 = arith.constant 0 : index
    %c2_135 = arith.constant 2 : index
    %c0_136 = arith.constant 0 : index
    %114 = vector.load %arg7[%c0_134, %c2_135, %c0_136] : memref<18x18x4xf32, #tpu.memory_space<vmem>>, vector<16x16x4xf32>
    %115 = vector.shape_cast %114 : vector<16x16x4xf32> to vector<256x4xf32>
    %116 = arith.truncf %115 : vector<256x4xf32> to vector<256x4xbf16>
    %c2_137 = arith.constant 2 : index
    %c0_138 = arith.constant 0 : index
    %c0_139 = arith.constant 0 : index
    %117 = vector.load %arg4[%c2_137, %c0_138, %c0_139] : memref<9x4x4xbf16, #tpu.memory_space<vmem>>, vector<1x4x4xbf16>
    %118 = vector.shape_cast %117 : vector<1x4x4xbf16> to vector<4x4xbf16>
    %cst_140 = arith.constant dense<0.000000e+00> : vector<256x4xf32>
    %119 = tpu.matmul %116, %118, %cst_140 {dimension_numbers = #tpu.dot_dimension_numbers<[1], [0], [0], [1], [0, 0, 1, 1], [], []>} : vector<256x4xbf16>, vector<4x4xbf16>, vector<256x4xf32> -> vector<256x4xf32>
    %c0_141 = arith.constant 0 : index
    %c0_142 = arith.constant 0 : index
    %120 = vector.load %arg8[%c0_141, %c0_142] : memref<256x4xf32, #tpu.memory_space<vmem>>, vector<256x4xf32>
    %121 = arith.addf %120, %119 : vector<256x4xf32>
    %c0_143 = arith.constant 0 : index
    %c0_144 = arith.constant 0 : index
    %122 = vector.load %arg8[%c0_143, %c0_144] : memref<256x4xf32, #tpu.memory_space<vmem>>, vector<256x4xf32>
    tpu.vector_store %arg8[%c0_143, %c0_144], %121 {strides = array<i32>} : memref<256x4xf32, #tpu.memory_space<vmem>>, vector<256x4xf32>,
    %c1_145 = arith.constant 1 : index
    %c0_146 = arith.constant 0 : index
    %c0_147 = arith.constant 0 : index
    %123 = vector.load %arg7[%c1_145, %c0_146, %c0_147] : memref<18x18x4xf32, #tpu.memory_space<vmem>>, vector<16x16x4xf32>
    %124 = vector.shape_cast %123 : vector<16x16x4xf32> to vector<256x4xf32>
    %125 = arith.truncf %124 : vector<256x4xf32> to vector<256x4xbf16>
    %c3_148 = arith.constant 3 : index
    %c0_149 = arith.constant 0 : index
    %c0_150 = arith.constant 0 : index
    %126 = vector.load %arg4[%c3_148, %c0_149, %c0_150] : memref<9x4x4xbf16, #tpu.memory_space<vmem>>, vector<1x4x4xbf16>
    %127 = vector.shape_cast %126 : vector<1x4x4xbf16> to vector<4x4xbf16>
    %cst_151 = arith.constant dense<0.000000e+00> : vector<256x4xf32>
    %128 = tpu.matmul %125, %127, %cst_151 {dimension_numbers = #tpu.dot_dimension_numbers<[1], [0], [0], [1], [0, 0, 1, 1], [], []>} : vector<256x4xbf16>, vector<4x4xbf16>, vector<256x4xf32> -> vector<256x4xf32>
    %c0_152 = arith.constant 0 : index
    %c0_153 = arith.constant 0 : index
    %129 = vector.load %arg8[%c0_152, %c0_153] : memref<256x4xf32, #tpu.memory_space<vmem>>, vector<256x4xf32>
    %130 = arith.addf %129, %128 : vector<256x4xf32>
    %c0_154 = arith.constant 0 : index
    %c0_155 = arith.constant 0 : index
    %131 = vector.load %arg8[%c0_154, %c0_155] : memref<256x4xf32, #tpu.memory_space<vmem>>, vector<256x4xf32>
    tpu.vector_store %arg8[%c0_154, %c0_155], %130 {strides = array<i32>} : memref<256x4xf32, #tpu.memory_space<vmem>>, vector<256x4xf32>,
    %c1_156 = arith.constant 1 : index
    %c1_157 = arith.constant 1 : index
    %c0_158 = arith.constant 0 : index
    %132 = vector.load %arg7[%c1_156, %c1_157, %c0_158] : memref<18x18x4xf32, #tpu.memory_space<vmem>>, vector<16x16x4xf32>
    %133 = vector.shape_cast %132 : vector<16x16x4xf32> to vector<256x4xf32>
    %134 = arith.truncf %133 : vector<256x4xf32> to vector<256x4xbf16>
    %c4_159 = arith.constant 4 : index
    %c0_160 = arith.constant 0 : index
    %c0_161 = arith.constant 0 : index
    %135 = vector.load %arg4[%c4_159, %c0_160, %c0_161] : memref<9x4x4xbf16, #tpu.memory_space<vmem>>, vector<1x4x4xbf16>
    %136 = vector.shape_cast %135 : vector<1x4x4xbf16> to vector<4x4xbf16>
    %cst_162 = arith.constant dense<0.000000e+00> : vector<256x4xf32>
    %137 = tpu.matmul %134, %136, %cst_162 {dimension_numbers = #tpu.dot_dimension_numbers<[1], [0], [0], [1], [0, 0, 1, 1], [], []>} : vector<256x4xbf16>, vector<4x4xbf16>, vector<256x4xf32> -> vector<256x4xf32>
    %c0_163 = arith.constant 0 : index
    %c0_164 = arith.constant 0 : index
    %138 = vector.load %arg8[%c0_163, %c0_164] : memref<256x4xf32, #tpu.memory_space<vmem>>, vector<256x4xf32>
    %139 = arith.addf %138, %137 : vector<256x4xf32>
    %c0_165 = arith.constant 0 : index
    %c0_166 = arith.constant 0 : index
    %140 = vector.load %arg8[%c0_165, %c0_166] : memref<256x4xf32, #tpu.memory_space<vmem>>, vector<256x4xf32>
    tpu.vector_store %arg8[%c0_165, %c0_166], %139 {strides = array<i32>} : memref<256x4xf32, #tpu.memory_space<vmem>>, vector<256x4xf32>,
    %c1_167 = arith.constant 1 : index
    %c2_168 = arith.constant 2 : index
    %c0_169 = arith.constant 0 : index
    %141 = vector.load %arg7[%c1_167, %c2_168, %c0_169] : memref<18x18x4xf32, #tpu.memory_space<vmem>>, vector<16x16x4xf32>
    %142 = vector.shape_cast %141 : vector<16x16x4xf32> to vector<256x4xf32>
    %143 = arith.truncf %142 : vector<256x4xf32> to vector<256x4xbf16>
    %c5_170 = arith.constant 5 : index
    %c0_171 = arith.constant 0 : index
    %c0_172 = arith.constant 0 : index
    %144 = vector.load %arg4[%c5_170, %c0_171, %c0_172] : memref<9x4x4xbf16, #tpu.memory_space<vmem>>, vector<1x4x4xbf16>
    %145 = vector.shape_cast %144 : vector<1x4x4xbf16> to vector<4x4xbf16>
    %cst_173 = arith.constant dense<0.000000e+00> : vector<256x4xf32>
    %146 = tpu.matmul %143, %145, %cst_173 {dimension_numbers = #tpu.dot_dimension_numbers<[1], [0], [0], [1], [0, 0, 1, 1], [], []>} : vector<256x4xbf16>, vector<4x4xbf16>, vector<256x4xf32> -> vector<256x4xf32>
    %c0_174 = arith.constant 0 : index
    %c0_175 = arith.constant 0 : index
    %147 = vector.load %arg8[%c0_174, %c0_175] : memref<256x4xf32, #tpu.memory_space<vmem>>, vector<256x4xf32>
    %148 = arith.addf %147, %146 : vector<256x4xf32>
    %c0_176 = arith.constant 0 : index
    %c0_177 = arith.constant 0 : index
    %149 = vector.load %arg8[%c0_176, %c0_177] : memref<256x4xf32, #tpu.memory_space<vmem>>, vector<256x4xf32>
    tpu.vector_store %arg8[%c0_176, %c0_177], %148 {strides = array<i32>} : memref<256x4xf32, #tpu.memory_space<vmem>>, vector<256x4xf32>,
    %c2_178 = arith.constant 2 : index
    %c0_179 = arith.constant 0 : index
    %c0_180 = arith.constant 0 : index
    %150 = vector.load %arg7[%c2_178, %c0_179, %c0_180] : memref<18x18x4xf32, #tpu.memory_space<vmem>>, vector<16x16x4xf32>
    %151 = vector.shape_cast %150 : vector<16x16x4xf32> to vector<256x4xf32>
    %152 = arith.truncf %151 : vector<256x4xf32> to vector<256x4xbf16>
    %c6_181 = arith.constant 6 : index
    %c0_182 = arith.constant 0 : index
    %c0_183 = arith.constant 0 : index
    %153 = vector.load %arg4[%c6_181, %c0_182, %c0_183] : memref<9x4x4xbf16, #tpu.memory_space<vmem>>, vector<1x4x4xbf16>
    %154 = vector.shape_cast %153 : vector<1x4x4xbf16> to vector<4x4xbf16>
    %cst_184 = arith.constant dense<0.000000e+00> : vector<256x4xf32>
    %155 = tpu.matmul %152, %154, %cst_184 {dimension_numbers = #tpu.dot_dimension_numbers<[1], [0], [0], [1], [0, 0, 1, 1], [], []>} : vector<256x4xbf16>, vector<4x4xbf16>, vector<256x4xf32> -> vector<256x4xf32>
    %c0_185 = arith.constant 0 : index
    %c0_186 = arith.constant 0 : index
    %156 = vector.load %arg8[%c0_185, %c0_186] : memref<256x4xf32, #tpu.memory_space<vmem>>, vector<256x4xf32>
    %157 = arith.addf %156, %155 : vector<256x4xf32>
    %c0_187 = arith.constant 0 : index
    %c0_188 = arith.constant 0 : index
    %158 = vector.load %arg8[%c0_187, %c0_188] : memref<256x4xf32, #tpu.memory_space<vmem>>, vector<256x4xf32>
    tpu.vector_store %arg8[%c0_187, %c0_188], %157 {strides = array<i32>} : memref<256x4xf32, #tpu.memory_space<vmem>>, vector<256x4xf32>,
    %c2_189 = arith.constant 2 : index
    %c1_190 = arith.constant 1 : index
    %c0_191 = arith.constant 0 : index
    %159 = vector.load %arg7[%c2_189, %c1_190, %c0_191] : memref<18x18x4xf32, #tpu.memory_space<vmem>>, vector<16x16x4xf32>
    %160 = vector.shape_cast %159 : vector<16x16x4xf32> to vector<256x4xf32>
    %161 = arith.truncf %160 : vector<256x4xf32> to vector<256x4xbf16>
    %c7_192 = arith.constant 7 : index
    %c0_193 = arith.constant 0 : index
    %c0_194 = arith.constant 0 : index
    %162 = vector.load %arg4[%c7_192, %c0_193, %c0_194] : memref<9x4x4xbf16, #tpu.memory_space<vmem>>, vector<1x4x4xbf16>
    %163 = vector.shape_cast %162 : vector<1x4x4xbf16> to vector<4x4xbf16>
    %cst_195 = arith.constant dense<0.000000e+00> : vector<256x4xf32>
    %164 = tpu.matmul %161, %163, %cst_195 {dimension_numbers = #tpu.dot_dimension_numbers<[1], [0], [0], [1], [0, 0, 1, 1], [], []>} : vector<256x4xbf16>, vector<4x4xbf16>, vector<256x4xf32> -> vector<256x4xf32>
    %c0_196 = arith.constant 0 : index
    %c0_197 = arith.constant 0 : index
    %165 = vector.load %arg8[%c0_196, %c0_197] : memref<256x4xf32, #tpu.memory_space<vmem>>, vector<256x4xf32>
    %166 = arith.addf %165, %164 : vector<256x4xf32>
    %c0_198 = arith.constant 0 : index
    %c0_199 = arith.constant 0 : index
    %167 = vector.load %arg8[%c0_198, %c0_199] : memref<256x4xf32, #tpu.memory_space<vmem>>, vector<256x4xf32>
    tpu.vector_store %arg8[%c0_198, %c0_199], %166 {strides = array<i32>} : memref<256x4xf32, #tpu.memory_space<vmem>>, vector<256x4xf32>,
    %c2_200 = arith.constant 2 : index
    %c2_201 = arith.constant 2 : index
    %c0_202 = arith.constant 0 : index
    %168 = vector.load %arg7[%c2_200, %c2_201, %c0_202] : memref<18x18x4xf32, #tpu.memory_space<vmem>>, vector<16x16x4xf32>
    %169 = vector.shape_cast %168 : vector<16x16x4xf32> to vector<256x4xf32>
    %170 = arith.truncf %169 : vector<256x4xf32> to vector<256x4xbf16>
    %c8_203 = arith.constant 8 : index
    %c0_204 = arith.constant 0 : index
    %c0_205 = arith.constant 0 : index
    %171 = vector.load %arg4[%c8_203, %c0_204, %c0_205] : memref<9x4x4xbf16, #tpu.memory_space<vmem>>, vector<1x4x4xbf16>
    %172 = vector.shape_cast %171 : vector<1x4x4xbf16> to vector<4x4xbf16>
    %cst_206 = arith.constant dense<0.000000e+00> : vector<256x4xf32>
    %173 = tpu.matmul %170, %172, %cst_206 {dimension_numbers = #tpu.dot_dimension_numbers<[1], [0], [0], [1], [0, 0, 1, 1], [], []>} : vector<256x4xbf16>, vector<4x4xbf16>, vector<256x4xf32> -> vector<256x4xf32>
    %c0_207 = arith.constant 0 : index
    %c0_208 = arith.constant 0 : index
    %174 = vector.load %arg8[%c0_207, %c0_208] : memref<256x4xf32, #tpu.memory_space<vmem>>, vector<256x4xf32>
    %175 = arith.addf %174, %173 : vector<256x4xf32>
    %c0_209 = arith.constant 0 : index
    %c0_210 = arith.constant 0 : index
    %176 = vector.load %arg8[%c0_209, %c0_210] : memref<256x4xf32, #tpu.memory_space<vmem>>, vector<256x4xf32>
    tpu.vector_store %arg8[%c0_209, %c0_210], %175 {strides = array<i32>} : memref<256x4xf32, #tpu.memory_space<vmem>>, vector<256x4xf32>,
    %c0_211 = arith.constant 0 : index
    %c0_212 = arith.constant 0 : index
    %177 = vector.load %arg8[%c0_211, %c0_212] : memref<256x4xf32, #tpu.memory_space<vmem>>, vector<256x4xf32>
    %178 = tpu.transpose %177, [1, 0] : vector<256x4xf32> -> vector<4x256xf32>
    %c0_213 = arith.constant 0 : index
    %c0_214 = arith.constant 0 : index
    %179 = vector.load %arg5[%c0_213, %c0_214] : memref<4x1xf32, #tpu.memory_space<vmem>>, vector<4x1xf32>
    %180 = vector.broadcast %179 : vector<4x1xf32> to vector<4x256xf32>
    %181 = arith.addf %178, %180 : vector<4x256xf32>
    %c0_215 = arith.constant 0 : index
    %c0_216 = arith.constant 0 : index
    %c0_217 = arith.constant 0 : index
    %182 = vector.load %arg1[%c0_215, %c0_216, %c0_217] : memref<1x4x256xf32, #tpu.memory_space<vmem>>, vector<1x4x256xf32>
    %183 = vector.shape_cast %182 : vector<1x4x256xf32> to vector<4x256xf32>
    %184 = arith.addf %181, %183 : vector<4x256xf32>
    %cst_218 = arith.constant 0.000000e+00 : f32
    %185 = vector.broadcast %cst_218 : f32 to vector<4x256xf32>
    %186 = arith.maximumf %184, %185 : vector<4x256xf32>
    %c0_219 = arith.constant 0 : index
    %c0_220 = arith.constant 0 : index
    %c0_221 = arith.constant 0 : index
    %187 = vector.load %arg6[%c0_219, %c0_220, %c0_221] : memref<1x4x256xf32, #tpu.memory_space<vmem>>, vector<1x4x256xf32>
    %188 = vector.shape_cast %187 : vector<1x4x256xf32> to vector<4x256xf32>
    %189 = vector.shape_cast %186 : vector<4x256xf32> to vector<1x4x256xf32>
    tpu.vector_store %arg6[%c0_219, %c0_220, %c0_221], %189 {strides = array<i32>} : memref<1x4x256xf32, #tpu.memory_space<vmem>>, vector<1x4x256xf32>,
    return
  }
  func.func @transform_0(%arg0: i32) -> (i32, i32, i32) {
    %c0_i32 = arith.constant 0 : i32
    %c0_i32_0 = arith.constant 0 : i32
    %c0_i32_1 = arith.constant 0 : i32
    return %arg0, %c0_i32, %c0_i32_0 : i32, i32, i32
  }
  func.func @transform_1(%arg0: i32) -> (i32, i32, i32) {
    %c0_i32 = arith.constant 0 : i32
    %c0_i32_0 = arith.constant 0 : i32
    %c0_i32_1 = arith.constant 0 : i32
    %c0_i32_2 = arith.constant 0 : i32
    return %c0_i32, %c0_i32_0, %c0_i32_1 : i32, i32, i32
  }
  func.func @transform_2(%arg0: i32) -> (i32, i32) {
    %c0_i32 = arith.constant 0 : i32
    %c0_i32_0 = arith.constant 0 : i32
    %c0_i32_1 = arith.constant 0 : i32
    return %c0_i32, %c0_i32_0 : i32, i32
  }
  func.func @transform_3(%arg0: i32) -> (i32, i32, i32) {
    %c0_i32 = arith.constant 0 : i32
    %c0_i32_0 = arith.constant 0 : i32
    %c0_i32_1 = arith.constant 0 : i32
    %c0_i32_2 = arith.constant 0 : i32
    return %c0_i32, %c0_i32_0, %c0_i32_1 : i32, i32, i32
  }
  func.func @transform_4(%arg0: i32) -> (i32, i32) {
    %c0_i32 = arith.constant 0 : i32
    %c0_i32_0 = arith.constant 0 : i32
    %c0_i32_1 = arith.constant 0 : i32
    return %c0_i32, %c0_i32_0 : i32, i32
  }
  func.func @transform_5(%arg0: i32) -> (i32, i32, i32) {
    %c0_i32 = arith.constant 0 : i32
    %c0_i32_0 = arith.constant 0 : i32
    %c0_i32_1 = arith.constant 0 : i32
    return %arg0, %c0_i32, %c0_i32_0 : i32, i32, i32
  }
}

</mosaic_0001>

<llo_original>
// kernel: tpu_custom_call.1
$region0: #{tpu_custom_call.1}
  #allocation0 [shape = 'u32[]', space=smem, size = 0x4, offset = 0x4, fixed_abs, tag = 'smem constant byte address 0x4 - core index']
  #allocation1 [shape = 'u32[72,128]{1,0:T(1,128)}', space=vmem, size = 0x9000, scoped, tag = 'internal scratch']
  #allocation2 [shape = 'f32[18,18,4]{2,1,0:T(8,128)}', space=vmem, size = 0x36000, scoped, tag = 'scratch operand']
  #allocation3 [shape = 'f32[256,4]{1,0:T(8,128)}', space=vmem, size = 0x20000, scoped, tag = 'scratch operand']
  %s0 = inlined_call_operand.vmem [shape: f32[2,4,256], index: 0, kind: input, shape index: {}]
  %s1 = inlined_call_operand.vmem [shape: bf16[9,4,4], index: 1, kind: input, shape index: {}]
  %s2 = inlined_call_operand.vmem [shape: f32[1,4], index: 2, kind: input, shape index: {}]
  %s3 = inlined_call_operand.vmem [shape: bf16[9,4,4], index: 3, kind: input, shape index: {}]
  %s4 = inlined_call_operand.vmem [shape: f32[4,1], index: 4, kind: input, shape index: {}]
  %s5 = inlined_call_operand.hbm [shape: f32[2,4,256], index: 5, kind: output, shape index: {}]
  %s6 = sld [smem:[#allocation0]]
  $region53: #{tpu_custom_call.1} parent=0
    _
  %s8 = ssub.s32 1, %s6
  %s9 = scalar_select 0, %s8, %s6
  $region1: #{tpu_custom_call.1} parent=0
    #allocation4 [shape = 'u8[8192]{0}', space=vmem, size = 0x2000, scoped, tag = 'output window, operand 0']
    #allocation5 [shape = 's32[2]{0}', space=sflag, size = 0x8, scoped, tag = 'scoped memory for tpu_custom_call.1']
    %10 = vsyncpa [#allocation5], 0
    %s11 = scalar_lea.sflag [#allocation5], 1
    %12 = vsyncpa %s11, 0
    loop: start=0, step=1, limit=4
    $region2: #{tpu_custom_call.1} parent=1 // loop_pre_header
      _
    $region3: #{tpu_custom_call.1} parent=1 // loop_header
      %s14 = sphi 0, %s18
      %p15 = scmp.ge.s32.totalorder %s14, 4
      %s24 = sphi 0, %s26
      %s27 = sphi 0, %s24
      %s28 = sphi 0, %s27
      %s44 = sphi 0, %s28
      %s48 = sphi 0, %s48
      %s50 = sphi 0, %s48
      %s51 = sphi 0, %s50
      %s65 = sphi 0, %s51
      %s69 = sphi 0, %s69
      %s71 = sphi 0, %s69
      %s72 = sphi 0, %s71
      %s86 = sphi 0, %s72
      %s90 = sphi 0, %s90
      %s92 = sphi 0, %s90
      %s93 = sphi 0, %s92
      %s107 = sphi 0, %s93
      %s111 = sphi 0, %s111
      %s113 = sphi 0, %s111
      %s114 = sphi 0, %s113
      %s128 = sphi 0, %s114
      %s134 = sphi 0, %s136
      %s137 = sphi 0, %s134
      %s138 = sphi 0, %s137
      %s154 = sphi 0, %s138
    $region4: #{tpu_custom_call.1} parent=1 // loop_header_branch
      %17 = sbr.rel (%p15) target = $region8
    $region5: #{tpu_custom_call.1} parent=1 // loop_body
      %s19 = ssub.s32 %s14, 1
      %s20 = ssub.s32 %s14, 2
      %s21 = sadd.s32 %s14, 1
      %s22 = ssub.s32 %s14, %s21
      %p23 = scmp.eq.s32.totalorder %s22, 0
      %s25 = sadd.s32 %s24, 1
      %s26 = scalar_select %p23, %s24, %s25
      %p29 = pneg %p23
      %p30 = scmp.eq.s32.totalorder %s14, 1
      %p31 = por %p29, %p30
      %p32 = scmp.ne.s32.totalorder %s24, %s27
      %p33 = scmp.eq.s32.totalorder %s14, 0
      %p34 = por %p32, %p33
      %p35 = scmp.ne.s32.totalorder %s24, %s27
      %p36 = scmp.eq.s32.totalorder %s19, 1
      %p37 = por %p35, %p36
      %p38 = scmp.ne.s32.totalorder %s27, %s28
      %p39 = scmp.eq.s32.totalorder %s19, 0
      %p40 = por %p38, %p39
      %p41 = scmp.ne.s32.totalorder %s27, %s28
      %p42 = scmp.eq.s32.totalorder %s20, 1
      %p43 = por %p41, %p42
      %p45 = scmp.ne.s32.totalorder %s28, %s44
      %p46 = scmp.eq.s32.totalorder %s20, 0
      %p47 = por %p45, %p46
      %s49 = sadd.s32 %s48, 1
      %p52 = scmp.eq.s32.totalorder %s14, 1
      %p53 = scmp.ne.s32.totalorder %s48, %s50
      %p54 = scmp.eq.s32.totalorder %s14, 0
      %p55 = por %p53, %p54
      %p56 = scmp.ne.s32.totalorder %s48, %s50
      %p57 = scmp.eq.s32.totalorder %s19, 1
      %p58 = por %p56, %p57
      %p59 = scmp.ne.s32.totalorder %s50, %s51
      %p60 = scmp.eq.s32.totalorder %s19, 0
      %p61 = por %p59, %p60
      %p62 = scmp.ne.s32.totalorder %s50, %s51
      %p63 = scmp.eq.s32.totalorder %s20, 1
      %p64 = por %p62, %p63
      %p66 = scmp.ne.s32.totalorder %s51, %s65
      %p67 = scmp.eq.s32.totalorder %s20, 0
      %p68 = por %p66, %p67
      %s70 = sadd.s32 %s69, 1
      %p73 = scmp.eq.s32.totalorder %s14, 1
      %p74 = scmp.ne.s32.totalorder %s69, %s71
      %p75 = scmp.eq.s32.totalorder %s14, 0
      %p76 = por %p74, %p75
      %p77 = scmp.ne.s32.totalorder %s69, %s71
      %p78 = scmp.eq.s32.totalorder %s19, 1
      %p79 = por %p77, %p78
      %p80 = scmp.ne.s32.totalorder %s71, %s72
      %p81 = scmp.eq.s32.totalorder %s19, 0
      %p82 = por %p80, %p81
      %p83 = scmp.ne.s32.totalorder %s71, %s72
      %p84 = scmp.eq.s32.totalorder %s20, 1
      %p85 = por %p83, %p84
      %p87 = scmp.ne.s32.totalorder %s72, %s86
      %p88 = scmp.eq.s32.totalorder %s20, 0
      %p89 = por %p87, %p88
      %s91 = sadd.s32 %s90, 1
      %p94 = scmp.eq.s32.totalorder %s14, 1
      %p95 = scmp.ne.s32.totalorder %s90, %s92
      %p96 = scmp.eq.s32.totalorder %s14, 0
      %p97 = por %p95, %p96
      %p98 = scmp.ne.s32.totalorder %s90, %s92
      %p99 = scmp.eq.s32.totalorder %s19, 1
      %p100 = por %p98, %p99
      %p101 = scmp.ne.s32.totalorder %s92, %s93
      %p102 = scmp.eq.s32.totalorder %s19, 0
      %p103 = por %p101, %p102
      %p104 = scmp.ne.s32.totalorder %s92, %s93
      %p105 = scmp.eq.s32.totalorder %s20, 1
      %p106 = por %p104, %p105
      %p108 = scmp.ne.s32.totalorder %s93, %s107
      %p109 = scmp.eq.s32.totalorder %s20, 0
      %p110 = por %p108, %p109
      %s112 = sadd.s32 %s111, 1
      %p115 = scmp.eq.s32.totalorder %s14, 1
      %p116 = scmp.ne.s32.totalorder %s111, %s113
      %p117 = scmp.eq.s32.totalorder %s14, 0
      %p118 = por %p116, %p117
      %p119 = scmp.ne.s32.totalorder %s111, %s113
      %p120 = scmp.eq.s32.totalorder %s19, 1
      %p121 = por %p119, %p120
      %p122 = scmp.ne.s32.totalorder %s113, %s114
      %p123 = scmp.eq.s32.totalorder %s19, 0
      %p124 = por %p122, %p123
      %p125 = scmp.ne.s32.totalorder %s113, %s114
      %p126 = scmp.eq.s32.totalorder %s20, 1
      %p127 = por %p125, %p126
      %p129 = scmp.ne.s32.totalorder %s114, %s128
      %p130 = scmp.eq.s32.totalorder %s20, 0
      %p131 = por %p129, %p130
      %s132 = ssub.s32 %s14, %s21
      %p133 = scmp.eq.s32.totalorder %s132, 0
      %s135 = sadd.s32 %s134, 1
      %s136 = scalar_select %p133, %s134, %s135
      %p139 = pneg %p133
      %p140 = scmp.eq.s32.totalorder %s14, 1
      %p141 = por %p139, %p140
      %p142 = scmp.ne.s32.totalorder %s134, %s137
      %p143 = scmp.eq.s32.totalorder %s14, 0
      %p144 = por %p142, %p143
      %p145 = scmp.ne.s32.totalorder %s134, %s137
      %p146 = scmp.eq.s32.totalorder %s19, 1
      %p147 = por %p145, %p146
      %p148 = scmp.ne.s32.totalorder %s137, %s138
      %p149 = scmp.eq.s32.totalorder %s19, 0
      %p150 = por %p148, %p149
      %p151 = scmp.ne.s32.totalorder %s137, %s138
      %p152 = scmp.eq.s32.totalorder %s20, 1
      %p153 = por %p151, %p152
      %p155 = scmp.ne.s32.totalorder %s138, %s154
      %p156 = scmp.eq.s32.totalorder %s20, 0
      %p157 = por %p155, %p156
      %p158 = scmp.le.s32.totalorder 1, %s14
      %p159 = scmp.lt.s32.totalorder %s14, 3
      %p160 = pnand %p158, %p159
      %p161 = pneg %p160
      // Predicated region
      $region9: #{tpu_custom_call.1} parent=5 // pred_check
        _
      $region10: #{tpu_custom_call.1} parent=5 // pred_check_branch
        %163 = sbr.rel (%p160) target = $region12
      $region11: #{tpu_custom_call.1} parent=5 // pred_region
        %s164 = ssub.s32 %s14, 1
        // Predicated region
        $region13: #{tpu_custom_call.1} parent=11 // pred_check
          %p165 = pneg %p61
        $region14: #{tpu_custom_call.1} parent=11 // pred_check_branch
          %167 = sbr.rel (%p165) target = $region16
        $region15: #{tpu_custom_call.1} parent=11 // pred_region
          _
        $region16: #{tpu_custom_call.1} parent=11 // pred_fallthru
          _
        // Predicated region
        $region17: #{tpu_custom_call.1} parent=11 // pred_check
          %p168 = pneg %p82
        $region18: #{tpu_custom_call.1} parent=11 // pred_check_branch
          %170 = sbr.rel (%p168) target = $region20
        $region19: #{tpu_custom_call.1} parent=11 // pred_region
          _
        $region20: #{tpu_custom_call.1} parent=11 // pred_fallthru
          _
        // Predicated region
        $region21: #{tpu_custom_call.1} parent=11 // pred_check
          %p171 = pneg %p103
        $region22: #{tpu_custom_call.1} parent=11 // pred_check_branch
          %173 = sbr.rel (%p171) target = $region24
        $region23: #{tpu_custom_call.1} parent=11 // pred_region
          _
        $region24: #{tpu_custom_call.1} parent=11 // pred_fallthru
          _
        // Predicated region
        $region25: #{tpu_custom_call.1} parent=11 // pred_check
          %p174 = pneg %p124
        $region26: #{tpu_custom_call.1} parent=11 // pred_check_branch
          %176 = sbr.rel (%p174) target = $region28
        $region27: #{tpu_custom_call.1} parent=11 // pred_region
          _
        $region28: #{tpu_custom_call.1} parent=11 // pred_fallthru
          _
      $region12: #{tpu_custom_call.1} parent=5 // pred_fallthru
        _
      %p177 = scmp.lt.s32.totalorder %s14, 2
      // Predicated region
      $region29: #{tpu_custom_call.1} parent=5 // pred_check
        %p178 = pneg %p177
      $region30: #{tpu_custom_call.1} parent=5 // pred_check_branch
        %180 = sbr.rel (%p178) target = $region32
      $region31: #{tpu_custom_call.1} parent=5 // pred_region
        // Predicated region
        $region33: #{tpu_custom_call.1} parent=31 // pred_check
          %p181 = pneg %p34
        $region34: #{tpu_custom_call.1} parent=31 // pred_check_branch
          %183 = sbr.rel (%p181) target = $region36
        $region35: #{tpu_custom_call.1} parent=31 // pred_region
          %p184 = scmp.lt.s32.totalorder %s14, 1
          %s185 = scalar_select %p184, %s14, 1
          %s186 = smul.addr %s185, 2
          %s187 = smul.addr %s186, 4
          %s188 = scalar_lea.vmem %s0, %s187
        $region36: #{tpu_custom_call.1} parent=31 // pred_fallthru
          _
      $region32: #{tpu_custom_call.1} parent=5 // pred_fallthru
        _
      %p189 = scmp.le.s32.totalorder 1, %s14
      %p190 = scmp.lt.s32.totalorder %s14, 3
      %p191 = pnand %p189, %p190
      %p192 = pneg %p191
      // Predicated region
      $region37: #{tpu_custom_call.1} parent=5 // pred_check
        _
      $region38: #{tpu_custom_call.1} parent=5 // pred_check_branch
        %194 = sbr.rel (%p191) target = $region40
      $region39: #{tpu_custom_call.1} parent=5 // pred_region
        %s195 = ssub.s32 %s14, 1
        %p196 = scmp.lt.s32.totalorder %s19, 1
        %s197 = scalar_select %p196, %s19, 1
        %s198 = smul.addr %s197, 2
        %s199 = smul.addr %s198, 4
        %s200 = scalar_lea.vmem %s0, %s199
        %p201 = pneg %p40
        %p202 = pneg %p37
        %p203 = pneg %p61
        %p204 = pneg %p58
        %p205 = pneg %p82
        %p206 = pneg %p79
        %p207 = pneg %p103
        %p208 = pneg %p100
        %p209 = pneg %p124
        %p210 = pneg %p121
        %p211 = pneg %p150
        %p212 = pneg %p147
        %s213 = sand.u32 %s137, 1
        %s214 = scalar_lea.sflag [#allocation5], %s213
        %s215 = sand.u32 %s137, 1
        %s216 = smul.addr %s215, 8
        %s217 = scalar_lea.vmem [#allocation4], %s216
        %p218 = scmp.lt.s32.totalorder %s19, 1
        %s219 = scalar_select %p218, %s19, 1
        %s220 = smul.addr %s219, 2
        %s221 = smul.addr %s220, 4
        %s222 = scalar_lea.vmem %s0, %s221
        %vm224 = vcmask 31744
        %225 = vst.msk [vmem:[#allocation2] sm:$0xff] %vm224, 0.0
        %226 = vst.msk [vmem:[#allocation2 + $0x8] sm:$0xff] %vm224, 0.0
        %vm227 = vcmask 25600
        %228 = vst.msk [vmem:[#allocation2 + $0x10] sm:$0x3] %vm227, 0.0
        %s229 = scalar_lea.vmem [#allocation2], 408
        %230 = vst.msk [vmem:[%s229] sm:$0xff] %vm224, 0.0
        %231 = vst.msk [vmem:[%s229 + $0x8] sm:$0xff] %vm224, 0.0
        %232 = vst.msk [vmem:[%s229 + $0x10] sm:$0x3] %vm227, 0.0
        %vm233 = vcmask 24576
        %234 = vst.msk [vmem:[#allocation2] sm:$0x1] %vm233, 0.0
        %235 = vst.msk [vmem:[#allocation2 + $0x18] sm:$0x1] %vm233, 0.0
        %236 = vst.msk [vmem:[#allocation2 + $0x30] sm:$0x1] %vm233, 0.0
        %237 = vst.msk [vmem:[#allocation2 + $0x48] sm:$0x1] %vm233, 0.0
        %238 = vst.msk [vmem:[#allocation2 + $0x60] sm:$0x1] %vm233, 0.0
        %239 = vst.msk [vmem:[#allocation2 + $0x78] sm:$0x1] %vm233, 0.0
        %240 = vst.msk [vmem:[#allocation2 + $0x90] sm:$0x1] %vm233, 0.0
        %241 = vst.msk [vmem:[#allocation2 + $0xa8] sm:$0x1] %vm233, 0.0
        %242 = vst.msk [vmem:[#allocation2 + $0xc0] sm:$0x1] %vm233, 0.0
        %243 = vst.msk [vmem:[#allocation2 + $0xd8] sm:$0x1] %vm233, 0.0
        %244 = vst.msk [vmem:[#allocation2 + $0xf0] sm:$0x1] %vm233, 0.0
        %245 = vst.msk [vmem:[#allocation2 + $0x108] sm:$0x1] %vm233, 0.0
        %246 = vst.msk [vmem:[#allocation2 + $0x120] sm:$0x1] %vm233, 0.0
        %247 = vst.msk [vmem:[#allocation2 + $0x138] sm:$0x1] %vm233, 0.0
        %248 = vst.msk [vmem:[#allocation2 + $0x150] sm:$0x1] %vm233, 0.0
        %249 = vst.msk [vmem:[#allocation2 + $0x168] sm:$0x1] %vm233, 0.0
        %250 = vst.msk [vmem:[#allocation2 + $0x180] sm:$0x1] %vm233, 0.0
        %251 = vst.msk [vmem:[#allocation2 + $0x198] sm:$0x1] %vm233, 0.0
        %252 = vst.msk [vmem:[#allocation2 + $0x11] sm:$0x1] %vm233, 0.0
        %253 = vst.msk [vmem:[#allocation2 + $0x29] sm:$0x1] %vm233, 0.0
        %254 = vst.msk [vmem:[#allocation2 + $0x41] sm:$0x1] %vm233, 0.0
        %255 = vst.msk [vmem:[#allocation2 + $0x59] sm:$0x1] %vm233, 0.0
        %256 = vst.msk [vmem:[#allocation2 + $0x71] sm:$0x1] %vm233, 0.0
        %257 = vst.msk [vmem:[#allocation2 + $0x89] sm:$0x1] %vm233, 0.0
        %258 = vst.msk [vmem:[#allocation2 + $0xa1] sm:$0x1] %vm233, 0.0
        %259 = vst.msk [vmem:[#allocation2 + $0xb9] sm:$0x1] %vm233, 0.0
        %260 = vst.msk [vmem:[#allocation2 + $0xd1] sm:$0x1] %vm233, 0.0
        %261 = vst.msk [vmem:[#allocation2 + $0xe9] sm:$0x1] %vm233, 0.0
        %262 = vst.msk [vmem:[#allocation2 + $0x101] sm:$0x1] %vm233, 0.0
        %263 = vst.msk [vmem:[#allocation2 + $0x119] sm:$0x1] %vm233, 0.0
        %264 = vst.msk [vmem:[#allocation2 + $0x131] sm:$0x1] %vm233, 0.0
        %265 = vst.msk [vmem:[#allocation2 + $0x149] sm:$0x1] %vm233, 0.0
        %266 = vst.msk [vmem:[#allocation2 + $0x161] sm:$0x1] %vm233, 0.0
        %267 = vst.msk [vmem:[#allocation2 + $0x179] sm:$0x1] %vm233, 0.0
        %268 = vst.msk [vmem:[#allocation2 + $0x191] sm:$0x1] %vm233, 0.0
        %269 = vst.msk [vmem:[#allocation2 + $0x1a9] sm:$0x1] %vm233, 0.0
        %v270 = vld [vmem:[%s222] sm:$0xff]
        %272 = vst [vmem:[#allocation1] ss:$2 sm:$0xff] %v270
        %v273 = vld.sshfl [vmem:[#allocation1] sm:$0xff pattern:$0x75316420]
        %v274 = vld.sshfl [vmem:[#allocation1 + $0x8] sm:$0xff pattern:$0x75316420]
        %277 = vxpose.xlu0.b32.start [1/16] %v273, 128
        %278 = vxpose.xlu0.b32.cont [2/16] 0.0, 128
        %279 = vxpose.xlu0.b32.cont [3/16] 0.0, 128
        %280 = vxpose.xlu0.b32.cont [4/16] 0.0, 128
        %281 = vxpose.xlu0.b32.cont [5/16] 0.0, 128
        %282 = vxpose.xlu0.b32.cont [6/16] 0.0, 128
        %283 = vxpose.xlu0.b32.cont [7/16] 0.0, 128
        %284 = vxpose.xlu0.b32.cont [8/16] 0.0, 128
        %285 = vxpose.xlu0.b32.cont [9/16] 0.0, 128
        %286 = vxpose.xlu0.b32.cont [10/16] 0.0, 128
        %287 = vxpose.xlu0.b32.cont [11/16] 0.0, 128
        %288 = vxpose.xlu0.b32.cont [12/16] 0.0, 128
        %289 = vxpose.xlu0.b32.cont [13/16] 0.0, 128
        %290 = vxpose.xlu0.b32.cont [14/16] 0.0, 128
        %291 = vxpose.xlu0.b32.cont [15/16] 0.0, 128
        %292 = vxpose.xlu0.b32.end [16/16] 0.0, 128
        %v293 = vpop.trf.xlu0
        %v294 = vpop.trf.xlu0
        %v295 = vpop.trf.xlu0
        %v296 = vpop.trf.xlu0
        %v297 = vpop.trf.xlu0
        %v298 = vpop.trf.xlu0
        %v299 = vpop.trf.xlu0
        %v300 = vpop.trf.xlu0
        %v301 = vpop.trf.xlu0
        %v302 = vpop.trf.xlu0
        %v303 = vpop.trf.xlu0
        %v304 = vpop.trf.xlu0
        %v305 = vpop.trf.xlu0
        %v306 = vpop.trf.xlu0
        %v307 = vpop.trf.xlu0
        %v308 = vpop.trf.xlu0
        %309 = vxpose.xlu0.b32.start [1/16] %v274, 128
        %310 = vxpose.xlu0.b32.cont [2/16] 0.0, 128
        %311 = vxpose.xlu0.b32.cont [3/16] 0.0, 128
        %312 = vxpose.xlu0.b32.cont [4/16] 0.0, 128
        %313 = vxpose.xlu0.b32.cont [5/16] 0.0, 128
        %314 = vxpose.xlu0.b32.cont [6/16] 0.0, 128
        %315 = vxpose.xlu0.b32.cont [7/16] 0.0, 128
        %316 = vxpose.xlu0.b32.cont [8/16] 0.0, 128
        %317 = vxpose.xlu0.b32.cont [9/16] 0.0, 128
        %318 = vxpose.xlu0.b32.cont [10/16] 0.0, 128
        %319 = vxpose.xlu0.b32.cont [11/16] 0.0, 128
        %320 = vxpose.xlu0.b32.cont [12/16] 0.0, 128
        %321 = vxpose.xlu0.b32.cont [13/16] 0.0, 128
        %322 = vxpose.xlu0.b32.cont [14/16] 0.0, 128
        %323 = vxpose.xlu0.b32.cont [15/16] 0.0, 128
        %324 = vxpose.xlu0.b32.end [16/16] 0.0, 128
        %v325 = vpop.trf.xlu0
        %v326 = vpop.trf.xlu0
        %v327 = vpop.trf.xlu0
        %v328 = vpop.trf.xlu0
        %v329 = vpop.trf.xlu0
        %v330 = vpop.trf.xlu0
        %v331 = vpop.trf.xlu0
        %v332 = vpop.trf.xlu0
        %v333 = vpop.trf.xlu0
        %v334 = vpop.trf.xlu0
        %v335 = vpop.trf.xlu0
        %v336 = vpop.trf.xlu0
        %v337 = vpop.trf.xlu0
        %v338 = vpop.trf.xlu0
        %v339 = vpop.trf.xlu0
        %v340 = vpop.trf.xlu0
        %s341 = scalar_lea.vmem [#allocation2], 24
        %342 = vst.msk [vmem:[%s341 + $0x1] sm:$0xff] %vm224, %v293
        %343 = vst.msk [vmem:[%s341 + $0x9] sm:$0xff] %vm224, %v294
        %344 = vst.msk [vmem:[%s341 + $0x19] sm:$0xff] %vm224, %v295
        %345 = vst.msk [vmem:[%s341 + $0x21] sm:$0xff] %vm224, %v296
        %346 = vst.msk [vmem:[%s341 + $0x31] sm:$0xff] %vm224, %v297
        %347 = vst.msk [vmem:[%s341 + $0x39] sm:$0xff] %vm224, %v298
        %348 = vst.msk [vmem:[%s341 + $0x49] sm:$0xff] %vm224, %v299
        %349 = vst.msk [vmem:[%s341 + $0x51] sm:$0xff] %vm224, %v300
        %350 = vst.msk [vmem:[%s341 + $0x61] sm:$0xff] %vm224, %v301
        %351 = vst.msk [vmem:[%s341 + $0x69] sm:$0xff] %vm224, %v302
        %352 = vst.msk [vmem:[%s341 + $0x79] sm:$0xff] %vm224, %v303
        %353 = vst.msk [vmem:[%s341 + $0x81] sm:$0xff] %vm224, %v304
        %354 = vst.msk [vmem:[%s341 + $0x91] sm:$0xff] %vm224, %v305
        %355 = vst.msk [vmem:[%s341 + $0x99] sm:$0xff] %vm224, %v306
        %356 = vst.msk [vmem:[%s341 + $0xa9] sm:$0xff] %vm224, %v307
        %357 = vst.msk [vmem:[%s341 + $0xb1] sm:$0xff] %vm224, %v308
        %358 = vst.msk [vmem:[%s341 + $0xc1] sm:$0xff] %vm224, %v325
        %359 = vst.msk [vmem:[%s341 + $0xc9] sm:$0xff] %vm224, %v326
        %360 = vst.msk [vmem:[%s341 + $0xd9] sm:$0xff] %vm224, %v327
        %361 = vst.msk [vmem:[%s341 + $0xe1] sm:$0xff] %vm224, %v328
        %362 = vst.msk [vmem:[%s341 + $0xf1] sm:$0xff] %vm224, %v329
        %363 = vst.msk [vmem:[%s341 + $0xf9] sm:$0xff] %vm224, %v330
        %364 = vst.msk [vmem:[%s341 + $0x109] sm:$0xff] %vm224, %v331
        %365 = vst.msk [vmem:[%s341 + $0x111] sm:$0xff] %vm224, %v332
        %366 = vst.msk [vmem:[%s341 + $0x121] sm:$0xff] %vm224, %v333
        %367 = vst.msk [vmem:[%s341 + $0x129] sm:$0xff] %vm224, %v334
        %368 = vst.msk [vmem:[%s341 + $0x139] sm:$0xff] %vm224, %v335
        %369 = vst.msk [vmem:[%s341 + $0x141] sm:$0xff] %vm224, %v336
        %370 = vst.msk [vmem:[%s341 + $0x151] sm:$0xff] %vm224, %v337
        %371 = vst.msk [vmem:[%s341 + $0x159] sm:$0xff] %vm224, %v338
        %372 = vst.msk [vmem:[%s341 + $0x169] sm:$0xff] %vm224, %v339
        %373 = vst.msk [vmem:[%s341 + $0x171] sm:$0xff] %vm224, %v340
        %v374 = vld [vmem:[#allocation2] sm:$0xff]
        %v375 = vld [vmem:[#allocation2 + $0x8] sm:$0xff]
        %v376 = vld [vmem:[#allocation2 + $0x18] sm:$0xff]
        %v377 = vld [vmem:[#allocation2 + $0x20] sm:$0xff]
        %v378 = vld [vmem:[#allocation2 + $0x30] sm:$0xff]
        %v379 = vld [vmem:[#allocation2 + $0x38] sm:$0xff]
        %v380 = vld [vmem:[#allocation2 + $0x48] sm:$0xff]
        %v381 = vld [vmem:[#allocation2 + $0x50] sm:$0xff]
        %v382 = vld [vmem:[#allocation2 + $0x60] sm:$0xff]
        %v383 = vld [vmem:[#allocation2 + $0x68] sm:$0xff]
        %v384 = vld [vmem:[#allocation2 + $0x78] sm:$0xff]
        %v385 = vld [vmem:[#allocation2 + $0x80] sm:$0xff]
        %v386 = vld [vmem:[#allocation2 + $0x90] sm:$0xff]
        %v387 = vld [vmem:[#allocation2 + $0x98] sm:$0xff]
        %v388 = vld [vmem:[#allocation2 + $0xa8] sm:$0xff]
        %v389 = vld [vmem:[#allocation2 + $0xb0] sm:$0xff]
        %v390 = vld [vmem:[#allocation2 + $0xc0] sm:$0xff]
        %v391 = vld [vmem:[#allocation2 + $0xc8] sm:$0xff]
        %v392 = vld [vmem:[#allocation2 + $0xd8] sm:$0xff]
        %v393 = vld [vmem:[#allocation2 + $0xe0] sm:$0xff]
        %v394 = vld [vmem:[#allocation2 + $0xf0] sm:$0xff]
        %v395 = vld [vmem:[#allocation2 + $0xf8] sm:$0xff]
        %v396 = vld [vmem:[#allocation2 + $0x108] sm:$0xff]
        %v397 = vld [vmem:[#allocation2 + $0x110] sm:$0xff]
        %v398 = vld [vmem:[#allocation2 + $0x120] sm:$0xff]
        %v399 = vld [vmem:[#allocation2 + $0x128] sm:$0xff]
        %v400 = vld [vmem:[#allocation2 + $0x138] sm:$0xff]
        %v401 = vld [vmem:[#allocation2 + $0x140] sm:$0xff]
        %v402 = vld [vmem:[#allocation2 + $0x150] sm:$0xff]
        %v403 = vld [vmem:[#allocation2 + $0x158] sm:$0xff]
        %v404 = vld [vmem:[#allocation2 + $0x168] sm:$0xff]
        %v405 = vld [vmem:[#allocation2 + $0x170] sm:$0xff]
        %v406 = vpack.c.bf16 %v375, %v374
        %v407 = vpack.c.bf16 %v377, %v376
        %v408 = vpack.c.bf16 %v379, %v378
        %v409 = vpack.c.bf16 %v381, %v380
        %v410 = vpack.c.bf16 %v383, %v382
        %v411 = vpack.c.bf16 %v385, %v384
        %v412 = vpack.c.bf16 %v387, %v386
        %v413 = vpack.c.bf16 %v389, %v388
        %v414 = vpack.c.bf16 %v391, %v390
        %v415 = vpack.c.bf16 %v393, %v392
        %v416 = vpack.c.bf16 %v395, %v394
        %v417 = vpack.c.bf16 %v397, %v396
        %v418 = vpack.c.bf16 %v399, %v398
        %v419 = vpack.c.bf16 %v401, %v400
        %v420 = vpack.c.bf16 %v403, %v402
        %v421 = vpack.c.bf16 %v405, %v404
        %v422 = vld [vmem:[%s1] sm:$0x3]
        %v424 = vsel %vm224, %v406, 0
        %v427 = vsel %vm224, %v407, 0
        %v430 = vsel %vm224, %v408, 0
        %v433 = vsel %vm224, %v409, 0
        %v436 = vsel %vm224, %v410, 0
        %v439 = vsel %vm224, %v411, 0
        %v442 = vsel %vm224, %v412, 0
        %v445 = vsel %vm224, %v413, 0
        %v448 = vsel %vm224, %v414, 0
        %v451 = vsel %vm224, %v415, 0
        %v454 = vsel %vm224, %v416, 0
        %v457 = vsel %vm224, %v417, 0
        %v460 = vsel %vm224, %v418, 0
        %v463 = vsel %vm224, %v419, 0
        %v466 = vsel %vm224, %v420, 0
        %v469 = vsel %vm224, %v421, 0
        %vm471 = vcmask 1041408
        %v473 = vsel %vm471, %v422, 0
        %475 = vmatpush.bf16.msra.mxu0 0
        %476 = vmatpush.bf16.msra.mxu0 0
        %477 = vmatpush.bf16.msra.mxu0 0
        %478 = vmatpush.bf16.msra.mxu0 0
        %479 = vmatpush.bf16.msra.mxu0 0
        %480 = vmatpush.bf16.msra.mxu0 0
        %481 = vmatpush.bf16.msra.mxu0 0
        %482 = vmatpush.bf16.msra.mxu0 %v473
        %483 = vmatmul.bf16.gmra.mxu0 %v424
        %v484 = vpop.f32.mrf.mxu0
        %v485 = vadd.f32 0.0, %v484
        %v486 = vpop.f32.mrf.mxu0
        %v487 = vadd.f32 0.0, %v486
        %488 = vmatmul.bf16.gmra.mxu0 %v427
        %v489 = vpop.f32.mrf.mxu0
        %v490 = vadd.f32 0.0, %v489
        %v491 = vpop.f32.mrf.mxu0
        %v492 = vadd.f32 0.0, %v491
        %493 = vmatmul.bf16.gmra.mxu0 %v430
        %v494 = vpop.f32.mrf.mxu0
        %v495 = vadd.f32 0.0, %v494
        %v496 = vpop.f32.mrf.mxu0
        %v497 = vadd.f32 0.0, %v496
        %498 = vmatmul.bf16.gmra.mxu0 %v433
        %v499 = vpop.f32.mrf.mxu0
        %v500 = vadd.f32 0.0, %v499
        %v501 = vpop.f32.mrf.mxu0
        %v502 = vadd.f32 0.0, %v501
        %503 = vmatmul.bf16.gmra.mxu0 %v436
        %v504 = vpop.f32.mrf.mxu0
        %v505 = vadd.f32 0.0, %v504
        %v506 = vpop.f32.mrf.mxu0
        %v507 = vadd.f32 0.0, %v506
        %508 = vmatmul.bf16.gmra.mxu0 %v439
        %v509 = vpop.f32.mrf.mxu0
        %v510 = vadd.f32 0.0, %v509
        %v511 = vpop.f32.mrf.mxu0
        %v512 = vadd.f32 0.0, %v511
        %513 = vmatmul.bf16.gmra.mxu0 %v442
        %v514 = vpop.f32.mrf.mxu0
        %v515 = vadd.f32 0.0, %v514
        %v516 = vpop.f32.mrf.mxu0
        %v517 = vadd.f32 0.0, %v516
        %518 = vmatmul.bf16.gmra.mxu0 %v445
        %v519 = vpop.f32.mrf.mxu0
        %v520 = vadd.f32 0.0, %v519
        %v521 = vpop.f32.mrf.mxu0
        %v522 = vadd.f32 0.0, %v521
        %523 = vmatmul.bf16.gmra.mxu0 %v448
        %v524 = vpop.f32.mrf.mxu0
        %v525 = vadd.f32 0.0, %v524
        %v526 = vpop.f32.mrf.mxu0
        %v527 = vadd.f32 0.0, %v526
        %528 = vmatmul.bf16.gmra.mxu0 %v451
        %v529 = vpop.f32.mrf.mxu0
        %v530 = vadd.f32 0.0, %v529
        %v531 = vpop.f32.mrf.mxu0
        %v532 = vadd.f32 0.0, %v531
        %533 = vmatmul.bf16.gmra.mxu0 %v454
        %v534 = vpop.f32.mrf.mxu0
        %v535 = vadd.f32 0.0, %v534
        %v536 = vpop.f32.mrf.mxu0
        %v537 = vadd.f32 0.0, %v536
        %538 = vmatmul.bf16.gmra.mxu0 %v457
        %v539 = vpop.f32.mrf.mxu0
        %v540 = vadd.f32 0.0, %v539
        %v541 = vpop.f32.mrf.mxu0
        %v542 = vadd.f32 0.0, %v541
        %543 = vmatmul.bf16.gmra.mxu0 %v460
        %v544 = vpop.f32.mrf.mxu0
        %v545 = vadd.f32 0.0, %v544
        %v546 = vpop.f32.mrf.mxu0
        %v547 = vadd.f32 0.0, %v546
        %548 = vmatmul.bf16.gmra.mxu0 %v463
        %v549 = vpop.f32.mrf.mxu0
        %v550 = vadd.f32 0.0, %v549
        %v551 = vpop.f32.mrf.mxu0
        %v552 = vadd.f32 0.0, %v551
        %553 = vmatmul.bf16.gmra.mxu0 %v466
        %v554 = vpop.f32.mrf.mxu0
        %v555 = vadd.f32 0.0, %v554
        %v556 = vpop.f32.mrf.mxu0
        %v557 = vadd.f32 0.0, %v556
        %558 = vmatmul.bf16.gmra.mxu0 %v469
        %v559 = vpop.f32.mrf.mxu0
        %v560 = vadd.f32 0.0, %v559
        %v561 = vpop.f32.mrf.mxu0
        %v562 = vadd.f32 0.0, %v561
        %563 = vdwg.mxu0
        %564 = vst.msk [vmem:[#allocation3] sm:$0xff] %vm224, %v485
        %565 = vst.msk [vmem:[#allocation3 + $0x8] sm:$0xff] %vm224, %v487
        %566 = vst.msk [vmem:[#allocation3 + $0x10] sm:$0xff] %vm224, %v490
        %567 = vst.msk [vmem:[#allocation3 + $0x18] sm:$0xff] %vm224, %v492
        %568 = vst.msk [vmem:[#allocation3 + $0x20] sm:$0xff] %vm224, %v495
        %569 = vst.msk [vmem:[#allocation3 + $0x28] sm:$0xff] %vm224, %v497
        %570 = vst.msk [vmem:[#allocation3 + $0x30] sm:$0xff] %vm224, %v500
        %571 = vst.msk [vmem:[#allocation3 + $0x38] sm:$0xff] %vm224, %v502
        %572 = vst.msk [vmem:[#allocation3 + $0x40] sm:$0xff] %vm224, %v505
        %573 = vst.msk [vmem:[#allocation3 + $0x48] sm:$0xff] %vm224, %v507
        %574 = vst.msk [vmem:[#allocation3 + $0x50] sm:$0xff] %vm224, %v510
        %575 = vst.msk [vmem:[#allocation3 + $0x58] sm:$0xff] %vm224, %v512
        %576 = vst.msk [vmem:[#allocation3 + $0x60] sm:$0xff] %vm224, %v515
        %577 = vst.msk [vmem:[#allocation3 + $0x68] sm:$0xff] %vm224, %v517
        %578 = vst.msk [vmem:[#allocation3 + $0x70] sm:$0xff] %vm224, %v520
        %579 = vst.msk [vmem:[#allocation3 + $0x78] sm:$0xff] %vm224, %v522
        %580 = vst.msk [vmem:[#allocation3 + $0x80] sm:$0xff] %vm224, %v525
        %581 = vst.msk [vmem:[#allocation3 + $0x88] sm:$0xff] %vm224, %v527
        %582 = vst.msk [vmem:[#allocation3 + $0x90] sm:$0xff] %vm224, %v530
        %583 = vst.msk [vmem:[#allocation3 + $0x98] sm:$0xff] %vm224, %v532
        %584 = vst.msk [vmem:[#allocation3 + $0xa0] sm:$0xff] %vm224, %v535
        %585 = vst.msk [vmem:[#allocation3 + $0xa8] sm:$0xff] %vm224, %v537
        %586 = vst.msk [vmem:[#allocation3 + $0xb0] sm:$0xff] %vm224, %v540
        %587 = vst.msk [vmem:[#allocation3 + $0xb8] sm:$0xff] %vm224, %v542
        %588 = vst.msk [vmem:[#allocation3 + $0xc0] sm:$0xff] %vm224, %v545
        %589 = vst.msk [vmem:[#allocation3 + $0xc8] sm:$0xff] %vm224, %v547
        %590 = vst.msk [vmem:[#allocation3 + $0xd0] sm:$0xff] %vm224, %v550
        %591 = vst.msk [vmem:[#allocation3 + $0xd8] sm:$0xff] %vm224, %v552
        %592 = vst.msk [vmem:[#allocation3 + $0xe0] sm:$0xff] %vm224, %v555
        %593 = vst.msk [vmem:[#allocation3 + $0xe8] sm:$0xff] %vm224, %v557
        %594 = vst.msk [vmem:[#allocation3 + $0xf0] sm:$0xff] %vm224, %v560
        %595 = vst.msk [vmem:[#allocation3 + $0xf8] sm:$0xff] %vm224, %v562
        %v596 = vld [vmem:[#allocation2 + $0x1] sm:$0xff]
        %v597 = vld [vmem:[#allocation2 + $0x9] sm:$0xff]
        %v598 = vld [vmem:[#allocation2 + $0x19] sm:$0xff]
        %v599 = vld [vmem:[#allocation2 + $0x21] sm:$0xff]
        %v600 = vld [vmem:[#allocation2 + $0x31] sm:$0xff]
        %v601 = vld [vmem:[#allocation2 + $0x39] sm:$0xff]
        %v602 = vld [vmem:[#allocation2 + $0x49] sm:$0xff]
        %v603 = vld [vmem:[#allocation2 + $0x51] sm:$0xff]
        %v604 = vld [vmem:[#allocation2 + $0x61] sm:$0xff]
        %v605 = vld [vmem:[#allocation2 + $0x69] sm:$0xff]
        %v606 = vld [vmem:[#allocation2 + $0x79] sm:$0xff]
        %v607 = vld [vmem:[#allocation2 + $0x81] sm:$0xff]
        %v608 = vld [vmem:[#allocation2 + $0x91] sm:$0xff]
        %v609 = vld [vmem:[#allocation2 + $0x99] sm:$0xff]
        %v610 = vld [vmem:[#allocation2 + $0xa9] sm:$0xff]
        %v611 = vld [vmem:[#allocation2 + $0xb1] sm:$0xff]
        %v612 = vld [vmem:[#allocation2 + $0xc1] sm:$0xff]
        %v613 = vld [vmem:[#allocation2 + $0xc9] sm:$0xff]
        %v614 = vld [vmem:[#allocation2 + $0xd9] sm:$0xff]
        %v615 = vld [vmem:[#allocation2 + $0xe1] sm:$0xff]
        %v616 = vld [vmem:[#allocation2 + $0xf1] sm:$0xff]
        %v617 = vld [vmem:[#allocation2 + $0xf9] sm:$0xff]
        %v618 = vld [vmem:[#allocation2 + $0x109] sm:$0xff]
        %v619 = vld [vmem:[#allocation2 + $0x111] sm:$0xff]
        %v620 = vld [vmem:[#allocation2 + $0x121] sm:$0xff]
        %v621 = vld [vmem:[#allocation2 + $0x129] sm:$0xff]
        %v622 = vld [vmem:[#allocation2 + $0x139] sm:$0xff]
        %v623 = vld [vmem:[#allocation2 + $0x141] sm:$0xff]
        %v624 = vld [vmem:[#allocation2 + $0x151] sm:$0xff]
        %v625 = vld [vmem:[#allocation2 + $0x159] sm:$0xff]
        %v626 = vld [vmem:[#allocation2 + $0x169] sm:$0xff]
        %v627 = vld [vmem:[#allocation2 + $0x171] sm:$0xff]
        %v628 = vpack.c.bf16 %v597, %v596
        %v629 = vpack.c.bf16 %v599, %v598
        %v630 = vpack.c.bf16 %v601, %v600
        %v631 = vpack.c.bf16 %v603, %v602
        %v632 = vpack.c.bf16 %v605, %v604
        %v633 = vpack.c.bf16 %v607, %v606
        %v634 = vpack.c.bf16 %v609, %v608
        %v635 = vpack.c.bf16 %v611, %v610
        %v636 = vpack.c.bf16 %v613, %v612
        %v637 = vpack.c.bf16 %v615, %v614
        %v638 = vpack.c.bf16 %v617, %v616
        %v639 = vpack.c.bf16 %v619, %v618
        %v640 = vpack.c.bf16 %v621, %v620
        %v641 = vpack.c.bf16 %v623, %v622
        %v642 = vpack.c.bf16 %v625, %v624
        %v643 = vpack.c.bf16 %v627, %v626
        %s644 = scalar_lea.vmem %s1, 2
        %v645 = vld [vmem:[%s644] sm:$0x3]
        %v647 = vsel %vm224, %v628, 0
        %v650 = vsel %vm224, %v629, 0
        %v653 = vsel %vm224, %v630, 0
        %v656 = vsel %vm224, %v631, 0
        %v659 = vsel %vm224, %v632, 0
        %v662 = vsel %vm224, %v633, 0
        %v665 = vsel %vm224, %v634, 0
        %v668 = vsel %vm224, %v635, 0
        %v671 = vsel %vm224, %v636, 0
        %v674 = vsel %vm224, %v637, 0
        %v677 = vsel %vm224, %v638, 0
        %v680 = vsel %vm224, %v639, 0
        %v683 = vsel %vm224, %v640, 0
        %v686 = vsel %vm224, %v641, 0
        %v689 = vsel %vm224, %v642, 0
        %v692 = vsel %vm224, %v643, 0
        %v695 = vsel %vm471, %v645, 0
        %697 = vmatpush.bf16.msra.mxu0 0
        %698 = vmatpush.bf16.msra.mxu0 0
        %699 = vmatpush.bf16.msra.mxu0 0
        %700 = vmatpush.bf16.msra.mxu0 0
        %701 = vmatpush.bf16.msra.mxu0 0
        %702 = vmatpush.bf16.msra.mxu0 0
        %703 = vmatpush.bf16.msra.mxu0 0
        %704 = vmatpush.bf16.msra.mxu0 %v695
        %705 = vmatmul.bf16.gmra.mxu0 %v647
        %v706 = vpop.f32.mrf.mxu0
        %v707 = vadd.f32 0.0, %v706
        %v708 = vpop.f32.mrf.mxu0
        %v709 = vadd.f32 0.0, %v708
        %710 = vmatmul.bf16.gmra.mxu0 %v650
        %v711 = vpop.f32.mrf.mxu0
        %v712 = vadd.f32 0.0, %v711
        %v713 = vpop.f32.mrf.mxu0
        %v714 = vadd.f32 0.0, %v713
        %715 = vmatmul.bf16.gmra.mxu0 %v653
        %v716 = vpop.f32.mrf.mxu0
        %v717 = vadd.f32 0.0, %v716
        %v718 = vpop.f32.mrf.mxu0
        %v719 = vadd.f32 0.0, %v718
        %720 = vmatmul.bf16.gmra.mxu0 %v656
        %v721 = vpop.f32.mrf.mxu0
        %v722 = vadd.f32 0.0, %v721
        %v723 = vpop.f32.mrf.mxu0
        %v724 = vadd.f32 0.0, %v723
        %725 = vmatmul.bf16.gmra.mxu0 %v659
        %v726 = vpop.f32.mrf.mxu0
        %v727 = vadd.f32 0.0, %v726
        %v728 = vpop.f32.mrf.mxu0
        %v729 = vadd.f32 0.0, %v728
        %730 = vmatmul.bf16.gmra.mxu0 %v662
        %v731 = vpop.f32.mrf.mxu0
        %v732 = vadd.f32 0.0, %v731
        %v733 = vpop.f32.mrf.mxu0
        %v734 = vadd.f32 0.0, %v733
        %735 = vmatmul.bf16.gmra.mxu0 %v665
        %v736 = vpop.f32.mrf.mxu0
        %v737 = vadd.f32 0.0, %v736
        %v738 = vpop.f32.mrf.mxu0
        %v739 = vadd.f32 0.0, %v738
        %740 = vmatmul.bf16.gmra.mxu0 %v668
        %v741 = vpop.f32.mrf.mxu0
        %v742 = vadd.f32 0.0, %v741
        %v743 = vpop.f32.mrf.mxu0
        %v744 = vadd.f32 0.0, %v743
        %745 = vmatmul.bf16.gmra.mxu0 %v671
        %v746 = vpop.f32.mrf.mxu0
        %v747 = vadd.f32 0.0, %v746
        %v748 = vpop.f32.mrf.mxu0
        %v749 = vadd.f32 0.0, %v748
        %750 = vmatmul.bf16.gmra.mxu0 %v674
        %v751 = vpop.f32.mrf.mxu0
        %v752 = vadd.f32 0.0, %v751
        %v753 = vpop.f32.mrf.mxu0
        %v754 = vadd.f32 0.0, %v753
        %755 = vmatmul.bf16.gmra.mxu0 %v677
        %v756 = vpop.f32.mrf.mxu0
        %v757 = vadd.f32 0.0, %v756
        %v758 = vpop.f32.mrf.mxu0
        %v759 = vadd.f32 0.0, %v758
        %760 = vmatmul.bf16.gmra.mxu0 %v680
        %v761 = vpop.f32.mrf.mxu0
        %v762 = vadd.f32 0.0, %v761
        %v763 = vpop.f32.mrf.mxu0
        %v764 = vadd.f32 0.0, %v763
        %765 = vmatmul.bf16.gmra.mxu0 %v683
        %v766 = vpop.f32.mrf.mxu0
        %v767 = vadd.f32 0.0, %v766
        %v768 = vpop.f32.mrf.mxu0
        %v769 = vadd.f32 0.0, %v768
        %770 = vmatmul.bf16.gmra.mxu0 %v686
        %v771 = vpop.f32.mrf.mxu0
        %v772 = vadd.f32 0.0, %v771
        %v773 = vpop.f32.mrf.mxu0
        %v774 = vadd.f32 0.0, %v773
        %775 = vmatmul.bf16.gmra.mxu0 %v689
        %v776 = vpop.f32.mrf.mxu0
        %v777 = vadd.f32 0.0, %v776
        %v778 = vpop.f32.mrf.mxu0
        %v779 = vadd.f32 0.0, %v778
        %780 = vmatmul.bf16.gmra.mxu0 %v692
        %v781 = vpop.f32.mrf.mxu0
        %v782 = vadd.f32 0.0, %v781
        %v783 = vpop.f32.mrf.mxu0
        %v784 = vadd.f32 0.0, %v783
        %785 = vdwg.mxu0
        %v786 = vld [vmem:[#allocation3] sm:$0xff]
        %v787 = vld [vmem:[#allocation3 + $0x8] sm:$0xff]
        %v788 = vld [vmem:[#allocation3 + $0x10] sm:$0xff]
        %v789 = vld [vmem:[#allocation3 + $0x18] sm:$0xff]
        %v790 = vld [vmem:[#allocation3 + $0x20] sm:$0xff]
        %v791 = vld [vmem:[#allocation3 + $0x28] sm:$0xff]
        %v792 = vld [vmem:[#allocation3 + $0x30] sm:$0xff]
        %v793 = vld [vmem:[#allocation3 + $0x38] sm:$0xff]
        %v794 = vld [vmem:[#allocation3 + $0x40] sm:$0xff]
        %v795 = vld [vmem:[#allocation3 + $0x48] sm:$0xff]
        %v796 = vld [vmem:[#allocation3 + $0x50] sm:$0xff]
        %v797 = vld [vmem:[#allocation3 + $0x58] sm:$0xff]
        %v798 = vld [vmem:[#allocation3 + $0x60] sm:$0xff]
        %v799 = vld [vmem:[#allocation3 + $0x68] sm:$0xff]
        %v800 = vld [vmem:[#allocation3 + $0x70] sm:$0xff]
        %v801 = vld [vmem:[#allocation3 + $0x78] sm:$0xff]
        %v802 = vld [vmem:[#allocation3 + $0x80] sm:$0xff]
        %v803 = vld [vmem:[#allocation3 + $0x88] sm:$0xff]
        %v804 = vld [vmem:[#allocation3 + $0x90] sm:$0xff]
        %v805 = vld [vmem:[#allocation3 + $0x98] sm:$0xff]
        %v806 = vld [vmem:[#allocation3 + $0xa0] sm:$0xff]
        %v807 = vld [vmem:[#allocation3 + $0xa8] sm:$0xff]
        %v808 = vld [vmem:[#allocation3 + $0xb0] sm:$0xff]
        %v809 = vld [vmem:[#allocation3 + $0xb8] sm:$0xff]
        %v810 = vld [vmem:[#allocation3 + $0xc0] sm:$0xff]
        %v811 = vld [vmem:[#allocation3 + $0xc8] sm:$0xff]
        %v812 = vld [vmem:[#allocation3 + $0xd0] sm:$0xff]
        %v813 = vld [vmem:[#allocation3 + $0xd8] sm:$0xff]
        %v814 = vld [vmem:[#allocation3 + $0xe0] sm:$0xff]
        %v815 = vld [vmem:[#allocation3 + $0xe8] sm:$0xff]
        %v816 = vld [vmem:[#allocation3 + $0xf0] sm:$0xff]
        %v817 = vld [vmem:[#allocation3 + $0xf8] sm:$0xff]
        %v818 = vadd.f32 %v786, %v707
        %v819 = vadd.f32 %v787, %v709
        %v820 = vadd.f32 %v788, %v712
        %v821 = vadd.f32 %v789, %v714
        %v822 = vadd.f32 %v790, %v717
        %v823 = vadd.f32 %v791, %v719
        %v824 = vadd.f32 %v792, %v722
        %v825 = vadd.f32 %v793, %v724
        %v826 = vadd.f32 %v794, %v727
        %v827 = vadd.f32 %v795, %v729
        %v828 = vadd.f32 %v796, %v732
        %v829 = vadd.f32 %v797, %v734
        %v830 = vadd.f32 %v798, %v737
        %v831 = vadd.f32 %v799, %v739
        %v832 = vadd.f32 %v800, %v742
        %v833 = vadd.f32 %v801, %v744
        %v834 = vadd.f32 %v802, %v747
        %v835 = vadd.f32 %v803, %v749
        %v836 = vadd.f32 %v804, %v752
        %v837 = vadd.f32 %v805, %v754
        %v838 = vadd.f32 %v806, %v757
        %v839 = vadd.f32 %v807, %v759
        %v840 = vadd.f32 %v808, %v762
        %v841 = vadd.f32 %v809, %v764
        %v842 = vadd.f32 %v810, %v767
        %v843 = vadd.f32 %v811, %v769
        %v844 = vadd.f32 %v812, %v772
        %v845 = vadd.f32 %v813, %v774
        %v846 = vadd.f32 %v814, %v777
        %v847 = vadd.f32 %v815, %v779
        %v848 = vadd.f32 %v816, %v782
        %v849 = vadd.f32 %v817, %v784
        %850 = vst.msk [vmem:[#allocation3] sm:$0xff] %vm224, %v818
        %851 = vst.msk [vmem:[#allocation3 + $0x8] sm:$0xff] %vm224, %v819
        %852 = vst.msk [vmem:[#allocation3 + $0x10] sm:$0xff] %vm224, %v820
        %853 = vst.msk [vmem:[#allocation3 + $0x18] sm:$0xff] %vm224, %v821
        %854 = vst.msk [vmem:[#allocation3 + $0x20] sm:$0xff] %vm224, %v822
        %855 = vst.msk [vmem:[#allocation3 + $0x28] sm:$0xff] %vm224, %v823
        %856 = vst.msk [vmem:[#allocation3 + $0x30] sm:$0xff] %vm224, %v824
        %857 = vst.msk [vmem:[#allocation3 + $0x38] sm:$0xff] %vm224, %v825
        %858 = vst.msk [vmem:[#allocation3 + $0x40] sm:$0xff] %vm224, %v826
        %859 = vst.msk [vmem:[#allocation3 + $0x48] sm:$0xff] %vm224, %v827
        %860 = vst.msk [vmem:[#allocation3 + $0x50] sm:$0xff] %vm224, %v828
        %861 = vst.msk [vmem:[#allocation3 + $0x58] sm:$0xff] %vm224, %v829
        %862 = vst.msk [vmem:[#allocation3 + $0x60] sm:$0xff] %vm224, %v830
        %863 = vst.msk [vmem:[#allocation3 + $0x68] sm:$0xff] %vm224, %v831
        %864 = vst.msk [vmem:[#allocation3 + $0x70] sm:$0xff] %vm224, %v832
        %865 = vst.msk [vmem:[#allocation3 + $0x78] sm:$0xff] %vm224, %v833
        %866 = vst.msk [vmem:[#allocation3 + $0x80] sm:$0xff] %vm224, %v834
        %867 = vst.msk [vmem:[#allocation3 + $0x88] sm:$0xff] %vm224, %v835
        %868 = vst.msk [vmem:[#allocation3 + $0x90] sm:$0xff] %vm224, %v836
        %869 = vst.msk [vmem:[#allocation3 + $0x98] sm:$0xff] %vm224, %v837
        %870 = vst.msk [vmem:[#allocation3 + $0xa0] sm:$0xff] %vm224, %v838
        %871 = vst.msk [vmem:[#allocation3 + $0xa8] sm:$0xff] %vm224, %v839
        %872 = vst.msk [vmem:[#allocation3 + $0xb0] sm:$0xff] %vm224, %v840
        %873 = vst.msk [vmem:[#allocation3 + $0xb8] sm:$0xff] %vm224, %v841
        %874 = vst.msk [vmem:[#allocation3 + $0xc0] sm:$0xff] %vm224, %v842
        %875 = vst.msk [vmem:[#allocation3 + $0xc8] sm:$0xff] %vm224, %v843
        %876 = vst.msk [vmem:[#allocation3 + $0xd0] sm:$0xff] %vm224, %v844
        %877 = vst.msk [vmem:[#allocation3 + $0xd8] sm:$0xff] %vm224, %v845
        %878 = vst.msk [vmem:[#allocation3 + $0xe0] sm:$0xff] %vm224, %v846
        %879 = vst.msk [vmem:[#allocation3 + $0xe8] sm:$0xff] %vm224, %v847
        %880 = vst.msk [vmem:[#allocation3 + $0xf0] sm:$0xff] %vm224, %v848
        %881 = vst.msk [vmem:[#allocation3 + $0xf8] sm:$0xff] %vm224, %v849
        %v882 = vld [vmem:[#allocation2 + $0x2] sm:$0xff]
        %v883 = vld [vmem:[#allocation2 + $0xa] sm:$0xff]
        %v884 = vld [vmem:[#allocation2 + $0x1a] sm:$0xff]
        %v885 = vld [vmem:[#allocation2 + $0x22] sm:$0xff]
        %v886 = vld [vmem:[#allocation2 + $0x32] sm:$0xff]
        %v887 = vld [vmem:[#allocation2 + $0x3a] sm:$0xff]
        %v888 = vld [vmem:[#allocation2 + $0x4a] sm:$0xff]
        %v889 = vld [vmem:[#allocation2 + $0x52] sm:$0xff]
        %v890 = vld [vmem:[#allocation2 + $0x62] sm:$0xff]
        %v891 = vld [vmem:[#allocation2 + $0x6a] sm:$0xff]
        %v892 = vld [vmem:[#allocation2 + $0x7a] sm:$0xff]
        %v893 = vld [vmem:[#allocation2 + $0x82] sm:$0xff]
        %v894 = vld [vmem:[#allocation2 + $0x92] sm:$0xff]
        %v895 = vld [vmem:[#allocation2 + $0x9a] sm:$0xff]
        %v896 = vld [vmem:[#allocation2 + $0xaa] sm:$0xff]
        %v897 = vld [vmem:[#allocation2 + $0xb2] sm:$0xff]
        %v898 = vld [vmem:[#allocation2 + $0xc2] sm:$0xff]
        %v899 = vld [vmem:[#allocation2 + $0xca] sm:$0xff]
        %v900 = vld [vmem:[#allocation2 + $0xda] sm:$0xff]
        %v901 = vld [vmem:[#allocation2 + $0xe2] sm:$0xff]
        %v902 = vld [vmem:[#allocation2 + $0xf2] sm:$0xff]
        %v903 = vld [vmem:[#allocation2 + $0xfa] sm:$0xff]
        %v904 = vld [vmem:[#allocation2 + $0x10a] sm:$0xff]
        %v905 = vld [vmem:[#allocation2 + $0x112] sm:$0xff]
        %v906 = vld [vmem:[#allocation2 + $0x122] sm:$0xff]
        %v907 = vld [vmem:[#allocation2 + $0x12a] sm:$0xff]
        %v908 = vld [vmem:[#allocation2 + $0x13a] sm:$0xff]
        %v909 = vld [vmem:[#allocation2 + $0x142] sm:$0xff]
        %v910 = vld [vmem:[#allocation2 + $0x152] sm:$0xff]
        %v911 = vld [vmem:[#allocation2 + $0x15a] sm:$0xff]
        %v912 = vld [vmem:[#allocation2 + $0x16a] sm:$0xff]
        %v913 = vld [vmem:[#allocation2 + $0x172] sm:$0xff]
        %v914 = vpack.c.bf16 %v883, %v882
        %v915 = vpack.c.bf16 %v885, %v884
        %v916 = vpack.c.bf16 %v887, %v886
        %v917 = vpack.c.bf16 %v889, %v888
        %v918 = vpack.c.bf16 %v891, %v890
        %v919 = vpack.c.bf16 %v893, %v892
        %v920 = vpack.c.bf16 %v895, %v894
        %v921 = vpack.c.bf16 %v897, %v896
        %v922 = vpack.c.bf16 %v899, %v898
        %v923 = vpack.c.bf16 %v901, %v900
        %v924 = vpack.c.bf16 %v903, %v902
        %v925 = vpack.c.bf16 %v905, %v904
        %v926 = vpack.c.bf16 %v907, %v906
        %v927 = vpack.c.bf16 %v909, %v908
        %v928 = vpack.c.bf16 %v911, %v910
        %v929 = vpack.c.bf16 %v913, %v912
        %s930 = scalar_lea.vmem %s1, 4
        %v931 = vld [vmem:[%s930] sm:$0x3]
        %v933 = vsel %vm224, %v914, 0
        %v936 = vsel %vm224, %v915, 0
        %v939 = vsel %vm224, %v916, 0
        %v942 = vsel %vm224, %v917, 0
        %v945 = vsel %vm224, %v918, 0
        %v948 = vsel %vm224, %v919, 0
        %v951 = vsel %vm224, %v920, 0
        %v954 = vsel %vm224, %v921, 0
        %v957 = vsel %vm224, %v922, 0
        %v960 = vsel %vm224, %v923, 0
        %v963 = vsel %vm224, %v924, 0
        %v966 = vsel %vm224, %v925, 0
        %v969 = vsel %vm224, %v926, 0
        %v972 = vsel %vm224, %v927, 0
        %v975 = vsel %vm224, %v928, 0
        %v978 = vsel %vm224, %v929, 0
        %v981 = vsel %vm471, %v931, 0
        %983 = vmatpush.bf16.msra.mxu0 0
        %984 = vmatpush.bf16.msra.mxu0 0
        %985 = vmatpush.bf16.msra.mxu0 0
        %986 = vmatpush.bf16.msra.mxu0 0
        %987 = vmatpush.bf16.msra.mxu0 0
        %988 = vmatpush.bf16.msra.mxu0 0
        %989 = vmatpush.bf16.msra.mxu0 0
        %990 = vmatpush.bf16.msra.mxu0 %v981
        %991 = vmatmul.bf16.gmra.mxu0 %v933
        %v992 = vpop.f32.mrf.mxu0
        %v993 = vadd.f32 0.0, %v992
        %v994 = vpop.f32.mrf.mxu0
        %v995 = vadd.f32 0.0, %v994
        %996 = vmatmul.bf16.gmra.mxu0 %v936
        %v997 = vpop.f32.mrf.mxu0
        %v998 = vadd.f32 0.0, %v997
        %v999 = vpop.f32.mrf.mxu0
        %v1000 = vadd.f32 0.0, %v999
        %1001 = vmatmul.bf16.gmra.mxu0 %v939
        %v1002 = vpop.f32.mrf.mxu0
        %v1003 = vadd.f32 0.0, %v1002
        %v1004 = vpop.f32.mrf.mxu0
        %v1005 = vadd.f32 0.0, %v1004
        %1006 = vmatmul.bf16.gmra.mxu0 %v942
        %v1007 = vpop.f32.mrf.mxu0
        %v1008 = vadd.f32 0.0, %v1007
        %v1009 = vpop.f32.mrf.mxu0
        %v1010 = vadd.f32 0.0, %v1009
        %1011 = vmatmul.bf16.gmra.mxu0 %v945
        %v1012 = vpop.f32.mrf.mxu0
        %v1013 = vadd.f32 0.0, %v1012
        %v1014 = vpop.f32.mrf.mxu0
        %v1015 = vadd.f32 0.0, %v1014
        %1016 = vmatmul.bf16.gmra.mxu0 %v948
        %v1017 = vpop.f32.mrf.mxu0
        %v1018 = vadd.f32 0.0, %v1017
        %v1019 = vpop.f32.mrf.mxu0
        %v1020 = vadd.f32 0.0, %v1019
        %1021 = vmatmul.bf16.gmra.mxu0 %v951
        %v1022 = vpop.f32.mrf.mxu0
        %v1023 = vadd.f32 0.0, %v1022
        %v1024 = vpop.f32.mrf.mxu0
        %v1025 = vadd.f32 0.0, %v1024
        %1026 = vmatmul.bf16.gmra.mxu0 %v954
        %v1027 = vpop.f32.mrf.mxu0
        %v1028 = vadd.f32 0.0, %v1027
        %v1029 = vpop.f32.mrf.mxu0
        %v1030 = vadd.f32 0.0, %v1029
        %1031 = vmatmul.bf16.gmra.mxu0 %v957
        %v1032 = vpop.f32.mrf.mxu0
        %v1033 = vadd.f32 0.0, %v1032
        %v1034 = vpop.f32.mrf.mxu0
        %v1035 = vadd.f32 0.0, %v1034
        %1036 = vmatmul.bf16.gmra.mxu0 %v960
        %v1037 = vpop.f32.mrf.mxu0
        %v1038 = vadd.f32 0.0, %v1037
        %v1039 = vpop.f32.mrf.mxu0
        %v1040 = vadd.f32 0.0, %v1039
        %1041 = vmatmul.bf16.gmra.mxu0 %v963
        %v1042 = vpop.f32.mrf.mxu0
        %v1043 = vadd.f32 0.0, %v1042
        %v1044 = vpop.f32.mrf.mxu0
        %v1045 = vadd.f32 0.0, %v1044
        %1046 = vmatmul.bf16.gmra.mxu0 %v966
        %v1047 = vpop.f32.mrf.mxu0
        %v1048 = vadd.f32 0.0, %v1047
        %v1049 = vpop.f32.mrf.mxu0
        %v1050 = vadd.f32 0.0, %v1049
        %1051 = vmatmul.bf16.gmra.mxu0 %v969
        %v1052 = vpop.f32.mrf.mxu0
        %v1053 = vadd.f32 0.0, %v1052
        %v1054 = vpop.f32.mrf.mxu0
        %v1055 = vadd.f32 0.0, %v1054
        %1056 = vmatmul.bf16.gmra.mxu0 %v972
        %v1057 = vpop.f32.mrf.mxu0
        %v1058 = vadd.f32 0.0, %v1057
        %v1059 = vpop.f32.mrf.mxu0
        %v1060 = vadd.f32 0.0, %v1059
        %1061 = vmatmul.bf16.gmra.mxu0 %v975
        %v1062 = vpop.f32.mrf.mxu0
        %v1063 = vadd.f32 0.0, %v1062
        %v1064 = vpop.f32.mrf.mxu0
        %v1065 = vadd.f32 0.0, %v1064
        %1066 = vmatmul.bf16.gmra.mxu0 %v978
        %v1067 = vpop.f32.mrf.mxu0
        %v1068 = vadd.f32 0.0, %v1067
        %v1069 = vpop.f32.mrf.mxu0
        %v1070 = vadd.f32 0.0, %v1069
        %1071 = vdwg.mxu0
        %v1072 = vld [vmem:[#allocation3] sm:$0xff]
        %v1073 = vld [vmem:[#allocation3 + $0x8] sm:$0xff]
        %v1074 = vld [vmem:[#allocation3 + $0x10] sm:$0xff]
        %v1075 = vld [vmem:[#allocation3 + $0x18] sm:$0xff]
        %v1076 = vld [vmem:[#allocation3 + $0x20] sm:$0xff]
        %v1077 = vld [vmem:[#allocation3 + $0x28] sm:$0xff]
        %v1078 = vld [vmem:[#allocation3 + $0x30] sm:$0xff]
        %v1079 = vld [vmem:[#allocation3 + $0x38] sm:$0xff]
        %v1080 = vld [vmem:[#allocation3 + $0x40] sm:$0xff]
        %v1081 = vld [vmem:[#allocation3 + $0x48] sm:$0xff]
        %v1082 = vld [vmem:[#allocation3 + $0x50] sm:$0xff]
        %v1083 = vld [vmem:[#allocation3 + $0x58] sm:$0xff]
        %v1084 = vld [vmem:[#allocation3 + $0x60] sm:$0xff]
        %v1085 = vld [vmem:[#allocation3 + $0x68] sm:$0xff]
        %v1086 = vld [vmem:[#allocation3 + $0x70] sm:$0xff]
        %v1087 = vld [vmem:[#allocation3 + $0x78] sm:$0xff]
        %v1088 = vld [vmem:[#allocation3 + $0x80] sm:$0xff]
        %v1089 = vld [vmem:[#allocation3 + $0x88] sm:$0xff]
        %v1090 = vld [vmem:[#allocation3 + $0x90] sm:$0xff]
        %v1091 = vld [vmem:[#allocation3 + $0x98] sm:$0xff]
        %v1092 = vld [vmem:[#allocation3 + $0xa0] sm:$0xff]
        %v1093 = vld [vmem:[#allocation3 + $0xa8] sm:$0xff]
        %v1094 = vld [vmem:[#allocation3 + $0xb0] sm:$0xff]
        %v1095 = vld [vmem:[#allocation3 + $0xb8] sm:$0xff]
        %v1096 = vld [vmem:[#allocation3 + $0xc0] sm:$0xff]
        %v1097 = vld [vmem:[#allocation3 + $0xc8] sm:$0xff]
        %v1098 = vld [vmem:[#allocation3 + $0xd0] sm:$0xff]
        %v1099 = vld [vmem:[#allocation3 + $0xd8] sm:$0xff]
        %v1100 = vld [vmem:[#allocation3 + $0xe0] sm:$0xff]
        %v1101 = vld [vmem:[#allocation3 + $0xe8] sm:$0xff]
        %v1102 = vld [vmem:[#allocation3 + $0xf0] sm:$0xff]
        %v1103 = vld [vmem:[#allocation3 + $0xf8] sm:$0xff]
        %v1104 = vadd.f32 %v1072, %v993
        %v1105 = vadd.f32 %v1073, %v995
        %v1106 = vadd.f32 %v1074, %v998
        %v1107 = vadd.f32 %v1075, %v1000
        %v1108 = vadd.f32 %v1076, %v1003
        %v1109 = vadd.f32 %v1077, %v1005
        %v1110 = vadd.f32 %v1078, %v1008
        %v1111 = vadd.f32 %v1079, %v1010
        %v1112 = vadd.f32 %v1080, %v1013
        %v1113 = vadd.f32 %v1081, %v1015
        %v1114 = vadd.f32 %v1082, %v1018
        %v1115 = vadd.f32 %v1083, %v1020
        %v1116 = vadd.f32 %v1084, %v1023
        %v1117 = vadd.f32 %v1085, %v1025
        %v1118 = vadd.f32 %v1086, %v1028
        %v1119 = vadd.f32 %v1087, %v1030
        %v1120 = vadd.f32 %v1088, %v1033
        %v1121 = vadd.f32 %v1089, %v1035
        %v1122 = vadd.f32 %v1090, %v1038
        %v1123 = vadd.f32 %v1091, %v1040
        %v1124 = vadd.f32 %v1092, %v1043
        %v1125 = vadd.f32 %v1093, %v1045
        %v1126 = vadd.f32 %v1094, %v1048
        %v1127 = vadd.f32 %v1095, %v1050
        %v1128 = vadd.f32 %v1096, %v1053
        %v1129 = vadd.f32 %v1097, %v1055
        %v1130 = vadd.f32 %v1098, %v1058
        %v1131 = vadd.f32 %v1099, %v1060
        %v1132 = vadd.f32 %v1100, %v1063
        %v1133 = vadd.f32 %v1101, %v1065
        %v1134 = vadd.f32 %v1102, %v1068
        %v1135 = vadd.f32 %v1103, %v1070
        %1136 = vst.msk [vmem:[#allocation3] sm:$0xff] %vm224, %v1104
        %1137 = vst.msk [vmem:[#allocation3 + $0x8] sm:$0xff] %vm224, %v1105
        %1138 = vst.msk [vmem:[#allocation3 + $0x10] sm:$0xff] %vm224, %v1106
        %1139 = vst.msk [vmem:[#allocation3 + $0x18] sm:$0xff] %vm224, %v1107
        %1140 = vst.msk [vmem:[#allocation3 + $0x20] sm:$0xff] %vm224, %v1108
        %1141 = vst.msk [vmem:[#allocation3 + $0x28] sm:$0xff] %vm224, %v1109
        %1142 = vst.msk [vmem:[#allocation3 + $0x30] sm:$0xff] %vm224, %v1110
        %1143 = vst.msk [vmem:[#allocation3 + $0x38] sm:$0xff] %vm224, %v1111
        %1144 = vst.msk [vmem:[#allocation3 + $0x40] sm:$0xff] %vm224, %v1112
        %1145 = vst.msk [vmem:[#allocation3 + $0x48] sm:$0xff] %vm224, %v1113
        %1146 = vst.msk [vmem:[#allocation3 + $0x50] sm:$0xff] %vm224, %v1114
        %1147 = vst.msk [vmem:[#allocation3 + $0x58] sm:$0xff] %vm224, %v1115
        %1148 = vst.msk [vmem:[#allocation3 + $0x60] sm:$0xff] %vm224, %v1116
        %1149 = vst.msk [vmem:[#allocation3 + $0x68] sm:$0xff] %vm224, %v1117
        %1150 = vst.msk [vmem:[#allocation3 + $0x70] sm:$0xff] %vm224, %v1118
        %1151 = vst.msk [vmem:[#allocation3 + $0x78] sm:$0xff] %vm224, %v1119
        %1152 = vst.msk [vmem:[#allocation3 + $0x80] sm:$0xff] %vm224, %v1120
        %1153 = vst.msk [vmem:[#allocation3 + $0x88] sm:$0xff] %vm224, %v1121
        %1154 = vst.msk [vmem:[#allocation3 + $0x90] sm:$0xff] %vm224, %v1122
        %1155 = vst.msk [vmem:[#allocation3 + $0x98] sm:$0xff] %vm224, %v1123
        %1156 = vst.msk [vmem:[#allocation3 + $0xa0] sm:$0xff] %vm224, %v1124
        %1157 = vst.msk [vmem:[#allocation3 + $0xa8] sm:$0xff] %vm224, %v1125
        %1158 = vst.msk [vmem:[#allocation3 + $0xb0] sm:$0xff] %vm224, %v1126
        %1159 = vst.msk [vmem:[#allocation3 + $0xb8] sm:$0xff] %vm224, %v1127
        %1160 = vst.msk [vmem:[#allocation3 + $0xc0] sm:$0xff] %vm224, %v1128
        %1161 = vst.msk [vmem:[#allocation3 + $0xc8] sm:$0xff] %vm224, %v1129
        %1162 = vst.msk [vmem:[#allocation3 + $0xd0] sm:$0xff] %vm224, %v1130
        %1163 = vst.msk [vmem:[#allocation3 + $0xd8] sm:$0xff] %vm224, %v1131
        %1164 = vst.msk [vmem:[#allocation3 + $0xe0] sm:$0xff] %vm224, %v1132
        %1165 = vst.msk [vmem:[#allocation3 + $0xe8] sm:$0xff] %vm224, %v1133
        %1166 = vst.msk [vmem:[#allocation3 + $0xf0] sm:$0xff] %vm224, %v1134
        %1167 = vst.msk [vmem:[#allocation3 + $0xf8] sm:$0xff] %vm224, %v1135
        %v1168 = vld [vmem:[%s341] sm:$0xff]
        %v1169 = vld [vmem:[%s341 + $0x8] sm:$0xff]
        %v1170 = vld [vmem:[%s341 + $0x18] sm:$0xff]
        %v1171 = vld [vmem:[%s341 + $0x20] sm:$0xff]
        %v1172 = vld [vmem:[%s341 + $0x30] sm:$0xff]
        %v1173 = vld [vmem:[%s341 + $0x38] sm:$0xff]
        %v1174 = vld [vmem:[%s341 + $0x48] sm:$0xff]
        %v1175 = vld [vmem:[%s341 + $0x50] sm:$0xff]
        %v1176 = vld [vmem:[%s341 + $0x60] sm:$0xff]
        %v1177 = vld [vmem:[%s341 + $0x68] sm:$0xff]
        %v1178 = vld [vmem:[%s341 + $0x78] sm:$0xff]
        %v1179 = vld [vmem:[%s341 + $0x80] sm:$0xff]
        %v1180 = vld [vmem:[%s341 + $0x90] sm:$0xff]
        %v1181 = vld [vmem:[%s341 + $0x98] sm:$0xff]
        %v1182 = vld [vmem:[%s341 + $0xa8] sm:$0xff]
        %v1183 = vld [vmem:[%s341 + $0xb0] sm:$0xff]
        %v1184 = vld [vmem:[%s341 + $0xc0] sm:$0xff]
        %v1185 = vld [vmem:[%s341 + $0xc8] sm:$0xff]
        %v1186 = vld [vmem:[%s341 + $0xd8] sm:$0xff]
        %v1187 = vld [vmem:[%s341 + $0xe0] sm:$0xff]
        %v1188 = vld [vmem:[%s341 + $0xf0] sm:$0xff]
        %v1189 = vld [vmem:[%s341 + $0xf8] sm:$0xff]
        %v1190 = vld [vmem:[%s341 + $0x108] sm:$0xff]
        %v1191 = vld [vmem:[%s341 + $0x110] sm:$0xff]
        %v1192 = vld [vmem:[%s341 + $0x120] sm:$0xff]
        %v1193 = vld [vmem:[%s341 + $0x128] sm:$0xff]
        %v1194 = vld [vmem:[%s341 + $0x138] sm:$0xff]
        %v1195 = vld [vmem:[%s341 + $0x140] sm:$0xff]
        %v1196 = vld [vmem:[%s341 + $0x150] sm:$0xff]
        %v1197 = vld [vmem:[%s341 + $0x158] sm:$0xff]
        %v1198 = vld [vmem:[%s341 + $0x168] sm:$0xff]
        %v1199 = vld [vmem:[%s341 + $0x170] sm:$0xff]
        %v1200 = vpack.c.bf16 %v1169, %v1168
        %v1201 = vpack.c.bf16 %v1171, %v1170
        %v1202 = vpack.c.bf16 %v1173, %v1172
        %v1203 = vpack.c.bf16 %v1175, %v1174
        %v1204 = vpack.c.bf16 %v1177, %v1176
        %v1205 = vpack.c.bf16 %v1179, %v1178
        %v1206 = vpack.c.bf16 %v1181, %v1180
        %v1207 = vpack.c.bf16 %v1183, %v1182
        %v1208 = vpack.c.bf16 %v1185, %v1184
        %v1209 = vpack.c.bf16 %v1187, %v1186
        %v1210 = vpack.c.bf16 %v1189, %v1188
        %v1211 = vpack.c.bf16 %v1191, %v1190
        %v1212 = vpack.c.bf16 %v1193, %v1192
        %v1213 = vpack.c.bf16 %v1195, %v1194
        %v1214 = vpack.c.bf16 %v1197, %v1196
        %v1215 = vpack.c.bf16 %v1199, %v1198
        %s1216 = scalar_lea.vmem %s1, 6
        %v1217 = vld [vmem:[%s1216] sm:$0x3]
        %v1219 = vsel %vm224, %v1200, 0
        %v1222 = vsel %vm224, %v1201, 0
        %v1225 = vsel %vm224, %v1202, 0
        %v1228 = vsel %vm224, %v1203, 0
        %v1231 = vsel %vm224, %v1204, 0
        %v1234 = vsel %vm224, %v1205, 0
        %v1237 = vsel %vm224, %v1206, 0
        %v1240 = vsel %vm224, %v1207, 0
        %v1243 = vsel %vm224, %v1208, 0
        %v1246 = vsel %vm224, %v1209, 0
        %v1249 = vsel %vm224, %v1210, 0
        %v1252 = vsel %vm224, %v1211, 0
        %v1255 = vsel %vm224, %v1212, 0
        %v1258 = vsel %vm224, %v1213, 0
        %v1261 = vsel %vm224, %v1214, 0
        %v1264 = vsel %vm224, %v1215, 0
        %v1267 = vsel %vm471, %v1217, 0
        %1269 = vmatpush.bf16.msra.mxu0 0
        %1270 = vmatpush.bf16.msra.mxu0 0
        %1271 = vmatpush.bf16.msra.mxu0 0
        %1272 = vmatpush.bf16.msra.mxu0 0
        %1273 = vmatpush.bf16.msra.mxu0 0
        %1274 = vmatpush.bf16.msra.mxu0 0
        %1275 = vmatpush.bf16.msra.mxu0 0
        %1276 = vmatpush.bf16.msra.mxu0 %v1267
        %1277 = vmatmul.bf16.gmra.mxu0 %v1219
        %v1278 = vpop.f32.mrf.mxu0
        %v1279 = vadd.f32 0.0, %v1278
        %v1280 = vpop.f32.mrf.mxu0
        %v1281 = vadd.f32 0.0, %v1280
        %1282 = vmatmul.bf16.gmra.mxu0 %v1222
        %v1283 = vpop.f32.mrf.mxu0
        %v1284 = vadd.f32 0.0, %v1283
        %v1285 = vpop.f32.mrf.mxu0
        %v1286 = vadd.f32 0.0, %v1285
        %1287 = vmatmul.bf16.gmra.mxu0 %v1225
        %v1288 = vpop.f32.mrf.mxu0
        %v1289 = vadd.f32 0.0, %v1288
        %v1290 = vpop.f32.mrf.mxu0
        %v1291 = vadd.f32 0.0, %v1290
        %1292 = vmatmul.bf16.gmra.mxu0 %v1228
        %v1293 = vpop.f32.mrf.mxu0
        %v1294 = vadd.f32 0.0, %v1293
        %v1295 = vpop.f32.mrf.mxu0
        %v1296 = vadd.f32 0.0, %v1295
        %1297 = vmatmul.bf16.gmra.mxu0 %v1231
        %v1298 = vpop.f32.mrf.mxu0
        %v1299 = vadd.f32 0.0, %v1298
        %v1300 = vpop.f32.mrf.mxu0
        %v1301 = vadd.f32 0.0, %v1300
        %1302 = vmatmul.bf16.gmra.mxu0 %v1234
        %v1303 = vpop.f32.mrf.mxu0
        %v1304 = vadd.f32 0.0, %v1303
        %v1305 = vpop.f32.mrf.mxu0
        %v1306 = vadd.f32 0.0, %v1305
        %1307 = vmatmul.bf16.gmra.mxu0 %v1237
        %v1308 = vpop.f32.mrf.mxu0
        %v1309 = vadd.f32 0.0, %v1308
        %v1310 = vpop.f32.mrf.mxu0
        %v1311 = vadd.f32 0.0, %v1310
        %1312 = vmatmul.bf16.gmra.mxu0 %v1240
        %v1313 = vpop.f32.mrf.mxu0
        %v1314 = vadd.f32 0.0, %v1313
        %v1315 = vpop.f32.mrf.mxu0
        %v1316 = vadd.f32 0.0, %v1315
        %1317 = vmatmul.bf16.gmra.mxu0 %v1243
        %v1318 = vpop.f32.mrf.mxu0
        %v1319 = vadd.f32 0.0, %v1318
        %v1320 = vpop.f32.mrf.mxu0
        %v1321 = vadd.f32 0.0, %v1320
        %1322 = vmatmul.bf16.gmra.mxu0 %v1246
        %v1323 = vpop.f32.mrf.mxu0
        %v1324 = vadd.f32 0.0, %v1323
        %v1325 = vpop.f32.mrf.mxu0
        %v1326 = vadd.f32 0.0, %v1325
        %1327 = vmatmul.bf16.gmra.mxu0 %v1249
        %v1328 = vpop.f32.mrf.mxu0
        %v1329 = vadd.f32 0.0, %v1328
        %v1330 = vpop.f32.mrf.mxu0
        %v1331 = vadd.f32 0.0, %v1330
        %1332 = vmatmul.bf16.gmra.mxu0 %v1252
        %v1333 = vpop.f32.mrf.mxu0
        %v1334 = vadd.f32 0.0, %v1333
        %v1335 = vpop.f32.mrf.mxu0
        %v1336 = vadd.f32 0.0, %v1335
        %1337 = vmatmul.bf16.gmra.mxu0 %v1255
        %v1338 = vpop.f32.mrf.mxu0
        %v1339 = vadd.f32 0.0, %v1338
        %v1340 = vpop.f32.mrf.mxu0
        %v1341 = vadd.f32 0.0, %v1340
        %1342 = vmatmul.bf16.gmra.mxu0 %v1258
        %v1343 = vpop.f32.mrf.mxu0
        %v1344 = vadd.f32 0.0, %v1343
        %v1345 = vpop.f32.mrf.mxu0
        %v1346 = vadd.f32 0.0, %v1345
        %1347 = vmatmul.bf16.gmra.mxu0 %v1261
        %v1348 = vpop.f32.mrf.mxu0
        %v1349 = vadd.f32 0.0, %v1348
        %v1350 = vpop.f32.mrf.mxu0
        %v1351 = vadd.f32 0.0, %v1350
        %1352 = vmatmul.bf16.gmra.mxu0 %v1264
        %v1353 = vpop.f32.mrf.mxu0
        %v1354 = vadd.f32 0.0, %v1353
        %v1355 = vpop.f32.mrf.mxu0
        %v1356 = vadd.f32 0.0, %v1355
        %1357 = vdwg.mxu0
        %v1358 = vld [vmem:[#allocation3] sm:$0xff]
        %v1359 = vld [vmem:[#allocation3 + $0x8] sm:$0xff]
        %v1360 = vld [vmem:[#allocation3 + $0x10] sm:$0xff]
        %v1361 = vld [vmem:[#allocation3 + $0x18] sm:$0xff]
        %v1362 = vld [vmem:[#allocation3 + $0x20] sm:$0xff]
        %v1363 = vld [vmem:[#allocation3 + $0x28] sm:$0xff]
        %v1364 = vld [vmem:[#allocation3 + $0x30] sm:$0xff]
        %v1365 = vld [vmem:[#allocation3 + $0x38] sm:$0xff]
        %v1366 = vld [vmem:[#allocation3 + $0x40] sm:$0xff]
        %v1367 = vld [vmem:[#allocation3 + $0x48] sm:$0xff]
        %v1368 = vld [vmem:[#allocation3 + $0x50] sm:$0xff]
        %v1369 = vld [vmem:[#allocation3 + $0x58] sm:$0xff]
        %v1370 = vld [vmem:[#allocation3 + $0x60] sm:$0xff]
        %v1371 = vld [vmem:[#allocation3 + $0x68] sm:$0xff]
        %v1372 = vld [vmem:[#allocation3 + $0x70] sm:$0xff]
        %v1373 = vld [vmem:[#allocation3 + $0x78] sm:$0xff]
        %v1374 = vld [vmem:[#allocation3 + $0x80] sm:$0xff]
        %v1375 = vld [vmem:[#allocation3 + $0x88] sm:$0xff]
        %v1376 = vld [vmem:[#allocation3 + $0x90] sm:$0xff]
        %v1377 = vld [vmem:[#allocation3 + $0x98] sm:$0xff]
        %v1378 = vld [vmem:[#allocation3 + $0xa0] sm:$0xff]
        %v1379 = vld [vmem:[#allocation3 + $0xa8] sm:$0xff]
        %v1380 = vld [vmem:[#allocation3 + $0xb0] sm:$0xff]
        %v1381 = vld [vmem:[#allocation3 + $0xb8] sm:$0xff]
        %v1382 = vld [vmem:[#allocation3 + $0xc0] sm:$0xff]
        %v1383 = vld [vmem:[#allocation3 + $0xc8] sm:$0xff]
        %v1384 = vld [vmem:[#allocation3 + $0xd0] sm:$0xff]
        %v1385 = vld [vmem:[#allocation3 + $0xd8] sm:$0xff]
        %v1386 = vld [vmem:[#allocation3 + $0xe0] sm:$0xff]
        %v1387 = vld [vmem:[#allocation3 + $0xe8] sm:$0xff]
        %v1388 = vld [vmem:[#allocation3 + $0xf0] sm:$0xff]
        %v1389 = vld [vmem:[#allocation3 + $0xf8] sm:$0xff]
        %v1390 = vadd.f32 %v1358, %v1279
        %v1391 = vadd.f32 %v1359, %v1281
        %v1392 = vadd.f32 %v1360, %v1284
        %v1393 = vadd.f32 %v1361, %v1286
        %v1394 = vadd.f32 %v1362, %v1289
        %v1395 = vadd.f32 %v1363, %v1291
        %v1396 = vadd.f32 %v1364, %v1294
        %v1397 = vadd.f32 %v1365, %v1296
        %v1398 = vadd.f32 %v1366, %v1299
        %v1399 = vadd.f32 %v1367, %v1301
        %v1400 = vadd.f32 %v1368, %v1304
        %v1401 = vadd.f32 %v1369, %v1306
        %v1402 = vadd.f32 %v1370, %v1309
        %v1403 = vadd.f32 %v1371, %v1311
        %v1404 = vadd.f32 %v1372, %v1314
        %v1405 = vadd.f32 %v1373, %v1316
        %v1406 = vadd.f32 %v1374, %v1319
        %v1407 = vadd.f32 %v1375, %v1321
        %v1408 = vadd.f32 %v1376, %v1324
        %v1409 = vadd.f32 %v1377, %v1326
        %v1410 = vadd.f32 %v1378, %v1329
        %v1411 = vadd.f32 %v1379, %v1331
        %v1412 = vadd.f32 %v1380, %v1334
        %v1413 = vadd.f32 %v1381, %v1336
        %v1414 = vadd.f32 %v1382, %v1339
        %v1415 = vadd.f32 %v1383, %v1341
        %v1416 = vadd.f32 %v1384, %v1344
        %v1417 = vadd.f32 %v1385, %v1346
        %v1418 = vadd.f32 %v1386, %v1349
        %v1419 = vadd.f32 %v1387, %v1351
        %v1420 = vadd.f32 %v1388, %v1354
        %v1421 = vadd.f32 %v1389, %v1356
        %1422 = vst.msk [vmem:[#allocation3] sm:$0xff] %vm224, %v1390
        %1423 = vst.msk [vmem:[#allocation3 + $0x8] sm:$0xff] %vm224, %v1391
        %1424 = vst.msk [vmem:[#allocation3 + $0x10] sm:$0xff] %vm224, %v1392
        %1425 = vst.msk [vmem:[#allocation3 + $0x18] sm:$0xff] %vm224, %v1393
        %1426 = vst.msk [vmem:[#allocation3 + $0x20] sm:$0xff] %vm224, %v1394
        %1427 = vst.msk [vmem:[#allocation3 + $0x28] sm:$0xff] %vm224, %v1395
        %1428 = vst.msk [vmem:[#allocation3 + $0x30] sm:$0xff] %vm224, %v1396
        %1429 = vst.msk [vmem:[#allocation3 + $0x38] sm:$0xff] %vm224, %v1397
        %1430 = vst.msk [vmem:[#allocation3 + $0x40] sm:$0xff] %vm224, %v1398
        %1431 = vst.msk [vmem:[#allocation3 + $0x48] sm:$0xff] %vm224, %v1399
        %1432 = vst.msk [vmem:[#allocation3 + $0x50] sm:$0xff] %vm224, %v1400
        %1433 = vst.msk [vmem:[#allocation3 + $0x58] sm:$0xff] %vm224, %v1401
        %1434 = vst.msk [vmem:[#allocation3 + $0x60] sm:$0xff] %vm224, %v1402
        %1435 = vst.msk [vmem:[#allocation3 + $0x68] sm:$0xff] %vm224, %v1403
        %1436 = vst.msk [vmem:[#allocation3 + $0x70] sm:$0xff] %vm224, %v1404
        %1437 = vst.msk [vmem:[#allocation3 + $0x78] sm:$0xff] %vm224, %v1405
        %1438 = vst.msk [vmem:[#allocation3 + $0x80] sm:$0xff] %vm224, %v1406
        %1439 = vst.msk [vmem:[#allocation3 + $0x88] sm:$0xff] %vm224, %v1407
        %1440 = vst.msk [vmem:[#allocation3 + $0x90] sm:$0xff] %vm224, %v1408
        %1441 = vst.msk [vmem:[#allocation3 + $0x98] sm:$0xff] %vm224, %v1409
        %1442 = vst.msk [vmem:[#allocation3 + $0xa0] sm:$0xff] %vm224, %v1410
        %1443 = vst.msk [vmem:[#allocation3 + $0xa8] sm:$0xff] %vm224, %v1411
        %1444 = vst.msk [vmem:[#allocation3 + $0xb0] sm:$0xff] %vm224, %v1412
        %1445 = vst.msk [vmem:[#allocation3 + $0xb8] sm:$0xff] %vm224, %v1413
        %1446 = vst.msk [vmem:[#allocation3 + $0xc0] sm:$0xff] %vm224, %v1414
        %1447 = vst.msk [vmem:[#allocation3 + $0xc8] sm:$0xff] %vm224, %v1415
        %1448 = vst.msk [vmem:[#allocation3 + $0xd0] sm:$0xff] %vm224, %v1416
        %1449 = vst.msk [vmem:[#allocation3 + $0xd8] sm:$0xff] %vm224, %v1417
        %1450 = vst.msk [vmem:[#allocation3 + $0xe0] sm:$0xff] %vm224, %v1418
        %1451 = vst.msk [vmem:[#allocation3 + $0xe8] sm:$0xff] %vm224, %v1419
        %1452 = vst.msk [vmem:[#allocation3 + $0xf0] sm:$0xff] %vm224, %v1420
        %1453 = vst.msk [vmem:[#allocation3 + $0xf8] sm:$0xff] %vm224, %v1421
        %v1454 = vld [vmem:[%s341 + $0x1] sm:$0xff]
        %v1455 = vld [vmem:[%s341 + $0x9] sm:$0xff]
        %v1456 = vld [vmem:[%s341 + $0x19] sm:$0xff]
        %v1457 = vld [vmem:[%s341 + $0x21] sm:$0xff]
        %v1458 = vld [vmem:[%s341 + $0x31] sm:$0xff]
        %v1459 = vld [vmem:[%s341 + $0x39] sm:$0xff]
        %v1460 = vld [vmem:[%s341 + $0x49] sm:$0xff]
        %v1461 = vld [vmem:[%s341 + $0x51] sm:$0xff]
        %v1462 = vld [vmem:[%s341 + $0x61] sm:$0xff]
        %v1463 = vld [vmem:[%s341 + $0x69] sm:$0xff]
        %v1464 = vld [vmem:[%s341 + $0x79] sm:$0xff]
        %v1465 = vld [vmem:[%s341 + $0x81] sm:$0xff]
        %v1466 = vld [vmem:[%s341 + $0x91] sm:$0xff]
        %v1467 = vld [vmem:[%s341 + $0x99] sm:$0xff]
        %v1468 = vld [vmem:[%s341 + $0xa9] sm:$0xff]
        %v1469 = vld [vmem:[%s341 + $0xb1] sm:$0xff]
        %v1470 = vld [vmem:[%s341 + $0xc1] sm:$0xff]
        %v1471 = vld [vmem:[%s341 + $0xc9] sm:$0xff]
        %v1472 = vld [vmem:[%s341 + $0xd9] sm:$0xff]
        %v1473 = vld [vmem:[%s341 + $0xe1] sm:$0xff]
        %v1474 = vld [vmem:[%s341 + $0xf1] sm:$0xff]
        %v1475 = vld [vmem:[%s341 + $0xf9] sm:$0xff]
        %v1476 = vld [vmem:[%s341 + $0x109] sm:$0xff]
        %v1477 = vld [vmem:[%s341 + $0x111] sm:$0xff]
        %v1478 = vld [vmem:[%s341 + $0x121] sm:$0xff]
        %v1479 = vld [vmem:[%s341 + $0x129] sm:$0xff]
        %v1480 = vld [vmem:[%s341 + $0x139] sm:$0xff]
        %v1481 = vld [vmem:[%s341 + $0x141] sm:$0xff]
        %v1482 = vld [vmem:[%s341 + $0x151] sm:$0xff]
        %v1483 = vld [vmem:[%s341 + $0x159] sm:$0xff]
        %v1484 = vld [vmem:[%s341 + $0x169] sm:$0xff]
        %v1485 = vld [vmem:[%s341 + $0x171] sm:$0xff]
        %v1486 = vpack.c.bf16 %v1455, %v1454
        %v1487 = vpack.c.bf16 %v1457, %v1456
        %v1488 = vpack.c.bf16 %v1459, %v1458
        %v1489 = vpack.c.bf16 %v1461, %v1460
        %v1490 = vpack.c.bf16 %v1463, %v1462
        %v1491 = vpack.c.bf16 %v1465, %v1464
        %v1492 = vpack.c.bf16 %v1467, %v1466
        %v1493 = vpack.c.bf16 %v1469, %v1468
        %v1494 = vpack.c.bf16 %v1471, %v1470
        %v1495 = vpack.c.bf16 %v1473, %v1472
        %v1496 = vpack.c.bf16 %v1475, %v1474
        %v1497 = vpack.c.bf16 %v1477, %v1476
        %v1498 = vpack.c.bf16 %v1479, %v1478
        %v1499 = vpack.c.bf16 %v1481, %v1480
        %v1500 = vpack.c.bf16 %v1483, %v1482
        %v1501 = vpack.c.bf16 %v1485, %v1484
        %s1502 = scalar_lea.vmem %s1, 8
        %v1503 = vld [vmem:[%s1502] sm:$0x3]
        %v1505 = vsel %vm224, %v1486, 0
        %v1508 = vsel %vm224, %v1487, 0
        %v1511 = vsel %vm224, %v1488, 0
        %v1514 = vsel %vm224, %v1489, 0
        %v1517 = vsel %vm224, %v1490, 0
        %v1520 = vsel %vm224, %v1491, 0
        %v1523 = vsel %vm224, %v1492, 0
        %v1526 = vsel %vm224, %v1493, 0
        %v1529 = vsel %vm224, %v1494, 0
        %v1532 = vsel %vm224, %v1495, 0
        %v1535 = vsel %vm224, %v1496, 0
        %v1538 = vsel %vm224, %v1497, 0
        %v1541 = vsel %vm224, %v1498, 0
        %v1544 = vsel %vm224, %v1499, 0
        %v1547 = vsel %vm224, %v1500, 0
        %v1550 = vsel %vm224, %v1501, 0
        %v1553 = vsel %vm471, %v1503, 0
        %1555 = vmatpush.bf16.msra.mxu0 0
        %1556 = vmatpush.bf16.msra.mxu0 0
        %1557 = vmatpush.bf16.msra.mxu0 0
        %1558 = vmatpush.bf16.msra.mxu0 0
        %1559 = vmatpush.bf16.msra.mxu0 0
        %1560 = vmatpush.bf16.msra.mxu0 0
        %1561 = vmatpush.bf16.msra.mxu0 0
        %1562 = vmatpush.bf16.msra.mxu0 %v1553
        %1563 = vmatmul.bf16.gmra.mxu0 %v1505
        %v1564 = vpop.f32.mrf.mxu0
        %v1565 = vadd.f32 0.0, %v1564
        %v1566 = vpop.f32.mrf.mxu0
        %v1567 = vadd.f32 0.0, %v1566
        %1568 = vmatmul.bf16.gmra.mxu0 %v1508
        %v1569 = vpop.f32.mrf.mxu0
        %v1570 = vadd.f32 0.0, %v1569
        %v1571 = vpop.f32.mrf.mxu0
        %v1572 = vadd.f32 0.0, %v1571
        %1573 = vmatmul.bf16.gmra.mxu0 %v1511
        %v1574 = vpop.f32.mrf.mxu0
        %v1575 = vadd.f32 0.0, %v1574
        %v1576 = vpop.f32.mrf.mxu0
        %v1577 = vadd.f32 0.0, %v1576
        %1578 = vmatmul.bf16.gmra.mxu0 %v1514
        %v1579 = vpop.f32.mrf.mxu0
        %v1580 = vadd.f32 0.0, %v1579
        %v1581 = vpop.f32.mrf.mxu0
        %v1582 = vadd.f32 0.0, %v1581
        %1583 = vmatmul.bf16.gmra.mxu0 %v1517
        %v1584 = vpop.f32.mrf.mxu0
        %v1585 = vadd.f32 0.0, %v1584
        %v1586 = vpop.f32.mrf.mxu0
        %v1587 = vadd.f32 0.0, %v1586
        %1588 = vmatmul.bf16.gmra.mxu0 %v1520
        %v1589 = vpop.f32.mrf.mxu0
        %v1590 = vadd.f32 0.0, %v1589
        %v1591 = vpop.f32.mrf.mxu0
        %v1592 = vadd.f32 0.0, %v1591
        %1593 = vmatmul.bf16.gmra.mxu0 %v1523
        %v1594 = vpop.f32.mrf.mxu0
        %v1595 = vadd.f32 0.0, %v1594
        %v1596 = vpop.f32.mrf.mxu0
        %v1597 = vadd.f32 0.0, %v1596
        %1598 = vmatmul.bf16.gmra.mxu0 %v1526
        %v1599 = vpop.f32.mrf.mxu0
        %v1600 = vadd.f32 0.0, %v1599
        %v1601 = vpop.f32.mrf.mxu0
        %v1602 = vadd.f32 0.0, %v1601
        %1603 = vmatmul.bf16.gmra.mxu0 %v1529
        %v1604 = vpop.f32.mrf.mxu0
        %v1605 = vadd.f32 0.0, %v1604
        %v1606 = vpop.f32.mrf.mxu0
        %v1607 = vadd.f32 0.0, %v1606
        %1608 = vmatmul.bf16.gmra.mxu0 %v1532
        %v1609 = vpop.f32.mrf.mxu0
        %v1610 = vadd.f32 0.0, %v1609
        %v1611 = vpop.f32.mrf.mxu0
        %v1612 = vadd.f32 0.0, %v1611
        %1613 = vmatmul.bf16.gmra.mxu0 %v1535
        %v1614 = vpop.f32.mrf.mxu0
        %v1615 = vadd.f32 0.0, %v1614
        %v1616 = vpop.f32.mrf.mxu0
        %v1617 = vadd.f32 0.0, %v1616
        %1618 = vmatmul.bf16.gmra.mxu0 %v1538
        %v1619 = vpop.f32.mrf.mxu0
        %v1620 = vadd.f32 0.0, %v1619
        %v1621 = vpop.f32.mrf.mxu0
        %v1622 = vadd.f32 0.0, %v1621
        %1623 = vmatmul.bf16.gmra.mxu0 %v1541
        %v1624 = vpop.f32.mrf.mxu0
        %v1625 = vadd.f32 0.0, %v1624
        %v1626 = vpop.f32.mrf.mxu0
        %v1627 = vadd.f32 0.0, %v1626
        %1628 = vmatmul.bf16.gmra.mxu0 %v1544
        %v1629 = vpop.f32.mrf.mxu0
        %v1630 = vadd.f32 0.0, %v1629
        %v1631 = vpop.f32.mrf.mxu0
        %v1632 = vadd.f32 0.0, %v1631
        %1633 = vmatmul.bf16.gmra.mxu0 %v1547
        %v1634 = vpop.f32.mrf.mxu0
        %v1635 = vadd.f32 0.0, %v1634
        %v1636 = vpop.f32.mrf.mxu0
        %v1637 = vadd.f32 0.0, %v1636
        %1638 = vmatmul.bf16.gmra.mxu0 %v1550
        %v1639 = vpop.f32.mrf.mxu0
        %v1640 = vadd.f32 0.0, %v1639
        %v1641 = vpop.f32.mrf.mxu0
        %v1642 = vadd.f32 0.0, %v1641
        %1643 = vdwg.mxu0
        %v1644 = vld [vmem:[#allocation3] sm:$0xff]
        %v1645 = vld [vmem:[#allocation3 + $0x8] sm:$0xff]
        %v1646 = vld [vmem:[#allocation3 + $0x10] sm:$0xff]
        %v1647 = vld [vmem:[#allocation3 + $0x18] sm:$0xff]
        %v1648 = vld [vmem:[#allocation3 + $0x20] sm:$0xff]
        %v1649 = vld [vmem:[#allocation3 + $0x28] sm:$0xff]
        %v1650 = vld [vmem:[#allocation3 + $0x30] sm:$0xff]
        %v1651 = vld [vmem:[#allocation3 + $0x38] sm:$0xff]
        %v1652 = vld [vmem:[#allocation3 + $0x40] sm:$0xff]
        %v1653 = vld [vmem:[#allocation3 + $0x48] sm:$0xff]
        %v1654 = vld [vmem:[#allocation3 + $0x50] sm:$0xff]
        %v1655 = vld [vmem:[#allocation3 + $0x58] sm:$0xff]
        %v1656 = vld [vmem:[#allocation3 + $0x60] sm:$0xff]
        %v1657 = vld [vmem:[#allocation3 + $0x68] sm:$0xff]
        %v1658 = vld [vmem:[#allocation3 + $0x70] sm:$0xff]
        %v1659 = vld [vmem:[#allocation3 + $0x78] sm:$0xff]
        %v1660 = vld [vmem:[#allocation3 + $0x80] sm:$0xff]
        %v1661 = vld [vmem:[#allocation3 + $0x88] sm:$0xff]
        %v1662 = vld [vmem:[#allocation3 + $0x90] sm:$0xff]
        %v1663 = vld [vmem:[#allocation3 + $0x98] sm:$0xff]
        %v1664 = vld [vmem:[#allocation3 + $0xa0] sm:$0xff]
        %v1665 = vld [vmem:[#allocation3 + $0xa8] sm:$0xff]
        %v1666 = vld [vmem:[#allocation3 + $0xb0] sm:$0xff]
        %v1667 = vld [vmem:[#allocation3 + $0xb8] sm:$0xff]
        %v1668 = vld [vmem:[#allocation3 + $0xc0] sm:$0xff]
        %v1669 = vld [vmem:[#allocation3 + $0xc8] sm:$0xff]
        %v1670 = vld [vmem:[#allocation3 + $0xd0] sm:$0xff]
        %v1671 = vld [vmem:[#allocation3 + $0xd8] sm:$0xff]
        %v1672 = vld [vmem:[#allocation3 + $0xe0] sm:$0xff]
        %v1673 = vld [vmem:[#allocation3 + $0xe8] sm:$0xff]
        %v1674 = vld [vmem:[#allocation3 + $0xf0] sm:$0xff]
        %v1675 = vld [vmem:[#allocation3 + $0xf8] sm:$0xff]
        %v1676 = vadd.f32 %v1644, %v1565
        %v1677 = vadd.f32 %v1645, %v1567
        %v1678 = vadd.f32 %v1646, %v1570
        %v1679 = vadd.f32 %v1647, %v1572
        %v1680 = vadd.f32 %v1648, %v1575
        %v1681 = vadd.f32 %v1649, %v1577
        %v1682 = vadd.f32 %v1650, %v1580
        %v1683 = vadd.f32 %v1651, %v1582
        %v1684 = vadd.f32 %v1652, %v1585
        %v1685 = vadd.f32 %v1653, %v1587
        %v1686 = vadd.f32 %v1654, %v1590
        %v1687 = vadd.f32 %v1655, %v1592
        %v1688 = vadd.f32 %v1656, %v1595
        %v1689 = vadd.f32 %v1657, %v1597
        %v1690 = vadd.f32 %v1658, %v1600
        %v1691 = vadd.f32 %v1659, %v1602
        %v1692 = vadd.f32 %v1660, %v1605
        %v1693 = vadd.f32 %v1661, %v1607
        %v1694 = vadd.f32 %v1662, %v1610
        %v1695 = vadd.f32 %v1663, %v1612
        %v1696 = vadd.f32 %v1664, %v1615
        %v1697 = vadd.f32 %v1665, %v1617
        %v1698 = vadd.f32 %v1666, %v1620
        %v1699 = vadd.f32 %v1667, %v1622
        %v1700 = vadd.f32 %v1668, %v1625
        %v1701 = vadd.f32 %v1669, %v1627
        %v1702 = vadd.f32 %v1670, %v1630
        %v1703 = vadd.f32 %v1671, %v1632
        %v1704 = vadd.f32 %v1672, %v1635
        %v1705 = vadd.f32 %v1673, %v1637
        %v1706 = vadd.f32 %v1674, %v1640
        %v1707 = vadd.f32 %v1675, %v1642
        %1708 = vst.msk [vmem:[#allocation3] sm:$0xff] %vm224, %v1676
        %1709 = vst.msk [vmem:[#allocation3 + $0x8] sm:$0xff] %vm224, %v1677
        %1710 = vst.msk [vmem:[#allocation3 + $0x10] sm:$0xff] %vm224, %v1678
        %1711 = vst.msk [vmem:[#allocation3 + $0x18] sm:$0xff] %vm224, %v1679
        %1712 = vst.msk [vmem:[#allocation3 + $0x20] sm:$0xff] %vm224, %v1680
        %1713 = vst.msk [vmem:[#allocation3 + $0x28] sm:$0xff] %vm224, %v1681
        %1714 = vst.msk [vmem:[#allocation3 + $0x30] sm:$0xff] %vm224, %v1682
        %1715 = vst.msk [vmem:[#allocation3 + $0x38] sm:$0xff] %vm224, %v1683
        %1716 = vst.msk [vmem:[#allocation3 + $0x40] sm:$0xff] %vm224, %v1684
        %1717 = vst.msk [vmem:[#allocation3 + $0x48] sm:$0xff] %vm224, %v1685
        %1718 = vst.msk [vmem:[#allocation3 + $0x50] sm:$0xff] %vm224, %v1686
        %1719 = vst.msk [vmem:[#allocation3 + $0x58] sm:$0xff] %vm224, %v1687
        %1720 = vst.msk [vmem:[#allocation3 + $0x60] sm:$0xff] %vm224, %v1688
        %1721 = vst.msk [vmem:[#allocation3 + $0x68] sm:$0xff] %vm224, %v1689
        %1722 = vst.msk [vmem:[#allocation3 + $0x70] sm:$0xff] %vm224, %v1690
        %1723 = vst.msk [vmem:[#allocation3 + $0x78] sm:$0xff] %vm224, %v1691
        %1724 = vst.msk [vmem:[#allocation3 + $0x80] sm:$0xff] %vm224, %v1692
        %1725 = vst.msk [vmem:[#allocation3 + $0x88] sm:$0xff] %vm224, %v1693
        %1726 = vst.msk [vmem:[#allocation3 + $0x90] sm:$0xff] %vm224, %v1694
        %1727 = vst.msk [vmem:[#allocation3 + $0x98] sm:$0xff] %vm224, %v1695
        %1728 = vst.msk [vmem:[#allocation3 + $0xa0] sm:$0xff] %vm224, %v1696
        %1729 = vst.msk [vmem:[#allocation3 + $0xa8] sm:$0xff] %vm224, %v1697
        %1730 = vst.msk [vmem:[#allocation3 + $0xb0] sm:$0xff] %vm224, %v1698
        %1731 = vst.msk [vmem:[#allocation3 + $0xb8] sm:$0xff] %vm224, %v1699
        %1732 = vst.msk [vmem:[#allocation3 + $0xc0] sm:$0xff] %vm224, %v1700
        %1733 = vst.msk [vmem:[#allocation3 + $0xc8] sm:$0xff] %vm224, %v1701
        %1734 = vst.msk [vmem:[#allocation3 + $0xd0] sm:$0xff] %vm224, %v1702
        %1735 = vst.msk [vmem:[#allocation3 + $0xd8] sm:$0xff] %vm224, %v1703
        %1736 = vst.msk [vmem:[#allocation3 + $0xe0] sm:$0xff] %vm224, %v1704
        %1737 = vst.msk [vmem:[#allocation3 + $0xe8] sm:$0xff] %vm224, %v1705
        %1738 = vst.msk [vmem:[#allocation3 + $0xf0] sm:$0xff] %vm224, %v1706
        %1739 = vst.msk [vmem:[#allocation3 + $0xf8] sm:$0xff] %vm224, %v1707
        %v1740 = vld [vmem:[%s341 + $0x2] sm:$0xff]
        %v1741 = vld [vmem:[%s341 + $0xa] sm:$0xff]
        %v1742 = vld [vmem:[%s341 + $0x1a] sm:$0xff]
        %v1743 = vld [vmem:[%s341 + $0x22] sm:$0xff]
        %v1744 = vld [vmem:[%s341 + $0x32] sm:$0xff]
        %v1745 = vld [vmem:[%s341 + $0x3a] sm:$0xff]
        %v1746 = vld [vmem:[%s341 + $0x4a] sm:$0xff]
        %v1747 = vld [vmem:[%s341 + $0x52] sm:$0xff]
        %v1748 = vld [vmem:[%s341 + $0x62] sm:$0xff]
        %v1749 = vld [vmem:[%s341 + $0x6a] sm:$0xff]
        %v1750 = vld [vmem:[%s341 + $0x7a] sm:$0xff]
        %v1751 = vld [vmem:[%s341 + $0x82] sm:$0xff]
        %v1752 = vld [vmem:[%s341 + $0x92] sm:$0xff]
        %v1753 = vld [vmem:[%s341 + $0x9a] sm:$0xff]
        %v1754 = vld [vmem:[%s341 + $0xaa] sm:$0xff]
        %v1755 = vld [vmem:[%s341 + $0xb2] sm:$0xff]
        %v1756 = vld [vmem:[%s341 + $0xc2] sm:$0xff]
        %v1757 = vld [vmem:[%s341 + $0xca] sm:$0xff]
        %v1758 = vld [vmem:[%s341 + $0xda] sm:$0xff]
        %v1759 = vld [vmem:[%s341 + $0xe2] sm:$0xff]
        %v1760 = vld [vmem:[%s341 + $0xf2] sm:$0xff]
        %v1761 = vld [vmem:[%s341 + $0xfa] sm:$0xff]
        %v1762 = vld [vmem:[%s341 + $0x10a] sm:$0xff]
        %v1763 = vld [vmem:[%s341 + $0x112] sm:$0xff]
        %v1764 = vld [vmem:[%s341 + $0x122] sm:$0xff]
        %v1765 = vld [vmem:[%s341 + $0x12a] sm:$0xff]
        %v1766 = vld [vmem:[%s341 + $0x13a] sm:$0xff]
        %v1767 = vld [vmem:[%s341 + $0x142] sm:$0xff]
        %v1768 = vld [vmem:[%s341 + $0x152] sm:$0xff]
        %v1769 = vld [vmem:[%s341 + $0x15a] sm:$0xff]
        %v1770 = vld [vmem:[%s341 + $0x16a] sm:$0xff]
        %v1771 = vld [vmem:[%s341 + $0x172] sm:$0xff]
        %v1772 = vpack.c.bf16 %v1741, %v1740
        %v1773 = vpack.c.bf16 %v1743, %v1742
        %v1774 = vpack.c.bf16 %v1745, %v1744
        %v1775 = vpack.c.bf16 %v1747, %v1746
        %v1776 = vpack.c.bf16 %v1749, %v1748
        %v1777 = vpack.c.bf16 %v1751, %v1750
        %v1778 = vpack.c.bf16 %v1753, %v1752
        %v1779 = vpack.c.bf16 %v1755, %v1754
        %v1780 = vpack.c.bf16 %v1757, %v1756
        %v1781 = vpack.c.bf16 %v1759, %v1758
        %v1782 = vpack.c.bf16 %v1761, %v1760
        %v1783 = vpack.c.bf16 %v1763, %v1762
        %v1784 = vpack.c.bf16 %v1765, %v1764
        %v1785 = vpack.c.bf16 %v1767, %v1766
        %v1786 = vpack.c.bf16 %v1769, %v1768
        %v1787 = vpack.c.bf16 %v1771, %v1770
        %s1788 = scalar_lea.vmem %s1, 10
        %v1789 = vld [vmem:[%s1788] sm:$0x3]
        %v1791 = vsel %vm224, %v1772, 0
        %v1794 = vsel %vm224, %v1773, 0
        %v1797 = vsel %vm224, %v1774, 0
        %v1800 = vsel %vm224, %v1775, 0
        %v1803 = vsel %vm224, %v1776, 0
        %v1806 = vsel %vm224, %v1777, 0
        %v1809 = vsel %vm224, %v1778, 0
        %v1812 = vsel %vm224, %v1779, 0
        %v1815 = vsel %vm224, %v1780, 0
        %v1818 = vsel %vm224, %v1781, 0
        %v1821 = vsel %vm224, %v1782, 0
        %v1824 = vsel %vm224, %v1783, 0
        %v1827 = vsel %vm224, %v1784, 0
        %v1830 = vsel %vm224, %v1785, 0
        %v1833 = vsel %vm224, %v1786, 0
        %v1836 = vsel %vm224, %v1787, 0
        %v1839 = vsel %vm471, %v1789, 0
        %1841 = vmatpush.bf16.msra.mxu0 0
        %1842 = vmatpush.bf16.msra.mxu0 0
        %1843 = vmatpush.bf16.msra.mxu0 0
        %1844 = vmatpush.bf16.msra.mxu0 0
        %1845 = vmatpush.bf16.msra.mxu0 0
        %1846 = vmatpush.bf16.msra.mxu0 0
        %1847 = vmatpush.bf16.msra.mxu0 0
        %1848 = vmatpush.bf16.msra.mxu0 %v1839
        %1849 = vmatmul.bf16.gmra.mxu0 %v1791
        %v1850 = vpop.f32.mrf.mxu0
        %v1851 = vadd.f32 0.0, %v1850
        %v1852 = vpop.f32.mrf.mxu0
        %v1853 = vadd.f32 0.0, %v1852
        %1854 = vmatmul.bf16.gmra.mxu0 %v1794
        %v1855 = vpop.f32.mrf.mxu0
        %v1856 = vadd.f32 0.0, %v1855
        %v1857 = vpop.f32.mrf.mxu0
        %v1858 = vadd.f32 0.0, %v1857
        %1859 = vmatmul.bf16.gmra.mxu0 %v1797
        %v1860 = vpop.f32.mrf.mxu0
        %v1861 = vadd.f32 0.0, %v1860
        %v1862 = vpop.f32.mrf.mxu0
        %v1863 = vadd.f32 0.0, %v1862
        %1864 = vmatmul.bf16.gmra.mxu0 %v1800
        %v1865 = vpop.f32.mrf.mxu0
        %v1866 = vadd.f32 0.0, %v1865
        %v1867 = vpop.f32.mrf.mxu0
        %v1868 = vadd.f32 0.0, %v1867
        %1869 = vmatmul.bf16.gmra.mxu0 %v1803
        %v1870 = vpop.f32.mrf.mxu0
        %v1871 = vadd.f32 0.0, %v1870
        %v1872 = vpop.f32.mrf.mxu0
        %v1873 = vadd.f32 0.0, %v1872
        %1874 = vmatmul.bf16.gmra.mxu0 %v1806
        %v1875 = vpop.f32.mrf.mxu0
        %v1876 = vadd.f32 0.0, %v1875
        %v1877 = vpop.f32.mrf.mxu0
        %v1878 = vadd.f32 0.0, %v1877
        %1879 = vmatmul.bf16.gmra.mxu0 %v1809
        %v1880 = vpop.f32.mrf.mxu0
        %v1881 = vadd.f32 0.0, %v1880
        %v1882 = vpop.f32.mrf.mxu0
        %v1883 = vadd.f32 0.0, %v1882
        %1884 = vmatmul.bf16.gmra.mxu0 %v1812
        %v1885 = vpop.f32.mrf.mxu0
        %v1886 = vadd.f32 0.0, %v1885
        %v1887 = vpop.f32.mrf.mxu0
        %v1888 = vadd.f32 0.0, %v1887
        %1889 = vmatmul.bf16.gmra.mxu0 %v1815
        %v1890 = vpop.f32.mrf.mxu0
        %v1891 = vadd.f32 0.0, %v1890
        %v1892 = vpop.f32.mrf.mxu0
        %v1893 = vadd.f32 0.0, %v1892
        %1894 = vmatmul.bf16.gmra.mxu0 %v1818
        %v1895 = vpop.f32.mrf.mxu0
        %v1896 = vadd.f32 0.0, %v1895
        %v1897 = vpop.f32.mrf.mxu0
        %v1898 = vadd.f32 0.0, %v1897
        %1899 = vmatmul.bf16.gmra.mxu0 %v1821
        %v1900 = vpop.f32.mrf.mxu0
        %v1901 = vadd.f32 0.0, %v1900
        %v1902 = vpop.f32.mrf.mxu0
        %v1903 = vadd.f32 0.0, %v1902
        %1904 = vmatmul.bf16.gmra.mxu0 %v1824
        %v1905 = vpop.f32.mrf.mxu0
        %v1906 = vadd.f32 0.0, %v1905
        %v1907 = vpop.f32.mrf.mxu0
        %v1908 = vadd.f32 0.0, %v1907
        %1909 = vmatmul.bf16.gmra.mxu0 %v1827
        %v1910 = vpop.f32.mrf.mxu0
        %v1911 = vadd.f32 0.0, %v1910
        %v1912 = vpop.f32.mrf.mxu0
        %v1913 = vadd.f32 0.0, %v1912
        %1914 = vmatmul.bf16.gmra.mxu0 %v1830
        %v1915 = vpop.f32.mrf.mxu0
        %v1916 = vadd.f32 0.0, %v1915
        %v1917 = vpop.f32.mrf.mxu0
        %v1918 = vadd.f32 0.0, %v1917
        %1919 = vmatmul.bf16.gmra.mxu0 %v1833
        %v1920 = vpop.f32.mrf.mxu0
        %v1921 = vadd.f32 0.0, %v1920
        %v1922 = vpop.f32.mrf.mxu0
        %v1923 = vadd.f32 0.0, %v1922
        %1924 = vmatmul.bf16.gmra.mxu0 %v1836
        %v1925 = vpop.f32.mrf.mxu0
        %v1926 = vadd.f32 0.0, %v1925
        %v1927 = vpop.f32.mrf.mxu0
        %v1928 = vadd.f32 0.0, %v1927
        %1929 = vdwg.mxu0
        %v1930 = vld [vmem:[#allocation3] sm:$0xff]
        %v1931 = vld [vmem:[#allocation3 + $0x8] sm:$0xff]
        %v1932 = vld [vmem:[#allocation3 + $0x10] sm:$0xff]
        %v1933 = vld [vmem:[#allocation3 + $0x18] sm:$0xff]
        %v1934 = vld [vmem:[#allocation3 + $0x20] sm:$0xff]
        %v1935 = vld [vmem:[#allocation3 + $0x28] sm:$0xff]
        %v1936 = vld [vmem:[#allocation3 + $0x30] sm:$0xff]
        %v1937 = vld [vmem:[#allocation3 + $0x38] sm:$0xff]
        %v1938 = vld [vmem:[#allocation3 + $0x40] sm:$0xff]
        %v1939 = vld [vmem:[#allocation3 + $0x48] sm:$0xff]
        %v1940 = vld [vmem:[#allocation3 + $0x50] sm:$0xff]
        %v1941 = vld [vmem:[#allocation3 + $0x58] sm:$0xff]
        %v1942 = vld [vmem:[#allocation3 + $0x60] sm:$0xff]
        %v1943 = vld [vmem:[#allocation3 + $0x68] sm:$0xff]
        %v1944 = vld [vmem:[#allocation3 + $0x70] sm:$0xff]
        %v1945 = vld [vmem:[#allocation3 + $0x78] sm:$0xff]
        %v1946 = vld [vmem:[#allocation3 + $0x80] sm:$0xff]
        %v1947 = vld [vmem:[#allocation3 + $0x88] sm:$0xff]
        %v1948 = vld [vmem:[#allocation3 + $0x90] sm:$0xff]
        %v1949 = vld [vmem:[#allocation3 + $0x98] sm:$0xff]
        %v1950 = vld [vmem:[#allocation3 + $0xa0] sm:$0xff]
        %v1951 = vld [vmem:[#allocation3 + $0xa8] sm:$0xff]
        %v1952 = vld [vmem:[#allocation3 + $0xb0] sm:$0xff]
        %v1953 = vld [vmem:[#allocation3 + $0xb8] sm:$0xff]
        %v1954 = vld [vmem:[#allocation3 + $0xc0] sm:$0xff]
        %v1955 = vld [vmem:[#allocation3 + $0xc8] sm:$0xff]
        %v1956 = vld [vmem:[#allocation3 + $0xd0] sm:$0xff]
        %v1957 = vld [vmem:[#allocation3 + $0xd8] sm:$0xff]
        %v1958 = vld [vmem:[#allocation3 + $0xe0] sm:$0xff]
        %v1959 = vld [vmem:[#allocation3 + $0xe8] sm:$0xff]
        %v1960 = vld [vmem:[#allocation3 + $0xf0] sm:$0xff]
        %v1961 = vld [vmem:[#allocation3 + $0xf8] sm:$0xff]
        %v1962 = vadd.f32 %v1930, %v1851
        %v1963 = vadd.f32 %v1931, %v1853
        %v1964 = vadd.f32 %v1932, %v1856
        %v1965 = vadd.f32 %v1933, %v1858
        %v1966 = vadd.f32 %v1934, %v1861
        %v1967 = vadd.f32 %v1935, %v1863
        %v1968 = vadd.f32 %v1936, %v1866
        %v1969 = vadd.f32 %v1937, %v1868
        %v1970 = vadd.f32 %v1938, %v1871
        %v1971 = vadd.f32 %v1939, %v1873
        %v1972 = vadd.f32 %v1940, %v1876
        %v1973 = vadd.f32 %v1941, %v1878
        %v1974 = vadd.f32 %v1942, %v1881
        %v1975 = vadd.f32 %v1943, %v1883
        %v1976 = vadd.f32 %v1944, %v1886
        %v1977 = vadd.f32 %v1945, %v1888
        %v1978 = vadd.f32 %v1946, %v1891
        %v1979 = vadd.f32 %v1947, %v1893
        %v1980 = vadd.f32 %v1948, %v1896
        %v1981 = vadd.f32 %v1949, %v1898
        %v1982 = vadd.f32 %v1950, %v1901
        %v1983 = vadd.f32 %v1951, %v1903
        %v1984 = vadd.f32 %v1952, %v1906
        %v1985 = vadd.f32 %v1953, %v1908
        %v1986 = vadd.f32 %v1954, %v1911
        %v1987 = vadd.f32 %v1955, %v1913
        %v1988 = vadd.f32 %v1956, %v1916
        %v1989 = vadd.f32 %v1957, %v1918
        %v1990 = vadd.f32 %v1958, %v1921
        %v1991 = vadd.f32 %v1959, %v1923
        %v1992 = vadd.f32 %v1960, %v1926
        %v1993 = vadd.f32 %v1961, %v1928
        %1994 = vst.msk [vmem:[#allocation3] sm:$0xff] %vm224, %v1962
        %1995 = vst.msk [vmem:[#allocation3 + $0x8] sm:$0xff] %vm224, %v1963
        %1996 = vst.msk [vmem:[#allocation3 + $0x10] sm:$0xff] %vm224, %v1964
        %1997 = vst.msk [vmem:[#allocation3 + $0x18] sm:$0xff] %vm224, %v1965
        %1998 = vst.msk [vmem:[#allocation3 + $0x20] sm:$0xff] %vm224, %v1966
        %1999 = vst.msk [vmem:[#allocation3 + $0x28] sm:$0xff] %vm224, %v1967
        %2000 = vst.msk [vmem:[#allocation3 + $0x30] sm:$0xff] %vm224, %v1968
        %2001 = vst.msk [vmem:[#allocation3 + $0x38] sm:$0xff] %vm224, %v1969
        %2002 = vst.msk [vmem:[#allocation3 + $0x40] sm:$0xff] %vm224, %v1970
        %2003 = vst.msk [vmem:[#allocation3 + $0x48] sm:$0xff] %vm224, %v1971
        %2004 = vst.msk [vmem:[#allocation3 + $0x50] sm:$0xff] %vm224, %v1972
        %2005 = vst.msk [vmem:[#allocation3 + $0x58] sm:$0xff] %vm224, %v1973
        %2006 = vst.msk [vmem:[#allocation3 + $0x60] sm:$0xff] %vm224, %v1974
        %2007 = vst.msk [vmem:[#allocation3 + $0x68] sm:$0xff] %vm224, %v1975
        %2008 = vst.msk [vmem:[#allocation3 + $0x70] sm:$0xff] %vm224, %v1976
        %2009 = vst.msk [vmem:[#allocation3 + $0x78] sm:$0xff] %vm224, %v1977
        %2010 = vst.msk [vmem:[#allocation3 + $0x80] sm:$0xff] %vm224, %v1978
        %2011 = vst.msk [vmem:[#allocation3 + $0x88] sm:$0xff] %vm224, %v1979
        %2012 = vst.msk [vmem:[#allocation3 + $0x90] sm:$0xff] %vm224, %v1980
        %2013 = vst.msk [vmem:[#allocation3 + $0x98] sm:$0xff] %vm224, %v1981
        %2014 = vst.msk [vmem:[#allocation3 + $0xa0] sm:$0xff] %vm224, %v1982
        %2015 = vst.msk [vmem:[#allocation3 + $0xa8] sm:$0xff] %vm224, %v1983
        %2016 = vst.msk [vmem:[#allocation3 + $0xb0] sm:$0xff] %vm224, %v1984
        %2017 = vst.msk [vmem:[#allocation3 + $0xb8] sm:$0xff] %vm224, %v1985
        %2018 = vst.msk [vmem:[#allocation3 + $0xc0] sm:$0xff] %vm224, %v1986
        %2019 = vst.msk [vmem:[#allocation3 + $0xc8] sm:$0xff] %vm224, %v1987
        %2020 = vst.msk [vmem:[#allocation3 + $0xd0] sm:$0xff] %vm224, %v1988
        %2021 = vst.msk [vmem:[#allocation3 + $0xd8] sm:$0xff] %vm224, %v1989
        %2022 = vst.msk [vmem:[#allocation3 + $0xe0] sm:$0xff] %vm224, %v1990
        %2023 = vst.msk [vmem:[#allocation3 + $0xe8] sm:$0xff] %vm224, %v1991
        %2024 = vst.msk [vmem:[#allocation3 + $0xf0] sm:$0xff] %vm224, %v1992
        %2025 = vst.msk [vmem:[#allocation3 + $0xf8] sm:$0xff] %vm224, %v1993
        %s2026 = scalar_lea.vmem [#allocation2], 48
        %v2027 = vld [vmem:[%s2026] sm:$0xff]
        %v2028 = vld [vmem:[%s2026 + $0x8] sm:$0xff]
        %v2029 = vld [vmem:[%s2026 + $0x18] sm:$0xff]
        %v2030 = vld [vmem:[%s2026 + $0x20] sm:$0xff]
        %v2031 = vld [vmem:[%s2026 + $0x30] sm:$0xff]
        %v2032 = vld [vmem:[%s2026 + $0x38] sm:$0xff]
        %v2033 = vld [vmem:[%s2026 + $0x48] sm:$0xff]
        %v2034 = vld [vmem:[%s2026 + $0x50] sm:$0xff]
        %v2035 = vld [vmem:[%s2026 + $0x60] sm:$0xff]
        %v2036 = vld [vmem:[%s2026 + $0x68] sm:$0xff]
        %v2037 = vld [vmem:[%s2026 + $0x78] sm:$0xff]
        %v2038 = vld [vmem:[%s2026 + $0x80] sm:$0xff]
        %v2039 = vld [vmem:[%s2026 + $0x90] sm:$0xff]
        %v2040 = vld [vmem:[%s2026 + $0x98] sm:$0xff]
        %v2041 = vld [vmem:[%s2026 + $0xa8] sm:$0xff]
        %v2042 = vld [vmem:[%s2026 + $0xb0] sm:$0xff]
        %v2043 = vld [vmem:[%s2026 + $0xc0] sm:$0xff]
        %v2044 = vld [vmem:[%s2026 + $0xc8] sm:$0xff]
        %v2045 = vld [vmem:[%s2026 + $0xd8] sm:$0xff]
        %v2046 = vld [vmem:[%s2026 + $0xe0] sm:$0xff]
        %v2047 = vld [vmem:[%s2026 + $0xf0] sm:$0xff]
        %v2048 = vld [vmem:[%s2026 + $0xf8] sm:$0xff]
        %v2049 = vld [vmem:[%s2026 + $0x108] sm:$0xff]
        %v2050 = vld [vmem:[%s2026 + $0x110] sm:$0xff]
        %v2051 = vld [vmem:[%s2026 + $0x120] sm:$0xff]
        %v2052 = vld [vmem:[%s2026 + $0x128] sm:$0xff]
        %v2053 = vld [vmem:[%s2026 + $0x138] sm:$0xff]
        %v2054 = vld [vmem:[%s2026 + $0x140] sm:$0xff]
        %v2055 = vld [vmem:[%s2026 + $0x150] sm:$0xff]
        %v2056 = vld [vmem:[%s2026 + $0x158] sm:$0xff]
        %v2057 = vld [vmem:[%s2026 + $0x168] sm:$0xff]
        %v2058 = vld [vmem:[%s2026 + $0x170] sm:$0xff]
        %v2059 = vpack.c.bf16 %v2028, %v2027
        %v2060 = vpack.c.bf16 %v2030, %v2029
        %v2061 = vpack.c.bf16 %v2032, %v2031
        %v2062 = vpack.c.bf16 %v2034, %v2033
        %v2063 = vpack.c.bf16 %v2036, %v2035
        %v2064 = vpack.c.bf16 %v2038, %v2037
        %v2065 = vpack.c.bf16 %v2040, %v2039
        %v2066 = vpack.c.bf16 %v2042, %v2041
        %v2067 = vpack.c.bf16 %v2044, %v2043
        %v2068 = vpack.c.bf16 %v2046, %v2045
        %v2069 = vpack.c.bf16 %v2048, %v2047
        %v2070 = vpack.c.bf16 %v2050, %v2049
        %v2071 = vpack.c.bf16 %v2052, %v2051
        %v2072 = vpack.c.bf16 %v2054, %v2053
        %v2073 = vpack.c.bf16 %v2056, %v2055
        %v2074 = vpack.c.bf16 %v2058, %v2057
        %s2075 = scalar_lea.vmem %s1, 12
        %v2076 = vld [vmem:[%s2075] sm:$0x3]
        %v2078 = vsel %vm224, %v2059, 0
        %v2081 = vsel %vm224, %v2060, 0
        %v2084 = vsel %vm224, %v2061, 0
        %v2087 = vsel %vm224, %v2062, 0
        %v2090 = vsel %vm224, %v2063, 0
        %v2093 = vsel %vm224, %v2064, 0
        %v2096 = vsel %vm224, %v2065, 0
        %v2099 = vsel %vm224, %v2066, 0
        %v2102 = vsel %vm224, %v2067, 0
        %v2105 = vsel %vm224, %v2068, 0
        %v2108 = vsel %vm224, %v2069, 0
        %v2111 = vsel %vm224, %v2070, 0
        %v2114 = vsel %vm224, %v2071, 0
        %v2117 = vsel %vm224, %v2072, 0
        %v2120 = vsel %vm224, %v2073, 0
        %v2123 = vsel %vm224, %v2074, 0
        %v2126 = vsel %vm471, %v2076, 0
        %2128 = vmatpush.bf16.msra.mxu0 0
        %2129 = vmatpush.bf16.msra.mxu0 0
        %2130 = vmatpush.bf16.msra.mxu0 0
        %2131 = vmatpush.bf16.msra.mxu0 0
        %2132 = vmatpush.bf16.msra.mxu0 0
        %2133 = vmatpush.bf16.msra.mxu0 0
        %2134 = vmatpush.bf16.msra.mxu0 0
        %2135 = vmatpush.bf16.msra.mxu0 %v2126
        %2136 = vmatmul.bf16.gmra.mxu0 %v2078
        %v2137 = vpop.f32.mrf.mxu0
        %v2138 = vadd.f32 0.0, %v2137
        %v2139 = vpop.f32.mrf.mxu0
        %v2140 = vadd.f32 0.0, %v2139
        %2141 = vmatmul.bf16.gmra.mxu0 %v2081
        %v2142 = vpop.f32.mrf.mxu0
        %v2143 = vadd.f32 0.0, %v2142
        %v2144 = vpop.f32.mrf.mxu0
        %v2145 = vadd.f32 0.0, %v2144
        %2146 = vmatmul.bf16.gmra.mxu0 %v2084
        %v2147 = vpop.f32.mrf.mxu0
        %v2148 = vadd.f32 0.0, %v2147
        %v2149 = vpop.f32.mrf.mxu0
        %v2150 = vadd.f32 0.0, %v2149
        %2151 = vmatmul.bf16.gmra.mxu0 %v2087
        %v2152 = vpop.f32.mrf.mxu0
        %v2153 = vadd.f32 0.0, %v2152
        %v2154 = vpop.f32.mrf.mxu0
        %v2155 = vadd.f32 0.0, %v2154
        %2156 = vmatmul.bf16.gmra.mxu0 %v2090
        %v2157 = vpop.f32.mrf.mxu0
        %v2158 = vadd.f32 0.0, %v2157
        %v2159 = vpop.f32.mrf.mxu0
        %v2160 = vadd.f32 0.0, %v2159
        %2161 = vmatmul.bf16.gmra.mxu0 %v2093
        %v2162 = vpop.f32.mrf.mxu0
        %v2163 = vadd.f32 0.0, %v2162
        %v2164 = vpop.f32.mrf.mxu0
        %v2165 = vadd.f32 0.0, %v2164
        %2166 = vmatmul.bf16.gmra.mxu0 %v2096
        %v2167 = vpop.f32.mrf.mxu0
        %v2168 = vadd.f32 0.0, %v2167
        %v2169 = vpop.f32.mrf.mxu0
        %v2170 = vadd.f32 0.0, %v2169
        %2171 = vmatmul.bf16.gmra.mxu0 %v2099
        %v2172 = vpop.f32.mrf.mxu0
        %v2173 = vadd.f32 0.0, %v2172
        %v2174 = vpop.f32.mrf.mxu0
        %v2175 = vadd.f32 0.0, %v2174
        %2176 = vmatmul.bf16.gmra.mxu0 %v2102
        %v2177 = vpop.f32.mrf.mxu0
        %v2178 = vadd.f32 0.0, %v2177
        %v2179 = vpop.f32.mrf.mxu0
        %v2180 = vadd.f32 0.0, %v2179
        %2181 = vmatmul.bf16.gmra.mxu0 %v2105
        %v2182 = vpop.f32.mrf.mxu0
        %v2183 = vadd.f32 0.0, %v2182
        %v2184 = vpop.f32.mrf.mxu0
        %v2185 = vadd.f32 0.0, %v2184
        %2186 = vmatmul.bf16.gmra.mxu0 %v2108
        %v2187 = vpop.f32.mrf.mxu0
        %v2188 = vadd.f32 0.0, %v2187
        %v2189 = vpop.f32.mrf.mxu0
        %v2190 = vadd.f32 0.0, %v2189
        %2191 = vmatmul.bf16.gmra.mxu0 %v2111
        %v2192 = vpop.f32.mrf.mxu0
        %v2193 = vadd.f32 0.0, %v2192
        %v2194 = vpop.f32.mrf.mxu0
        %v2195 = vadd.f32 0.0, %v2194
        %2196 = vmatmul.bf16.gmra.mxu0 %v2114
        %v2197 = vpop.f32.mrf.mxu0
        %v2198 = vadd.f32 0.0, %v2197
        %v2199 = vpop.f32.mrf.mxu0
        %v2200 = vadd.f32 0.0, %v2199
        %2201 = vmatmul.bf16.gmra.mxu0 %v2117
        %v2202 = vpop.f32.mrf.mxu0
        %v2203 = vadd.f32 0.0, %v2202
        %v2204 = vpop.f32.mrf.mxu0
        %v2205 = vadd.f32 0.0, %v2204
        %2206 = vmatmul.bf16.gmra.mxu0 %v2120
        %v2207 = vpop.f32.mrf.mxu0
        %v2208 = vadd.f32 0.0, %v2207
        %v2209 = vpop.f32.mrf.mxu0
        %v2210 = vadd.f32 0.0, %v2209
        %2211 = vmatmul.bf16.gmra.mxu0 %v2123
        %v2212 = vpop.f32.mrf.mxu0
        %v2213 = vadd.f32 0.0, %v2212
        %v2214 = vpop.f32.mrf.mxu0
        %v2215 = vadd.f32 0.0, %v2214
        %2216 = vdwg.mxu0
        %v2217 = vld [vmem:[#allocation3] sm:$0xff]
        %v2218 = vld [vmem:[#allocation3 + $0x8] sm:$0xff]
        %v2219 = vld [vmem:[#allocation3 + $0x10] sm:$0xff]
        %v2220 = vld [vmem:[#allocation3 + $0x18] sm:$0xff]
        %v2221 = vld [vmem:[#allocation3 + $0x20] sm:$0xff]
        %v2222 = vld [vmem:[#allocation3 + $0x28] sm:$0xff]
        %v2223 = vld [vmem:[#allocation3 + $0x30] sm:$0xff]
        %v2224 = vld [vmem:[#allocation3 + $0x38] sm:$0xff]
        %v2225 = vld [vmem:[#allocation3 + $0x40] sm:$0xff]
        %v2226 = vld [vmem:[#allocation3 + $0x48] sm:$0xff]
        %v2227 = vld [vmem:[#allocation3 + $0x50] sm:$0xff]
        %v2228 = vld [vmem:[#allocation3 + $0x58] sm:$0xff]
        %v2229 = vld [vmem:[#allocation3 + $0x60] sm:$0xff]
        %v2230 = vld [vmem:[#allocation3 + $0x68] sm:$0xff]
        %v2231 = vld [vmem:[#allocation3 + $0x70] sm:$0xff]
        %v2232 = vld [vmem:[#allocation3 + $0x78] sm:$0xff]
        %v2233 = vld [vmem:[#allocation3 + $0x80] sm:$0xff]
        %v2234 = vld [vmem:[#allocation3 + $0x88] sm:$0xff]
        %v2235 = vld [vmem:[#allocation3 + $0x90] sm:$0xff]
        %v2236 = vld [vmem:[#allocation3 + $0x98] sm:$0xff]
        %v2237 = vld [vmem:[#allocation3 + $0xa0] sm:$0xff]
        %v2238 = vld [vmem:[#allocation3 + $0xa8] sm:$0xff]
        %v2239 = vld [vmem:[#allocation3 + $0xb0] sm:$0xff]
        %v2240 = vld [vmem:[#allocation3 + $0xb8] sm:$0xff]
        %v2241 = vld [vmem:[#allocation3 + $0xc0] sm:$0xff]
        %v2242 = vld [vmem:[#allocation3 + $0xc8] sm:$0xff]
        %v2243 = vld [vmem:[#allocation3 + $0xd0] sm:$0xff]
        %v2244 = vld [vmem:[#allocation3 + $0xd8] sm:$0xff]
        %v2245 = vld [vmem:[#allocation3 + $0xe0] sm:$0xff]
        %v2246 = vld [vmem:[#allocation3 + $0xe8] sm:$0xff]
        %v2247 = vld [vmem:[#allocation3 + $0xf0] sm:$0xff]
        %v2248 = vld [vmem:[#allocation3 + $0xf8] sm:$0xff]
        %v2249 = vadd.f32 %v2217, %v2138
        %v2250 = vadd.f32 %v2218, %v2140
        %v2251 = vadd.f32 %v2219, %v2143
        %v2252 = vadd.f32 %v2220, %v2145
        %v2253 = vadd.f32 %v2221, %v2148
        %v2254 = vadd.f32 %v2222, %v2150
        %v2255 = vadd.f32 %v2223, %v2153
        %v2256 = vadd.f32 %v2224, %v2155
        %v2257 = vadd.f32 %v2225, %v2158
        %v2258 = vadd.f32 %v2226, %v2160
        %v2259 = vadd.f32 %v2227, %v2163
        %v2260 = vadd.f32 %v2228, %v2165
        %v2261 = vadd.f32 %v2229, %v2168
        %v2262 = vadd.f32 %v2230, %v2170
        %v2263 = vadd.f32 %v2231, %v2173
        %v2264 = vadd.f32 %v2232, %v2175
        %v2265 = vadd.f32 %v2233, %v2178
        %v2266 = vadd.f32 %v2234, %v2180
        %v2267 = vadd.f32 %v2235, %v2183
        %v2268 = vadd.f32 %v2236, %v2185
        %v2269 = vadd.f32 %v2237, %v2188
        %v2270 = vadd.f32 %v2238, %v2190
        %v2271 = vadd.f32 %v2239, %v2193
        %v2272 = vadd.f32 %v2240, %v2195
        %v2273 = vadd.f32 %v2241, %v2198
        %v2274 = vadd.f32 %v2242, %v2200
        %v2275 = vadd.f32 %v2243, %v2203
        %v2276 = vadd.f32 %v2244, %v2205
        %v2277 = vadd.f32 %v2245, %v2208
        %v2278 = vadd.f32 %v2246, %v2210
        %v2279 = vadd.f32 %v2247, %v2213
        %v2280 = vadd.f32 %v2248, %v2215
        %2281 = vst.msk [vmem:[#allocation3] sm:$0xff] %vm224, %v2249
        %2282 = vst.msk [vmem:[#allocation3 + $0x8] sm:$0xff] %vm224, %v2250
        %2283 = vst.msk [vmem:[#allocation3 + $0x10] sm:$0xff] %vm224, %v2251
        %2284 = vst.msk [vmem:[#allocation3 + $0x18] sm:$0xff] %vm224, %v2252
        %2285 = vst.msk [vmem:[#allocation3 + $0x20] sm:$0xff] %vm224, %v2253
        %2286 = vst.msk [vmem:[#allocation3 + $0x28] sm:$0xff] %vm224, %v2254
        %2287 = vst.msk [vmem:[#allocation3 + $0x30] sm:$0xff] %vm224, %v2255
        %2288 = vst.msk [vmem:[#allocation3 + $0x38] sm:$0xff] %vm224, %v2256
        %2289 = vst.msk [vmem:[#allocation3 + $0x40] sm:$0xff] %vm224, %v2257
        %2290 = vst.msk [vmem:[#allocation3 + $0x48] sm:$0xff] %vm224, %v2258
        %2291 = vst.msk [vmem:[#allocation3 + $0x50] sm:$0xff] %vm224, %v2259
        %2292 = vst.msk [vmem:[#allocation3 + $0x58] sm:$0xff] %vm224, %v2260
        %2293 = vst.msk [vmem:[#allocation3 + $0x60] sm:$0xff] %vm224, %v2261
        %2294 = vst.msk [vmem:[#allocation3 + $0x68] sm:$0xff] %vm224, %v2262
        %2295 = vst.msk [vmem:[#allocation3 + $0x70] sm:$0xff] %vm224, %v2263
        %2296 = vst.msk [vmem:[#allocation3 + $0x78] sm:$0xff] %vm224, %v2264
        %2297 = vst.msk [vmem:[#allocation3 + $0x80] sm:$0xff] %vm224, %v2265
        %2298 = vst.msk [vmem:[#allocation3 + $0x88] sm:$0xff] %vm224, %v2266
        %2299 = vst.msk [vmem:[#allocation3 + $0x90] sm:$0xff] %vm224, %v2267
        %2300 = vst.msk [vmem:[#allocation3 + $0x98] sm:$0xff] %vm224, %v2268
        %2301 = vst.msk [vmem:[#allocation3 + $0xa0] sm:$0xff] %vm224, %v2269
        %2302 = vst.msk [vmem:[#allocation3 + $0xa8] sm:$0xff] %vm224, %v2270
        %2303 = vst.msk [vmem:[#allocation3 + $0xb0] sm:$0xff] %vm224, %v2271
        %2304 = vst.msk [vmem:[#allocation3 + $0xb8] sm:$0xff] %vm224, %v2272
        %2305 = vst.msk [vmem:[#allocation3 + $0xc0] sm:$0xff] %vm224, %v2273
        %2306 = vst.msk [vmem:[#allocation3 + $0xc8] sm:$0xff] %vm224, %v2274
        %2307 = vst.msk [vmem:[#allocation3 + $0xd0] sm:$0xff] %vm224, %v2275
        %2308 = vst.msk [vmem:[#allocation3 + $0xd8] sm:$0xff] %vm224, %v2276
        %2309 = vst.msk [vmem:[#allocation3 + $0xe0] sm:$0xff] %vm224, %v2277
        %2310 = vst.msk [vmem:[#allocation3 + $0xe8] sm:$0xff] %vm224, %v2278
        %2311 = vst.msk [vmem:[#allocation3 + $0xf0] sm:$0xff] %vm224, %v2279
        %2312 = vst.msk [vmem:[#allocation3 + $0xf8] sm:$0xff] %vm224, %v2280
        %v2313 = vld [vmem:[%s2026 + $0x1] sm:$0xff]
        %v2314 = vld [vmem:[%s2026 + $0x9] sm:$0xff]
        %v2315 = vld [vmem:[%s2026 + $0x19] sm:$0xff]
        %v2316 = vld [vmem:[%s2026 + $0x21] sm:$0xff]
        %v2317 = vld [vmem:[%s2026 + $0x31] sm:$0xff]
        %v2318 = vld [vmem:[%s2026 + $0x39] sm:$0xff]
        %v2319 = vld [vmem:[%s2026 + $0x49] sm:$0xff]
        %v2320 = vld [vmem:[%s2026 + $0x51] sm:$0xff]
        %v2321 = vld [vmem:[%s2026 + $0x61] sm:$0xff]
        %v2322 = vld [vmem:[%s2026 + $0x69] sm:$0xff]
        %v2323 = vld [vmem:[%s2026 + $0x79] sm:$0xff]
        %v2324 = vld [vmem:[%s2026 + $0x81] sm:$0xff]
        %v2325 = vld [vmem:[%s2026 + $0x91] sm:$0xff]
        %v2326 = vld [vmem:[%s2026 + $0x99] sm:$0xff]
        %v2327 = vld [vmem:[%s2026 + $0xa9] sm:$0xff]
        %v2328 = vld [vmem:[%s2026 + $0xb1] sm:$0xff]
        %v2329 = vld [vmem:[%s2026 + $0xc1] sm:$0xff]
        %v2330 = vld [vmem:[%s2026 + $0xc9] sm:$0xff]
        %v2331 = vld [vmem:[%s2026 + $0xd9] sm:$0xff]
        %v2332 = vld [vmem:[%s2026 + $0xe1] sm:$0xff]
        %v2333 = vld [vmem:[%s2026 + $0xf1] sm:$0xff]
        %v2334 = vld [vmem:[%s2026 + $0xf9] sm:$0xff]
        %v2335 = vld [vmem:[%s2026 + $0x109] sm:$0xff]
        %v2336 = vld [vmem:[%s2026 + $0x111] sm:$0xff]
        %v2337 = vld [vmem:[%s2026 + $0x121] sm:$0xff]
        %v2338 = vld [vmem:[%s2026 + $0x129] sm:$0xff]
        %v2339 = vld [vmem:[%s2026 + $0x139] sm:$0xff]
        %v2340 = vld [vmem:[%s2026 + $0x141] sm:$0xff]
        %v2341 = vld [vmem:[%s2026 + $0x151] sm:$0xff]
        %v2342 = vld [vmem:[%s2026 + $0x159] sm:$0xff]
        %v2343 = vld [vmem:[%s2026 + $0x169] sm:$0xff]
        %v2344 = vld [vmem:[%s2026 + $0x171] sm:$0xff]
        %v2345 = vpack.c.bf16 %v2314, %v2313
        %v2346 = vpack.c.bf16 %v2316, %v2315
        %v2347 = vpack.c.bf16 %v2318, %v2317
        %v2348 = vpack.c.bf16 %v2320, %v2319
        %v2349 = vpack.c.bf16 %v2322, %v2321
        %v2350 = vpack.c.bf16 %v2324, %v2323
        %v2351 = vpack.c.bf16 %v2326, %v2325
        %v2352 = vpack.c.bf16 %v2328, %v2327
        %v2353 = vpack.c.bf16 %v2330, %v2329
        %v2354 = vpack.c.bf16 %v2332, %v2331
        %v2355 = vpack.c.bf16 %v2334, %v2333
        %v2356 = vpack.c.bf16 %v2336, %v2335
        %v2357 = vpack.c.bf16 %v2338, %v2337
        %v2358 = vpack.c.bf16 %v2340, %v2339
        %v2359 = vpack.c.bf16 %v2342, %v2341
        %v2360 = vpack.c.bf16 %v2344, %v2343
        %s2361 = scalar_lea.vmem %s1, 14
        %v2362 = vld [vmem:[%s2361] sm:$0x3]
        %v2364 = vsel %vm224, %v2345, 0
        %v2367 = vsel %vm224, %v2346, 0
        %v2370 = vsel %vm224, %v2347, 0
        %v2373 = vsel %vm224, %v2348, 0
        %v2376 = vsel %vm224, %v2349, 0
        %v2379 = vsel %vm224, %v2350, 0
        %v2382 = vsel %vm224, %v2351, 0
        %v2385 = vsel %vm224, %v2352, 0
        %v2388 = vsel %vm224, %v2353, 0
        %v2391 = vsel %vm224, %v2354, 0
        %v2394 = vsel %vm224, %v2355, 0
        %v2397 = vsel %vm224, %v2356, 0
        %v2400 = vsel %vm224, %v2357, 0
        %v2403 = vsel %vm224, %v2358, 0
        %v2406 = vsel %vm224, %v2359, 0
        %v2409 = vsel %vm224, %v2360, 0
        %v2412 = vsel %vm471, %v2362, 0
        %2414 = vmatpush.bf16.msra.mxu0 0
        %2415 = vmatpush.bf16.msra.mxu0 0
        %2416 = vmatpush.bf16.msra.mxu0 0
        %2417 = vmatpush.bf16.msra.mxu0 0
        %2418 = vmatpush.bf16.msra.mxu0 0
        %2419 = vmatpush.bf16.msra.mxu0 0
        %2420 = vmatpush.bf16.msra.mxu0 0
        %2421 = vmatpush.bf16.msra.mxu0 %v2412
        %2422 = vmatmul.bf16.gmra.mxu0 %v2364
        %v2423 = vpop.f32.mrf.mxu0
        %v2424 = vadd.f32 0.0, %v2423
        %v2425 = vpop.f32.mrf.mxu0
        %v2426 = vadd.f32 0.0, %v2425
        %2427 = vmatmul.bf16.gmra.mxu0 %v2367
        %v2428 = vpop.f32.mrf.mxu0
        %v2429 = vadd.f32 0.0, %v2428
        %v2430 = vpop.f32.mrf.mxu0
        %v2431 = vadd.f32 0.0, %v2430
        %2432 = vmatmul.bf16.gmra.mxu0 %v2370
        %v2433 = vpop.f32.mrf.mxu0
        %v2434 = vadd.f32 0.0, %v2433
        %v2435 = vpop.f32.mrf.mxu0
        %v2436 = vadd.f32 0.0, %v2435
        %2437 = vmatmul.bf16.gmra.mxu0 %v2373
        %v2438 = vpop.f32.mrf.mxu0
        %v2439 = vadd.f32 0.0, %v2438
        %v2440 = vpop.f32.mrf.mxu0
        %v2441 = vadd.f32 0.0, %v2440
        %2442 = vmatmul.bf16.gmra.mxu0 %v2376
        %v2443 = vpop.f32.mrf.mxu0
        %v2444 = vadd.f32 0.0, %v2443
        %v2445 = vpop.f32.mrf.mxu0
        %v2446 = vadd.f32 0.0, %v2445
        %2447 = vmatmul.bf16.gmra.mxu0 %v2379
        %v2448 = vpop.f32.mrf.mxu0
        %v2449 = vadd.f32 0.0, %v2448
        %v2450 = vpop.f32.mrf.mxu0
        %v2451 = vadd.f32 0.0, %v2450
        %2452 = vmatmul.bf16.gmra.mxu0 %v2382
        %v2453 = vpop.f32.mrf.mxu0
        %v2454 = vadd.f32 0.0, %v2453
        %v2455 = vpop.f32.mrf.mxu0
        %v2456 = vadd.f32 0.0, %v2455
        %2457 = vmatmul.bf16.gmra.mxu0 %v2385
        %v2458 = vpop.f32.mrf.mxu0
        %v2459 = vadd.f32 0.0, %v2458
        %v2460 = vpop.f32.mrf.mxu0
        %v2461 = vadd.f32 0.0, %v2460
        %2462 = vmatmul.bf16.gmra.mxu0 %v2388
        %v2463 = vpop.f32.mrf.mxu0
        %v2464 = vadd.f32 0.0, %v2463
        %v2465 = vpop.f32.mrf.mxu0
        %v2466 = vadd.f32 0.0, %v2465
        %2467 = vmatmul.bf16.gmra.mxu0 %v2391
        %v2468 = vpop.f32.mrf.mxu0
        %v2469 = vadd.f32 0.0, %v2468
        %v2470 = vpop.f32.mrf.mxu0
        %v2471 = vadd.f32 0.0, %v2470
        %2472 = vmatmul.bf16.gmra.mxu0 %v2394
        %v2473 = vpop.f32.mrf.mxu0
        %v2474 = vadd.f32 0.0, %v2473
        %v2475 = vpop.f32.mrf.mxu0
        %v2476 = vadd.f32 0.0, %v2475
        %2477 = vmatmul.bf16.gmra.mxu0 %v2397
        %v2478 = vpop.f32.mrf.mxu0
        %v2479 = vadd.f32 0.0, %v2478
        %v2480 = vpop.f32.mrf.mxu0
        %v2481 = vadd.f32 0.0, %v2480
        %2482 = vmatmul.bf16.gmra.mxu0 %v2400
        %v2483 = vpop.f32.mrf.mxu0
        %v2484 = vadd.f32 0.0, %v2483
        %v2485 = vpop.f32.mrf.mxu0
        %v2486 = vadd.f32 0.0, %v2485
        %2487 = vmatmul.bf16.gmra.mxu0 %v2403
        %v2488 = vpop.f32.mrf.mxu0
        %v2489 = vadd.f32 0.0, %v2488
        %v2490 = vpop.f32.mrf.mxu0
        %v2491 = vadd.f32 0.0, %v2490
        %2492 = vmatmul.bf16.gmra.mxu0 %v2406
        %v2493 = vpop.f32.mrf.mxu0
        %v2494 = vadd.f32 0.0, %v2493
        %v2495 = vpop.f32.mrf.mxu0
        %v2496 = vadd.f32 0.0, %v2495
        %2497 = vmatmul.bf16.gmra.mxu0 %v2409
        %v2498 = vpop.f32.mrf.mxu0
        %v2499 = vadd.f32 0.0, %v2498
        %v2500 = vpop.f32.mrf.mxu0
        %v2501 = vadd.f32 0.0, %v2500
        %2502 = vdwg.mxu0
        %v2503 = vld [vmem:[#allocation3] sm:$0xff]
        %v2504 = vld [vmem:[#allocation3 + $0x8] sm:$0xff]
        %v2505 = vld [vmem:[#allocation3 + $0x10] sm:$0xff]
        %v2506 = vld [vmem:[#allocation3 + $0x18] sm:$0xff]
        %v2507 = vld [vmem:[#allocation3 + $0x20] sm:$0xff]
        %v2508 = vld [vmem:[#allocation3 + $0x28] sm:$0xff]
        %v2509 = vld [vmem:[#allocation3 + $0x30] sm:$0xff]
        %v2510 = vld [vmem:[#allocation3 + $0x38] sm:$0xff]
        %v2511 = vld [vmem:[#allocation3 + $0x40] sm:$0xff]
        %v2512 = vld [vmem:[#allocation3 + $0x48] sm:$0xff]
        %v2513 = vld [vmem:[#allocation3 + $0x50] sm:$0xff]
        %v2514 = vld [vmem:[#allocation3 + $0x58] sm:$0xff]
        %v2515 = vld [vmem:[#allocation3 + $0x60] sm:$0xff]
        %v2516 = vld [vmem:[#allocation3 + $0x68] sm:$0xff]
        %v2517 = vld [vmem:[#allocation3 + $0x70] sm:$0xff]
        %v2518 = vld [vmem:[#allocation3 + $0x78] sm:$0xff]
        %v2519 = vld [vmem:[#allocation3 + $0x80] sm:$0xff]
        %v2520 = vld [vmem:[#allocation3 + $0x88] sm:$0xff]
        %v2521 = vld [vmem:[#allocation3 + $0x90] sm:$0xff]
        %v2522 = vld [vmem:[#allocation3 + $0x98] sm:$0xff]
        %v2523 = vld [vmem:[#allocation3 + $0xa0] sm:$0xff]
        %v2524 = vld [vmem:[#allocation3 + $0xa8] sm:$0xff]
        %v2525 = vld [vmem:[#allocation3 + $0xb0] sm:$0xff]
        %v2526 = vld [vmem:[#allocation3 + $0xb8] sm:$0xff]
        %v2527 = vld [vmem:[#allocation3 + $0xc0] sm:$0xff]
        %v2528 = vld [vmem:[#allocation3 + $0xc8] sm:$0xff]
        %v2529 = vld [vmem:[#allocation3 + $0xd0] sm:$0xff]
        %v2530 = vld [vmem:[#allocation3 + $0xd8] sm:$0xff]
        %v2531 = vld [vmem:[#allocation3 + $0xe0] sm:$0xff]
        %v2532 = vld [vmem:[#allocation3 + $0xe8] sm:$0xff]
        %v2533 = vld [vmem:[#allocation3 + $0xf0] sm:$0xff]
        %v2534 = vld [vmem:[#allocation3 + $0xf8] sm:$0xff]
        %v2535 = vadd.f32 %v2503, %v2424
        %v2536 = vadd.f32 %v2504, %v2426
        %v2537 = vadd.f32 %v2505, %v2429
        %v2538 = vadd.f32 %v2506, %v2431
        %v2539 = vadd.f32 %v2507, %v2434
        %v2540 = vadd.f32 %v2508, %v2436
        %v2541 = vadd.f32 %v2509, %v2439
        %v2542 = vadd.f32 %v2510, %v2441
        %v2543 = vadd.f32 %v2511, %v2444
        %v2544 = vadd.f32 %v2512, %v2446
        %v2545 = vadd.f32 %v2513, %v2449
        %v2546 = vadd.f32 %v2514, %v2451
        %v2547 = vadd.f32 %v2515, %v2454
        %v2548 = vadd.f32 %v2516, %v2456
        %v2549 = vadd.f32 %v2517, %v2459
        %v2550 = vadd.f32 %v2518, %v2461
        %v2551 = vadd.f32 %v2519, %v2464
        %v2552 = vadd.f32 %v2520, %v2466
        %v2553 = vadd.f32 %v2521, %v2469
        %v2554 = vadd.f32 %v2522, %v2471
        %v2555 = vadd.f32 %v2523, %v2474
        %v2556 = vadd.f32 %v2524, %v2476
        %v2557 = vadd.f32 %v2525, %v2479
        %v2558 = vadd.f32 %v2526, %v2481
        %v2559 = vadd.f32 %v2527, %v2484
        %v2560 = vadd.f32 %v2528, %v2486
        %v2561 = vadd.f32 %v2529, %v2489
        %v2562 = vadd.f32 %v2530, %v2491
        %v2563 = vadd.f32 %v2531, %v2494
        %v2564 = vadd.f32 %v2532, %v2496
        %v2565 = vadd.f32 %v2533, %v2499
        %v2566 = vadd.f32 %v2534, %v2501
        %2567 = vst.msk [vmem:[#allocation3] sm:$0xff] %vm224, %v2535
        %2568 = vst.msk [vmem:[#allocation3 + $0x8] sm:$0xff] %vm224, %v2536
        %2569 = vst.msk [vmem:[#allocation3 + $0x10] sm:$0xff] %vm224, %v2537
        %2570 = vst.msk [vmem:[#allocation3 + $0x18] sm:$0xff] %vm224, %v2538
        %2571 = vst.msk [vmem:[#allocation3 + $0x20] sm:$0xff] %vm224, %v2539
        %2572 = vst.msk [vmem:[#allocation3 + $0x28] sm:$0xff] %vm224, %v2540
        %2573 = vst.msk [vmem:[#allocation3 + $0x30] sm:$0xff] %vm224, %v2541
        %2574 = vst.msk [vmem:[#allocation3 + $0x38] sm:$0xff] %vm224, %v2542
        %2575 = vst.msk [vmem:[#allocation3 + $0x40] sm:$0xff] %vm224, %v2543
        %2576 = vst.msk [vmem:[#allocation3 + $0x48] sm:$0xff] %vm224, %v2544
        %2577 = vst.msk [vmem:[#allocation3 + $0x50] sm:$0xff] %vm224, %v2545
        %2578 = vst.msk [vmem:[#allocation3 + $0x58] sm:$0xff] %vm224, %v2546
        %2579 = vst.msk [vmem:[#allocation3 + $0x60] sm:$0xff] %vm224, %v2547
        %2580 = vst.msk [vmem:[#allocation3 + $0x68] sm:$0xff] %vm224, %v2548
        %2581 = vst.msk [vmem:[#allocation3 + $0x70] sm:$0xff] %vm224, %v2549
        %2582 = vst.msk [vmem:[#allocation3 + $0x78] sm:$0xff] %vm224, %v2550
        %2583 = vst.msk [vmem:[#allocation3 + $0x80] sm:$0xff] %vm224, %v2551
        %2584 = vst.msk [vmem:[#allocation3 + $0x88] sm:$0xff] %vm224, %v2552
        %2585 = vst.msk [vmem:[#allocation3 + $0x90] sm:$0xff] %vm224, %v2553
        %2586 = vst.msk [vmem:[#allocation3 + $0x98] sm:$0xff] %vm224, %v2554
        %2587 = vst.msk [vmem:[#allocation3 + $0xa0] sm:$0xff] %vm224, %v2555
        %2588 = vst.msk [vmem:[#allocation3 + $0xa8] sm:$0xff] %vm224, %v2556
        %2589 = vst.msk [vmem:[#allocation3 + $0xb0] sm:$0xff] %vm224, %v2557
        %2590 = vst.msk [vmem:[#allocation3 + $0xb8] sm:$0xff] %vm224, %v2558
        %2591 = vst.msk [vmem:[#allocation3 + $0xc0] sm:$0xff] %vm224, %v2559
        %2592 = vst.msk [vmem:[#allocation3 + $0xc8] sm:$0xff] %vm224, %v2560
        %2593 = vst.msk [vmem:[#allocation3 + $0xd0] sm:$0xff] %vm224, %v2561
        %2594 = vst.msk [vmem:[#allocation3 + $0xd8] sm:$0xff] %vm224, %v2562
        %2595 = vst.msk [vmem:[#allocation3 + $0xe0] sm:$0xff] %vm224, %v2563
        %2596 = vst.msk [vmem:[#allocation3 + $0xe8] sm:$0xff] %vm224, %v2564
        %2597 = vst.msk [vmem:[#allocation3 + $0xf0] sm:$0xff] %vm224, %v2565
        %2598 = vst.msk [vmem:[#allocation3 + $0xf8] sm:$0xff] %vm224, %v2566
        %v2599 = vld [vmem:[%s2026 + $0x2] sm:$0xff]
        %v2600 = vld [vmem:[%s2026 + $0xa] sm:$0xff]
        %v2601 = vld [vmem:[%s2026 + $0x1a] sm:$0xff]
        %v2602 = vld [vmem:[%s2026 + $0x22] sm:$0xff]
        %v2603 = vld [vmem:[%s2026 + $0x32] sm:$0xff]
        %v2604 = vld [vmem:[%s2026 + $0x3a] sm:$0xff]
        %v2605 = vld [vmem:[%s2026 + $0x4a] sm:$0xff]
        %v2606 = vld [vmem:[%s2026 + $0x52] sm:$0xff]
        %v2607 = vld [vmem:[%s2026 + $0x62] sm:$0xff]
        %v2608 = vld [vmem:[%s2026 + $0x6a] sm:$0xff]
        %v2609 = vld [vmem:[%s2026 + $0x7a] sm:$0xff]
        %v2610 = vld [vmem:[%s2026 + $0x82] sm:$0xff]
        %v2611 = vld [vmem:[%s2026 + $0x92] sm:$0xff]
        %v2612 = vld [vmem:[%s2026 + $0x9a] sm:$0xff]
        %v2613 = vld [vmem:[%s2026 + $0xaa] sm:$0xff]
        %v2614 = vld [vmem:[%s2026 + $0xb2] sm:$0xff]
        %v2615 = vld [vmem:[%s2026 + $0xc2] sm:$0xff]
        %v2616 = vld [vmem:[%s2026 + $0xca] sm:$0xff]
        %v2617 = vld [vmem:[%s2026 + $0xda] sm:$0xff]
        %v2618 = vld [vmem:[%s2026 + $0xe2] sm:$0xff]
        %v2619 = vld [vmem:[%s2026 + $0xf2] sm:$0xff]
        %v2620 = vld [vmem:[%s2026 + $0xfa] sm:$0xff]
        %v2621 = vld [vmem:[%s2026 + $0x10a] sm:$0xff]
        %v2622 = vld [vmem:[%s2026 + $0x112] sm:$0xff]
        %v2623 = vld [vmem:[%s2026 + $0x122] sm:$0xff]
        %v2624 = vld [vmem:[%s2026 + $0x12a] sm:$0xff]
        %v2625 = vld [vmem:[%s2026 + $0x13a] sm:$0xff]
        %v2626 = vld [vmem:[%s2026 + $0x142] sm:$0xff]
        %v2627 = vld [vmem:[%s2026 + $0x152] sm:$0xff]
        %v2628 = vld [vmem:[%s2026 + $0x15a] sm:$0xff]
        %v2629 = vld [vmem:[%s2026 + $0x16a] sm:$0xff]
        %v2630 = vld [vmem:[%s2026 + $0x172] sm:$0xff]
        %v2631 = vpack.c.bf16 %v2600, %v2599
        %v2632 = vpack.c.bf16 %v2602, %v2601
        %v2633 = vpack.c.bf16 %v2604, %v2603
        %v2634 = vpack.c.bf16 %v2606, %v2605
        %v2635 = vpack.c.bf16 %v2608, %v2607
        %v2636 = vpack.c.bf16 %v2610, %v2609
        %v2637 = vpack.c.bf16 %v2612, %v2611
        %v2638 = vpack.c.bf16 %v2614, %v2613
        %v2639 = vpack.c.bf16 %v2616, %v2615
        %v2640 = vpack.c.bf16 %v2618, %v2617
        %v2641 = vpack.c.bf16 %v2620, %v2619
        %v2642 = vpack.c.bf16 %v2622, %v2621
        %v2643 = vpack.c.bf16 %v2624, %v2623
        %v2644 = vpack.c.bf16 %v2626, %v2625
        %v2645 = vpack.c.bf16 %v2628, %v2627
        %v2646 = vpack.c.bf16 %v2630, %v2629
        %s2647 = scalar_lea.vmem %s1, 16
        %v2648 = vld [vmem:[%s2647] sm:$0x3]
        %v2650 = vsel %vm224, %v2631, 0
        %v2653 = vsel %vm224, %v2632, 0
        %v2656 = vsel %vm224, %v2633, 0
        %v2659 = vsel %vm224, %v2634, 0
        %v2662 = vsel %vm224, %v2635, 0
        %v2665 = vsel %vm224, %v2636, 0
        %v2668 = vsel %vm224, %v2637, 0
        %v2671 = vsel %vm224, %v2638, 0
        %v2674 = vsel %vm224, %v2639, 0
        %v2677 = vsel %vm224, %v2640, 0
        %v2680 = vsel %vm224, %v2641, 0
        %v2683 = vsel %vm224, %v2642, 0
        %v2686 = vsel %vm224, %v2643, 0
        %v2689 = vsel %vm224, %v2644, 0
        %v2692 = vsel %vm224, %v2645, 0
        %v2695 = vsel %vm224, %v2646, 0
        %v2698 = vsel %vm471, %v2648, 0
        %2700 = vmatpush.bf16.msra.mxu0 0
        %2701 = vmatpush.bf16.msra.mxu0 0
        %2702 = vmatpush.bf16.msra.mxu0 0
        %2703 = vmatpush.bf16.msra.mxu0 0
        %2704 = vmatpush.bf16.msra.mxu0 0
        %2705 = vmatpush.bf16.msra.mxu0 0
        %2706 = vmatpush.bf16.msra.mxu0 0
        %2707 = vmatpush.bf16.msra.mxu0 %v2698
        %2708 = vmatmul.bf16.gmra.mxu0 %v2650
        %v2709 = vpop.f32.mrf.mxu0
        %v2710 = vadd.f32 0.0, %v2709
        %v2711 = vpop.f32.mrf.mxu0
        %v2712 = vadd.f32 0.0, %v2711
        %2713 = vmatmul.bf16.gmra.mxu0 %v2653
        %v2714 = vpop.f32.mrf.mxu0
        %v2715 = vadd.f32 0.0, %v2714
        %v2716 = vpop.f32.mrf.mxu0
        %v2717 = vadd.f32 0.0, %v2716
        %2718 = vmatmul.bf16.gmra.mxu0 %v2656
        %v2719 = vpop.f32.mrf.mxu0
        %v2720 = vadd.f32 0.0, %v2719
        %v2721 = vpop.f32.mrf.mxu0
        %v2722 = vadd.f32 0.0, %v2721
        %2723 = vmatmul.bf16.gmra.mxu0 %v2659
        %v2724 = vpop.f32.mrf.mxu0
        %v2725 = vadd.f32 0.0, %v2724
        %v2726 = vpop.f32.mrf.mxu0
        %v2727 = vadd.f32 0.0, %v2726
        %2728 = vmatmul.bf16.gmra.mxu0 %v2662
        %v2729 = vpop.f32.mrf.mxu0
        %v2730 = vadd.f32 0.0, %v2729
        %v2731 = vpop.f32.mrf.mxu0
        %v2732 = vadd.f32 0.0, %v2731
        %2733 = vmatmul.bf16.gmra.mxu0 %v2665
        %v2734 = vpop.f32.mrf.mxu0
        %v2735 = vadd.f32 0.0, %v2734
        %v2736 = vpop.f32.mrf.mxu0
        %v2737 = vadd.f32 0.0, %v2736
        %2738 = vmatmul.bf16.gmra.mxu0 %v2668
        %v2739 = vpop.f32.mrf.mxu0
        %v2740 = vadd.f32 0.0, %v2739
        %v2741 = vpop.f32.mrf.mxu0
        %v2742 = vadd.f32 0.0, %v2741
        %2743 = vmatmul.bf16.gmra.mxu0 %v2671
        %v2744 = vpop.f32.mrf.mxu0
        %v2745 = vadd.f32 0.0, %v2744
        %v2746 = vpop.f32.mrf.mxu0
        %v2747 = vadd.f32 0.0, %v2746
        %2748 = vmatmul.bf16.gmra.mxu0 %v2674
        %v2749 = vpop.f32.mrf.mxu0
        %v2750 = vadd.f32 0.0, %v2749
        %v2751 = vpop.f32.mrf.mxu0
        %v2752 = vadd.f32 0.0, %v2751
        %2753 = vmatmul.bf16.gmra.mxu0 %v2677
        %v2754 = vpop.f32.mrf.mxu0
        %v2755 = vadd.f32 0.0, %v2754
        %v2756 = vpop.f32.mrf.mxu0
        %v2757 = vadd.f32 0.0, %v2756
        %2758 = vmatmul.bf16.gmra.mxu0 %v2680
        %v2759 = vpop.f32.mrf.mxu0
        %v2760 = vadd.f32 0.0, %v2759
        %v2761 = vpop.f32.mrf.mxu0
        %v2762 = vadd.f32 0.0, %v2761
        %2763 = vmatmul.bf16.gmra.mxu0 %v2683
        %v2764 = vpop.f32.mrf.mxu0
        %v2765 = vadd.f32 0.0, %v2764
        %v2766 = vpop.f32.mrf.mxu0
        %v2767 = vadd.f32 0.0, %v2766
        %2768 = vmatmul.bf16.gmra.mxu0 %v2686
        %v2769 = vpop.f32.mrf.mxu0
        %v2770 = vadd.f32 0.0, %v2769
        %v2771 = vpop.f32.mrf.mxu0
        %v2772 = vadd.f32 0.0, %v2771
        %2773 = vmatmul.bf16.gmra.mxu0 %v2689
        %v2774 = vpop.f32.mrf.mxu0
        %v2775 = vadd.f32 0.0, %v2774
        %v2776 = vpop.f32.mrf.mxu0
        %v2777 = vadd.f32 0.0, %v2776
        %2778 = vmatmul.bf16.gmra.mxu0 %v2692
        %v2779 = vpop.f32.mrf.mxu0
        %v2780 = vadd.f32 0.0, %v2779
        %v2781 = vpop.f32.mrf.mxu0
        %v2782 = vadd.f32 0.0, %v2781
        %2783 = vmatmul.bf16.gmra.mxu0 %v2695
        %v2784 = vpop.f32.mrf.mxu0
        %v2785 = vadd.f32 0.0, %v2784
        %v2786 = vpop.f32.mrf.mxu0
        %v2787 = vadd.f32 0.0, %v2786
        %2788 = vdwg.mxu0
        %v2789 = vld [vmem:[#allocation3] sm:$0xff]
        %v2790 = vld [vmem:[#allocation3 + $0x8] sm:$0xff]
        %v2791 = vld [vmem:[#allocation3 + $0x10] sm:$0xff]
        %v2792 = vld [vmem:[#allocation3 + $0x18] sm:$0xff]
        %v2793 = vld [vmem:[#allocation3 + $0x20] sm:$0xff]
        %v2794 = vld [vmem:[#allocation3 + $0x28] sm:$0xff]
        %v2795 = vld [vmem:[#allocation3 + $0x30] sm:$0xff]
        %v2796 = vld [vmem:[#allocation3 + $0x38] sm:$0xff]
        %v2797 = vld [vmem:[#allocation3 + $0x40] sm:$0xff]
        %v2798 = vld [vmem:[#allocation3 + $0x48] sm:$0xff]
        %v2799 = vld [vmem:[#allocation3 + $0x50] sm:$0xff]
        %v2800 = vld [vmem:[#allocation3 + $0x58] sm:$0xff]
        %v2801 = vld [vmem:[#allocation3 + $0x60] sm:$0xff]
        %v2802 = vld [vmem:[#allocation3 + $0x68] sm:$0xff]
        %v2803 = vld [vmem:[#allocation3 + $0x70] sm:$0xff]
        %v2804 = vld [vmem:[#allocation3 + $0x78] sm:$0xff]
        %v2805 = vld [vmem:[#allocation3 + $0x80] sm:$0xff]
        %v2806 = vld [vmem:[#allocation3 + $0x88] sm:$0xff]
        %v2807 = vld [vmem:[#allocation3 + $0x90] sm:$0xff]
        %v2808 = vld [vmem:[#allocation3 + $0x98] sm:$0xff]
        %v2809 = vld [vmem:[#allocation3 + $0xa0] sm:$0xff]
        %v2810 = vld [vmem:[#allocation3 + $0xa8] sm:$0xff]
        %v2811 = vld [vmem:[#allocation3 + $0xb0] sm:$0xff]
        %v2812 = vld [vmem:[#allocation3 + $0xb8] sm:$0xff]
        %v2813 = vld [vmem:[#allocation3 + $0xc0] sm:$0xff]
        %v2814 = vld [vmem:[#allocation3 + $0xc8] sm:$0xff]
        %v2815 = vld [vmem:[#allocation3 + $0xd0] sm:$0xff]
        %v2816 = vld [vmem:[#allocation3 + $0xd8] sm:$0xff]
        %v2817 = vld [vmem:[#allocation3 + $0xe0] sm:$0xff]
        %v2818 = vld [vmem:[#allocation3 + $0xe8] sm:$0xff]
        %v2819 = vld [vmem:[#allocation3 + $0xf0] sm:$0xff]
        %v2820 = vld [vmem:[#allocation3 + $0xf8] sm:$0xff]
        %v2821 = vadd.f32 %v2789, %v2710
        %v2822 = vadd.f32 %v2790, %v2712
        %v2823 = vadd.f32 %v2791, %v2715
        %v2824 = vadd.f32 %v2792, %v2717
        %v2825 = vadd.f32 %v2793, %v2720
        %v2826 = vadd.f32 %v2794, %v2722
        %v2827 = vadd.f32 %v2795, %v2725
        %v2828 = vadd.f32 %v2796, %v2727
        %v2829 = vadd.f32 %v2797, %v2730
        %v2830 = vadd.f32 %v2798, %v2732
        %v2831 = vadd.f32 %v2799, %v2735
        %v2832 = vadd.f32 %v2800, %v2737
        %v2833 = vadd.f32 %v2801, %v2740
        %v2834 = vadd.f32 %v2802, %v2742
        %v2835 = vadd.f32 %v2803, %v2745
        %v2836 = vadd.f32 %v2804, %v2747
        %v2837 = vadd.f32 %v2805, %v2750
        %v2838 = vadd.f32 %v2806, %v2752
        %v2839 = vadd.f32 %v2807, %v2755
        %v2840 = vadd.f32 %v2808, %v2757
        %v2841 = vadd.f32 %v2809, %v2760
        %v2842 = vadd.f32 %v2810, %v2762
        %v2843 = vadd.f32 %v2811, %v2765
        %v2844 = vadd.f32 %v2812, %v2767
        %v2845 = vadd.f32 %v2813, %v2770
        %v2846 = vadd.f32 %v2814, %v2772
        %v2847 = vadd.f32 %v2815, %v2775
        %v2848 = vadd.f32 %v2816, %v2777
        %v2849 = vadd.f32 %v2817, %v2780
        %v2850 = vadd.f32 %v2818, %v2782
        %v2851 = vadd.f32 %v2819, %v2785
        %v2852 = vadd.f32 %v2820, %v2787
        %2853 = vst.msk [vmem:[#allocation3] sm:$0xff] %vm224, %v2821
        %2854 = vst.msk [vmem:[#allocation3 + $0x8] sm:$0xff] %vm224, %v2822
        %2855 = vst.msk [vmem:[#allocation3 + $0x10] sm:$0xff] %vm224, %v2823
        %2856 = vst.msk [vmem:[#allocation3 + $0x18] sm:$0xff] %vm224, %v2824
        %2857 = vst.msk [vmem:[#allocation3 + $0x20] sm:$0xff] %vm224, %v2825
        %2858 = vst.msk [vmem:[#allocation3 + $0x28] sm:$0xff] %vm224, %v2826
        %2859 = vst.msk [vmem:[#allocation3 + $0x30] sm:$0xff] %vm224, %v2827
        %2860 = vst.msk [vmem:[#allocation3 + $0x38] sm:$0xff] %vm224, %v2828
        %2861 = vst.msk [vmem:[#allocation3 + $0x40] sm:$0xff] %vm224, %v2829
        %2862 = vst.msk [vmem:[#allocation3 + $0x48] sm:$0xff] %vm224, %v2830
        %2863 = vst.msk [vmem:[#allocation3 + $0x50] sm:$0xff] %vm224, %v2831
        %2864 = vst.msk [vmem:[#allocation3 + $0x58] sm:$0xff] %vm224, %v2832
        %2865 = vst.msk [vmem:[#allocation3 + $0x60] sm:$0xff] %vm224, %v2833
        %2866 = vst.msk [vmem:[#allocation3 + $0x68] sm:$0xff] %vm224, %v2834
        %2867 = vst.msk [vmem:[#allocation3 + $0x70] sm:$0xff] %vm224, %v2835
        %2868 = vst.msk [vmem:[#allocation3 + $0x78] sm:$0xff] %vm224, %v2836
        %2869 = vst.msk [vmem:[#allocation3 + $0x80] sm:$0xff] %vm224, %v2837
        %2870 = vst.msk [vmem:[#allocation3 + $0x88] sm:$0xff] %vm224, %v2838
        %2871 = vst.msk [vmem:[#allocation3 + $0x90] sm:$0xff] %vm224, %v2839
        %2872 = vst.msk [vmem:[#allocation3 + $0x98] sm:$0xff] %vm224, %v2840
        %2873 = vst.msk [vmem:[#allocation3 + $0xa0] sm:$0xff] %vm224, %v2841
        %2874 = vst.msk [vmem:[#allocation3 + $0xa8] sm:$0xff] %vm224, %v2842
        %2875 = vst.msk [vmem:[#allocation3 + $0xb0] sm:$0xff] %vm224, %v2843
        %2876 = vst.msk [vmem:[#allocation3 + $0xb8] sm:$0xff] %vm224, %v2844
        %2877 = vst.msk [vmem:[#allocation3 + $0xc0] sm:$0xff] %vm224, %v2845
        %2878 = vst.msk [vmem:[#allocation3 + $0xc8] sm:$0xff] %vm224, %v2846
        %2879 = vst.msk [vmem:[#allocation3 + $0xd0] sm:$0xff] %vm224, %v2847
        %2880 = vst.msk [vmem:[#allocation3 + $0xd8] sm:$0xff] %vm224, %v2848
        %2881 = vst.msk [vmem:[#allocation3 + $0xe0] sm:$0xff] %vm224, %v2849
        %2882 = vst.msk [vmem:[#allocation3 + $0xe8] sm:$0xff] %vm224, %v2850
        %2883 = vst.msk [vmem:[#allocation3 + $0xf0] sm:$0xff] %vm224, %v2851
        %2884 = vst.msk [vmem:[#allocation3 + $0xf8] sm:$0xff] %vm224, %v2852
        %v2885 = vld [vmem:[#allocation3] sm:$0xff]
        %v2886 = vld [vmem:[#allocation3 + $0x8] sm:$0xff]
        %v2887 = vld [vmem:[#allocation3 + $0x10] sm:$0xff]
        %v2888 = vld [vmem:[#allocation3 + $0x18] sm:$0xff]
        %v2889 = vld [vmem:[#allocation3 + $0x20] sm:$0xff]
        %v2890 = vld [vmem:[#allocation3 + $0x28] sm:$0xff]
        %v2891 = vld [vmem:[#allocation3 + $0x30] sm:$0xff]
        %v2892 = vld [vmem:[#allocation3 + $0x38] sm:$0xff]
        %v2893 = vld [vmem:[#allocation3 + $0x40] sm:$0xff]
        %v2894 = vld [vmem:[#allocation3 + $0x48] sm:$0xff]
        %v2895 = vld [vmem:[#allocation3 + $0x50] sm:$0xff]
        %v2896 = vld [vmem:[#allocation3 + $0x58] sm:$0xff]
        %v2897 = vld [vmem:[#allocation3 + $0x60] sm:$0xff]
        %v2898 = vld [vmem:[#allocation3 + $0x68] sm:$0xff]
        %v2899 = vld [vmem:[#allocation3 + $0x70] sm:$0xff]
        %v2900 = vld [vmem:[#allocation3 + $0x78] sm:$0xff]
        %v2901 = vld [vmem:[#allocation3 + $0x80] sm:$0xff]
        %v2902 = vld [vmem:[#allocation3 + $0x88] sm:$0xff]
        %v2903 = vld [vmem:[#allocation3 + $0x90] sm:$0xff]
        %v2904 = vld [vmem:[#allocation3 + $0x98] sm:$0xff]
        %v2905 = vld [vmem:[#allocation3 + $0xa0] sm:$0xff]
        %v2906 = vld [vmem:[#allocation3 + $0xa8] sm:$0xff]
        %v2907 = vld [vmem:[#allocation3 + $0xb0] sm:$0xff]
        %v2908 = vld [vmem:[#allocation3 + $0xb8] sm:$0xff]
        %v2909 = vld [vmem:[#allocation3 + $0xc0] sm:$0xff]
        %v2910 = vld [vmem:[#allocation3 + $0xc8] sm:$0xff]
        %v2911 = vld [vmem:[#allocation3 + $0xd0] sm:$0xff]
        %v2912 = vld [vmem:[#allocation3 + $0xd8] sm:$0xff]
        %v2913 = vld [vmem:[#allocation3 + $0xe0] sm:$0xff]
        %v2914 = vld [vmem:[#allocation3 + $0xe8] sm:$0xff]
        %v2915 = vld [vmem:[#allocation3 + $0xf0] sm:$0xff]
        %v2916 = vld [vmem:[#allocation3 + $0xf8] sm:$0xff]
        %v2917 = vld [vmem:[%s2] sm:$0x1]
        %v2919 = vperm.slane %v2917, 0
        %v2921 = vadd.f32 %v2885, %v2919
        %v2922 = vadd.f32 %v2886, %v2919
        %v2923 = vadd.f32 %v2887, %v2919
        %v2924 = vadd.f32 %v2888, %v2919
        %v2925 = vadd.f32 %v2889, %v2919
        %v2926 = vadd.f32 %v2890, %v2919
        %v2927 = vadd.f32 %v2891, %v2919
        %v2928 = vadd.f32 %v2892, %v2919
        %v2929 = vadd.f32 %v2893, %v2919
        %v2930 = vadd.f32 %v2894, %v2919
        %v2931 = vadd.f32 %v2895, %v2919
        %v2932 = vadd.f32 %v2896, %v2919
        %v2933 = vadd.f32 %v2897, %v2919
        %v2934 = vadd.f32 %v2898, %v2919
        %v2935 = vadd.f32 %v2899, %v2919
        %v2936 = vadd.f32 %v2900, %v2919
        %v2937 = vadd.f32 %v2901, %v2919
        %v2938 = vadd.f32 %v2902, %v2919
        %v2939 = vadd.f32 %v2903, %v2919
        %v2940 = vadd.f32 %v2904, %v2919
        %v2941 = vadd.f32 %v2905, %v2919
        %v2942 = vadd.f32 %v2906, %v2919
        %v2943 = vadd.f32 %v2907, %v2919
        %v2944 = vadd.f32 %v2908, %v2919
        %v2945 = vadd.f32 %v2909, %v2919
        %v2946 = vadd.f32 %v2910, %v2919
        %v2947 = vadd.f32 %v2911, %v2919
        %v2948 = vadd.f32 %v2912, %v2919
        %v2949 = vadd.f32 %v2913, %v2919
        %v2950 = vadd.f32 %v2914, %v2919
        %v2951 = vadd.f32 %v2915, %v2919
        %v2952 = vadd.f32 %v2916, %v2919
        %v2953 = vmax.f32 %v2921, 0.0
        %v2954 = vmax.f32 %v2922, 0.0
        %v2955 = vmax.f32 %v2923, 0.0
        %v2956 = vmax.f32 %v2924, 0.0
        %v2957 = vmax.f32 %v2925, 0.0
        %v2958 = vmax.f32 %v2926, 0.0
        %v2959 = vmax.f32 %v2927, 0.0
        %v2960 = vmax.f32 %v2928, 0.0
        %v2961 = vmax.f32 %v2929, 0.0
        %v2962 = vmax.f32 %v2930, 0.0
        %v2963 = vmax.f32 %v2931, 0.0
        %v2964 = vmax.f32 %v2932, 0.0
        %v2965 = vmax.f32 %v2933, 0.0
        %v2966 = vmax.f32 %v2934, 0.0
        %v2967 = vmax.f32 %v2935, 0.0
        %v2968 = vmax.f32 %v2936, 0.0
        %v2969 = vmax.f32 %v2937, 0.0
        %v2970 = vmax.f32 %v2938, 0.0
        %v2971 = vmax.f32 %v2939, 0.0
        %v2972 = vmax.f32 %v2940, 0.0
        %v2973 = vmax.f32 %v2941, 0.0
        %v2974 = vmax.f32 %v2942, 0.0
        %v2975 = vmax.f32 %v2943, 0.0
        %v2976 = vmax.f32 %v2944, 0.0
        %v2977 = vmax.f32 %v2945, 0.0
        %v2978 = vmax.f32 %v2946, 0.0
        %v2979 = vmax.f32 %v2947, 0.0
        %v2980 = vmax.f32 %v2948, 0.0
        %v2981 = vmax.f32 %v2949, 0.0
        %v2982 = vmax.f32 %v2950, 0.0
        %v2983 = vmax.f32 %v2951, 0.0
        %v2984 = vmax.f32 %v2952, 0.0
        %2985 = vst.msk [vmem:[%s341 + $0x1] sm:$0xff] %vm224, %v2953
        %2986 = vst.msk [vmem:[%s341 + $0x9] sm:$0xff] %vm224, %v2954
        %2987 = vst.msk [vmem:[%s341 + $0x19] sm:$0xff] %vm224, %v2955
        %2988 = vst.msk [vmem:[%s341 + $0x21] sm:$0xff] %vm224, %v2956
        %2989 = vst.msk [vmem:[%s341 + $0x31] sm:$0xff] %vm224, %v2957
        %2990 = vst.msk [vmem:[%s341 + $0x39] sm:$0xff] %vm224, %v2958
        %2991 = vst.msk [vmem:[%s341 + $0x49] sm:$0xff] %vm224, %v2959
        %2992 = vst.msk [vmem:[%s341 + $0x51] sm:$0xff] %vm224, %v2960
        %2993 = vst.msk [vmem:[%s341 + $0x61] sm:$0xff] %vm224, %v2961
        %2994 = vst.msk [vmem:[%s341 + $0x69] sm:$0xff] %vm224, %v2962
        %2995 = vst.msk [vmem:[%s341 + $0x79] sm:$0xff] %vm224, %v2963
        %2996 = vst.msk [vmem:[%s341 + $0x81] sm:$0xff] %vm224, %v2964
        %2997 = vst.msk [vmem:[%s341 + $0x91] sm:$0xff] %vm224, %v2965
        %2998 = vst.msk [vmem:[%s341 + $0x99] sm:$0xff] %vm224, %v2966
        %2999 = vst.msk [vmem:[%s341 + $0xa9] sm:$0xff] %vm224, %v2967
        %3000 = vst.msk [vmem:[%s341 + $0xb1] sm:$0xff] %vm224, %v2968
        %3001 = vst.msk [vmem:[%s341 + $0xc1] sm:$0xff] %vm224, %v2969
        %3002 = vst.msk [vmem:[%s341 + $0xc9] sm:$0xff] %vm224, %v2970
        %3003 = vst.msk [vmem:[%s341 + $0xd9] sm:$0xff] %vm224, %v2971
        %3004 = vst.msk [vmem:[%s341 + $0xe1] sm:$0xff] %vm224, %v2972
        %3005 = vst.msk [vmem:[%s341 + $0xf1] sm:$0xff] %vm224, %v2973
        %3006 = vst.msk [vmem:[%s341 + $0xf9] sm:$0xff] %vm224, %v2974
        %3007 = vst.msk [vmem:[%s341 + $0x109] sm:$0xff] %vm224, %v2975
        %3008 = vst.msk [vmem:[%s341 + $0x111] sm:$0xff] %vm224, %v2976
        %3009 = vst.msk [vmem:[%s341 + $0x121] sm:$0xff] %vm224, %v2977
        %3010 = vst.msk [vmem:[%s341 + $0x129] sm:$0xff] %vm224, %v2978
        %3011 = vst.msk [vmem:[%s341 + $0x139] sm:$0xff] %vm224, %v2979
        %3012 = vst.msk [vmem:[%s341 + $0x141] sm:$0xff] %vm224, %v2980
        %3013 = vst.msk [vmem:[%s341 + $0x151] sm:$0xff] %vm224, %v2981
        %3014 = vst.msk [vmem:[%s341 + $0x159] sm:$0xff] %vm224, %v2982
        %3015 = vst.msk [vmem:[%s341 + $0x169] sm:$0xff] %vm224, %v2983
        %3016 = vst.msk [vmem:[%s341 + $0x171] sm:$0xff] %vm224, %v2984
        %v3017 = vld [vmem:[#allocation2] sm:$0xff]
        %v3018 = vld [vmem:[#allocation2 + $0x8] sm:$0xff]
        %v3019 = vld [vmem:[#allocation2 + $0x18] sm:$0xff]
        %v3020 = vld [vmem:[#allocation2 + $0x20] sm:$0xff]
        %v3021 = vld [vmem:[#allocation2 + $0x30] sm:$0xff]
        %v3022 = vld [vmem:[#allocation2 + $0x38] sm:$0xff]
        %v3023 = vld [vmem:[#allocation2 + $0x48] sm:$0xff]
        %v3024 = vld [vmem:[#allocation2 + $0x50] sm:$0xff]
        %v3025 = vld [vmem:[#allocation2 + $0x60] sm:$0xff]
        %v3026 = vld [vmem:[#allocation2 + $0x68] sm:$0xff]
        %v3027 = vld [vmem:[#allocation2 + $0x78] sm:$0xff]
        %v3028 = vld [vmem:[#allocation2 + $0x80] sm:$0xff]
        %v3029 = vld [vmem:[#allocation2 + $0x90] sm:$0xff]
        %v3030 = vld [vmem:[#allocation2 + $0x98] sm:$0xff]
        %v3031 = vld [vmem:[#allocation2 + $0xa8] sm:$0xff]
        %v3032 = vld [vmem:[#allocation2 + $0xb0] sm:$0xff]
        %v3033 = vld [vmem:[#allocation2 + $0xc0] sm:$0xff]
        %v3034 = vld [vmem:[#allocation2 + $0xc8] sm:$0xff]
        %v3035 = vld [vmem:[#allocation2 + $0xd8] sm:$0xff]
        %v3036 = vld [vmem:[#allocation2 + $0xe0] sm:$0xff]
        %v3037 = vld [vmem:[#allocation2 + $0xf0] sm:$0xff]
        %v3038 = vld [vmem:[#allocation2 + $0xf8] sm:$0xff]
        %v3039 = vld [vmem:[#allocation2 + $0x108] sm:$0xff]
        %v3040 = vld [vmem:[#allocation2 + $0x110] sm:$0xff]
        %v3041 = vld [vmem:[#allocation2 + $0x120] sm:$0xff]
        %v3042 = vld [vmem:[#allocation2 + $0x128] sm:$0xff]
        %v3043 = vld [vmem:[#allocation2 + $0x138] sm:$0xff]
        %v3044 = vld [vmem:[#allocation2 + $0x140] sm:$0xff]
        %v3045 = vld [vmem:[#allocation2 + $0x150] sm:$0xff]
        %v3046 = vld [vmem:[#allocation2 + $0x158] sm:$0xff]
        %v3047 = vld [vmem:[#allocation2 + $0x168] sm:$0xff]
        %v3048 = vld [vmem:[#allocation2 + $0x170] sm:$0xff]
        %v3049 = vpack.c.bf16 %v3018, %v3017
        %v3050 = vpack.c.bf16 %v3020, %v3019
        %v3051 = vpack.c.bf16 %v3022, %v3021
        %v3052 = vpack.c.bf16 %v3024, %v3023
        %v3053 = vpack.c.bf16 %v3026, %v3025
        %v3054 = vpack.c.bf16 %v3028, %v3027
        %v3055 = vpack.c.bf16 %v3030, %v3029
        %v3056 = vpack.c.bf16 %v3032, %v3031
        %v3057 = vpack.c.bf16 %v3034, %v3033
        %v3058 = vpack.c.bf16 %v3036, %v3035
        %v3059 = vpack.c.bf16 %v3038, %v3037
        %v3060 = vpack.c.bf16 %v3040, %v3039
        %v3061 = vpack.c.bf16 %v3042, %v3041
        %v3062 = vpack.c.bf16 %v3044, %v3043
        %v3063 = vpack.c.bf16 %v3046, %v3045
        %v3064 = vpack.c.bf16 %v3048, %v3047
        %v3065 = vld [vmem:[%s3] sm:$0x3]
        %v3067 = vsel %vm224, %v3049, 0
        %v3070 = vsel %vm224, %v3050, 0
        %v3073 = vsel %vm224, %v3051, 0
        %v3076 = vsel %vm224, %v3052, 0
        %v3079 = vsel %vm224, %v3053, 0
        %v3082 = vsel %vm224, %v3054, 0
        %v3085 = vsel %vm224, %v3055, 0
        %v3088 = vsel %vm224, %v3056, 0
        %v3091 = vsel %vm224, %v3057, 0
        %v3094 = vsel %vm224, %v3058, 0
        %v3097 = vsel %vm224, %v3059, 0
        %v3100 = vsel %vm224, %v3060, 0
        %v3103 = vsel %vm224, %v3061, 0
        %v3106 = vsel %vm224, %v3062, 0
        %v3109 = vsel %vm224, %v3063, 0
        %v3112 = vsel %vm224, %v3064, 0
        %v3115 = vsel %vm471, %v3065, 0
        %3117 = vmatpush.bf16.msra.mxu0 0
        %3118 = vmatpush.bf16.msra.mxu0 0
        %3119 = vmatpush.bf16.msra.mxu0 0
        %3120 = vmatpush.bf16.msra.mxu0 0
        %3121 = vmatpush.bf16.msra.mxu0 0
        %3122 = vmatpush.bf16.msra.mxu0 0
        %3123 = vmatpush.bf16.msra.mxu0 0
        %3124 = vmatpush.bf16.msra.mxu0 %v3115
        %3125 = vmatmul.bf16.gmra.mxu0 %v3067
        %v3126 = vpop.f32.mrf.mxu0
        %v3127 = vadd.f32 0.0, %v3126
        %v3128 = vpop.f32.mrf.mxu0
        %v3129 = vadd.f32 0.0, %v3128
        %3130 = vmatmul.bf16.gmra.mxu0 %v3070
        %v3131 = vpop.f32.mrf.mxu0
        %v3132 = vadd.f32 0.0, %v3131
        %v3133 = vpop.f32.mrf.mxu0
        %v3134 = vadd.f32 0.0, %v3133
        %3135 = vmatmul.bf16.gmra.mxu0 %v3073
        %v3136 = vpop.f32.mrf.mxu0
        %v3137 = vadd.f32 0.0, %v3136
        %v3138 = vpop.f32.mrf.mxu0
        %v3139 = vadd.f32 0.0, %v3138
        %3140 = vmatmul.bf16.gmra.mxu0 %v3076
        %v3141 = vpop.f32.mrf.mxu0
        %v3142 = vadd.f32 0.0, %v3141
        %v3143 = vpop.f32.mrf.mxu0
        %v3144 = vadd.f32 0.0, %v3143
        %3145 = vmatmul.bf16.gmra.mxu0 %v3079
        %v3146 = vpop.f32.mrf.mxu0
        %v3147 = vadd.f32 0.0, %v3146
        %v3148 = vpop.f32.mrf.mxu0
        %v3149 = vadd.f32 0.0, %v3148
        %3150 = vmatmul.bf16.gmra.mxu0 %v3082
        %v3151 = vpop.f32.mrf.mxu0
        %v3152 = vadd.f32 0.0, %v3151
        %v3153 = vpop.f32.mrf.mxu0
        %v3154 = vadd.f32 0.0, %v3153
        %3155 = vmatmul.bf16.gmra.mxu0 %v3085
        %v3156 = vpop.f32.mrf.mxu0
        %v3157 = vadd.f32 0.0, %v3156
        %v3158 = vpop.f32.mrf.mxu0
        %v3159 = vadd.f32 0.0, %v3158
        %3160 = vmatmul.bf16.gmra.mxu0 %v3088
        %v3161 = vpop.f32.mrf.mxu0
        %v3162 = vadd.f32 0.0, %v3161
        %v3163 = vpop.f32.mrf.mxu0
        %v3164 = vadd.f32 0.0, %v3163
        %3165 = vmatmul.bf16.gmra.mxu0 %v3091
        %v3166 = vpop.f32.mrf.mxu0
        %v3167 = vadd.f32 0.0, %v3166
        %v3168 = vpop.f32.mrf.mxu0
        %v3169 = vadd.f32 0.0, %v3168
        %3170 = vmatmul.bf16.gmra.mxu0 %v3094
        %v3171 = vpop.f32.mrf.mxu0
        %v3172 = vadd.f32 0.0, %v3171
        %v3173 = vpop.f32.mrf.mxu0
        %v3174 = vadd.f32 0.0, %v3173
        %3175 = vmatmul.bf16.gmra.mxu0 %v3097
        %v3176 = vpop.f32.mrf.mxu0
        %v3177 = vadd.f32 0.0, %v3176
        %v3178 = vpop.f32.mrf.mxu0
        %v3179 = vadd.f32 0.0, %v3178
        %3180 = vmatmul.bf16.gmra.mxu0 %v3100
        %v3181 = vpop.f32.mrf.mxu0
        %v3182 = vadd.f32 0.0, %v3181
        %v3183 = vpop.f32.mrf.mxu0
        %v3184 = vadd.f32 0.0, %v3183
        %3185 = vmatmul.bf16.gmra.mxu0 %v3103
        %v3186 = vpop.f32.mrf.mxu0
        %v3187 = vadd.f32 0.0, %v3186
        %v3188 = vpop.f32.mrf.mxu0
        %v3189 = vadd.f32 0.0, %v3188
        %3190 = vmatmul.bf16.gmra.mxu0 %v3106
        %v3191 = vpop.f32.mrf.mxu0
        %v3192 = vadd.f32 0.0, %v3191
        %v3193 = vpop.f32.mrf.mxu0
        %v3194 = vadd.f32 0.0, %v3193
        %3195 = vmatmul.bf16.gmra.mxu0 %v3109
        %v3196 = vpop.f32.mrf.mxu0
        %v3197 = vadd.f32 0.0, %v3196
        %v3198 = vpop.f32.mrf.mxu0
        %v3199 = vadd.f32 0.0, %v3198
        %3200 = vmatmul.bf16.gmra.mxu0 %v3112
        %v3201 = vpop.f32.mrf.mxu0
        %v3202 = vadd.f32 0.0, %v3201
        %v3203 = vpop.f32.mrf.mxu0
        %v3204 = vadd.f32 0.0, %v3203
        %3205 = vdwg.mxu0
        %3206 = vst.msk [vmem:[#allocation3] sm:$0xff] %vm224, %v3127
        %3207 = vst.msk [vmem:[#allocation3 + $0x8] sm:$0xff] %vm224, %v3129
        %3208 = vst.msk [vmem:[#allocation3 + $0x10] sm:$0xff] %vm224, %v3132
        %3209 = vst.msk [vmem:[#allocation3 + $0x18] sm:$0xff] %vm224, %v3134
        %3210 = vst.msk [vmem:[#allocation3 + $0x20] sm:$0xff] %vm224, %v3137
        %3211 = vst.msk [vmem:[#allocation3 + $0x28] sm:$0xff] %vm224, %v3139
        %3212 = vst.msk [vmem:[#allocation3 + $0x30] sm:$0xff] %vm224, %v3142
        %3213 = vst.msk [vmem:[#allocation3 + $0x38] sm:$0xff] %vm224, %v3144
        %3214 = vst.msk [vmem:[#allocation3 + $0x40] sm:$0xff] %vm224, %v3147
        %3215 = vst.msk [vmem:[#allocation3 + $0x48] sm:$0xff] %vm224, %v3149
        %3216 = vst.msk [vmem:[#allocation3 + $0x50] sm:$0xff] %vm224, %v3152
        %3217 = vst.msk [vmem:[#allocation3 + $0x58] sm:$0xff] %vm224, %v3154
        %3218 = vst.msk [vmem:[#allocation3 + $0x60] sm:$0xff] %vm224, %v3157
        %3219 = vst.msk [vmem:[#allocation3 + $0x68] sm:$0xff] %vm224, %v3159
        %3220 = vst.msk [vmem:[#allocation3 + $0x70] sm:$0xff] %vm224, %v3162
        %3221 = vst.msk [vmem:[#allocation3 + $0x78] sm:$0xff] %vm224, %v3164
        %3222 = vst.msk [vmem:[#allocation3 + $0x80] sm:$0xff] %vm224, %v3167
        %3223 = vst.msk [vmem:[#allocation3 + $0x88] sm:$0xff] %vm224, %v3169
        %3224 = vst.msk [vmem:[#allocation3 + $0x90] sm:$0xff] %vm224, %v3172
        %3225 = vst.msk [vmem:[#allocation3 + $0x98] sm:$0xff] %vm224, %v3174
        %3226 = vst.msk [vmem:[#allocation3 + $0xa0] sm:$0xff] %vm224, %v3177
        %3227 = vst.msk [vmem:[#allocation3 + $0xa8] sm:$0xff] %vm224, %v3179
        %3228 = vst.msk [vmem:[#allocation3 + $0xb0] sm:$0xff] %vm224, %v3182
        %3229 = vst.msk [vmem:[#allocation3 + $0xb8] sm:$0xff] %vm224, %v3184
        %3230 = vst.msk [vmem:[#allocation3 + $0xc0] sm:$0xff] %vm224, %v3187
        %3231 = vst.msk [vmem:[#allocation3 + $0xc8] sm:$0xff] %vm224, %v3189
        %3232 = vst.msk [vmem:[#allocation3 + $0xd0] sm:$0xff] %vm224, %v3192
        %3233 = vst.msk [vmem:[#allocation3 + $0xd8] sm:$0xff] %vm224, %v3194
        %3234 = vst.msk [vmem:[#allocation3 + $0xe0] sm:$0xff] %vm224, %v3197
        %3235 = vst.msk [vmem:[#allocation3 + $0xe8] sm:$0xff] %vm224, %v3199
        %3236 = vst.msk [vmem:[#allocation3 + $0xf0] sm:$0xff] %vm224, %v3202
        %3237 = vst.msk [vmem:[#allocation3 + $0xf8] sm:$0xff] %vm224, %v3204
        %v3238 = vld [vmem:[#allocation2 + $0x1] sm:$0xff]
        %v3239 = vld [vmem:[#allocation2 + $0x9] sm:$0xff]
        %v3240 = vld [vmem:[#allocation2 + $0x19] sm:$0xff]
        %v3241 = vld [vmem:[#allocation2 + $0x21] sm:$0xff]
        %v3242 = vld [vmem:[#allocation2 + $0x31] sm:$0xff]
        %v3243 = vld [vmem:[#allocation2 + $0x39] sm:$0xff]
        %v3244 = vld [vmem:[#allocation2 + $0x49] sm:$0xff]
        %v3245 = vld [vmem:[#allocation2 + $0x51] sm:$0xff]
        %v3246 = vld [vmem:[#allocation2 + $0x61] sm:$0xff]
        %v3247 = vld [vmem:[#allocation2 + $0x69] sm:$0xff]
        %v3248 = vld [vmem:[#allocation2 + $0x79] sm:$0xff]
        %v3249 = vld [vmem:[#allocation2 + $0x81] sm:$0xff]
        %v3250 = vld [vmem:[#allocation2 + $0x91] sm:$0xff]
        %v3251 = vld [vmem:[#allocation2 + $0x99] sm:$0xff]
        %v3252 = vld [vmem:[#allocation2 + $0xa9] sm:$0xff]
        %v3253 = vld [vmem:[#allocation2 + $0xb1] sm:$0xff]
        %v3254 = vld [vmem:[#allocation2 + $0xc1] sm:$0xff]
        %v3255 = vld [vmem:[#allocation2 + $0xc9] sm:$0xff]
        %v3256 = vld [vmem:[#allocation2 + $0xd9] sm:$0xff]
        %v3257 = vld [vmem:[#allocation2 + $0xe1] sm:$0xff]
        %v3258 = vld [vmem:[#allocation2 + $0xf1] sm:$0xff]
        %v3259 = vld [vmem:[#allocation2 + $0xf9] sm:$0xff]
        %v3260 = vld [vmem:[#allocation2 + $0x109] sm:$0xff]
        %v3261 = vld [vmem:[#allocation2 + $0x111] sm:$0xff]
        %v3262 = vld [vmem:[#allocation2 + $0x121] sm:$0xff]
        %v3263 = vld [vmem:[#allocation2 + $0x129] sm:$0xff]
        %v3264 = vld [vmem:[#allocation2 + $0x139] sm:$0xff]
        %v3265 = vld [vmem:[#allocation2 + $0x141] sm:$0xff]
        %v3266 = vld [vmem:[#allocation2 + $0x151] sm:$0xff]
        %v3267 = vld [vmem:[#allocation2 + $0x159] sm:$0xff]
        %v3268 = vld [vmem:[#allocation2 + $0x169] sm:$0xff]
        %v3269 = vld [vmem:[#allocation2 + $0x171] sm:$0xff]
        %v3270 = vpack.c.bf16 %v3239, %v3238
        %v3271 = vpack.c.bf16 %v3241, %v3240
        %v3272 = vpack.c.bf16 %v3243, %v3242
        %v3273 = vpack.c.bf16 %v3245, %v3244
        %v3274 = vpack.c.bf16 %v3247, %v3246
        %v3275 = vpack.c.bf16 %v3249, %v3248
        %v3276 = vpack.c.bf16 %v3251, %v3250
        %v3277 = vpack.c.bf16 %v3253, %v3252
        %v3278 = vpack.c.bf16 %v3255, %v3254
        %v3279 = vpack.c.bf16 %v3257, %v3256
        %v3280 = vpack.c.bf16 %v3259, %v3258
        %v3281 = vpack.c.bf16 %v3261, %v3260
        %v3282 = vpack.c.bf16 %v3263, %v3262
        %v3283 = vpack.c.bf16 %v3265, %v3264
        %v3284 = vpack.c.bf16 %v3267, %v3266
        %v3285 = vpack.c.bf16 %v3269, %v3268
        %s3286 = scalar_lea.vmem %s3, 2
        %v3287 = vld [vmem:[%s3286] sm:$0x3]
        %v3289 = vsel %vm224, %v3270, 0
        %v3292 = vsel %vm224, %v3271, 0
        %v3295 = vsel %vm224, %v3272, 0
        %v3298 = vsel %vm224, %v3273, 0
        %v3301 = vsel %vm224, %v3274, 0
        %v3304 = vsel %vm224, %v3275, 0
        %v3307 = vsel %vm224, %v3276, 0
        %v3310 = vsel %vm224, %v3277, 0
        %v3313 = vsel %vm224, %v3278, 0
        %v3316 = vsel %vm224, %v3279, 0
        %v3319 = vsel %vm224, %v3280, 0
        %v3322 = vsel %vm224, %v3281, 0
        %v3325 = vsel %vm224, %v3282, 0
        %v3328 = vsel %vm224, %v3283, 0
        %v3331 = vsel %vm224, %v3284, 0
        %v3334 = vsel %vm224, %v3285, 0
        %v3337 = vsel %vm471, %v3287, 0
        %3339 = vmatpush.bf16.msra.mxu0 0
        %3340 = vmatpush.bf16.msra.mxu0 0
        %3341 = vmatpush.bf16.msra.mxu0 0
        %3342 = vmatpush.bf16.msra.mxu0 0
        %3343 = vmatpush.bf16.msra.mxu0 0
        %3344 = vmatpush.bf16.msra.mxu0 0
        %3345 = vmatpush.bf16.msra.mxu0 0
        %3346 = vmatpush.bf16.msra.mxu0 %v3337
        %3347 = vmatmul.bf16.gmra.mxu0 %v3289
        %v3348 = vpop.f32.mrf.mxu0
        %v3349 = vadd.f32 0.0, %v3348
        %v3350 = vpop.f32.mrf.mxu0
        %v3351 = vadd.f32 0.0, %v3350
        %3352 = vmatmul.bf16.gmra.mxu0 %v3292
        %v3353 = vpop.f32.mrf.mxu0
        %v3354 = vadd.f32 0.0, %v3353
        %v3355 = vpop.f32.mrf.mxu0
        %v3356 = vadd.f32 0.0, %v3355
        %3357 = vmatmul.bf16.gmra.mxu0 %v3295
        %v3358 = vpop.f32.mrf.mxu0
        %v3359 = vadd.f32 0.0, %v3358
        %v3360 = vpop.f32.mrf.mxu0
        %v3361 = vadd.f32 0.0, %v3360
        %3362 = vmatmul.bf16.gmra.mxu0 %v3298
        %v3363 = vpop.f32.mrf.mxu0
        %v3364 = vadd.f32 0.0, %v3363
        %v3365 = vpop.f32.mrf.mxu0
        %v3366 = vadd.f32 0.0, %v3365
        %3367 = vmatmul.bf16.gmra.mxu0 %v3301
        %v3368 = vpop.f32.mrf.mxu0
        %v3369 = vadd.f32 0.0, %v3368
        %v3370 = vpop.f32.mrf.mxu0
        %v3371 = vadd.f32 0.0, %v3370
        %3372 = vmatmul.bf16.gmra.mxu0 %v3304
        %v3373 = vpop.f32.mrf.mxu0
        %v3374 = vadd.f32 0.0, %v3373
        %v3375 = vpop.f32.mrf.mxu0
        %v3376 = vadd.f32 0.0, %v3375
        %3377 = vmatmul.bf16.gmra.mxu0 %v3307
        %v3378 = vpop.f32.mrf.mxu0
        %v3379 = vadd.f32 0.0, %v3378
        %v3380 = vpop.f32.mrf.mxu0
        %v3381 = vadd.f32 0.0, %v3380
        %3382 = vmatmul.bf16.gmra.mxu0 %v3310
        %v3383 = vpop.f32.mrf.mxu0
        %v3384 = vadd.f32 0.0, %v3383
        %v3385 = vpop.f32.mrf.mxu0
        %v3386 = vadd.f32 0.0, %v3385
        %3387 = vmatmul.bf16.gmra.mxu0 %v3313
        %v3388 = vpop.f32.mrf.mxu0
        %v3389 = vadd.f32 0.0, %v3388
        %v3390 = vpop.f32.mrf.mxu0
        %v3391 = vadd.f32 0.0, %v3390
        %3392 = vmatmul.bf16.gmra.mxu0 %v3316
        %v3393 = vpop.f32.mrf.mxu0
        %v3394 = vadd.f32 0.0, %v3393
        %v3395 = vpop.f32.mrf.mxu0
        %v3396 = vadd.f32 0.0, %v3395
        %3397 = vmatmul.bf16.gmra.mxu0 %v3319
        %v3398 = vpop.f32.mrf.mxu0
        %v3399 = vadd.f32 0.0, %v3398
        %v3400 = vpop.f32.mrf.mxu0
        %v3401 = vadd.f32 0.0, %v3400
        %3402 = vmatmul.bf16.gmra.mxu0 %v3322
        %v3403 = vpop.f32.mrf.mxu0
        %v3404 = vadd.f32 0.0, %v3403
        %v3405 = vpop.f32.mrf.mxu0
        %v3406 = vadd.f32 0.0, %v3405
        %3407 = vmatmul.bf16.gmra.mxu0 %v3325
        %v3408 = vpop.f32.mrf.mxu0
        %v3409 = vadd.f32 0.0, %v3408
        %v3410 = vpop.f32.mrf.mxu0
        %v3411 = vadd.f32 0.0, %v3410
        %3412 = vmatmul.bf16.gmra.mxu0 %v3328
        %v3413 = vpop.f32.mrf.mxu0
        %v3414 = vadd.f32 0.0, %v3413
        %v3415 = vpop.f32.mrf.mxu0
        %v3416 = vadd.f32 0.0, %v3415
        %3417 = vmatmul.bf16.gmra.mxu0 %v3331
        %v3418 = vpop.f32.mrf.mxu0
        %v3419 = vadd.f32 0.0, %v3418
        %v3420 = vpop.f32.mrf.mxu0
        %v3421 = vadd.f32 0.0, %v3420
        %3422 = vmatmul.bf16.gmra.mxu0 %v3334
        %v3423 = vpop.f32.mrf.mxu0
        %v3424 = vadd.f32 0.0, %v3423
        %v3425 = vpop.f32.mrf.mxu0
        %v3426 = vadd.f32 0.0, %v3425
        %3427 = vdwg.mxu0
        %v3428 = vld [vmem:[#allocation3] sm:$0xff]
        %v3429 = vld [vmem:[#allocation3 + $0x8] sm:$0xff]
        %v3430 = vld [vmem:[#allocation3 + $0x10] sm:$0xff]
        %v3431 = vld [vmem:[#allocation3 + $0x18] sm:$0xff]
        %v3432 = vld [vmem:[#allocation3 + $0x20] sm:$0xff]
        %v3433 = vld [vmem:[#allocation3 + $0x28] sm:$0xff]
        %v3434 = vld [vmem:[#allocation3 + $0x30] sm:$0xff]
        %v3435 = vld [vmem:[#allocation3 + $0x38] sm:$0xff]
        %v3436 = vld [vmem:[#allocation3 + $0x40] sm:$0xff]
        %v3437 = vld [vmem:[#allocation3 + $0x48] sm:$0xff]
        %v3438 = vld [vmem:[#allocation3 + $0x50] sm:$0xff]
        %v3439 = vld [vmem:[#allocation3 + $0x58] sm:$0xff]
        %v3440 = vld [vmem:[#allocation3 + $0x60] sm:$0xff]
        %v3441 = vld [vmem:[#allocation3 + $0x68] sm:$0xff]
        %v3442 = vld [vmem:[#allocation3 + $0x70] sm:$0xff]
        %v3443 = vld [vmem:[#allocation3 + $0x78] sm:$0xff]
        %v3444 = vld [vmem:[#allocation3 + $0x80] sm:$0xff]
        %v3445 = vld [vmem:[#allocation3 + $0x88] sm:$0xff]
        %v3446 = vld [vmem:[#allocation3 + $0x90] sm:$0xff]
        %v3447 = vld [vmem:[#allocation3 + $0x98] sm:$0xff]
        %v3448 = vld [vmem:[#allocation3 + $0xa0] sm:$0xff]
        %v3449 = vld [vmem:[#allocation3 + $0xa8] sm:$0xff]
        %v3450 = vld [vmem:[#allocation3 + $0xb0] sm:$0xff]
        %v3451 = vld [vmem:[#allocation3 + $0xb8] sm:$0xff]
        %v3452 = vld [vmem:[#allocation3 + $0xc0] sm:$0xff]
        %v3453 = vld [vmem:[#allocation3 + $0xc8] sm:$0xff]
        %v3454 = vld [vmem:[#allocation3 + $0xd0] sm:$0xff]
        %v3455 = vld [vmem:[#allocation3 + $0xd8] sm:$0xff]
        %v3456 = vld [vmem:[#allocation3 + $0xe0] sm:$0xff]
        %v3457 = vld [vmem:[#allocation3 + $0xe8] sm:$0xff]
        %v3458 = vld [vmem:[#allocation3 + $0xf0] sm:$0xff]
        %v3459 = vld [vmem:[#allocation3 + $0xf8] sm:$0xff]
        %v3460 = vadd.f32 %v3428, %v3349
        %v3461 = vadd.f32 %v3429, %v3351
        %v3462 = vadd.f32 %v3430, %v3354
        %v3463 = vadd.f32 %v3431, %v3356
        %v3464 = vadd.f32 %v3432, %v3359
        %v3465 = vadd.f32 %v3433, %v3361
        %v3466 = vadd.f32 %v3434, %v3364
        %v3467 = vadd.f32 %v3435, %v3366
        %v3468 = vadd.f32 %v3436, %v3369
        %v3469 = vadd.f32 %v3437, %v3371
        %v3470 = vadd.f32 %v3438, %v3374
        %v3471 = vadd.f32 %v3439, %v3376
        %v3472 = vadd.f32 %v3440, %v3379
        %v3473 = vadd.f32 %v3441, %v3381
        %v3474 = vadd.f32 %v3442, %v3384
        %v3475 = vadd.f32 %v3443, %v3386
        %v3476 = vadd.f32 %v3444, %v3389
        %v3477 = vadd.f32 %v3445, %v3391
        %v3478 = vadd.f32 %v3446, %v3394
        %v3479 = vadd.f32 %v3447, %v3396
        %v3480 = vadd.f32 %v3448, %v3399
        %v3481 = vadd.f32 %v3449, %v3401
        %v3482 = vadd.f32 %v3450, %v3404
        %v3483 = vadd.f32 %v3451, %v3406
        %v3484 = vadd.f32 %v3452, %v3409
        %v3485 = vadd.f32 %v3453, %v3411
        %v3486 = vadd.f32 %v3454, %v3414
        %v3487 = vadd.f32 %v3455, %v3416
        %v3488 = vadd.f32 %v3456, %v3419
        %v3489 = vadd.f32 %v3457, %v3421
        %v3490 = vadd.f32 %v3458, %v3424
        %v3491 = vadd.f32 %v3459, %v3426
        %3492 = vst.msk [vmem:[#allocation3] sm:$0xff] %vm224, %v3460
        %3493 = vst.msk [vmem:[#allocation3 + $0x8] sm:$0xff] %vm224, %v3461
        %3494 = vst.msk [vmem:[#allocation3 + $0x10] sm:$0xff] %vm224, %v3462
        %3495 = vst.msk [vmem:[#allocation3 + $0x18] sm:$0xff] %vm224, %v3463
        %3496 = vst.msk [vmem:[#allocation3 + $0x20] sm:$0xff] %vm224, %v3464
        %3497 = vst.msk [vmem:[#allocation3 + $0x28] sm:$0xff] %vm224, %v3465
        %3498 = vst.msk [vmem:[#allocation3 + $0x30] sm:$0xff] %vm224, %v3466
        %3499 = vst.msk [vmem:[#allocation3 + $0x38] sm:$0xff] %vm224, %v3467
        %3500 = vst.msk [vmem:[#allocation3 + $0x40] sm:$0xff] %vm224, %v3468
        %3501 = vst.msk [vmem:[#allocation3 + $0x48] sm:$0xff] %vm224, %v3469
        %3502 = vst.msk [vmem:[#allocation3 + $0x50] sm:$0xff] %vm224, %v3470
        %3503 = vst.msk [vmem:[#allocation3 + $0x58] sm:$0xff] %vm224, %v3471
        %3504 = vst.msk [vmem:[#allocation3 + $0x60] sm:$0xff] %vm224, %v3472
        %3505 = vst.msk [vmem:[#allocation3 + $0x68] sm:$0xff] %vm224, %v3473
        %3506 = vst.msk [vmem:[#allocation3 + $0x70] sm:$0xff] %vm224, %v3474
        %3507 = vst.msk [vmem:[#allocation3 + $0x78] sm:$0xff] %vm224, %v3475
        %3508 = vst.msk [vmem:[#allocation3 + $0x80] sm:$0xff] %vm224, %v3476
        %3509 = vst.msk [vmem:[#allocation3 + $0x88] sm:$0xff] %vm224, %v3477
        %3510 = vst.msk [vmem:[#allocation3 + $0x90] sm:$0xff] %vm224, %v3478
        %3511 = vst.msk [vmem:[#allocation3 + $0x98] sm:$0xff] %vm224, %v3479
        %3512 = vst.msk [vmem:[#allocation3 + $0xa0] sm:$0xff] %vm224, %v3480
        %3513 = vst.msk [vmem:[#allocation3 + $0xa8] sm:$0xff] %vm224, %v3481
        %3514 = vst.msk [vmem:[#allocation3 + $0xb0] sm:$0xff] %vm224, %v3482
        %3515 = vst.msk [vmem:[#allocation3 + $0xb8] sm:$0xff] %vm224, %v3483
        %3516 = vst.msk [vmem:[#allocation3 + $0xc0] sm:$0xff] %vm224, %v3484
        %3517 = vst.msk [vmem:[#allocation3 + $0xc8] sm:$0xff] %vm224, %v3485
        %3518 = vst.msk [vmem:[#allocation3 + $0xd0] sm:$0xff] %vm224, %v3486
        %3519 = vst.msk [vmem:[#allocation3 + $0xd8] sm:$0xff] %vm224, %v3487
        %3520 = vst.msk [vmem:[#allocation3 + $0xe0] sm:$0xff] %vm224, %v3488
        %3521 = vst.msk [vmem:[#allocation3 + $0xe8] sm:$0xff] %vm224, %v3489
        %3522 = vst.msk [vmem:[#allocation3 + $0xf0] sm:$0xff] %vm224, %v3490
        %3523 = vst.msk [vmem:[#allocation3 + $0xf8] sm:$0xff] %vm224, %v3491
        %v3524 = vld [vmem:[#allocation2 + $0x2] sm:$0xff]
        %v3525 = vld [vmem:[#allocation2 + $0xa] sm:$0xff]
        %v3526 = vld [vmem:[#allocation2 + $0x1a] sm:$0xff]
        %v3527 = vld [vmem:[#allocation2 + $0x22] sm:$0xff]
        %v3528 = vld [vmem:[#allocation2 + $0x32] sm:$0xff]
        %v3529 = vld [vmem:[#allocation2 + $0x3a] sm:$0xff]
        %v3530 = vld [vmem:[#allocation2 + $0x4a] sm:$0xff]
        %v3531 = vld [vmem:[#allocation2 + $0x52] sm:$0xff]
        %v3532 = vld [vmem:[#allocation2 + $0x62] sm:$0xff]
        %v3533 = vld [vmem:[#allocation2 + $0x6a] sm:$0xff]
        %v3534 = vld [vmem:[#allocation2 + $0x7a] sm:$0xff]
        %v3535 = vld [vmem:[#allocation2 + $0x82] sm:$0xff]
        %v3536 = vld [vmem:[#allocation2 + $0x92] sm:$0xff]
        %v3537 = vld [vmem:[#allocation2 + $0x9a] sm:$0xff]
        %v3538 = vld [vmem:[#allocation2 + $0xaa] sm:$0xff]
        %v3539 = vld [vmem:[#allocation2 + $0xb2] sm:$0xff]
        %v3540 = vld [vmem:[#allocation2 + $0xc2] sm:$0xff]
        %v3541 = vld [vmem:[#allocation2 + $0xca] sm:$0xff]
        %v3542 = vld [vmem:[#allocation2 + $0xda] sm:$0xff]
        %v3543 = vld [vmem:[#allocation2 + $0xe2] sm:$0xff]
        %v3544 = vld [vmem:[#allocation2 + $0xf2] sm:$0xff]
        %v3545 = vld [vmem:[#allocation2 + $0xfa] sm:$0xff]
        %v3546 = vld [vmem:[#allocation2 + $0x10a] sm:$0xff]
        %v3547 = vld [vmem:[#allocation2 + $0x112] sm:$0xff]
        %v3548 = vld [vmem:[#allocation2 + $0x122] sm:$0xff]
        %v3549 = vld [vmem:[#allocation2 + $0x12a] sm:$0xff]
        %v3550 = vld [vmem:[#allocation2 + $0x13a] sm:$0xff]
        %v3551 = vld [vmem:[#allocation2 + $0x142] sm:$0xff]
        %v3552 = vld [vmem:[#allocation2 + $0x152] sm:$0xff]
        %v3553 = vld [vmem:[#allocation2 + $0x15a] sm:$0xff]
        %v3554 = vld [vmem:[#allocation2 + $0x16a] sm:$0xff]
        %v3555 = vld [vmem:[#allocation2 + $0x172] sm:$0xff]
        %v3556 = vpack.c.bf16 %v3525, %v3524
        %v3557 = vpack.c.bf16 %v3527, %v3526
        %v3558 = vpack.c.bf16 %v3529, %v3528
        %v3559 = vpack.c.bf16 %v3531, %v3530
        %v3560 = vpack.c.bf16 %v3533, %v3532
        %v3561 = vpack.c.bf16 %v3535, %v3534
        %v3562 = vpack.c.bf16 %v3537, %v3536
        %v3563 = vpack.c.bf16 %v3539, %v3538
        %v3564 = vpack.c.bf16 %v3541, %v3540
        %v3565 = vpack.c.bf16 %v3543, %v3542
        %v3566 = vpack.c.bf16 %v3545, %v3544
        %v3567 = vpack.c.bf16 %v3547, %v3546
        %v3568 = vpack.c.bf16 %v3549, %v3548
        %v3569 = vpack.c.bf16 %v3551, %v3550
        %v3570 = vpack.c.bf16 %v3553, %v3552
        %v3571 = vpack.c.bf16 %v3555, %v3554
        %s3572 = scalar_lea.vmem %s3, 4
        %v3573 = vld [vmem:[%s3572] sm:$0x3]
        %v3575 = vsel %vm224, %v3556, 0
        %v3578 = vsel %vm224, %v3557, 0
        %v3581 = vsel %vm224, %v3558, 0
        %v3584 = vsel %vm224, %v3559, 0
        %v3587 = vsel %vm224, %v3560, 0
        %v3590 = vsel %vm224, %v3561, 0
        %v3593 = vsel %vm224, %v3562, 0
        %v3596 = vsel %vm224, %v3563, 0
        %v3599 = vsel %vm224, %v3564, 0
        %v3602 = vsel %vm224, %v3565, 0
        %v3605 = vsel %vm224, %v3566, 0
        %v3608 = vsel %vm224, %v3567, 0
        %v3611 = vsel %vm224, %v3568, 0
        %v3614 = vsel %vm224, %v3569, 0
        %v3617 = vsel %vm224, %v3570, 0
        %v3620 = vsel %vm224, %v3571, 0
        %v3623 = vsel %vm471, %v3573, 0
        %3625 = vmatpush.bf16.msra.mxu0 0
        %3626 = vmatpush.bf16.msra.mxu0 0
        %3627 = vmatpush.bf16.msra.mxu0 0
        %3628 = vmatpush.bf16.msra.mxu0 0
        %3629 = vmatpush.bf16.msra.mxu0 0
        %3630 = vmatpush.bf16.msra.mxu0 0
        %3631 = vmatpush.bf16.msra.mxu0 0
        %3632 = vmatpush.bf16.msra.mxu0 %v3623
        %3633 = vmatmul.bf16.gmra.mxu0 %v3575
        %v3634 = vpop.f32.mrf.mxu0
        %v3635 = vadd.f32 0.0, %v3634
        %v3636 = vpop.f32.mrf.mxu0
        %v3637 = vadd.f32 0.0, %v3636
        %3638 = vmatmul.bf16.gmra.mxu0 %v3578
        %v3639 = vpop.f32.mrf.mxu0
        %v3640 = vadd.f32 0.0, %v3639
        %v3641 = vpop.f32.mrf.mxu0
        %v3642 = vadd.f32 0.0, %v3641
        %3643 = vmatmul.bf16.gmra.mxu0 %v3581
        %v3644 = vpop.f32.mrf.mxu0
        %v3645 = vadd.f32 0.0, %v3644
        %v3646 = vpop.f32.mrf.mxu0
        %v3647 = vadd.f32 0.0, %v3646
        %3648 = vmatmul.bf16.gmra.mxu0 %v3584
        %v3649 = vpop.f32.mrf.mxu0
        %v3650 = vadd.f32 0.0, %v3649
        %v3651 = vpop.f32.mrf.mxu0
        %v3652 = vadd.f32 0.0, %v3651
        %3653 = vmatmul.bf16.gmra.mxu0 %v3587
        %v3654 = vpop.f32.mrf.mxu0
        %v3655 = vadd.f32 0.0, %v3654
        %v3656 = vpop.f32.mrf.mxu0
        %v3657 = vadd.f32 0.0, %v3656
        %3658 = vmatmul.bf16.gmra.mxu0 %v3590
        %v3659 = vpop.f32.mrf.mxu0
        %v3660 = vadd.f32 0.0, %v3659
        %v3661 = vpop.f32.mrf.mxu0
        %v3662 = vadd.f32 0.0, %v3661
        %3663 = vmatmul.bf16.gmra.mxu0 %v3593
        %v3664 = vpop.f32.mrf.mxu0
        %v3665 = vadd.f32 0.0, %v3664
        %v3666 = vpop.f32.mrf.mxu0
        %v3667 = vadd.f32 0.0, %v3666
        %3668 = vmatmul.bf16.gmra.mxu0 %v3596
        %v3669 = vpop.f32.mrf.mxu0
        %v3670 = vadd.f32 0.0, %v3669
        %v3671 = vpop.f32.mrf.mxu0
        %v3672 = vadd.f32 0.0, %v3671
        %3673 = vmatmul.bf16.gmra.mxu0 %v3599
        %v3674 = vpop.f32.mrf.mxu0
        %v3675 = vadd.f32 0.0, %v3674
        %v3676 = vpop.f32.mrf.mxu0
        %v3677 = vadd.f32 0.0, %v3676
        %3678 = vmatmul.bf16.gmra.mxu0 %v3602
        %v3679 = vpop.f32.mrf.mxu0
        %v3680 = vadd.f32 0.0, %v3679
        %v3681 = vpop.f32.mrf.mxu0
        %v3682 = vadd.f32 0.0, %v3681
        %3683 = vmatmul.bf16.gmra.mxu0 %v3605
        %v3684 = vpop.f32.mrf.mxu0
        %v3685 = vadd.f32 0.0, %v3684
        %v3686 = vpop.f32.mrf.mxu0
        %v3687 = vadd.f32 0.0, %v3686
        %3688 = vmatmul.bf16.gmra.mxu0 %v3608
        %v3689 = vpop.f32.mrf.mxu0
        %v3690 = vadd.f32 0.0, %v3689
        %v3691 = vpop.f32.mrf.mxu0
        %v3692 = vadd.f32 0.0, %v3691
        %3693 = vmatmul.bf16.gmra.mxu0 %v3611
        %v3694 = vpop.f32.mrf.mxu0
        %v3695 = vadd.f32 0.0, %v3694
        %v3696 = vpop.f32.mrf.mxu0
        %v3697 = vadd.f32 0.0, %v3696
        %3698 = vmatmul.bf16.gmra.mxu0 %v3614
        %v3699 = vpop.f32.mrf.mxu0
        %v3700 = vadd.f32 0.0, %v3699
        %v3701 = vpop.f32.mrf.mxu0
        %v3702 = vadd.f32 0.0, %v3701
        %3703 = vmatmul.bf16.gmra.mxu0 %v3617
        %v3704 = vpop.f32.mrf.mxu0
        %v3705 = vadd.f32 0.0, %v3704
        %v3706 = vpop.f32.mrf.mxu0
        %v3707 = vadd.f32 0.0, %v3706
        %3708 = vmatmul.bf16.gmra.mxu0 %v3620
        %v3709 = vpop.f32.mrf.mxu0
        %v3710 = vadd.f32 0.0, %v3709
        %v3711 = vpop.f32.mrf.mxu0
        %v3712 = vadd.f32 0.0, %v3711
        %3713 = vdwg.mxu0
        %v3714 = vld [vmem:[#allocation3] sm:$0xff]
        %v3715 = vld [vmem:[#allocation3 + $0x8] sm:$0xff]
        %v3716 = vld [vmem:[#allocation3 + $0x10] sm:$0xff]
        %v3717 = vld [vmem:[#allocation3 + $0x18] sm:$0xff]
        %v3718 = vld [vmem:[#allocation3 + $0x20] sm:$0xff]
        %v3719 = vld [vmem:[#allocation3 + $0x28] sm:$0xff]
        %v3720 = vld [vmem:[#allocation3 + $0x30] sm:$0xff]
        %v3721 = vld [vmem:[#allocation3 + $0x38] sm:$0xff]
        %v3722 = vld [vmem:[#allocation3 + $0x40] sm:$0xff]
        %v3723 = vld [vmem:[#allocation3 + $0x48] sm:$0xff]
        %v3724 = vld [vmem:[#allocation3 + $0x50] sm:$0xff]
        %v3725 = vld [vmem:[#allocation3 + $0x58] sm:$0xff]
        %v3726 = vld [vmem:[#allocation3 + $0x60] sm:$0xff]
        %v3727 = vld [vmem:[#allocation3 + $0x68] sm:$0xff]
        %v3728 = vld [vmem:[#allocation3 + $0x70] sm:$0xff]
        %v3729 = vld [vmem:[#allocation3 + $0x78] sm:$0xff]
        %v3730 = vld [vmem:[#allocation3 + $0x80] sm:$0xff]
        %v3731 = vld [vmem:[#allocation3 + $0x88] sm:$0xff]
        %v3732 = vld [vmem:[#allocation3 + $0x90] sm:$0xff]
        %v3733 = vld [vmem:[#allocation3 + $0x98] sm:$0xff]
        %v3734 = vld [vmem:[#allocation3 + $0xa0] sm:$0xff]
        %v3735 = vld [vmem:[#allocation3 + $0xa8] sm:$0xff]
        %v3736 = vld [vmem:[#allocation3 + $0xb0] sm:$0xff]
        %v3737 = vld [vmem:[#allocation3 + $0xb8] sm:$0xff]
        %v3738 = vld [vmem:[#allocation3 + $0xc0] sm:$0xff]
        %v3739 = vld [vmem:[#allocation3 + $0xc8] sm:$0xff]
        %v3740 = vld [vmem:[#allocation3 + $0xd0] sm:$0xff]
        %v3741 = vld [vmem:[#allocation3 + $0xd8] sm:$0xff]
        %v3742 = vld [vmem:[#allocation3 + $0xe0] sm:$0xff]
        %v3743 = vld [vmem:[#allocation3 + $0xe8] sm:$0xff]
        %v3744 = vld [vmem:[#allocation3 + $0xf0] sm:$0xff]
        %v3745 = vld [vmem:[#allocation3 + $0xf8] sm:$0xff]
        %v3746 = vadd.f32 %v3714, %v3635
        %v3747 = vadd.f32 %v3715, %v3637
        %v3748 = vadd.f32 %v3716, %v3640
        %v3749 = vadd.f32 %v3717, %v3642
        %v3750 = vadd.f32 %v3718, %v3645
        %v3751 = vadd.f32 %v3719, %v3647
        %v3752 = vadd.f32 %v3720, %v3650
        %v3753 = vadd.f32 %v3721, %v3652
        %v3754 = vadd.f32 %v3722, %v3655
        %v3755 = vadd.f32 %v3723, %v3657
        %v3756 = vadd.f32 %v3724, %v3660
        %v3757 = vadd.f32 %v3725, %v3662
        %v3758 = vadd.f32 %v3726, %v3665
        %v3759 = vadd.f32 %v3727, %v3667
        %v3760 = vadd.f32 %v3728, %v3670
        %v3761 = vadd.f32 %v3729, %v3672
        %v3762 = vadd.f32 %v3730, %v3675
        %v3763 = vadd.f32 %v3731, %v3677
        %v3764 = vadd.f32 %v3732, %v3680
        %v3765 = vadd.f32 %v3733, %v3682
        %v3766 = vadd.f32 %v3734, %v3685
        %v3767 = vadd.f32 %v3735, %v3687
        %v3768 = vadd.f32 %v3736, %v3690
        %v3769 = vadd.f32 %v3737, %v3692
        %v3770 = vadd.f32 %v3738, %v3695
        %v3771 = vadd.f32 %v3739, %v3697
        %v3772 = vadd.f32 %v3740, %v3700
        %v3773 = vadd.f32 %v3741, %v3702
        %v3774 = vadd.f32 %v3742, %v3705
        %v3775 = vadd.f32 %v3743, %v3707
        %v3776 = vadd.f32 %v3744, %v3710
        %v3777 = vadd.f32 %v3745, %v3712
        %3778 = vst.msk [vmem:[#allocation3] sm:$0xff] %vm224, %v3746
        %3779 = vst.msk [vmem:[#allocation3 + $0x8] sm:$0xff] %vm224, %v3747
        %3780 = vst.msk [vmem:[#allocation3 + $0x10] sm:$0xff] %vm224, %v3748
        %3781 = vst.msk [vmem:[#allocation3 + $0x18] sm:$0xff] %vm224, %v3749
        %3782 = vst.msk [vmem:[#allocation3 + $0x20] sm:$0xff] %vm224, %v3750
        %3783 = vst.msk [vmem:[#allocation3 + $0x28] sm:$0xff] %vm224, %v3751
        %3784 = vst.msk [vmem:[#allocation3 + $0x30] sm:$0xff] %vm224, %v3752
        %3785 = vst.msk [vmem:[#allocation3 + $0x38] sm:$0xff] %vm224, %v3753
        %3786 = vst.msk [vmem:[#allocation3 + $0x40] sm:$0xff] %vm224, %v3754
        %3787 = vst.msk [vmem:[#allocation3 + $0x48] sm:$0xff] %vm224, %v3755
        %3788 = vst.msk [vmem:[#allocation3 + $0x50] sm:$0xff] %vm224, %v3756
        %3789 = vst.msk [vmem:[#allocation3 + $0x58] sm:$0xff] %vm224, %v3757
        %3790 = vst.msk [vmem:[#allocation3 + $0x60] sm:$0xff] %vm224, %v3758
        %3791 = vst.msk [vmem:[#allocation3 + $0x68] sm:$0xff] %vm224, %v3759
        %3792 = vst.msk [vmem:[#allocation3 + $0x70] sm:$0xff] %vm224, %v3760
        %3793 = vst.msk [vmem:[#allocation3 + $0x78] sm:$0xff] %vm224, %v3761
        %3794 = vst.msk [vmem:[#allocation3 + $0x80] sm:$0xff] %vm224, %v3762
        %3795 = vst.msk [vmem:[#allocation3 + $0x88] sm:$0xff] %vm224, %v3763
        %3796 = vst.msk [vmem:[#allocation3 + $0x90] sm:$0xff] %vm224, %v3764
        %3797 = vst.msk [vmem:[#allocation3 + $0x98] sm:$0xff] %vm224, %v3765
        %3798 = vst.msk [vmem:[#allocation3 + $0xa0] sm:$0xff] %vm224, %v3766
        %3799 = vst.msk [vmem:[#allocation3 + $0xa8] sm:$0xff] %vm224, %v3767
        %3800 = vst.msk [vmem:[#allocation3 + $0xb0] sm:$0xff] %vm224, %v3768
        %3801 = vst.msk [vmem:[#allocation3 + $0xb8] sm:$0xff] %vm224, %v3769
        %3802 = vst.msk [vmem:[#allocation3 + $0xc0] sm:$0xff] %vm224, %v3770
        %3803 = vst.msk [vmem:[#allocation3 + $0xc8] sm:$0xff] %vm224, %v3771
        %3804 = vst.msk [vmem:[#allocation3 + $0xd0] sm:$0xff] %vm224, %v3772
        %3805 = vst.msk [vmem:[#allocation3 + $0xd8] sm:$0xff] %vm224, %v3773
        %3806 = vst.msk [vmem:[#allocation3 + $0xe0] sm:$0xff] %vm224, %v3774
        %3807 = vst.msk [vmem:[#allocation3 + $0xe8] sm:$0xff] %vm224, %v3775
        %3808 = vst.msk [vmem:[#allocation3 + $0xf0] sm:$0xff] %vm224, %v3776
        %3809 = vst.msk [vmem:[#allocation3 + $0xf8] sm:$0xff] %vm224, %v3777
        %v3810 = vld [vmem:[%s341] sm:$0xff]
        %v3811 = vld [vmem:[%s341 + $0x8] sm:$0xff]
        %v3812 = vld [vmem:[%s341 + $0x18] sm:$0xff]
        %v3813 = vld [vmem:[%s341 + $0x20] sm:$0xff]
        %v3814 = vld [vmem:[%s341 + $0x30] sm:$0xff]
        %v3815 = vld [vmem:[%s341 + $0x38] sm:$0xff]
        %v3816 = vld [vmem:[%s341 + $0x48] sm:$0xff]
        %v3817 = vld [vmem:[%s341 + $0x50] sm:$0xff]
        %v3818 = vld [vmem:[%s341 + $0x60] sm:$0xff]
        %v3819 = vld [vmem:[%s341 + $0x68] sm:$0xff]
        %v3820 = vld [vmem:[%s341 + $0x78] sm:$0xff]
        %v3821 = vld [vmem:[%s341 + $0x80] sm:$0xff]
        %v3822 = vld [vmem:[%s341 + $0x90] sm:$0xff]
        %v3823 = vld [vmem:[%s341 + $0x98] sm:$0xff]
        %v3824 = vld [vmem:[%s341 + $0xa8] sm:$0xff]
        %v3825 = vld [vmem:[%s341 + $0xb0] sm:$0xff]
        %v3826 = vld [vmem:[%s341 + $0xc0] sm:$0xff]
        %v3827 = vld [vmem:[%s341 + $0xc8] sm:$0xff]
        %v3828 = vld [vmem:[%s341 + $0xd8] sm:$0xff]
        %v3829 = vld [vmem:[%s341 + $0xe0] sm:$0xff]
        %v3830 = vld [vmem:[%s341 + $0xf0] sm:$0xff]
        %v3831 = vld [vmem:[%s341 + $0xf8] sm:$0xff]
        %v3832 = vld [vmem:[%s341 + $0x108] sm:$0xff]
        %v3833 = vld [vmem:[%s341 + $0x110] sm:$0xff]
        %v3834 = vld [vmem:[%s341 + $0x120] sm:$0xff]
        %v3835 = vld [vmem:[%s341 + $0x128] sm:$0xff]
        %v3836 = vld [vmem:[%s341 + $0x138] sm:$0xff]
        %v3837 = vld [vmem:[%s341 + $0x140] sm:$0xff]
        %v3838 = vld [vmem:[%s341 + $0x150] sm:$0xff]
        %v3839 = vld [vmem:[%s341 + $0x158] sm:$0xff]
        %v3840 = vld [vmem:[%s341 + $0x168] sm:$0xff]
        %v3841 = vld [vmem:[%s341 + $0x170] sm:$0xff]
        %v3842 = vpack.c.bf16 %v3811, %v3810
        %v3843 = vpack.c.bf16 %v3813, %v3812
        %v3844 = vpack.c.bf16 %v3815, %v3814
        %v3845 = vpack.c.bf16 %v3817, %v3816
        %v3846 = vpack.c.bf16 %v3819, %v3818
        %v3847 = vpack.c.bf16 %v3821, %v3820
        %v3848 = vpack.c.bf16 %v3823, %v3822
        %v3849 = vpack.c.bf16 %v3825, %v3824
        %v3850 = vpack.c.bf16 %v3827, %v3826
        %v3851 = vpack.c.bf16 %v3829, %v3828
        %v3852 = vpack.c.bf16 %v3831, %v3830
        %v3853 = vpack.c.bf16 %v3833, %v3832
        %v3854 = vpack.c.bf16 %v3835, %v3834
        %v3855 = vpack.c.bf16 %v3837, %v3836
        %v3856 = vpack.c.bf16 %v3839, %v3838
        %v3857 = vpack.c.bf16 %v3841, %v3840
        %s3858 = scalar_lea.vmem %s3, 6
        %v3859 = vld [vmem:[%s3858] sm:$0x3]
        %v3861 = vsel %vm224, %v3842, 0
        %v3864 = vsel %vm224, %v3843, 0
        %v3867 = vsel %vm224, %v3844, 0
        %v3870 = vsel %vm224, %v3845, 0
        %v3873 = vsel %vm224, %v3846, 0
        %v3876 = vsel %vm224, %v3847, 0
        %v3879 = vsel %vm224, %v3848, 0
        %v3882 = vsel %vm224, %v3849, 0
        %v3885 = vsel %vm224, %v3850, 0
        %v3888 = vsel %vm224, %v3851, 0
        %v3891 = vsel %vm224, %v3852, 0
        %v3894 = vsel %vm224, %v3853, 0
        %v3897 = vsel %vm224, %v3854, 0
        %v3900 = vsel %vm224, %v3855, 0
        %v3903 = vsel %vm224, %v3856, 0
        %v3906 = vsel %vm224, %v3857, 0
        %v3909 = vsel %vm471, %v3859, 0
        %3911 = vmatpush.bf16.msra.mxu0 0
        %3912 = vmatpush.bf16.msra.mxu0 0
        %3913 = vmatpush.bf16.msra.mxu0 0
        %3914 = vmatpush.bf16.msra.mxu0 0
        %3915 = vmatpush.bf16.msra.mxu0 0
        %3916 = vmatpush.bf16.msra.mxu0 0
        %3917 = vmatpush.bf16.msra.mxu0 0
        %3918 = vmatpush.bf16.msra.mxu0 %v3909
        %3919 = vmatmul.bf16.gmra.mxu0 %v3861
        %v3920 = vpop.f32.mrf.mxu0
        %v3921 = vadd.f32 0.0, %v3920
        %v3922 = vpop.f32.mrf.mxu0
        %v3923 = vadd.f32 0.0, %v3922
        %3924 = vmatmul.bf16.gmra.mxu0 %v3864
        %v3925 = vpop.f32.mrf.mxu0
        %v3926 = vadd.f32 0.0, %v3925
        %v3927 = vpop.f32.mrf.mxu0
        %v3928 = vadd.f32 0.0, %v3927
        %3929 = vmatmul.bf16.gmra.mxu0 %v3867
        %v3930 = vpop.f32.mrf.mxu0
        %v3931 = vadd.f32 0.0, %v3930
        %v3932 = vpop.f32.mrf.mxu0
        %v3933 = vadd.f32 0.0, %v3932
        %3934 = vmatmul.bf16.gmra.mxu0 %v3870
        %v3935 = vpop.f32.mrf.mxu0
        %v3936 = vadd.f32 0.0, %v3935
        %v3937 = vpop.f32.mrf.mxu0
        %v3938 = vadd.f32 0.0, %v3937
        %3939 = vmatmul.bf16.gmra.mxu0 %v3873
        %v3940 = vpop.f32.mrf.mxu0
        %v3941 = vadd.f32 0.0, %v3940
        %v3942 = vpop.f32.mrf.mxu0
        %v3943 = vadd.f32 0.0, %v3942
        %3944 = vmatmul.bf16.gmra.mxu0 %v3876
        %v3945 = vpop.f32.mrf.mxu0
        %v3946 = vadd.f32 0.0, %v3945
        %v3947 = vpop.f32.mrf.mxu0
        %v3948 = vadd.f32 0.0, %v3947
        %3949 = vmatmul.bf16.gmra.mxu0 %v3879
        %v3950 = vpop.f32.mrf.mxu0
        %v3951 = vadd.f32 0.0, %v3950
        %v3952 = vpop.f32.mrf.mxu0
        %v3953 = vadd.f32 0.0, %v3952
        %3954 = vmatmul.bf16.gmra.mxu0 %v3882
        %v3955 = vpop.f32.mrf.mxu0
        %v3956 = vadd.f32 0.0, %v3955
        %v3957 = vpop.f32.mrf.mxu0
        %v3958 = vadd.f32 0.0, %v3957
        %3959 = vmatmul.bf16.gmra.mxu0 %v3885
        %v3960 = vpop.f32.mrf.mxu0
        %v3961 = vadd.f32 0.0, %v3960
        %v3962 = vpop.f32.mrf.mxu0
        %v3963 = vadd.f32 0.0, %v3962
        %3964 = vmatmul.bf16.gmra.mxu0 %v3888
        %v3965 = vpop.f32.mrf.mxu0
        %v3966 = vadd.f32 0.0, %v3965
        %v3967 = vpop.f32.mrf.mxu0
        %v3968 = vadd.f32 0.0, %v3967
        %3969 = vmatmul.bf16.gmra.mxu0 %v3891
        %v3970 = vpop.f32.mrf.mxu0
        %v3971 = vadd.f32 0.0, %v3970
        %v3972 = vpop.f32.mrf.mxu0
        %v3973 = vadd.f32 0.0, %v3972
        %3974 = vmatmul.bf16.gmra.mxu0 %v3894
        %v3975 = vpop.f32.mrf.mxu0
        %v3976 = vadd.f32 0.0, %v3975
        %v3977 = vpop.f32.mrf.mxu0
        %v3978 = vadd.f32 0.0, %v3977
        %3979 = vmatmul.bf16.gmra.mxu0 %v3897
        %v3980 = vpop.f32.mrf.mxu0
        %v3981 = vadd.f32 0.0, %v3980
        %v3982 = vpop.f32.mrf.mxu0
        %v3983 = vadd.f32 0.0, %v3982
        %3984 = vmatmul.bf16.gmra.mxu0 %v3900
        %v3985 = vpop.f32.mrf.mxu0
        %v3986 = vadd.f32 0.0, %v3985
        %v3987 = vpop.f32.mrf.mxu0
        %v3988 = vadd.f32 0.0, %v3987
        %3989 = vmatmul.bf16.gmra.mxu0 %v3903
        %v3990 = vpop.f32.mrf.mxu0
        %v3991 = vadd.f32 0.0, %v3990
        %v3992 = vpop.f32.mrf.mxu0
        %v3993 = vadd.f32 0.0, %v3992
        %3994 = vmatmul.bf16.gmra.mxu0 %v3906
        %v3995 = vpop.f32.mrf.mxu0
        %v3996 = vadd.f32 0.0, %v3995
        %v3997 = vpop.f32.mrf.mxu0
        %v3998 = vadd.f32 0.0, %v3997
        %3999 = vdwg.mxu0
        %v4000 = vld [vmem:[#allocation3] sm:$0xff]
        %v4001 = vld [vmem:[#allocation3 + $0x8] sm:$0xff]
        %v4002 = vld [vmem:[#allocation3 + $0x10] sm:$0xff]
        %v4003 = vld [vmem:[#allocation3 + $0x18] sm:$0xff]
        %v4004 = vld [vmem:[#allocation3 + $0x20] sm:$0xff]
        %v4005 = vld [vmem:[#allocation3 + $0x28] sm:$0xff]
        %v4006 = vld [vmem:[#allocation3 + $0x30] sm:$0xff]
        %v4007 = vld [vmem:[#allocation3 + $0x38] sm:$0xff]
        %v4008 = vld [vmem:[#allocation3 + $0x40] sm:$0xff]
        %v4009 = vld [vmem:[#allocation3 + $0x48] sm:$0xff]
        %v4010 = vld [vmem:[#allocation3 + $0x50] sm:$0xff]
        %v4011 = vld [vmem:[#allocation3 + $0x58] sm:$0xff]
        %v4012 = vld [vmem:[#allocation3 + $0x60] sm:$0xff]
        %v4013 = vld [vmem:[#allocation3 + $0x68] sm:$0xff]
        %v4014 = vld [vmem:[#allocation3 + $0x70] sm:$0xff]
        %v4015 = vld [vmem:[#allocation3 + $0x78] sm:$0xff]
        %v4016 = vld [vmem:[#allocation3 + $0x80] sm:$0xff]
        %v4017 = vld [vmem:[#allocation3 + $0x88] sm:$0xff]
        %v4018 = vld [vmem:[#allocation3 + $0x90] sm:$0xff]
        %v4019 = vld [vmem:[#allocation3 + $0x98] sm:$0xff]
        %v4020 = vld [vmem:[#allocation3 + $0xa0] sm:$0xff]
        %v4021 = vld [vmem:[#allocation3 + $0xa8] sm:$0xff]
        %v4022 = vld [vmem:[#allocation3 + $0xb0] sm:$0xff]
        %v4023 = vld [vmem:[#allocation3 + $0xb8] sm:$0xff]
        %v4024 = vld [vmem:[#allocation3 + $0xc0] sm:$0xff]
        %v4025 = vld [vmem:[#allocation3 + $0xc8] sm:$0xff]
        %v4026 = vld [vmem:[#allocation3 + $0xd0] sm:$0xff]
        %v4027 = vld [vmem:[#allocation3 + $0xd8] sm:$0xff]
        %v4028 = vld [vmem:[#allocation3 + $0xe0] sm:$0xff]
        %v4029 = vld [vmem:[#allocation3 + $0xe8] sm:$0xff]
        %v4030 = vld [vmem:[#allocation3 + $0xf0] sm:$0xff]
        %v4031 = vld [vmem:[#allocation3 + $0xf8] sm:$0xff]
        %v4032 = vadd.f32 %v4000, %v3921
        %v4033 = vadd.f32 %v4001, %v3923
        %v4034 = vadd.f32 %v4002, %v3926
        %v4035 = vadd.f32 %v4003, %v3928
        %v4036 = vadd.f32 %v4004, %v3931
        %v4037 = vadd.f32 %v4005, %v3933
        %v4038 = vadd.f32 %v4006, %v3936
        %v4039 = vadd.f32 %v4007, %v3938
        %v4040 = vadd.f32 %v4008, %v3941
        %v4041 = vadd.f32 %v4009, %v3943
        %v4042 = vadd.f32 %v4010, %v3946
        %v4043 = vadd.f32 %v4011, %v3948
        %v4044 = vadd.f32 %v4012, %v3951
        %v4045 = vadd.f32 %v4013, %v3953
        %v4046 = vadd.f32 %v4014, %v3956
        %v4047 = vadd.f32 %v4015, %v3958
        %v4048 = vadd.f32 %v4016, %v3961
        %v4049 = vadd.f32 %v4017, %v3963
        %v4050 = vadd.f32 %v4018, %v3966
        %v4051 = vadd.f32 %v4019, %v3968
        %v4052 = vadd.f32 %v4020, %v3971
        %v4053 = vadd.f32 %v4021, %v3973
        %v4054 = vadd.f32 %v4022, %v3976
        %v4055 = vadd.f32 %v4023, %v3978
        %v4056 = vadd.f32 %v4024, %v3981
        %v4057 = vadd.f32 %v4025, %v3983
        %v4058 = vadd.f32 %v4026, %v3986
        %v4059 = vadd.f32 %v4027, %v3988
        %v4060 = vadd.f32 %v4028, %v3991
        %v4061 = vadd.f32 %v4029, %v3993
        %v4062 = vadd.f32 %v4030, %v3996
        %v4063 = vadd.f32 %v4031, %v3998
        %4064 = vst.msk [vmem:[#allocation3] sm:$0xff] %vm224, %v4032
        %4065 = vst.msk [vmem:[#allocation3 + $0x8] sm:$0xff] %vm224, %v4033
        %4066 = vst.msk [vmem:[#allocation3 + $0x10] sm:$0xff] %vm224, %v4034
        %4067 = vst.msk [vmem:[#allocation3 + $0x18] sm:$0xff] %vm224, %v4035
        %4068 = vst.msk [vmem:[#allocation3 + $0x20] sm:$0xff] %vm224, %v4036
        %4069 = vst.msk [vmem:[#allocation3 + $0x28] sm:$0xff] %vm224, %v4037
        %4070 = vst.msk [vmem:[#allocation3 + $0x30] sm:$0xff] %vm224, %v4038
        %4071 = vst.msk [vmem:[#allocation3 + $0x38] sm:$0xff] %vm224, %v4039
        %4072 = vst.msk [vmem:[#allocation3 + $0x40] sm:$0xff] %vm224, %v4040
        %4073 = vst.msk [vmem:[#allocation3 + $0x48] sm:$0xff] %vm224, %v4041
        %4074 = vst.msk [vmem:[#allocation3 + $0x50] sm:$0xff] %vm224, %v4042
        %4075 = vst.msk [vmem:[#allocation3 + $0x58] sm:$0xff] %vm224, %v4043
        %4076 = vst.msk [vmem:[#allocation3 + $0x60] sm:$0xff] %vm224, %v4044
        %4077 = vst.msk [vmem:[#allocation3 + $0x68] sm:$0xff] %vm224, %v4045
        %4078 = vst.msk [vmem:[#allocation3 + $0x70] sm:$0xff] %vm224, %v4046
        %4079 = vst.msk [vmem:[#allocation3 + $0x78] sm:$0xff] %vm224, %v4047
        %4080 = vst.msk [vmem:[#allocation3 + $0x80] sm:$0xff] %vm224, %v4048
        %4081 = vst.msk [vmem:[#allocation3 + $0x88] sm:$0xff] %vm224, %v4049
        %4082 = vst.msk [vmem:[#allocation3 + $0x90] sm:$0xff] %vm224, %v4050
        %4083 = vst.msk [vmem:[#allocation3 + $0x98] sm:$0xff] %vm224, %v4051
        %4084 = vst.msk [vmem:[#allocation3 + $0xa0] sm:$0xff] %vm224, %v4052
        %4085 = vst.msk [vmem:[#allocation3 + $0xa8] sm:$0xff] %vm224, %v4053
        %4086 = vst.msk [vmem:[#allocation3 + $0xb0] sm:$0xff] %vm224, %v4054
        %4087 = vst.msk [vmem:[#allocation3 + $0xb8] sm:$0xff] %vm224, %v4055
        %4088 = vst.msk [vmem:[#allocation3 + $0xc0] sm:$0xff] %vm224, %v4056
        %4089 = vst.msk [vmem:[#allocation3 + $0xc8] sm:$0xff] %vm224, %v4057
        %4090 = vst.msk [vmem:[#allocation3 + $0xd0] sm:$0xff] %vm224, %v4058
        %4091 = vst.msk [vmem:[#allocation3 + $0xd8] sm:$0xff] %vm224, %v4059
        %4092 = vst.msk [vmem:[#allocation3 + $0xe0] sm:$0xff] %vm224, %v4060
        %4093 = vst.msk [vmem:[#allocation3 + $0xe8] sm:$0xff] %vm224, %v4061
        %4094 = vst.msk [vmem:[#allocation3 + $0xf0] sm:$0xff] %vm224, %v4062
        %4095 = vst.msk [vmem:[#allocation3 + $0xf8] sm:$0xff] %vm224, %v4063
        %v4096 = vld [vmem:[%s341 + $0x1] sm:$0xff]
        %v4097 = vld [vmem:[%s341 + $0x9] sm:$0xff]
        %v4098 = vld [vmem:[%s341 + $0x19] sm:$0xff]
        %v4099 = vld [vmem:[%s341 + $0x21] sm:$0xff]
        %v4100 = vld [vmem:[%s341 + $0x31] sm:$0xff]
        %v4101 = vld [vmem:[%s341 + $0x39] sm:$0xff]
        %v4102 = vld [vmem:[%s341 + $0x49] sm:$0xff]
        %v4103 = vld [vmem:[%s341 + $0x51] sm:$0xff]
        %v4104 = vld [vmem:[%s341 + $0x61] sm:$0xff]
        %v4105 = vld [vmem:[%s341 + $0x69] sm:$0xff]
        %v4106 = vld [vmem:[%s341 + $0x79] sm:$0xff]
        %v4107 = vld [vmem:[%s341 + $0x81] sm:$0xff]
        %v4108 = vld [vmem:[%s341 + $0x91] sm:$0xff]
        %v4109 = vld [vmem:[%s341 + $0x99] sm:$0xff]
        %v4110 = vld [vmem:[%s341 + $0xa9] sm:$0xff]
        %v4111 = vld [vmem:[%s341 + $0xb1] sm:$0xff]
        %v4112 = vld [vmem:[%s341 + $0xc1] sm:$0xff]
        %v4113 = vld [vmem:[%s341 + $0xc9] sm:$0xff]
        %v4114 = vld [vmem:[%s341 + $0xd9] sm:$0xff]
        %v4115 = vld [vmem:[%s341 + $0xe1] sm:$0xff]
        %v4116 = vld [vmem:[%s341 + $0xf1] sm:$0xff]
        %v4117 = vld [vmem:[%s341 + $0xf9] sm:$0xff]
        %v4118 = vld [vmem:[%s341 + $0x109] sm:$0xff]
        %v4119 = vld [vmem:[%s341 + $0x111] sm:$0xff]
        %v4120 = vld [vmem:[%s341 + $0x121] sm:$0xff]
        %v4121 = vld [vmem:[%s341 + $0x129] sm:$0xff]
        %v4122 = vld [vmem:[%s341 + $0x139] sm:$0xff]
        %v4123 = vld [vmem:[%s341 + $0x141] sm:$0xff]
        %v4124 = vld [vmem:[%s341 + $0x151] sm:$0xff]
        %v4125 = vld [vmem:[%s341 + $0x159] sm:$0xff]
        %v4126 = vld [vmem:[%s341 + $0x169] sm:$0xff]
        %v4127 = vld [vmem:[%s341 + $0x171] sm:$0xff]
        %v4128 = vpack.c.bf16 %v4097, %v4096
        %v4129 = vpack.c.bf16 %v4099, %v4098
        %v4130 = vpack.c.bf16 %v4101, %v4100
        %v4131 = vpack.c.bf16 %v4103, %v4102
        %v4132 = vpack.c.bf16 %v4105, %v4104
        %v4133 = vpack.c.bf16 %v4107, %v4106
        %v4134 = vpack.c.bf16 %v4109, %v4108
        %v4135 = vpack.c.bf16 %v4111, %v4110
        %v4136 = vpack.c.bf16 %v4113, %v4112
        %v4137 = vpack.c.bf16 %v4115, %v4114
        %v4138 = vpack.c.bf16 %v4117, %v4116
        %v4139 = vpack.c.bf16 %v4119, %v4118
        %v4140 = vpack.c.bf16 %v4121, %v4120
        %v4141 = vpack.c.bf16 %v4123, %v4122
        %v4142 = vpack.c.bf16 %v4125, %v4124
        %v4143 = vpack.c.bf16 %v4127, %v4126
        %s4144 = scalar_lea.vmem %s3, 8
        %v4145 = vld [vmem:[%s4144] sm:$0x3]
        %v4147 = vsel %vm224, %v4128, 0
        %v4150 = vsel %vm224, %v4129, 0
        %v4153 = vsel %vm224, %v4130, 0
        %v4156 = vsel %vm224, %v4131, 0
        %v4159 = vsel %vm224, %v4132, 0
        %v4162 = vsel %vm224, %v4133, 0
        %v4165 = vsel %vm224, %v4134, 0
        %v4168 = vsel %vm224, %v4135, 0
        %v4171 = vsel %vm224, %v4136, 0
        %v4174 = vsel %vm224, %v4137, 0
        %v4177 = vsel %vm224, %v4138, 0
        %v4180 = vsel %vm224, %v4139, 0
        %v4183 = vsel %vm224, %v4140, 0
        %v4186 = vsel %vm224, %v4141, 0
        %v4189 = vsel %vm224, %v4142, 0
        %v4192 = vsel %vm224, %v4143, 0
        %v4195 = vsel %vm471, %v4145, 0
        %4197 = vmatpush.bf16.msra.mxu0 0
        %4198 = vmatpush.bf16.msra.mxu0 0
        %4199 = vmatpush.bf16.msra.mxu0 0
        %4200 = vmatpush.bf16.msra.mxu0 0
        %4201 = vmatpush.bf16.msra.mxu0 0
        %4202 = vmatpush.bf16.msra.mxu0 0
        %4203 = vmatpush.bf16.msra.mxu0 0
        %4204 = vmatpush.bf16.msra.mxu0 %v4195
        %4205 = vmatmul.bf16.gmra.mxu0 %v4147
        %v4206 = vpop.f32.mrf.mxu0
        %v4207 = vadd.f32 0.0, %v4206
        %v4208 = vpop.f32.mrf.mxu0
        %v4209 = vadd.f32 0.0, %v4208
        %4210 = vmatmul.bf16.gmra.mxu0 %v4150
        %v4211 = vpop.f32.mrf.mxu0
        %v4212 = vadd.f32 0.0, %v4211
        %v4213 = vpop.f32.mrf.mxu0
        %v4214 = vadd.f32 0.0, %v4213
        %4215 = vmatmul.bf16.gmra.mxu0 %v4153
        %v4216 = vpop.f32.mrf.mxu0
        %v4217 = vadd.f32 0.0, %v4216
        %v4218 = vpop.f32.mrf.mxu0
        %v4219 = vadd.f32 0.0, %v4218
        %4220 = vmatmul.bf16.gmra.mxu0 %v4156
        %v4221 = vpop.f32.mrf.mxu0
        %v4222 = vadd.f32 0.0, %v4221
        %v4223 = vpop.f32.mrf.mxu0
        %v4224 = vadd.f32 0.0, %v4223
        %4225 = vmatmul.bf16.gmra.mxu0 %v4159
        %v4226 = vpop.f32.mrf.mxu0
        %v4227 = vadd.f32 0.0, %v4226
        %v4228 = vpop.f32.mrf.mxu0
        %v4229 = vadd.f32 0.0, %v4228
        %4230 = vmatmul.bf16.gmra.mxu0 %v4162
        %v4231 = vpop.f32.mrf.mxu0
        %v4232 = vadd.f32 0.0, %v4231
        %v4233 = vpop.f32.mrf.mxu0
        %v4234 = vadd.f32 0.0, %v4233
        %4235 = vmatmul.bf16.gmra.mxu0 %v4165
        %v4236 = vpop.f32.mrf.mxu0
        %v4237 = vadd.f32 0.0, %v4236
        %v4238 = vpop.f32.mrf.mxu0
        %v4239 = vadd.f32 0.0, %v4238
        %4240 = vmatmul.bf16.gmra.mxu0 %v4168
        %v4241 = vpop.f32.mrf.mxu0
        %v4242 = vadd.f32 0.0, %v4241
        %v4243 = vpop.f32.mrf.mxu0
        %v4244 = vadd.f32 0.0, %v4243
        %4245 = vmatmul.bf16.gmra.mxu0 %v4171
        %v4246 = vpop.f32.mrf.mxu0
        %v4247 = vadd.f32 0.0, %v4246
        %v4248 = vpop.f32.mrf.mxu0
        %v4249 = vadd.f32 0.0, %v4248
        %4250 = vmatmul.bf16.gmra.mxu0 %v4174
        %v4251 = vpop.f32.mrf.mxu0
        %v4252 = vadd.f32 0.0, %v4251
        %v4253 = vpop.f32.mrf.mxu0
        %v4254 = vadd.f32 0.0, %v4253
        %4255 = vmatmul.bf16.gmra.mxu0 %v4177
        %v4256 = vpop.f32.mrf.mxu0
        %v4257 = vadd.f32 0.0, %v4256
        %v4258 = vpop.f32.mrf.mxu0
        %v4259 = vadd.f32 0.0, %v4258
        %4260 = vmatmul.bf16.gmra.mxu0 %v4180
        %v4261 = vpop.f32.mrf.mxu0
        %v4262 = vadd.f32 0.0, %v4261
        %v4263 = vpop.f32.mrf.mxu0
        %v4264 = vadd.f32 0.0, %v4263
        %4265 = vmatmul.bf16.gmra.mxu0 %v4183
        %v4266 = vpop.f32.mrf.mxu0
        %v4267 = vadd.f32 0.0, %v4266
        %v4268 = vpop.f32.mrf.mxu0
        %v4269 = vadd.f32 0.0, %v4268
        %4270 = vmatmul.bf16.gmra.mxu0 %v4186
        %v4271 = vpop.f32.mrf.mxu0
        %v4272 = vadd.f32 0.0, %v4271
        %v4273 = vpop.f32.mrf.mxu0
        %v4274 = vadd.f32 0.0, %v4273
        %4275 = vmatmul.bf16.gmra.mxu0 %v4189
        %v4276 = vpop.f32.mrf.mxu0
        %v4277 = vadd.f32 0.0, %v4276
        %v4278 = vpop.f32.mrf.mxu0
        %v4279 = vadd.f32 0.0, %v4278
        %4280 = vmatmul.bf16.gmra.mxu0 %v4192
        %v4281 = vpop.f32.mrf.mxu0
        %v4282 = vadd.f32 0.0, %v4281
        %v4283 = vpop.f32.mrf.mxu0
        %v4284 = vadd.f32 0.0, %v4283
        %4285 = vdwg.mxu0
        %v4286 = vld [vmem:[#allocation3] sm:$0xff]
        %v4287 = vld [vmem:[#allocation3 + $0x8] sm:$0xff]
        %v4288 = vld [vmem:[#allocation3 + $0x10] sm:$0xff]
        %v4289 = vld [vmem:[#allocation3 + $0x18] sm:$0xff]
        %v4290 = vld [vmem:[#allocation3 + $0x20] sm:$0xff]
        %v4291 = vld [vmem:[#allocation3 + $0x28] sm:$0xff]
        %v4292 = vld [vmem:[#allocation3 + $0x30] sm:$0xff]
        %v4293 = vld [vmem:[#allocation3 + $0x38] sm:$0xff]
        %v4294 = vld [vmem:[#allocation3 + $0x40] sm:$0xff]
        %v4295 = vld [vmem:[#allocation3 + $0x48] sm:$0xff]
        %v4296 = vld [vmem:[#allocation3 + $0x50] sm:$0xff]
        %v4297 = vld [vmem:[#allocation3 + $0x58] sm:$0xff]
        %v4298 = vld [vmem:[#allocation3 + $0x60] sm:$0xff]
        %v4299 = vld [vmem:[#allocation3 + $0x68] sm:$0xff]
        %v4300 = vld [vmem:[#allocation3 + $0x70] sm:$0xff]
        %v4301 = vld [vmem:[#allocation3 + $0x78] sm:$0xff]
        %v4302 = vld [vmem:[#allocation3 + $0x80] sm:$0xff]
        %v4303 = vld [vmem:[#allocation3 + $0x88] sm:$0xff]
        %v4304 = vld [vmem:[#allocation3 + $0x90] sm:$0xff]
        %v4305 = vld [vmem:[#allocation3 + $0x98] sm:$0xff]
        %v4306 = vld [vmem:[#allocation3 + $0xa0] sm:$0xff]
        %v4307 = vld [vmem:[#allocation3 + $0xa8] sm:$0xff]
        %v4308 = vld [vmem:[#allocation3 + $0xb0] sm:$0xff]
        %v4309 = vld [vmem:[#allocation3 + $0xb8] sm:$0xff]
        %v4310 = vld [vmem:[#allocation3 + $0xc0] sm:$0xff]
        %v4311 = vld [vmem:[#allocation3 + $0xc8] sm:$0xff]
        %v4312 = vld [vmem:[#allocation3 + $0xd0] sm:$0xff]
        %v4313 = vld [vmem:[#allocation3 + $0xd8] sm:$0xff]
        %v4314 = vld [vmem:[#allocation3 + $0xe0] sm:$0xff]
        %v4315 = vld [vmem:[#allocation3 + $0xe8] sm:$0xff]
        %v4316 = vld [vmem:[#allocation3 + $0xf0] sm:$0xff]
        %v4317 = vld [vmem:[#allocation3 + $0xf8] sm:$0xff]
        %v4318 = vadd.f32 %v4286, %v4207
        %v4319 = vadd.f32 %v4287, %v4209
        %v4320 = vadd.f32 %v4288, %v4212
        %v4321 = vadd.f32 %v4289, %v4214
        %v4322 = vadd.f32 %v4290, %v4217
        %v4323 = vadd.f32 %v4291, %v4219
        %v4324 = vadd.f32 %v4292, %v4222
        %v4325 = vadd.f32 %v4293, %v4224
        %v4326 = vadd.f32 %v4294, %v4227
        %v4327 = vadd.f32 %v4295, %v4229
        %v4328 = vadd.f32 %v4296, %v4232
        %v4329 = vadd.f32 %v4297, %v4234
        %v4330 = vadd.f32 %v4298, %v4237
        %v4331 = vadd.f32 %v4299, %v4239
        %v4332 = vadd.f32 %v4300, %v4242
        %v4333 = vadd.f32 %v4301, %v4244
        %v4334 = vadd.f32 %v4302, %v4247
        %v4335 = vadd.f32 %v4303, %v4249
        %v4336 = vadd.f32 %v4304, %v4252
        %v4337 = vadd.f32 %v4305, %v4254
        %v4338 = vadd.f32 %v4306, %v4257
        %v4339 = vadd.f32 %v4307, %v4259
        %v4340 = vadd.f32 %v4308, %v4262
        %v4341 = vadd.f32 %v4309, %v4264
        %v4342 = vadd.f32 %v4310, %v4267
        %v4343 = vadd.f32 %v4311, %v4269
        %v4344 = vadd.f32 %v4312, %v4272
        %v4345 = vadd.f32 %v4313, %v4274
        %v4346 = vadd.f32 %v4314, %v4277
        %v4347 = vadd.f32 %v4315, %v4279
        %v4348 = vadd.f32 %v4316, %v4282
        %v4349 = vadd.f32 %v4317, %v4284
        %4350 = vst.msk [vmem:[#allocation3] sm:$0xff] %vm224, %v4318
        %4351 = vst.msk [vmem:[#allocation3 + $0x8] sm:$0xff] %vm224, %v4319
        %4352 = vst.msk [vmem:[#allocation3 + $0x10] sm:$0xff] %vm224, %v4320
        %4353 = vst.msk [vmem:[#allocation3 + $0x18] sm:$0xff] %vm224, %v4321
        %4354 = vst.msk [vmem:[#allocation3 + $0x20] sm:$0xff] %vm224, %v4322
        %4355 = vst.msk [vmem:[#allocation3 + $0x28] sm:$0xff] %vm224, %v4323
        %4356 = vst.msk [vmem:[#allocation3 + $0x30] sm:$0xff] %vm224, %v4324
        %4357 = vst.msk [vmem:[#allocation3 + $0x38] sm:$0xff] %vm224, %v4325
        %4358 = vst.msk [vmem:[#allocation3 + $0x40] sm:$0xff] %vm224, %v4326
        %4359 = vst.msk [vmem:[#allocation3 + $0x48] sm:$0xff] %vm224, %v4327
        %4360 = vst.msk [vmem:[#allocation3 + $0x50] sm:$0xff] %vm224, %v4328
        %4361 = vst.msk [vmem:[#allocation3 + $0x58] sm:$0xff] %vm224, %v4329
        %4362 = vst.msk [vmem:[#allocation3 + $0x60] sm:$0xff] %vm224, %v4330
        %4363 = vst.msk [vmem:[#allocation3 + $0x68] sm:$0xff] %vm224, %v4331
        %4364 = vst.msk [vmem:[#allocation3 + $0x70] sm:$0xff] %vm224, %v4332
        %4365 = vst.msk [vmem:[#allocation3 + $0x78] sm:$0xff] %vm224, %v4333
        %4366 = vst.msk [vmem:[#allocation3 + $0x80] sm:$0xff] %vm224, %v4334
        %4367 = vst.msk [vmem:[#allocation3 + $0x88] sm:$0xff] %vm224, %v4335
        %4368 = vst.msk [vmem:[#allocation3 + $0x90] sm:$0xff] %vm224, %v4336
        %4369 = vst.msk [vmem:[#allocation3 + $0x98] sm:$0xff] %vm224, %v4337
        %4370 = vst.msk [vmem:[#allocation3 + $0xa0] sm:$0xff] %vm224, %v4338
        %4371 = vst.msk [vmem:[#allocation3 + $0xa8] sm:$0xff] %vm224, %v4339
        %4372 = vst.msk [vmem:[#allocation3 + $0xb0] sm:$0xff] %vm224, %v4340
        %4373 = vst.msk [vmem:[#allocation3 + $0xb8] sm:$0xff] %vm224, %v4341
        %4374 = vst.msk [vmem:[#allocation3 + $0xc0] sm:$0xff] %vm224, %v4342
        %4375 = vst.msk [vmem:[#allocation3 + $0xc8] sm:$0xff] %vm224, %v4343
        %4376 = vst.msk [vmem:[#allocation3 + $0xd0] sm:$0xff] %vm224, %v4344
        %4377 = vst.msk [vmem:[#allocation3 + $0xd8] sm:$0xff] %vm224, %v4345
        %4378 = vst.msk [vmem:[#allocation3 + $0xe0] sm:$0xff] %vm224, %v4346
        %4379 = vst.msk [vmem:[#allocation3 + $0xe8] sm:$0xff] %vm224, %v4347
        %4380 = vst.msk [vmem:[#allocation3 + $0xf0] sm:$0xff] %vm224, %v4348
        %4381 = vst.msk [vmem:[#allocation3 + $0xf8] sm:$0xff] %vm224, %v4349
        %v4382 = vld [vmem:[%s341 + $0x2] sm:$0xff]
        %v4383 = vld [vmem:[%s341 + $0xa] sm:$0xff]
        %v4384 = vld [vmem:[%s341 + $0x1a] sm:$0xff]
        %v4385 = vld [vmem:[%s341 + $0x22] sm:$0xff]
        %v4386 = vld [vmem:[%s341 + $0x32] sm:$0xff]
        %v4387 = vld [vmem:[%s341 + $0x3a] sm:$0xff]
        %v4388 = vld [vmem:[%s341 + $0x4a] sm:$0xff]
        %v4389 = vld [vmem:[%s341 + $0x52] sm:$0xff]
        %v4390 = vld [vmem:[%s341 + $0x62] sm:$0xff]
        %v4391 = vld [vmem:[%s341 + $0x6a] sm:$0xff]
        %v4392 = vld [vmem:[%s341 + $0x7a] sm:$0xff]
        %v4393 = vld [vmem:[%s341 + $0x82] sm:$0xff]
        %v4394 = vld [vmem:[%s341 + $0x92] sm:$0xff]
        %v4395 = vld [vmem:[%s341 + $0x9a] sm:$0xff]
        %v4396 = vld [vmem:[%s341 + $0xaa] sm:$0xff]
        %v4397 = vld [vmem:[%s341 + $0xb2] sm:$0xff]
        %v4398 = vld [vmem:[%s341 + $0xc2] sm:$0xff]
        %v4399 = vld [vmem:[%s341 + $0xca] sm:$0xff]
        %v4400 = vld [vmem:[%s341 + $0xda] sm:$0xff]
        %v4401 = vld [vmem:[%s341 + $0xe2] sm:$0xff]
        %v4402 = vld [vmem:[%s341 + $0xf2] sm:$0xff]
        %v4403 = vld [vmem:[%s341 + $0xfa] sm:$0xff]
        %v4404 = vld [vmem:[%s341 + $0x10a] sm:$0xff]
        %v4405 = vld [vmem:[%s341 + $0x112] sm:$0xff]
        %v4406 = vld [vmem:[%s341 + $0x122] sm:$0xff]
        %v4407 = vld [vmem:[%s341 + $0x12a] sm:$0xff]
        %v4408 = vld [vmem:[%s341 + $0x13a] sm:$0xff]
        %v4409 = vld [vmem:[%s341 + $0x142] sm:$0xff]
        %v4410 = vld [vmem:[%s341 + $0x152] sm:$0xff]
        %v4411 = vld [vmem:[%s341 + $0x15a] sm:$0xff]
        %v4412 = vld [vmem:[%s341 + $0x16a] sm:$0xff]
        %v4413 = vld [vmem:[%s341 + $0x172] sm:$0xff]
        %v4414 = vpack.c.bf16 %v4383, %v4382
        %v4415 = vpack.c.bf16 %v4385, %v4384
        %v4416 = vpack.c.bf16 %v4387, %v4386
        %v4417 = vpack.c.bf16 %v4389, %v4388
        %v4418 = vpack.c.bf16 %v4391, %v4390
        %v4419 = vpack.c.bf16 %v4393, %v4392
        %v4420 = vpack.c.bf16 %v4395, %v4394
        %v4421 = vpack.c.bf16 %v4397, %v4396
        %v4422 = vpack.c.bf16 %v4399, %v4398
        %v4423 = vpack.c.bf16 %v4401, %v4400
        %v4424 = vpack.c.bf16 %v4403, %v4402
        %v4425 = vpack.c.bf16 %v4405, %v4404
        %v4426 = vpack.c.bf16 %v4407, %v4406
        %v4427 = vpack.c.bf16 %v4409, %v4408
        %v4428 = vpack.c.bf16 %v4411, %v4410
        %v4429 = vpack.c.bf16 %v4413, %v4412
        %s4430 = scalar_lea.vmem %s3, 10
        %v4431 = vld [vmem:[%s4430] sm:$0x3]
        %v4433 = vsel %vm224, %v4414, 0
        %v4436 = vsel %vm224, %v4415, 0
        %v4439 = vsel %vm224, %v4416, 0
        %v4442 = vsel %vm224, %v4417, 0
        %v4445 = vsel %vm224, %v4418, 0
        %v4448 = vsel %vm224, %v4419, 0
        %v4451 = vsel %vm224, %v4420, 0
        %v4454 = vsel %vm224, %v4421, 0
        %v4457 = vsel %vm224, %v4422, 0
        %v4460 = vsel %vm224, %v4423, 0
        %v4463 = vsel %vm224, %v4424, 0
        %v4466 = vsel %vm224, %v4425, 0
        %v4469 = vsel %vm224, %v4426, 0
        %v4472 = vsel %vm224, %v4427, 0
        %v4475 = vsel %vm224, %v4428, 0
        %v4478 = vsel %vm224, %v4429, 0
        %v4481 = vsel %vm471, %v4431, 0
        %4483 = vmatpush.bf16.msra.mxu0 0
        %4484 = vmatpush.bf16.msra.mxu0 0
        %4485 = vmatpush.bf16.msra.mxu0 0
        %4486 = vmatpush.bf16.msra.mxu0 0
        %4487 = vmatpush.bf16.msra.mxu0 0
        %4488 = vmatpush.bf16.msra.mxu0 0
        %4489 = vmatpush.bf16.msra.mxu0 0
        %4490 = vmatpush.bf16.msra.mxu0 %v4481
        %4491 = vmatmul.bf16.gmra.mxu0 %v4433
        %v4492 = vpop.f32.mrf.mxu0
        %v4493 = vadd.f32 0.0, %v4492
        %v4494 = vpop.f32.mrf.mxu0
        %v4495 = vadd.f32 0.0, %v4494
        %4496 = vmatmul.bf16.gmra.mxu0 %v4436
        %v4497 = vpop.f32.mrf.mxu0
        %v4498 = vadd.f32 0.0, %v4497
        %v4499 = vpop.f32.mrf.mxu0
        %v4500 = vadd.f32 0.0, %v4499
        %4501 = vmatmul.bf16.gmra.mxu0 %v4439
        %v4502 = vpop.f32.mrf.mxu0
        %v4503 = vadd.f32 0.0, %v4502
        %v4504 = vpop.f32.mrf.mxu0
        %v4505 = vadd.f32 0.0, %v4504
        %4506 = vmatmul.bf16.gmra.mxu0 %v4442
        %v4507 = vpop.f32.mrf.mxu0
        %v4508 = vadd.f32 0.0, %v4507
        %v4509 = vpop.f32.mrf.mxu0
        %v4510 = vadd.f32 0.0, %v4509
        %4511 = vmatmul.bf16.gmra.mxu0 %v4445
        %v4512 = vpop.f32.mrf.mxu0
        %v4513 = vadd.f32 0.0, %v4512
        %v4514 = vpop.f32.mrf.mxu0
        %v4515 = vadd.f32 0.0, %v4514
        %4516 = vmatmul.bf16.gmra.mxu0 %v4448
        %v4517 = vpop.f32.mrf.mxu0
        %v4518 = vadd.f32 0.0, %v4517
        %v4519 = vpop.f32.mrf.mxu0
        %v4520 = vadd.f32 0.0, %v4519
        %4521 = vmatmul.bf16.gmra.mxu0 %v4451
        %v4522 = vpop.f32.mrf.mxu0
        %v4523 = vadd.f32 0.0, %v4522
        %v4524 = vpop.f32.mrf.mxu0
        %v4525 = vadd.f32 0.0, %v4524
        %4526 = vmatmul.bf16.gmra.mxu0 %v4454
        %v4527 = vpop.f32.mrf.mxu0
        %v4528 = vadd.f32 0.0, %v4527
        %v4529 = vpop.f32.mrf.mxu0
        %v4530 = vadd.f32 0.0, %v4529
        %4531 = vmatmul.bf16.gmra.mxu0 %v4457
        %v4532 = vpop.f32.mrf.mxu0
        %v4533 = vadd.f32 0.0, %v4532
        %v4534 = vpop.f32.mrf.mxu0
        %v4535 = vadd.f32 0.0, %v4534
        %4536 = vmatmul.bf16.gmra.mxu0 %v4460
        %v4537 = vpop.f32.mrf.mxu0
        %v4538 = vadd.f32 0.0, %v4537
        %v4539 = vpop.f32.mrf.mxu0
        %v4540 = vadd.f32 0.0, %v4539
        %4541 = vmatmul.bf16.gmra.mxu0 %v4463
        %v4542 = vpop.f32.mrf.mxu0
        %v4543 = vadd.f32 0.0, %v4542
        %v4544 = vpop.f32.mrf.mxu0
        %v4545 = vadd.f32 0.0, %v4544
        %4546 = vmatmul.bf16.gmra.mxu0 %v4466
        %v4547 = vpop.f32.mrf.mxu0
        %v4548 = vadd.f32 0.0, %v4547
        %v4549 = vpop.f32.mrf.mxu0
        %v4550 = vadd.f32 0.0, %v4549
        %4551 = vmatmul.bf16.gmra.mxu0 %v4469
        %v4552 = vpop.f32.mrf.mxu0
        %v4553 = vadd.f32 0.0, %v4552
        %v4554 = vpop.f32.mrf.mxu0
        %v4555 = vadd.f32 0.0, %v4554
        %4556 = vmatmul.bf16.gmra.mxu0 %v4472
        %v4557 = vpop.f32.mrf.mxu0
        %v4558 = vadd.f32 0.0, %v4557
        %v4559 = vpop.f32.mrf.mxu0
        %v4560 = vadd.f32 0.0, %v4559
        %4561 = vmatmul.bf16.gmra.mxu0 %v4475
        %v4562 = vpop.f32.mrf.mxu0
        %v4563 = vadd.f32 0.0, %v4562
        %v4564 = vpop.f32.mrf.mxu0
        %v4565 = vadd.f32 0.0, %v4564
        %4566 = vmatmul.bf16.gmra.mxu0 %v4478
        %v4567 = vpop.f32.mrf.mxu0
        %v4568 = vadd.f32 0.0, %v4567
        %v4569 = vpop.f32.mrf.mxu0
        %v4570 = vadd.f32 0.0, %v4569
        %4571 = vdwg.mxu0
        %v4572 = vld [vmem:[#allocation3] sm:$0xff]
        %v4573 = vld [vmem:[#allocation3 + $0x8] sm:$0xff]
        %v4574 = vld [vmem:[#allocation3 + $0x10] sm:$0xff]
        %v4575 = vld [vmem:[#allocation3 + $0x18] sm:$0xff]
        %v4576 = vld [vmem:[#allocation3 + $0x20] sm:$0xff]
        %v4577 = vld [vmem:[#allocation3 + $0x28] sm:$0xff]
        %v4578 = vld [vmem:[#allocation3 + $0x30] sm:$0xff]
        %v4579 = vld [vmem:[#allocation3 + $0x38] sm:$0xff]
        %v4580 = vld [vmem:[#allocation3 + $0x40] sm:$0xff]
        %v4581 = vld [vmem:[#allocation3 + $0x48] sm:$0xff]
        %v4582 = vld [vmem:[#allocation3 + $0x50] sm:$0xff]
        %v4583 = vld [vmem:[#allocation3 + $0x58] sm:$0xff]
        %v4584 = vld [vmem:[#allocation3 + $0x60] sm:$0xff]
        %v4585 = vld [vmem:[#allocation3 + $0x68] sm:$0xff]
        %v4586 = vld [vmem:[#allocation3 + $0x70] sm:$0xff]
        %v4587 = vld [vmem:[#allocation3 + $0x78] sm:$0xff]
        %v4588 = vld [vmem:[#allocation3 + $0x80] sm:$0xff]
        %v4589 = vld [vmem:[#allocation3 + $0x88] sm:$0xff]
        %v4590 = vld [vmem:[#allocation3 + $0x90] sm:$0xff]
        %v4591 = vld [vmem:[#allocation3 + $0x98] sm:$0xff]
        %v4592 = vld [vmem:[#allocation3 + $0xa0] sm:$0xff]
        %v4593 = vld [vmem:[#allocation3 + $0xa8] sm:$0xff]
        %v4594 = vld [vmem:[#allocation3 + $0xb0] sm:$0xff]
        %v4595 = vld [vmem:[#allocation3 + $0xb8] sm:$0xff]
        %v4596 = vld [vmem:[#allocation3 + $0xc0] sm:$0xff]
        %v4597 = vld [vmem:[#allocation3 + $0xc8] sm:$0xff]
        %v4598 = vld [vmem:[#allocation3 + $0xd0] sm:$0xff]
        %v4599 = vld [vmem:[#allocation3 + $0xd8] sm:$0xff]
        %v4600 = vld [vmem:[#allocation3 + $0xe0] sm:$0xff]
        %v4601 = vld [vmem:[#allocation3 + $0xe8] sm:$0xff]
        %v4602 = vld [vmem:[#allocation3 + $0xf0] sm:$0xff]
        %v4603 = vld [vmem:[#allocation3 + $0xf8] sm:$0xff]
        %v4604 = vadd.f32 %v4572, %v4493
        %v4605 = vadd.f32 %v4573, %v4495
        %v4606 = vadd.f32 %v4574, %v4498
        %v4607 = vadd.f32 %v4575, %v4500
        %v4608 = vadd.f32 %v4576, %v4503
        %v4609 = vadd.f32 %v4577, %v4505
        %v4610 = vadd.f32 %v4578, %v4508
        %v4611 = vadd.f32 %v4579, %v4510
        %v4612 = vadd.f32 %v4580, %v4513
        %v4613 = vadd.f32 %v4581, %v4515
        %v4614 = vadd.f32 %v4582, %v4518
        %v4615 = vadd.f32 %v4583, %v4520
        %v4616 = vadd.f32 %v4584, %v4523
        %v4617 = vadd.f32 %v4585, %v4525
        %v4618 = vadd.f32 %v4586, %v4528
        %v4619 = vadd.f32 %v4587, %v4530
        %v4620 = vadd.f32 %v4588, %v4533
        %v4621 = vadd.f32 %v4589, %v4535
        %v4622 = vadd.f32 %v4590, %v4538
        %v4623 = vadd.f32 %v4591, %v4540
        %v4624 = vadd.f32 %v4592, %v4543
        %v4625 = vadd.f32 %v4593, %v4545
        %v4626 = vadd.f32 %v4594, %v4548
        %v4627 = vadd.f32 %v4595, %v4550
        %v4628 = vadd.f32 %v4596, %v4553
        %v4629 = vadd.f32 %v4597, %v4555
        %v4630 = vadd.f32 %v4598, %v4558
        %v4631 = vadd.f32 %v4599, %v4560
        %v4632 = vadd.f32 %v4600, %v4563
        %v4633 = vadd.f32 %v4601, %v4565
        %v4634 = vadd.f32 %v4602, %v4568
        %v4635 = vadd.f32 %v4603, %v4570
        %4636 = vst.msk [vmem:[#allocation3] sm:$0xff] %vm224, %v4604
        %4637 = vst.msk [vmem:[#allocation3 + $0x8] sm:$0xff] %vm224, %v4605
        %4638 = vst.msk [vmem:[#allocation3 + $0x10] sm:$0xff] %vm224, %v4606
        %4639 = vst.msk [vmem:[#allocation3 + $0x18] sm:$0xff] %vm224, %v4607
        %4640 = vst.msk [vmem:[#allocation3 + $0x20] sm:$0xff] %vm224, %v4608
        %4641 = vst.msk [vmem:[#allocation3 + $0x28] sm:$0xff] %vm224, %v4609
        %4642 = vst.msk [vmem:[#allocation3 + $0x30] sm:$0xff] %vm224, %v4610
        %4643 = vst.msk [vmem:[#allocation3 + $0x38] sm:$0xff] %vm224, %v4611
        %4644 = vst.msk [vmem:[#allocation3 + $0x40] sm:$0xff] %vm224, %v4612
        %4645 = vst.msk [vmem:[#allocation3 + $0x48] sm:$0xff] %vm224, %v4613
        %4646 = vst.msk [vmem:[#allocation3 + $0x50] sm:$0xff] %vm224, %v4614
        %4647 = vst.msk [vmem:[#allocation3 + $0x58] sm:$0xff] %vm224, %v4615
        %4648 = vst.msk [vmem:[#allocation3 + $0x60] sm:$0xff] %vm224, %v4616
        %4649 = vst.msk [vmem:[#allocation3 + $0x68] sm:$0xff] %vm224, %v4617
        %4650 = vst.msk [vmem:[#allocation3 + $0x70] sm:$0xff] %vm224, %v4618
        %4651 = vst.msk [vmem:[#allocation3 + $0x78] sm:$0xff] %vm224, %v4619
        %4652 = vst.msk [vmem:[#allocation3 + $0x80] sm:$0xff] %vm224, %v4620
        %4653 = vst.msk [vmem:[#allocation3 + $0x88] sm:$0xff] %vm224, %v4621
        %4654 = vst.msk [vmem:[#allocation3 + $0x90] sm:$0xff] %vm224, %v4622
        %4655 = vst.msk [vmem:[#allocation3 + $0x98] sm:$0xff] %vm224, %v4623
        %4656 = vst.msk [vmem:[#allocation3 + $0xa0] sm:$0xff] %vm224, %v4624
        %4657 = vst.msk [vmem:[#allocation3 + $0xa8] sm:$0xff] %vm224, %v4625
        %4658 = vst.msk [vmem:[#allocation3 + $0xb0] sm:$0xff] %vm224, %v4626
        %4659 = vst.msk [vmem:[#allocation3 + $0xb8] sm:$0xff] %vm224, %v4627
        %4660 = vst.msk [vmem:[#allocation3 + $0xc0] sm:$0xff] %vm224, %v4628
        %4661 = vst.msk [vmem:[#allocation3 + $0xc8] sm:$0xff] %vm224, %v4629
        %4662 = vst.msk [vmem:[#allocation3 + $0xd0] sm:$0xff] %vm224, %v4630
        %4663 = vst.msk [vmem:[#allocation3 + $0xd8] sm:$0xff] %vm224, %v4631
        %4664 = vst.msk [vmem:[#allocation3 + $0xe0] sm:$0xff] %vm224, %v4632
        %4665 = vst.msk [vmem:[#allocation3 + $0xe8] sm:$0xff] %vm224, %v4633
        %4666 = vst.msk [vmem:[#allocation3 + $0xf0] sm:$0xff] %vm224, %v4634
        %4667 = vst.msk [vmem:[#allocation3 + $0xf8] sm:$0xff] %vm224, %v4635
        %v4668 = vld [vmem:[%s2026] sm:$0xff]
        %v4669 = vld [vmem:[%s2026 + $0x8] sm:$0xff]
        %v4670 = vld [vmem:[%s2026 + $0x18] sm:$0xff]
        %v4671 = vld [vmem:[%s2026 + $0x20] sm:$0xff]
        %v4672 = vld [vmem:[%s2026 + $0x30] sm:$0xff]
        %v4673 = vld [vmem:[%s2026 + $0x38] sm:$0xff]
        %v4674 = vld [vmem:[%s2026 + $0x48] sm:$0xff]
        %v4675 = vld [vmem:[%s2026 + $0x50] sm:$0xff]
        %v4676 = vld [vmem:[%s2026 + $0x60] sm:$0xff]
        %v4677 = vld [vmem:[%s2026 + $0x68] sm:$0xff]
        %v4678 = vld [vmem:[%s2026 + $0x78] sm:$0xff]
        %v4679 = vld [vmem:[%s2026 + $0x80] sm:$0xff]
        %v4680 = vld [vmem:[%s2026 + $0x90] sm:$0xff]
        %v4681 = vld [vmem:[%s2026 + $0x98] sm:$0xff]
        %v4682 = vld [vmem:[%s2026 + $0xa8] sm:$0xff]
        %v4683 = vld [vmem:[%s2026 + $0xb0] sm:$0xff]
        %v4684 = vld [vmem:[%s2026 + $0xc0] sm:$0xff]
        %v4685 = vld [vmem:[%s2026 + $0xc8] sm:$0xff]
        %v4686 = vld [vmem:[%s2026 + $0xd8] sm:$0xff]
        %v4687 = vld [vmem:[%s2026 + $0xe0] sm:$0xff]
        %v4688 = vld [vmem:[%s2026 + $0xf0] sm:$0xff]
        %v4689 = vld [vmem:[%s2026 + $0xf8] sm:$0xff]
        %v4690 = vld [vmem:[%s2026 + $0x108] sm:$0xff]
        %v4691 = vld [vmem:[%s2026 + $0x110] sm:$0xff]
        %v4692 = vld [vmem:[%s2026 + $0x120] sm:$0xff]
        %v4693 = vld [vmem:[%s2026 + $0x128] sm:$0xff]
        %v4694 = vld [vmem:[%s2026 + $0x138] sm:$0xff]
        %v4695 = vld [vmem:[%s2026 + $0x140] sm:$0xff]
        %v4696 = vld [vmem:[%s2026 + $0x150] sm:$0xff]
        %v4697 = vld [vmem:[%s2026 + $0x158] sm:$0xff]
        %v4698 = vld [vmem:[%s2026 + $0x168] sm:$0xff]
        %v4699 = vld [vmem:[%s2026 + $0x170] sm:$0xff]
        %v4700 = vpack.c.bf16 %v4669, %v4668
        %v4701 = vpack.c.bf16 %v4671, %v4670
        %v4702 = vpack.c.bf16 %v4673, %v4672
        %v4703 = vpack.c.bf16 %v4675, %v4674
        %v4704 = vpack.c.bf16 %v4677, %v4676
        %v4705 = vpack.c.bf16 %v4679, %v4678
        %v4706 = vpack.c.bf16 %v4681, %v4680
        %v4707 = vpack.c.bf16 %v4683, %v4682
        %v4708 = vpack.c.bf16 %v4685, %v4684
        %v4709 = vpack.c.bf16 %v4687, %v4686
        %v4710 = vpack.c.bf16 %v4689, %v4688
        %v4711 = vpack.c.bf16 %v4691, %v4690
        %v4712 = vpack.c.bf16 %v4693, %v4692
        %v4713 = vpack.c.bf16 %v4695, %v4694
        %v4714 = vpack.c.bf16 %v4697, %v4696
        %v4715 = vpack.c.bf16 %v4699, %v4698
        %s4716 = scalar_lea.vmem %s3, 12
        %v4717 = vld [vmem:[%s4716] sm:$0x3]
        %v4719 = vsel %vm224, %v4700, 0
        %v4722 = vsel %vm224, %v4701, 0
        %v4725 = vsel %vm224, %v4702, 0
        %v4728 = vsel %vm224, %v4703, 0
        %v4731 = vsel %vm224, %v4704, 0
        %v4734 = vsel %vm224, %v4705, 0
        %v4737 = vsel %vm224, %v4706, 0
        %v4740 = vsel %vm224, %v4707, 0
        %v4743 = vsel %vm224, %v4708, 0
        %v4746 = vsel %vm224, %v4709, 0
        %v4749 = vsel %vm224, %v4710, 0
        %v4752 = vsel %vm224, %v4711, 0
        %v4755 = vsel %vm224, %v4712, 0
        %v4758 = vsel %vm224, %v4713, 0
        %v4761 = vsel %vm224, %v4714, 0
        %v4764 = vsel %vm224, %v4715, 0
        %v4767 = vsel %vm471, %v4717, 0
        %4769 = vmatpush.bf16.msra.mxu0 0
        %4770 = vmatpush.bf16.msra.mxu0 0
        %4771 = vmatpush.bf16.msra.mxu0 0
        %4772 = vmatpush.bf16.msra.mxu0 0
        %4773 = vmatpush.bf16.msra.mxu0 0
        %4774 = vmatpush.bf16.msra.mxu0 0
        %4775 = vmatpush.bf16.msra.mxu0 0
        %4776 = vmatpush.bf16.msra.mxu0 %v4767
        %4777 = vmatmul.bf16.gmra.mxu0 %v4719
        %v4778 = vpop.f32.mrf.mxu0
        %v4779 = vadd.f32 0.0, %v4778
        %v4780 = vpop.f32.mrf.mxu0
        %v4781 = vadd.f32 0.0, %v4780
        %4782 = vmatmul.bf16.gmra.mxu0 %v4722
        %v4783 = vpop.f32.mrf.mxu0
        %v4784 = vadd.f32 0.0, %v4783
        %v4785 = vpop.f32.mrf.mxu0
        %v4786 = vadd.f32 0.0, %v4785
        %4787 = vmatmul.bf16.gmra.mxu0 %v4725
        %v4788 = vpop.f32.mrf.mxu0
        %v4789 = vadd.f32 0.0, %v4788
        %v4790 = vpop.f32.mrf.mxu0
        %v4791 = vadd.f32 0.0, %v4790
        %4792 = vmatmul.bf16.gmra.mxu0 %v4728
        %v4793 = vpop.f32.mrf.mxu0
        %v4794 = vadd.f32 0.0, %v4793
        %v4795 = vpop.f32.mrf.mxu0
        %v4796 = vadd.f32 0.0, %v4795
        %4797 = vmatmul.bf16.gmra.mxu0 %v4731
        %v4798 = vpop.f32.mrf.mxu0
        %v4799 = vadd.f32 0.0, %v4798
        %v4800 = vpop.f32.mrf.mxu0
        %v4801 = vadd.f32 0.0, %v4800
        %4802 = vmatmul.bf16.gmra.mxu0 %v4734
        %v4803 = vpop.f32.mrf.mxu0
        %v4804 = vadd.f32 0.0, %v4803
        %v4805 = vpop.f32.mrf.mxu0
        %v4806 = vadd.f32 0.0, %v4805
        %4807 = vmatmul.bf16.gmra.mxu0 %v4737
        %v4808 = vpop.f32.mrf.mxu0
        %v4809 = vadd.f32 0.0, %v4808
        %v4810 = vpop.f32.mrf.mxu0
        %v4811 = vadd.f32 0.0, %v4810
        %4812 = vmatmul.bf16.gmra.mxu0 %v4740
        %v4813 = vpop.f32.mrf.mxu0
        %v4814 = vadd.f32 0.0, %v4813
        %v4815 = vpop.f32.mrf.mxu0
        %v4816 = vadd.f32 0.0, %v4815
        %4817 = vmatmul.bf16.gmra.mxu0 %v4743
        %v4818 = vpop.f32.mrf.mxu0
        %v4819 = vadd.f32 0.0, %v4818
        %v4820 = vpop.f32.mrf.mxu0
        %v4821 = vadd.f32 0.0, %v4820
        %4822 = vmatmul.bf16.gmra.mxu0 %v4746
        %v4823 = vpop.f32.mrf.mxu0
        %v4824 = vadd.f32 0.0, %v4823
        %v4825 = vpop.f32.mrf.mxu0
        %v4826 = vadd.f32 0.0, %v4825
        %4827 = vmatmul.bf16.gmra.mxu0 %v4749
        %v4828 = vpop.f32.mrf.mxu0
        %v4829 = vadd.f32 0.0, %v4828
        %v4830 = vpop.f32.mrf.mxu0
        %v4831 = vadd.f32 0.0, %v4830
        %4832 = vmatmul.bf16.gmra.mxu0 %v4752
        %v4833 = vpop.f32.mrf.mxu0
        %v4834 = vadd.f32 0.0, %v4833
        %v4835 = vpop.f32.mrf.mxu0
        %v4836 = vadd.f32 0.0, %v4835
        %4837 = vmatmul.bf16.gmra.mxu0 %v4755
        %v4838 = vpop.f32.mrf.mxu0
        %v4839 = vadd.f32 0.0, %v4838
        %v4840 = vpop.f32.mrf.mxu0
        %v4841 = vadd.f32 0.0, %v4840
        %4842 = vmatmul.bf16.gmra.mxu0 %v4758
        %v4843 = vpop.f32.mrf.mxu0
        %v4844 = vadd.f32 0.0, %v4843
        %v4845 = vpop.f32.mrf.mxu0
        %v4846 = vadd.f32 0.0, %v4845
        %4847 = vmatmul.bf16.gmra.mxu0 %v4761
        %v4848 = vpop.f32.mrf.mxu0
        %v4849 = vadd.f32 0.0, %v4848
        %v4850 = vpop.f32.mrf.mxu0
        %v4851 = vadd.f32 0.0, %v4850
        %4852 = vmatmul.bf16.gmra.mxu0 %v4764
        %v4853 = vpop.f32.mrf.mxu0
        %v4854 = vadd.f32 0.0, %v4853
        %v4855 = vpop.f32.mrf.mxu0
        %v4856 = vadd.f32 0.0, %v4855
        %4857 = vdwg.mxu0
        %v4858 = vld [vmem:[#allocation3] sm:$0xff]
        %v4859 = vld [vmem:[#allocation3 + $0x8] sm:$0xff]
        %v4860 = vld [vmem:[#allocation3 + $0x10] sm:$0xff]
        %v4861 = vld [vmem:[#allocation3 + $0x18] sm:$0xff]
        %v4862 = vld [vmem:[#allocation3 + $0x20] sm:$0xff]
        %v4863 = vld [vmem:[#allocation3 + $0x28] sm:$0xff]
        %v4864 = vld [vmem:[#allocation3 + $0x30] sm:$0xff]
        %v4865 = vld [vmem:[#allocation3 + $0x38] sm:$0xff]
        %v4866 = vld [vmem:[#allocation3 + $0x40] sm:$0xff]
        %v4867 = vld [vmem:[#allocation3 + $0x48] sm:$0xff]
        %v4868 = vld [vmem:[#allocation3 + $0x50] sm:$0xff]
        %v4869 = vld [vmem:[#allocation3 + $0x58] sm:$0xff]
        %v4870 = vld [vmem:[#allocation3 + $0x60] sm:$0xff]
        %v4871 = vld [vmem:[#allocation3 + $0x68] sm:$0xff]
        %v4872 = vld [vmem:[#allocation3 + $0x70] sm:$0xff]
        %v4873 = vld [vmem:[#allocation3 + $0x78] sm:$0xff]
        %v4874 = vld [vmem:[#allocation3 + $0x80] sm:$0xff]
        %v4875 = vld [vmem:[#allocation3 + $0x88] sm:$0xff]
        %v4876 = vld [vmem:[#allocation3 + $0x90] sm:$0xff]
        %v4877 = vld [vmem:[#allocation3 + $0x98] sm:$0xff]
        %v4878 = vld [vmem:[#allocation3 + $0xa0] sm:$0xff]
        %v4879 = vld [vmem:[#allocation3 + $0xa8] sm:$0xff]
        %v4880 = vld [vmem:[#allocation3 + $0xb0] sm:$0xff]
        %v4881 = vld [vmem:[#allocation3 + $0xb8] sm:$0xff]
        %v4882 = vld [vmem:[#allocation3 + $0xc0] sm:$0xff]
        %v4883 = vld [vmem:[#allocation3 + $0xc8] sm:$0xff]
        %v4884 = vld [vmem:[#allocation3 + $0xd0] sm:$0xff]
        %v4885 = vld [vmem:[#allocation3 + $0xd8] sm:$0xff]
        %v4886 = vld [vmem:[#allocation3 + $0xe0] sm:$0xff]
        %v4887 = vld [vmem:[#allocation3 + $0xe8] sm:$0xff]
        %v4888 = vld [vmem:[#allocation3 + $0xf0] sm:$0xff]
        %v4889 = vld [vmem:[#allocation3 + $0xf8] sm:$0xff]
        %v4890 = vadd.f32 %v4858, %v4779
        %v4891 = vadd.f32 %v4859, %v4781
        %v4892 = vadd.f32 %v4860, %v4784
        %v4893 = vadd.f32 %v4861, %v4786
        %v4894 = vadd.f32 %v4862, %v4789
        %v4895 = vadd.f32 %v4863, %v4791
        %v4896 = vadd.f32 %v4864, %v4794
        %v4897 = vadd.f32 %v4865, %v4796
        %v4898 = vadd.f32 %v4866, %v4799
        %v4899 = vadd.f32 %v4867, %v4801
        %v4900 = vadd.f32 %v4868, %v4804
        %v4901 = vadd.f32 %v4869, %v4806
        %v4902 = vadd.f32 %v4870, %v4809
        %v4903 = vadd.f32 %v4871, %v4811
        %v4904 = vadd.f32 %v4872, %v4814
        %v4905 = vadd.f32 %v4873, %v4816
        %v4906 = vadd.f32 %v4874, %v4819
        %v4907 = vadd.f32 %v4875, %v4821
        %v4908 = vadd.f32 %v4876, %v4824
        %v4909 = vadd.f32 %v4877, %v4826
        %v4910 = vadd.f32 %v4878, %v4829
        %v4911 = vadd.f32 %v4879, %v4831
        %v4912 = vadd.f32 %v4880, %v4834
        %v4913 = vadd.f32 %v4881, %v4836
        %v4914 = vadd.f32 %v4882, %v4839
        %v4915 = vadd.f32 %v4883, %v4841
        %v4916 = vadd.f32 %v4884, %v4844
        %v4917 = vadd.f32 %v4885, %v4846
        %v4918 = vadd.f32 %v4886, %v4849
        %v4919 = vadd.f32 %v4887, %v4851
        %v4920 = vadd.f32 %v4888, %v4854
        %v4921 = vadd.f32 %v4889, %v4856
        %4922 = vst.msk [vmem:[#allocation3] sm:$0xff] %vm224, %v4890
        %4923 = vst.msk [vmem:[#allocation3 + $0x8] sm:$0xff] %vm224, %v4891
        %4924 = vst.msk [vmem:[#allocation3 + $0x10] sm:$0xff] %vm224, %v4892
        %4925 = vst.msk [vmem:[#allocation3 + $0x18] sm:$0xff] %vm224, %v4893
        %4926 = vst.msk [vmem:[#allocation3 + $0x20] sm:$0xff] %vm224, %v4894
        %4927 = vst.msk [vmem:[#allocation3 + $0x28] sm:$0xff] %vm224, %v4895
        %4928 = vst.msk [vmem:[#allocation3 + $0x30] sm:$0xff] %vm224, %v4896
        %4929 = vst.msk [vmem:[#allocation3 + $0x38] sm:$0xff] %vm224, %v4897
        %4930 = vst.msk [vmem:[#allocation3 + $0x40] sm:$0xff] %vm224, %v4898
        %4931 = vst.msk [vmem:[#allocation3 + $0x48] sm:$0xff] %vm224, %v4899
        %4932 = vst.msk [vmem:[#allocation3 + $0x50] sm:$0xff] %vm224, %v4900
        %4933 = vst.msk [vmem:[#allocation3 + $0x58] sm:$0xff] %vm224, %v4901
        %4934 = vst.msk [vmem:[#allocation3 + $0x60] sm:$0xff] %vm224, %v4902
        %4935 = vst.msk [vmem:[#allocation3 + $0x68] sm:$0xff] %vm224, %v4903
        %4936 = vst.msk [vmem:[#allocation3 + $0x70] sm:$0xff] %vm224, %v4904
        %4937 = vst.msk [vmem:[#allocation3 + $0x78] sm:$0xff] %vm224, %v4905
        %4938 = vst.msk [vmem:[#allocation3 + $0x80] sm:$0xff] %vm224, %v4906
        %4939 = vst.msk [vmem:[#allocation3 + $0x88] sm:$0xff] %vm224, %v4907
        %4940 = vst.msk [vmem:[#allocation3 + $0x90] sm:$0xff] %vm224, %v4908
        %4941 = vst.msk [vmem:[#allocation3 + $0x98] sm:$0xff] %vm224, %v4909
        %4942 = vst.msk [vmem:[#allocation3 + $0xa0] sm:$0xff] %vm224, %v4910
        %4943 = vst.msk [vmem:[#allocation3 + $0xa8] sm:$0xff] %vm224, %v4911
        %4944 = vst.msk [vmem:[#allocation3 + $0xb0] sm:$0xff] %vm224, %v4912
        %4945 = vst.msk [vmem:[#allocation3 + $0xb8] sm:$0xff] %vm224, %v4913
        %4946 = vst.msk [vmem:[#allocation3 + $0xc0] sm:$0xff] %vm224, %v4914
        %4947 = vst.msk [vmem:[#allocation3 + $0xc8] sm:$0xff] %vm224, %v4915
        %4948 = vst.msk [vmem:[#allocation3 + $0xd0] sm:$0xff] %vm224, %v4916
        %4949 = vst.msk [vmem:[#allocation3 + $0xd8] sm:$0xff] %vm224, %v4917
        %4950 = vst.msk [vmem:[#allocation3 + $0xe0] sm:$0xff] %vm224, %v4918
        %4951 = vst.msk [vmem:[#allocation3 + $0xe8] sm:$0xff] %vm224, %v4919
        %4952 = vst.msk [vmem:[#allocation3 + $0xf0] sm:$0xff] %vm224, %v4920
        %4953 = vst.msk [vmem:[#allocation3 + $0xf8] sm:$0xff] %vm224, %v4921
        %v4954 = vld [vmem:[%s2026 + $0x1] sm:$0xff]
        %v4955 = vld [vmem:[%s2026 + $0x9] sm:$0xff]
        %v4956 = vld [vmem:[%s2026 + $0x19] sm:$0xff]
        %v4957 = vld [vmem:[%s2026 + $0x21] sm:$0xff]
        %v4958 = vld [vmem:[%s2026 + $0x31] sm:$0xff]
        %v4959 = vld [vmem:[%s2026 + $0x39] sm:$0xff]
        %v4960 = vld [vmem:[%s2026 + $0x49] sm:$0xff]
        %v4961 = vld [vmem:[%s2026 + $0x51] sm:$0xff]
        %v4962 = vld [vmem:[%s2026 + $0x61] sm:$0xff]
        %v4963 = vld [vmem:[%s2026 + $0x69] sm:$0xff]
        %v4964 = vld [vmem:[%s2026 + $0x79] sm:$0xff]
        %v4965 = vld [vmem:[%s2026 + $0x81] sm:$0xff]
        %v4966 = vld [vmem:[%s2026 + $0x91] sm:$0xff]
        %v4967 = vld [vmem:[%s2026 + $0x99] sm:$0xff]
        %v4968 = vld [vmem:[%s2026 + $0xa9] sm:$0xff]
        %v4969 = vld [vmem:[%s2026 + $0xb1] sm:$0xff]
        %v4970 = vld [vmem:[%s2026 + $0xc1] sm:$0xff]
        %v4971 = vld [vmem:[%s2026 + $0xc9] sm:$0xff]
        %v4972 = vld [vmem:[%s2026 + $0xd9] sm:$0xff]
        %v4973 = vld [vmem:[%s2026 + $0xe1] sm:$0xff]
        %v4974 = vld [vmem:[%s2026 + $0xf1] sm:$0xff]
        %v4975 = vld [vmem:[%s2026 + $0xf9] sm:$0xff]
        %v4976 = vld [vmem:[%s2026 + $0x109] sm:$0xff]
        %v4977 = vld [vmem:[%s2026 + $0x111] sm:$0xff]
        %v4978 = vld [vmem:[%s2026 + $0x121] sm:$0xff]
        %v4979 = vld [vmem:[%s2026 + $0x129] sm:$0xff]
        %v4980 = vld [vmem:[%s2026 + $0x139] sm:$0xff]
        %v4981 = vld [vmem:[%s2026 + $0x141] sm:$0xff]
        %v4982 = vld [vmem:[%s2026 + $0x151] sm:$0xff]
        %v4983 = vld [vmem:[%s2026 + $0x159] sm:$0xff]
        %v4984 = vld [vmem:[%s2026 + $0x169] sm:$0xff]
        %v4985 = vld [vmem:[%s2026 + $0x171] sm:$0xff]
        %v4986 = vpack.c.bf16 %v4955, %v4954
        %v4987 = vpack.c.bf16 %v4957, %v4956
        %v4988 = vpack.c.bf16 %v4959, %v4958
        %v4989 = vpack.c.bf16 %v4961, %v4960
        %v4990 = vpack.c.bf16 %v4963, %v4962
        %v4991 = vpack.c.bf16 %v4965, %v4964
        %v4992 = vpack.c.bf16 %v4967, %v4966
        %v4993 = vpack.c.bf16 %v4969, %v4968
        %v4994 = vpack.c.bf16 %v4971, %v4970
        %v4995 = vpack.c.bf16 %v4973, %v4972
        %v4996 = vpack.c.bf16 %v4975, %v4974
        %v4997 = vpack.c.bf16 %v4977, %v4976
        %v4998 = vpack.c.bf16 %v4979, %v4978
        %v4999 = vpack.c.bf16 %v4981, %v4980
        %v5000 = vpack.c.bf16 %v4983, %v4982
        %v5001 = vpack.c.bf16 %v4985, %v4984
        %s5002 = scalar_lea.vmem %s3, 14
        %v5003 = vld [vmem:[%s5002] sm:$0x3]
        %v5005 = vsel %vm224, %v4986, 0
        %v5008 = vsel %vm224, %v4987, 0
        %v5011 = vsel %vm224, %v4988, 0
        %v5014 = vsel %vm224, %v4989, 0
        %v5017 = vsel %vm224, %v4990, 0
        %v5020 = vsel %vm224, %v4991, 0
        %v5023 = vsel %vm224, %v4992, 0
        %v5026 = vsel %vm224, %v4993, 0
        %v5029 = vsel %vm224, %v4994, 0
        %v5032 = vsel %vm224, %v4995, 0
        %v5035 = vsel %vm224, %v4996, 0
        %v5038 = vsel %vm224, %v4997, 0
        %v5041 = vsel %vm224, %v4998, 0
        %v5044 = vsel %vm224, %v4999, 0
        %v5047 = vsel %vm224, %v5000, 0
        %v5050 = vsel %vm224, %v5001, 0
        %v5053 = vsel %vm471, %v5003, 0
        %5055 = vmatpush.bf16.msra.mxu0 0
        %5056 = vmatpush.bf16.msra.mxu0 0
        %5057 = vmatpush.bf16.msra.mxu0 0
        %5058 = vmatpush.bf16.msra.mxu0 0
        %5059 = vmatpush.bf16.msra.mxu0 0
        %5060 = vmatpush.bf16.msra.mxu0 0
        %5061 = vmatpush.bf16.msra.mxu0 0
        %5062 = vmatpush.bf16.msra.mxu0 %v5053
        %5063 = vmatmul.bf16.gmra.mxu0 %v5005
        %v5064 = vpop.f32.mrf.mxu0
        %v5065 = vadd.f32 0.0, %v5064
        %v5066 = vpop.f32.mrf.mxu0
        %v5067 = vadd.f32 0.0, %v5066
        %5068 = vmatmul.bf16.gmra.mxu0 %v5008
        %v5069 = vpop.f32.mrf.mxu0
        %v5070 = vadd.f32 0.0, %v5069
        %v5071 = vpop.f32.mrf.mxu0
        %v5072 = vadd.f32 0.0, %v5071
        %5073 = vmatmul.bf16.gmra.mxu0 %v5011
        %v5074 = vpop.f32.mrf.mxu0
        %v5075 = vadd.f32 0.0, %v5074
        %v5076 = vpop.f32.mrf.mxu0
        %v5077 = vadd.f32 0.0, %v5076
        %5078 = vmatmul.bf16.gmra.mxu0 %v5014
        %v5079 = vpop.f32.mrf.mxu0
        %v5080 = vadd.f32 0.0, %v5079
        %v5081 = vpop.f32.mrf.mxu0
        %v5082 = vadd.f32 0.0, %v5081
        %5083 = vmatmul.bf16.gmra.mxu0 %v5017
        %v5084 = vpop.f32.mrf.mxu0
        %v5085 = vadd.f32 0.0, %v5084
        %v5086 = vpop.f32.mrf.mxu0
        %v5087 = vadd.f32 0.0, %v5086
        %5088 = vmatmul.bf16.gmra.mxu0 %v5020
        %v5089 = vpop.f32.mrf.mxu0
        %v5090 = vadd.f32 0.0, %v5089
        %v5091 = vpop.f32.mrf.mxu0
        %v5092 = vadd.f32 0.0, %v5091
        %5093 = vmatmul.bf16.gmra.mxu0 %v5023
        %v5094 = vpop.f32.mrf.mxu0
        %v5095 = vadd.f32 0.0, %v5094
        %v5096 = vpop.f32.mrf.mxu0
        %v5097 = vadd.f32 0.0, %v5096
        %5098 = vmatmul.bf16.gmra.mxu0 %v5026
        %v5099 = vpop.f32.mrf.mxu0
        %v5100 = vadd.f32 0.0, %v5099
        %v5101 = vpop.f32.mrf.mxu0
        %v5102 = vadd.f32 0.0, %v5101
        %5103 = vmatmul.bf16.gmra.mxu0 %v5029
        %v5104 = vpop.f32.mrf.mxu0
        %v5105 = vadd.f32 0.0, %v5104
        %v5106 = vpop.f32.mrf.mxu0
        %v5107 = vadd.f32 0.0, %v5106
        %5108 = vmatmul.bf16.gmra.mxu0 %v5032
        %v5109 = vpop.f32.mrf.mxu0
        %v5110 = vadd.f32 0.0, %v5109
        %v5111 = vpop.f32.mrf.mxu0
        %v5112 = vadd.f32 0.0, %v5111
        %5113 = vmatmul.bf16.gmra.mxu0 %v5035
        %v5114 = vpop.f32.mrf.mxu0
        %v5115 = vadd.f32 0.0, %v5114
        %v5116 = vpop.f32.mrf.mxu0
        %v5117 = vadd.f32 0.0, %v5116
        %5118 = vmatmul.bf16.gmra.mxu0 %v5038
        %v5119 = vpop.f32.mrf.mxu0
        %v5120 = vadd.f32 0.0, %v5119
        %v5121 = vpop.f32.mrf.mxu0
        %v5122 = vadd.f32 0.0, %v5121
        %5123 = vmatmul.bf16.gmra.mxu0 %v5041
        %v5124 = vpop.f32.mrf.mxu0
        %v5125 = vadd.f32 0.0, %v5124
        %v5126 = vpop.f32.mrf.mxu0
        %v5127 = vadd.f32 0.0, %v5126
        %5128 = vmatmul.bf16.gmra.mxu0 %v5044
        %v5129 = vpop.f32.mrf.mxu0
        %v5130 = vadd.f32 0.0, %v5129
        %v5131 = vpop.f32.mrf.mxu0
        %v5132 = vadd.f32 0.0, %v5131
        %5133 = vmatmul.bf16.gmra.mxu0 %v5047
        %v5134 = vpop.f32.mrf.mxu0
        %v5135 = vadd.f32 0.0, %v5134
        %v5136 = vpop.f32.mrf.mxu0
        %v5137 = vadd.f32 0.0, %v5136
        %5138 = vmatmul.bf16.gmra.mxu0 %v5050
        %v5139 = vpop.f32.mrf.mxu0
        %v5140 = vadd.f32 0.0, %v5139
        %v5141 = vpop.f32.mrf.mxu0
        %v5142 = vadd.f32 0.0, %v5141
        %5143 = vdwg.mxu0
        %v5144 = vld [vmem:[#allocation3] sm:$0xff]
        %v5145 = vld [vmem:[#allocation3 + $0x8] sm:$0xff]
        %v5146 = vld [vmem:[#allocation3 + $0x10] sm:$0xff]
        %v5147 = vld [vmem:[#allocation3 + $0x18] sm:$0xff]
        %v5148 = vld [vmem:[#allocation3 + $0x20] sm:$0xff]
        %v5149 = vld [vmem:[#allocation3 + $0x28] sm:$0xff]
        %v5150 = vld [vmem:[#allocation3 + $0x30] sm:$0xff]
        %v5151 = vld [vmem:[#allocation3 + $0x38] sm:$0xff]
        %v5152 = vld [vmem:[#allocation3 + $0x40] sm:$0xff]
        %v5153 = vld [vmem:[#allocation3 + $0x48] sm:$0xff]
        %v5154 = vld [vmem:[#allocation3 + $0x50] sm:$0xff]
        %v5155 = vld [vmem:[#allocation3 + $0x58] sm:$0xff]
        %v5156 = vld [vmem:[#allocation3 + $0x60] sm:$0xff]
        %v5157 = vld [vmem:[#allocation3 + $0x68] sm:$0xff]
        %v5158 = vld [vmem:[#allocation3 + $0x70] sm:$0xff]
        %v5159 = vld [vmem:[#allocation3 + $0x78] sm:$0xff]
        %v5160 = vld [vmem:[#allocation3 + $0x80] sm:$0xff]
        %v5161 = vld [vmem:[#allocation3 + $0x88] sm:$0xff]
        %v5162 = vld [vmem:[#allocation3 + $0x90] sm:$0xff]
        %v5163 = vld [vmem:[#allocation3 + $0x98] sm:$0xff]
        %v5164 = vld [vmem:[#allocation3 + $0xa0] sm:$0xff]
        %v5165 = vld [vmem:[#allocation3 + $0xa8] sm:$0xff]
        %v5166 = vld [vmem:[#allocation3 + $0xb0] sm:$0xff]
        %v5167 = vld [vmem:[#allocation3 + $0xb8] sm:$0xff]
        %v5168 = vld [vmem:[#allocation3 + $0xc0] sm:$0xff]
        %v5169 = vld [vmem:[#allocation3 + $0xc8] sm:$0xff]
        %v5170 = vld [vmem:[#allocation3 + $0xd0] sm:$0xff]
        %v5171 = vld [vmem:[#allocation3 + $0xd8] sm:$0xff]
        %v5172 = vld [vmem:[#allocation3 + $0xe0] sm:$0xff]
        %v5173 = vld [vmem:[#allocation3 + $0xe8] sm:$0xff]
        %v5174 = vld [vmem:[#allocation3 + $0xf0] sm:$0xff]
        %v5175 = vld [vmem:[#allocation3 + $0xf8] sm:$0xff]
        %v5176 = vadd.f32 %v5144, %v5065
        %v5177 = vadd.f32 %v5145, %v5067
        %v5178 = vadd.f32 %v5146, %v5070
        %v5179 = vadd.f32 %v5147, %v5072
        %v5180 = vadd.f32 %v5148, %v5075
        %v5181 = vadd.f32 %v5149, %v5077
        %v5182 = vadd.f32 %v5150, %v5080
        %v5183 = vadd.f32 %v5151, %v5082
        %v5184 = vadd.f32 %v5152, %v5085
        %v5185 = vadd.f32 %v5153, %v5087
        %v5186 = vadd.f32 %v5154, %v5090
        %v5187 = vadd.f32 %v5155, %v5092
        %v5188 = vadd.f32 %v5156, %v5095
        %v5189 = vadd.f32 %v5157, %v5097
        %v5190 = vadd.f32 %v5158, %v5100
        %v5191 = vadd.f32 %v5159, %v5102
        %v5192 = vadd.f32 %v5160, %v5105
        %v5193 = vadd.f32 %v5161, %v5107
        %v5194 = vadd.f32 %v5162, %v5110
        %v5195 = vadd.f32 %v5163, %v5112
        %v5196 = vadd.f32 %v5164, %v5115
        %v5197 = vadd.f32 %v5165, %v5117
        %v5198 = vadd.f32 %v5166, %v5120
        %v5199 = vadd.f32 %v5167, %v5122
        %v5200 = vadd.f32 %v5168, %v5125
        %v5201 = vadd.f32 %v5169, %v5127
        %v5202 = vadd.f32 %v5170, %v5130
        %v5203 = vadd.f32 %v5171, %v5132
        %v5204 = vadd.f32 %v5172, %v5135
        %v5205 = vadd.f32 %v5173, %v5137
        %v5206 = vadd.f32 %v5174, %v5140
        %v5207 = vadd.f32 %v5175, %v5142
        %5208 = vst.msk [vmem:[#allocation3] sm:$0xff] %vm224, %v5176
        %5209 = vst.msk [vmem:[#allocation3 + $0x8] sm:$0xff] %vm224, %v5177
        %5210 = vst.msk [vmem:[#allocation3 + $0x10] sm:$0xff] %vm224, %v5178
        %5211 = vst.msk [vmem:[#allocation3 + $0x18] sm:$0xff] %vm224, %v5179
        %5212 = vst.msk [vmem:[#allocation3 + $0x20] sm:$0xff] %vm224, %v5180
        %5213 = vst.msk [vmem:[#allocation3 + $0x28] sm:$0xff] %vm224, %v5181
        %5214 = vst.msk [vmem:[#allocation3 + $0x30] sm:$0xff] %vm224, %v5182
        %5215 = vst.msk [vmem:[#allocation3 + $0x38] sm:$0xff] %vm224, %v5183
        %5216 = vst.msk [vmem:[#allocation3 + $0x40] sm:$0xff] %vm224, %v5184
        %5217 = vst.msk [vmem:[#allocation3 + $0x48] sm:$0xff] %vm224, %v5185
        %5218 = vst.msk [vmem:[#allocation3 + $0x50] sm:$0xff] %vm224, %v5186
        %5219 = vst.msk [vmem:[#allocation3 + $0x58] sm:$0xff] %vm224, %v5187
        %5220 = vst.msk [vmem:[#allocation3 + $0x60] sm:$0xff] %vm224, %v5188
        %5221 = vst.msk [vmem:[#allocation3 + $0x68] sm:$0xff] %vm224, %v5189
        %5222 = vst.msk [vmem:[#allocation3 + $0x70] sm:$0xff] %vm224, %v5190
        %5223 = vst.msk [vmem:[#allocation3 + $0x78] sm:$0xff] %vm224, %v5191
        %5224 = vst.msk [vmem:[#allocation3 + $0x80] sm:$0xff] %vm224, %v5192
        %5225 = vst.msk [vmem:[#allocation3 + $0x88] sm:$0xff] %vm224, %v5193
        %5226 = vst.msk [vmem:[#allocation3 + $0x90] sm:$0xff] %vm224, %v5194
        %5227 = vst.msk [vmem:[#allocation3 + $0x98] sm:$0xff] %vm224, %v5195
        %5228 = vst.msk [vmem:[#allocation3 + $0xa0] sm:$0xff] %vm224, %v5196
        %5229 = vst.msk [vmem:[#allocation3 + $0xa8] sm:$0xff] %vm224, %v5197
        %5230 = vst.msk [vmem:[#allocation3 + $0xb0] sm:$0xff] %vm224, %v5198
        %5231 = vst.msk [vmem:[#allocation3 + $0xb8] sm:$0xff] %vm224, %v5199
        %5232 = vst.msk [vmem:[#allocation3 + $0xc0] sm:$0xff] %vm224, %v5200
        %5233 = vst.msk [vmem:[#allocation3 + $0xc8] sm:$0xff] %vm224, %v5201
        %5234 = vst.msk [vmem:[#allocation3 + $0xd0] sm:$0xff] %vm224, %v5202
        %5235 = vst.msk [vmem:[#allocation3 + $0xd8] sm:$0xff] %vm224, %v5203
        %5236 = vst.msk [vmem:[#allocation3 + $0xe0] sm:$0xff] %vm224, %v5204
        %5237 = vst.msk [vmem:[#allocation3 + $0xe8] sm:$0xff] %vm224, %v5205
        %5238 = vst.msk [vmem:[#allocation3 + $0xf0] sm:$0xff] %vm224, %v5206
        %5239 = vst.msk [vmem:[#allocation3 + $0xf8] sm:$0xff] %vm224, %v5207
        %v5240 = vld [vmem:[%s2026 + $0x2] sm:$0xff]
        %v5241 = vld [vmem:[%s2026 + $0xa] sm:$0xff]
        %v5242 = vld [vmem:[%s2026 + $0x1a] sm:$0xff]
        %v5243 = vld [vmem:[%s2026 + $0x22] sm:$0xff]
        %v5244 = vld [vmem:[%s2026 + $0x32] sm:$0xff]
        %v5245 = vld [vmem:[%s2026 + $0x3a] sm:$0xff]
        %v5246 = vld [vmem:[%s2026 + $0x4a] sm:$0xff]
        %v5247 = vld [vmem:[%s2026 + $0x52] sm:$0xff]
        %v5248 = vld [vmem:[%s2026 + $0x62] sm:$0xff]
        %v5249 = vld [vmem:[%s2026 + $0x6a] sm:$0xff]
        %v5250 = vld [vmem:[%s2026 + $0x7a] sm:$0xff]
        %v5251 = vld [vmem:[%s2026 + $0x82] sm:$0xff]
        %v5252 = vld [vmem:[%s2026 + $0x92] sm:$0xff]
        %v5253 = vld [vmem:[%s2026 + $0x9a] sm:$0xff]
        %v5254 = vld [vmem:[%s2026 + $0xaa] sm:$0xff]
        %v5255 = vld [vmem:[%s2026 + $0xb2] sm:$0xff]
        %v5256 = vld [vmem:[%s2026 + $0xc2] sm:$0xff]
        %v5257 = vld [vmem:[%s2026 + $0xca] sm:$0xff]
        %v5258 = vld [vmem:[%s2026 + $0xda] sm:$0xff]
        %v5259 = vld [vmem:[%s2026 + $0xe2] sm:$0xff]
        %v5260 = vld [vmem:[%s2026 + $0xf2] sm:$0xff]
        %v5261 = vld [vmem:[%s2026 + $0xfa] sm:$0xff]
        %v5262 = vld [vmem:[%s2026 + $0x10a] sm:$0xff]
        %v5263 = vld [vmem:[%s2026 + $0x112] sm:$0xff]
        %v5264 = vld [vmem:[%s2026 + $0x122] sm:$0xff]
        %v5265 = vld [vmem:[%s2026 + $0x12a] sm:$0xff]
        %v5266 = vld [vmem:[%s2026 + $0x13a] sm:$0xff]
        %v5267 = vld [vmem:[%s2026 + $0x142] sm:$0xff]
        %v5268 = vld [vmem:[%s2026 + $0x152] sm:$0xff]
        %v5269 = vld [vmem:[%s2026 + $0x15a] sm:$0xff]
        %v5270 = vld [vmem:[%s2026 + $0x16a] sm:$0xff]
        %v5271 = vld [vmem:[%s2026 + $0x172] sm:$0xff]
        %v5272 = vpack.c.bf16 %v5241, %v5240
        %v5273 = vpack.c.bf16 %v5243, %v5242
        %v5274 = vpack.c.bf16 %v5245, %v5244
        %v5275 = vpack.c.bf16 %v5247, %v5246
        %v5276 = vpack.c.bf16 %v5249, %v5248
        %v5277 = vpack.c.bf16 %v5251, %v5250
        %v5278 = vpack.c.bf16 %v5253, %v5252
        %v5279 = vpack.c.bf16 %v5255, %v5254
        %v5280 = vpack.c.bf16 %v5257, %v5256
        %v5281 = vpack.c.bf16 %v5259, %v5258
        %v5282 = vpack.c.bf16 %v5261, %v5260
        %v5283 = vpack.c.bf16 %v5263, %v5262
        %v5284 = vpack.c.bf16 %v5265, %v5264
        %v5285 = vpack.c.bf16 %v5267, %v5266
        %v5286 = vpack.c.bf16 %v5269, %v5268
        %v5287 = vpack.c.bf16 %v5271, %v5270
        %s5288 = scalar_lea.vmem %s3, 16
        %v5289 = vld [vmem:[%s5288] sm:$0x3]
        %v5291 = vsel %vm224, %v5272, 0
        %v5294 = vsel %vm224, %v5273, 0
        %v5297 = vsel %vm224, %v5274, 0
        %v5300 = vsel %vm224, %v5275, 0
        %v5303 = vsel %vm224, %v5276, 0
        %v5306 = vsel %vm224, %v5277, 0
        %v5309 = vsel %vm224, %v5278, 0
        %v5312 = vsel %vm224, %v5279, 0
        %v5315 = vsel %vm224, %v5280, 0
        %v5318 = vsel %vm224, %v5281, 0
        %v5321 = vsel %vm224, %v5282, 0
        %v5324 = vsel %vm224, %v5283, 0
        %v5327 = vsel %vm224, %v5284, 0
        %v5330 = vsel %vm224, %v5285, 0
        %v5333 = vsel %vm224, %v5286, 0
        %v5336 = vsel %vm224, %v5287, 0
        %v5339 = vsel %vm471, %v5289, 0
        %5341 = vmatpush.bf16.msra.mxu0 0
        %5342 = vmatpush.bf16.msra.mxu0 0
        %5343 = vmatpush.bf16.msra.mxu0 0
        %5344 = vmatpush.bf16.msra.mxu0 0
        %5345 = vmatpush.bf16.msra.mxu0 0
        %5346 = vmatpush.bf16.msra.mxu0 0
        %5347 = vmatpush.bf16.msra.mxu0 0
        %5348 = vmatpush.bf16.msra.mxu0 %v5339
        %5349 = vmatmul.bf16.gmra.mxu0 %v5291
        %v5350 = vpop.f32.mrf.mxu0
        %v5351 = vadd.f32 0.0, %v5350
        %v5352 = vpop.f32.mrf.mxu0
        %v5353 = vadd.f32 0.0, %v5352
        %5354 = vmatmul.bf16.gmra.mxu0 %v5294
        %v5355 = vpop.f32.mrf.mxu0
        %v5356 = vadd.f32 0.0, %v5355
        %v5357 = vpop.f32.mrf.mxu0
        %v5358 = vadd.f32 0.0, %v5357
        %5359 = vmatmul.bf16.gmra.mxu0 %v5297
        %v5360 = vpop.f32.mrf.mxu0
        %v5361 = vadd.f32 0.0, %v5360
        %v5362 = vpop.f32.mrf.mxu0
        %v5363 = vadd.f32 0.0, %v5362
        %5364 = vmatmul.bf16.gmra.mxu0 %v5300
        %v5365 = vpop.f32.mrf.mxu0
        %v5366 = vadd.f32 0.0, %v5365
        %v5367 = vpop.f32.mrf.mxu0
        %v5368 = vadd.f32 0.0, %v5367
        %5369 = vmatmul.bf16.gmra.mxu0 %v5303
        %v5370 = vpop.f32.mrf.mxu0
        %v5371 = vadd.f32 0.0, %v5370
        %v5372 = vpop.f32.mrf.mxu0
        %v5373 = vadd.f32 0.0, %v5372
        %5374 = vmatmul.bf16.gmra.mxu0 %v5306
        %v5375 = vpop.f32.mrf.mxu0
        %v5376 = vadd.f32 0.0, %v5375
        %v5377 = vpop.f32.mrf.mxu0
        %v5378 = vadd.f32 0.0, %v5377
        %5379 = vmatmul.bf16.gmra.mxu0 %v5309
        %v5380 = vpop.f32.mrf.mxu0
        %v5381 = vadd.f32 0.0, %v5380
        %v5382 = vpop.f32.mrf.mxu0
        %v5383 = vadd.f32 0.0, %v5382
        %5384 = vmatmul.bf16.gmra.mxu0 %v5312
        %v5385 = vpop.f32.mrf.mxu0
        %v5386 = vadd.f32 0.0, %v5385
        %v5387 = vpop.f32.mrf.mxu0
        %v5388 = vadd.f32 0.0, %v5387
        %5389 = vmatmul.bf16.gmra.mxu0 %v5315
        %v5390 = vpop.f32.mrf.mxu0
        %v5391 = vadd.f32 0.0, %v5390
        %v5392 = vpop.f32.mrf.mxu0
        %v5393 = vadd.f32 0.0, %v5392
        %5394 = vmatmul.bf16.gmra.mxu0 %v5318
        %v5395 = vpop.f32.mrf.mxu0
        %v5396 = vadd.f32 0.0, %v5395
        %v5397 = vpop.f32.mrf.mxu0
        %v5398 = vadd.f32 0.0, %v5397
        %5399 = vmatmul.bf16.gmra.mxu0 %v5321
        %v5400 = vpop.f32.mrf.mxu0
        %v5401 = vadd.f32 0.0, %v5400
        %v5402 = vpop.f32.mrf.mxu0
        %v5403 = vadd.f32 0.0, %v5402
        %5404 = vmatmul.bf16.gmra.mxu0 %v5324
        %v5405 = vpop.f32.mrf.mxu0
        %v5406 = vadd.f32 0.0, %v5405
        %v5407 = vpop.f32.mrf.mxu0
        %v5408 = vadd.f32 0.0, %v5407
        %5409 = vmatmul.bf16.gmra.mxu0 %v5327
        %v5410 = vpop.f32.mrf.mxu0
        %v5411 = vadd.f32 0.0, %v5410
        %v5412 = vpop.f32.mrf.mxu0
        %v5413 = vadd.f32 0.0, %v5412
        %5414 = vmatmul.bf16.gmra.mxu0 %v5330
        %v5415 = vpop.f32.mrf.mxu0
        %v5416 = vadd.f32 0.0, %v5415
        %v5417 = vpop.f32.mrf.mxu0
        %v5418 = vadd.f32 0.0, %v5417
        %5419 = vmatmul.bf16.gmra.mxu0 %v5333
        %v5420 = vpop.f32.mrf.mxu0
        %v5421 = vadd.f32 0.0, %v5420
        %v5422 = vpop.f32.mrf.mxu0
        %v5423 = vadd.f32 0.0, %v5422
        %5424 = vmatmul.bf16.gmra.mxu0 %v5336
        %v5425 = vpop.f32.mrf.mxu0
        %v5426 = vadd.f32 0.0, %v5425
        %v5427 = vpop.f32.mrf.mxu0
        %v5428 = vadd.f32 0.0, %v5427
        %5429 = vdwg.mxu0
        %v5430 = vld [vmem:[#allocation3] sm:$0xff]
        %v5431 = vld [vmem:[#allocation3 + $0x8] sm:$0xff]
        %v5432 = vld [vmem:[#allocation3 + $0x10] sm:$0xff]
        %v5433 = vld [vmem:[#allocation3 + $0x18] sm:$0xff]
        %v5434 = vld [vmem:[#allocation3 + $0x20] sm:$0xff]
        %v5435 = vld [vmem:[#allocation3 + $0x28] sm:$0xff]
        %v5436 = vld [vmem:[#allocation3 + $0x30] sm:$0xff]
        %v5437 = vld [vmem:[#allocation3 + $0x38] sm:$0xff]
        %v5438 = vld [vmem:[#allocation3 + $0x40] sm:$0xff]
        %v5439 = vld [vmem:[#allocation3 + $0x48] sm:$0xff]
        %v5440 = vld [vmem:[#allocation3 + $0x50] sm:$0xff]
        %v5441 = vld [vmem:[#allocation3 + $0x58] sm:$0xff]
        %v5442 = vld [vmem:[#allocation3 + $0x60] sm:$0xff]
        %v5443 = vld [vmem:[#allocation3 + $0x68] sm:$0xff]
        %v5444 = vld [vmem:[#allocation3 + $0x70] sm:$0xff]
        %v5445 = vld [vmem:[#allocation3 + $0x78] sm:$0xff]
        %v5446 = vld [vmem:[#allocation3 + $0x80] sm:$0xff]
        %v5447 = vld [vmem:[#allocation3 + $0x88] sm:$0xff]
        %v5448 = vld [vmem:[#allocation3 + $0x90] sm:$0xff]
        %v5449 = vld [vmem:[#allocation3 + $0x98] sm:$0xff]
        %v5450 = vld [vmem:[#allocation3 + $0xa0] sm:$0xff]
        %v5451 = vld [vmem:[#allocation3 + $0xa8] sm:$0xff]
        %v5452 = vld [vmem:[#allocation3 + $0xb0] sm:$0xff]
        %v5453 = vld [vmem:[#allocation3 + $0xb8] sm:$0xff]
        %v5454 = vld [vmem:[#allocation3 + $0xc0] sm:$0xff]
        %v5455 = vld [vmem:[#allocation3 + $0xc8] sm:$0xff]
        %v5456 = vld [vmem:[#allocation3 + $0xd0] sm:$0xff]
        %v5457 = vld [vmem:[#allocation3 + $0xd8] sm:$0xff]
        %v5458 = vld [vmem:[#allocation3 + $0xe0] sm:$0xff]
        %v5459 = vld [vmem:[#allocation3 + $0xe8] sm:$0xff]
        %v5460 = vld [vmem:[#allocation3 + $0xf0] sm:$0xff]
        %v5461 = vld [vmem:[#allocation3 + $0xf8] sm:$0xff]
        %v5462 = vadd.f32 %v5430, %v5351
        %v5463 = vadd.f32 %v5431, %v5353
        %v5464 = vadd.f32 %v5432, %v5356
        %v5465 = vadd.f32 %v5433, %v5358
        %v5466 = vadd.f32 %v5434, %v5361
        %v5467 = vadd.f32 %v5435, %v5363
        %v5468 = vadd.f32 %v5436, %v5366
        %v5469 = vadd.f32 %v5437, %v5368
        %v5470 = vadd.f32 %v5438, %v5371
        %v5471 = vadd.f32 %v5439, %v5373
        %v5472 = vadd.f32 %v5440, %v5376
        %v5473 = vadd.f32 %v5441, %v5378
        %v5474 = vadd.f32 %v5442, %v5381
        %v5475 = vadd.f32 %v5443, %v5383
        %v5476 = vadd.f32 %v5444, %v5386
        %v5477 = vadd.f32 %v5445, %v5388
        %v5478 = vadd.f32 %v5446, %v5391
        %v5479 = vadd.f32 %v5447, %v5393
        %v5480 = vadd.f32 %v5448, %v5396
        %v5481 = vadd.f32 %v5449, %v5398
        %v5482 = vadd.f32 %v5450, %v5401
        %v5483 = vadd.f32 %v5451, %v5403
        %v5484 = vadd.f32 %v5452, %v5406
        %v5485 = vadd.f32 %v5453, %v5408
        %v5486 = vadd.f32 %v5454, %v5411
        %v5487 = vadd.f32 %v5455, %v5413
        %v5488 = vadd.f32 %v5456, %v5416
        %v5489 = vadd.f32 %v5457, %v5418
        %v5490 = vadd.f32 %v5458, %v5421
        %v5491 = vadd.f32 %v5459, %v5423
        %v5492 = vadd.f32 %v5460, %v5426
        %v5493 = vadd.f32 %v5461, %v5428
        %5494 = vst.msk [vmem:[#allocation3] sm:$0xff] %vm224, %v5462
        %5495 = vst.msk [vmem:[#allocation3 + $0x8] sm:$0xff] %vm224, %v5463
        %5496 = vst.msk [vmem:[#allocation3 + $0x10] sm:$0xff] %vm224, %v5464
        %5497 = vst.msk [vmem:[#allocation3 + $0x18] sm:$0xff] %vm224, %v5465
        %5498 = vst.msk [vmem:[#allocation3 + $0x20] sm:$0xff] %vm224, %v5466
        %5499 = vst.msk [vmem:[#allocation3 + $0x28] sm:$0xff] %vm224, %v5467
        %5500 = vst.msk [vmem:[#allocation3 + $0x30] sm:$0xff] %vm224, %v5468
        %5501 = vst.msk [vmem:[#allocation3 + $0x38] sm:$0xff] %vm224, %v5469
        %5502 = vst.msk [vmem:[#allocation3 + $0x40] sm:$0xff] %vm224, %v5470
        %5503 = vst.msk [vmem:[#allocation3 + $0x48] sm:$0xff] %vm224, %v5471
        %5504 = vst.msk [vmem:[#allocation3 + $0x50] sm:$0xff] %vm224, %v5472
        %5505 = vst.msk [vmem:[#allocation3 + $0x58] sm:$0xff] %vm224, %v5473
        %5506 = vst.msk [vmem:[#allocation3 + $0x60] sm:$0xff] %vm224, %v5474
        %5507 = vst.msk [vmem:[#allocation3 + $0x68] sm:$0xff] %vm224, %v5475
        %5508 = vst.msk [vmem:[#allocation3 + $0x70] sm:$0xff] %vm224, %v5476
        %5509 = vst.msk [vmem:[#allocation3 + $0x78] sm:$0xff] %vm224, %v5477
        %5510 = vst.msk [vmem:[#allocation3 + $0x80] sm:$0xff] %vm224, %v5478
        %5511 = vst.msk [vmem:[#allocation3 + $0x88] sm:$0xff] %vm224, %v5479
        %5512 = vst.msk [vmem:[#allocation3 + $0x90] sm:$0xff] %vm224, %v5480
        %5513 = vst.msk [vmem:[#allocation3 + $0x98] sm:$0xff] %vm224, %v5481
        %5514 = vst.msk [vmem:[#allocation3 + $0xa0] sm:$0xff] %vm224, %v5482
        %5515 = vst.msk [vmem:[#allocation3 + $0xa8] sm:$0xff] %vm224, %v5483
        %5516 = vst.msk [vmem:[#allocation3 + $0xb0] sm:$0xff] %vm224, %v5484
        %5517 = vst.msk [vmem:[#allocation3 + $0xb8] sm:$0xff] %vm224, %v5485
        %5518 = vst.msk [vmem:[#allocation3 + $0xc0] sm:$0xff] %vm224, %v5486
        %5519 = vst.msk [vmem:[#allocation3 + $0xc8] sm:$0xff] %vm224, %v5487
        %5520 = vst.msk [vmem:[#allocation3 + $0xd0] sm:$0xff] %vm224, %v5488
        %5521 = vst.msk [vmem:[#allocation3 + $0xd8] sm:$0xff] %vm224, %v5489
        %5522 = vst.msk [vmem:[#allocation3 + $0xe0] sm:$0xff] %vm224, %v5490
        %5523 = vst.msk [vmem:[#allocation3 + $0xe8] sm:$0xff] %vm224, %v5491
        %5524 = vst.msk [vmem:[#allocation3 + $0xf0] sm:$0xff] %vm224, %v5492
        %5525 = vst.msk [vmem:[#allocation3 + $0xf8] sm:$0xff] %vm224, %v5493
        %v5526 = vld [vmem:[#allocation3] sm:$0xff]
        %v5527 = vld [vmem:[#allocation3 + $0x8] sm:$0xff]
        %v5528 = vld [vmem:[#allocation3 + $0x10] sm:$0xff]
        %v5529 = vld [vmem:[#allocation3 + $0x18] sm:$0xff]
        %v5530 = vld [vmem:[#allocation3 + $0x20] sm:$0xff]
        %v5531 = vld [vmem:[#allocation3 + $0x28] sm:$0xff]
        %v5532 = vld [vmem:[#allocation3 + $0x30] sm:$0xff]
        %v5533 = vld [vmem:[#allocation3 + $0x38] sm:$0xff]
        %v5534 = vld [vmem:[#allocation3 + $0x40] sm:$0xff]
        %v5535 = vld [vmem:[#allocation3 + $0x48] sm:$0xff]
        %v5536 = vld [vmem:[#allocation3 + $0x50] sm:$0xff]
        %v5537 = vld [vmem:[#allocation3 + $0x58] sm:$0xff]
        %v5538 = vld [vmem:[#allocation3 + $0x60] sm:$0xff]
        %v5539 = vld [vmem:[#allocation3 + $0x68] sm:$0xff]
        %v5540 = vld [vmem:[#allocation3 + $0x70] sm:$0xff]
        %v5541 = vld [vmem:[#allocation3 + $0x78] sm:$0xff]
        %v5542 = vld [vmem:[#allocation3 + $0x80] sm:$0xff]
        %v5543 = vld [vmem:[#allocation3 + $0x88] sm:$0xff]
        %v5544 = vld [vmem:[#allocation3 + $0x90] sm:$0xff]
        %v5545 = vld [vmem:[#allocation3 + $0x98] sm:$0xff]
        %v5546 = vld [vmem:[#allocation3 + $0xa0] sm:$0xff]
        %v5547 = vld [vmem:[#allocation3 + $0xa8] sm:$0xff]
        %v5548 = vld [vmem:[#allocation3 + $0xb0] sm:$0xff]
        %v5549 = vld [vmem:[#allocation3 + $0xb8] sm:$0xff]
        %v5550 = vld [vmem:[#allocation3 + $0xc0] sm:$0xff]
        %v5551 = vld [vmem:[#allocation3 + $0xc8] sm:$0xff]
        %v5552 = vld [vmem:[#allocation3 + $0xd0] sm:$0xff]
        %v5553 = vld [vmem:[#allocation3 + $0xd8] sm:$0xff]
        %v5554 = vld [vmem:[#allocation3 + $0xe0] sm:$0xff]
        %v5555 = vld [vmem:[#allocation3 + $0xe8] sm:$0xff]
        %v5556 = vld [vmem:[#allocation3 + $0xf0] sm:$0xff]
        %v5557 = vld [vmem:[#allocation3 + $0xf8] sm:$0xff]
        %5558 = vxpose.xlu0.b32.start [1/16] %v5526, 128
        %5559 = vxpose.xlu0.b32.cont [2/16] %v5527, 128
        %5560 = vxpose.xlu0.b32.cont [3/16] %v5528, 128
        %5561 = vxpose.xlu0.b32.cont [4/16] %v5529, 128
        %5562 = vxpose.xlu0.b32.cont [5/16] %v5530, 128
        %5563 = vxpose.xlu0.b32.cont [6/16] %v5531, 128
        %5564 = vxpose.xlu0.b32.cont [7/16] %v5532, 128
        %5565 = vxpose.xlu0.b32.cont [8/16] %v5533, 128
        %5566 = vxpose.xlu0.b32.cont [9/16] %v5534, 128
        %5567 = vxpose.xlu0.b32.cont [10/16] %v5535, 128
        %5568 = vxpose.xlu0.b32.cont [11/16] %v5536, 128
        %5569 = vxpose.xlu0.b32.cont [12/16] %v5537, 128
        %5570 = vxpose.xlu0.b32.cont [13/16] %v5538, 128
        %5571 = vxpose.xlu0.b32.cont [14/16] %v5539, 128
        %5572 = vxpose.xlu0.b32.cont [15/16] %v5540, 128
        %5573 = vxpose.xlu0.b32.end [16/16] %v5541, 128
        %v5574 = vpop.trf.xlu0
        %v5575 = vpop.trf.xlu0
        %v5576 = vpop.trf.xlu0
        %v5577 = vpop.trf.xlu0
        %v5578 = vpop.trf.xlu0
        %v5579 = vpop.trf.xlu0
        %v5580 = vpop.trf.xlu0
        %v5581 = vpop.trf.xlu0
        %v5582 = vpop.trf.xlu0
        %v5583 = vpop.trf.xlu0
        %v5584 = vpop.trf.xlu0
        %v5585 = vpop.trf.xlu0
        %v5586 = vpop.trf.xlu0
        %v5587 = vpop.trf.xlu0
        %v5588 = vpop.trf.xlu0
        %v5589 = vpop.trf.xlu0
        %5590 = vxpose.xlu0.b32.start [1/16] %v5542, 128
        %5591 = vxpose.xlu0.b32.cont [2/16] %v5543, 128
        %5592 = vxpose.xlu0.b32.cont [3/16] %v5544, 128
        %5593 = vxpose.xlu0.b32.cont [4/16] %v5545, 128
        %5594 = vxpose.xlu0.b32.cont [5/16] %v5546, 128
        %5595 = vxpose.xlu0.b32.cont [6/16] %v5547, 128
        %5596 = vxpose.xlu0.b32.cont [7/16] %v5548, 128
        %5597 = vxpose.xlu0.b32.cont [8/16] %v5549, 128
        %5598 = vxpose.xlu0.b32.cont [9/16] %v5550, 128
        %5599 = vxpose.xlu0.b32.cont [10/16] %v5551, 128
        %5600 = vxpose.xlu0.b32.cont [11/16] %v5552, 128
        %5601 = vxpose.xlu0.b32.cont [12/16] %v5553, 128
        %5602 = vxpose.xlu0.b32.cont [13/16] %v5554, 128
        %5603 = vxpose.xlu0.b32.cont [14/16] %v5555, 128
        %5604 = vxpose.xlu0.b32.cont [15/16] %v5556, 128
        %5605 = vxpose.xlu0.b32.end [16/16] %v5557, 128
        %v5606 = vpop.trf.xlu0
        %v5607 = vpop.trf.xlu0
        %v5608 = vpop.trf.xlu0
        %v5609 = vpop.trf.xlu0
        %v5610 = vpop.trf.xlu0
        %v5611 = vpop.trf.xlu0
        %v5612 = vpop.trf.xlu0
        %v5613 = vpop.trf.xlu0
        %v5614 = vpop.trf.xlu0
        %v5615 = vpop.trf.xlu0
        %v5616 = vpop.trf.xlu0
        %v5617 = vpop.trf.xlu0
        %v5618 = vpop.trf.xlu0
        %v5619 = vpop.trf.xlu0
        %v5620 = vpop.trf.xlu0
        %v5621 = vpop.trf.xlu0
        %v5622 = vld [vmem:[%s4] sm:$0xf]
        %5624 = vset.pattern.permute.xlu0 0
        %5625 = vperm.xlu0 %5624, %v5622
        %v5626 = vpop.permute.xlu0 %5625
        %v5628 = vadd.f32 %v5574, %v5626
        %v5629 = vadd.f32 %v5606, %v5626
        %v5630 = vld [vmem:[%s222] sm:$0xff]
        %5632 = vst [vmem:[#allocation1] ss:$2 sm:$0xff] %v5630
        %v5633 = vld.sshfl [vmem:[#allocation1] sm:$0xff pattern:$0x75316420]
        %v5634 = vld.sshfl [vmem:[#allocation1 + $0x8] sm:$0xff pattern:$0x75316420]
        %v5637 = vadd.f32 %v5628, %v5633
        %v5638 = vadd.f32 %v5629, %v5634
        %v5639 = vmax.f32 %v5637, 0.0
        %v5640 = vmax.f32 %v5638, 0.0
        %v5643 = vrot.slane %v5640, 4
        %vm5644 = vcmask 1043456
        %v5645 = vsel %vm5644, %v5639, %v5643
        %5647 = vst [vmem:[%s217] sm:$0xff] %v5645
        %s5648 = sand.u32 %s137, 1
        %s5649 = scalar_lea.sflag [#allocation5], %s5648
        %s5650 = sand.u32 %s137, 1
        %s5651 = smul.addr %s5650, 8
        %s5652 = scalar_lea.vmem [#allocation4], %s5651
        // Predicated region
        $region41: #{tpu_custom_call.1} parent=39 // pred_check
          %p5653 = pneg %p147
        $region42: #{tpu_custom_call.1} parent=39 // pred_check_branch
          %5655 = sbr.rel (%p5653) target = $region44
        $region43: #{tpu_custom_call.1} parent=39 // pred_region
          %5657 = vsyncadd %s5649, 0
          %s5658 = smul.addr %s19, 2
          %s5659 = smul.addr %s5658, 4
          %s5660 = scalar_lea.hbm %s5, %s5659
          %s5662 = sshll.u32 %s5652, 4
          %s5663 = int_to_ptr.vmem [resolvable:$true] %s5662
          %s5664 = sshll.u32 %s5660, 4
          %s5665 = int_to_ptr.hbm [resolvable:$true] %s5664
          %5667 = dma.vmem_to_hbm [thread:$0]  %s5663, 128, %s5665, %s5649
        $region44: #{tpu_custom_call.1} parent=39 // pred_fallthru
          _
      $region40: #{tpu_custom_call.1} parent=5 // pred_fallthru
        _
      %p5668 = scmp.le.s32.totalorder 2, %s14
      // Predicated region
      $region45: #{tpu_custom_call.1} parent=5 // pred_check
        %p5669 = pneg %p5668
      $region46: #{tpu_custom_call.1} parent=5 // pred_check_branch
        %5671 = sbr.rel (%p5669) target = $region48
      $region47: #{tpu_custom_call.1} parent=5 // pred_region
        %s5672 = ssub.s32 %s14, 2
        // Predicated region
        $region49: #{tpu_custom_call.1} parent=47 // pred_check
          %p5673 = pneg %p153
        $region50: #{tpu_custom_call.1} parent=47 // pred_check_branch
          %5675 = sbr.rel (%p5673) target = $region52
        $region51: #{tpu_custom_call.1} parent=47 // pred_region
          %s5676 = sand.u32 %s138, 1
          %s5677 = scalar_lea.sflag [#allocation5], %s5676
          %s5678 = sand.u32 %s138, 1
          %s5679 = smul.addr %s5678, 8
          %s5680 = scalar_lea.vmem [#allocation4], %s5679
          %5682 = dma.done %s5677, 128
        $region52: #{tpu_custom_call.1} parent=47 // pred_fallthru
          _
      $region48: #{tpu_custom_call.1} parent=5 // pred_fallthru
        _
    $region6: #{tpu_custom_call.1} parent=1 // loop_footer
      %s18 = sadd.s32 1, %s14
    $region7: #{tpu_custom_call.1} parent=1 // loop_footer_branch
      %13 = sbr.rel target = $region3
    $region8: #{tpu_custom_call.1} parent=1 // loop_exit
      _
    %5683 = vsyncpa [#allocation5], 1
    %s5684 = scalar_lea.sflag [#allocation5], 1
    %5685 = vsyncpa %s5684, 1

</llo_original>
